<compile_context>
chip_gen: v7x
topology: tpu7x:2x2x1
jax: 0.10.0
libtpu: 0.0.40
codegen_flags: <defaults>
</compile_context>

<pallas_src>
import functools

import jax
import jax.numpy as jnp
from jax.experimental import pallas as pl
from jax.experimental.pallas import tpu as pltpu

EPS = 1e-6


def _vmem():
    return pl.BlockSpec(memory_space=pltpu.MemorySpace.VMEM)


def _whole_spec(a):
    """Whole-array VMEM block, resident across all grid steps (1-D grid)."""
    zeros = (0,) * a.ndim
    return pl.BlockSpec(a.shape, lambda n: zeros)


def _ln(x, g, b):
    mu = jnp.mean(x, axis=-1, keepdims=True)
    var = jnp.mean((x - mu) ** 2, axis=-1, keepdims=True)
    return (x - mu) * jax.lax.rsqrt(var + EPS) * g + b


# ----------------------------- Pallas kernels ------------------------------

def _stem_kernel(p_ref, w_ref, b_ref, g_ref, bt_ref, o_ref):
    # fused: patch-matmul (bf16 on MXU) + bias + LayerNorm2d, bf16 output
    y = jnp.dot(p_ref[...].astype(jnp.bfloat16), w_ref[...],
                preferred_element_type=jnp.float32) + b_ref[...]
    o_ref[...] = _ln(y, g_ref[...], bt_ref[...]).astype(o_ref.dtype)


def stem_fused(p2d, params):
    M = p2d.shape[0]
    C = params['stem_w'].shape[1]
    return pl.pallas_call(
        _stem_kernel,
        out_shape=jax.ShapeDtypeStruct((M, C), jnp.bfloat16),
        in_specs=[_vmem()] * 5,
        out_specs=_vmem(),
    )(p2d, params['stem_w'], params['stem_b'].reshape(1, C),
      params['stem_ln_g'].reshape(1, C), params['stem_ln_b'].reshape(1, C))


def _cnblock_kernel(H, W,
                    x_ref, dw_ref, dwb_ref, g_ref, bt_ref,
                    w1_ref, b1_ref, w2_ref, b2_ref, ls_ref,
                    o_ref, xp_ref):
    # x_ref / o_ref: (H, W, C) — one image (batch dim squeezed by BlockSpec).
    C = x_ref.shape[-1]
    x = x_ref[...].astype(jnp.float32)

    # Stage into the spatially padded scratch.  Zero ONLY the halo; the
    # interior is overwritten by the staging copy right after.
    xp_ref[0:3, :, :] = jnp.zeros((3, W + 6, C), jnp.float32)
    xp_ref[H + 3:H + 6, :, :] = jnp.zeros((3, W + 6, C), jnp.float32)
    xp_ref[3:H + 3, 0:3, :] = jnp.zeros((H, 3, C), jnp.float32)
    xp_ref[3:H + 3, W + 3:W + 6, :] = jnp.zeros((H, 3, C), jnp.float32)
    xp_ref[3:H + 3, 3:W + 3, :] = x

    # Depthwise 7x7: 49 plain shifted slices (no masks), one accumulator per
    # kernel row (7 independent VALU chains) + tree sum at the end.
    # TODO(synk): column shifts are sub-lane-misaligned slices; a further
    # micro-opt is 7 pltpu.roll's (XLU) shared across the 7 rows.
    dw = dw_ref[...]                                    # (7, 7, C) f32
    parts = []
    for di in range(7):
        a = xp_ref[di:di + H, 0:W, :] * dw[di, 0]
        for dj in range(1, 7):
            a = a + xp_ref[di:di + H, dj:dj + W, :] * dw[di, dj]
        parts.append(a)
    y = (((parts[0] + parts[1]) + (parts[2] + parts[3]))
         + ((parts[4] + parts[5]) + parts[6]))
    y = y.reshape(H * W, C) + dwb_ref[...]

    # LayerNorm + MLP (bf16 MXU matmuls, f32 accumulation).
    # TODO(synk): for real ConvNeXt widths, pad C / 4C to multiples of 128 for
    # the MXU; at the toy widths this only wastes MXU lanes, not correctness.
    yn = _ln(y, g_ref[...], bt_ref[...])
    h = jnp.dot(yn.astype(jnp.bfloat16), w1_ref[...],
                preferred_element_type=jnp.float32) + b1_ref[...]
    # Tanh-approx GELU (EUP slot); intentional deviation from nn.GELU()'s exact erf.
    h = jax.nn.gelu(h, approximate=True)
    z = jnp.dot(h.astype(jnp.bfloat16), w2_ref[...],
                preferred_element_type=jnp.float32) + b2_ref[...]

    # layer_scale * z + residual in f32, store back in bf16.
    # TODO(synk): StochasticDepth(p, 'row') is identity at p=0 / eval; not modeled.
    res = x.reshape(H * W, C) + ls_ref[...] * z
    o_ref[...] = res.reshape(H, W, C).astype(o_ref.dtype)


def cn_block_fused(x4, blk, H, W):
    N, _, _, C = x4.shape
    act_spec = pl.BlockSpec((None, H, W, C), lambda n: (n, 0, 0, 0))
    args = (x4,
            blk['dw_w'], blk['dw_b'].reshape(1, C),
            blk['ln_g'].reshape(1, C), blk['ln_b'].reshape(1, C),
            blk['w1'], blk['b1'].reshape(1, -1),
            blk['w2'], blk['b2'].reshape(1, C),
            blk['ls'].reshape(1, C))
    in_specs = [act_spec] + [_whole_spec(a) for a in args[1:]]
    return pl.pallas_call(
        functools.partial(_cnblock_kernel, H, W),
        out_shape=jax.ShapeDtypeStruct((N, H, W, C), jnp.bfloat16),
        grid=(N,),                                   # halo never crosses images
        in_specs=in_specs,
        out_specs=act_spec,
        scratch_shapes=[pltpu.VMEM((H + 6, W + 6, C), jnp.float32)],
        input_output_aliases={0: 0},                 # residual buffer reused
        compiler_params=pltpu.CompilerParams(
            dimension_semantics=("parallel",),       # megacore split on v7x
            vmem_limit_bytes=32 * 1024 * 1024),      # explicit VMEM budget
    )(*args)


def _downsample_kernel(p_ref, g_ref, bt_ref, w_ref, b_ref, o_ref):
    # p_ref: (M, 4, C) 2x2 patches (segment index kh*2+kw, channel c).
    # Pre-norm LayerNorm per segment, then ONE (M,4C) x (4C,Cout) MXU matmul.
    p = p_ref[...].astype(jnp.float32)
    pn = _ln(p, g_ref[...], bt_ref[...])
    M = p.shape[0]
    pn2 = pn.reshape(M, -1).astype(jnp.bfloat16)
    y = jnp.dot(pn2, w_ref[...], preferred_element_type=jnp.float32) + b_ref[...]
    o_ref[...] = y.astype(o_ref.dtype)


def downsample_fused(pd, stage, C):
    M = pd.shape[0]
    cout = stage['down_w'].shape[-1]
    w = stage['down_w'].reshape(4 * C, cout)           # (kh,kw,cin) -> rows
    return pl.pallas_call(
        _downsample_kernel,
        out_shape=jax.ShapeDtypeStruct((M, cout), jnp.bfloat16),
        in_specs=[_vmem()] * 5,
        out_specs=_vmem(),
    )(pd, stage['down_ln_g'].reshape(1, C), stage['down_ln_b'].reshape(1, C),
      w, stage['down_b'].reshape(1, cout))


def _head_kernel(x_ref, g_ref, bt_ref, w_ref, wb_ref, o_ref):
    # fused: global avg pool + LayerNorm2d + Linear
    x = jnp.mean(x_ref[...].astype(jnp.float32), axis=1)
    xn = _ln(x, g_ref[...], bt_ref[...])
    o_ref[...] = jnp.dot(xn.astype(jnp.bfloat16), w_ref[...],
                         preferred_element_type=jnp.float32) + wb_ref[...]


def head_fused(x3d, params):
    N, _, C = x3d.shape
    K = params['head_w'].shape[1]
    return pl.pallas_call(
        _head_kernel,
        out_shape=jax.ShapeDtypeStruct((N, K), jnp.float32),
        in_specs=[_vmem()] * 5,
        out_specs=_vmem(),
    )(x3d, params['head_ln_g'].reshape(1, C), params['head_ln_b'].reshape(1, C),
      params['head_w'], params['head_b'].reshape(1, K))


# ------------------------------- glue (JAX) --------------------------------

def patchify(x, k):
    """NHWC -> (N, H/k, W/k, k*k*C), patch elements ordered (kh, kw, C)."""
    N, H, W, C = x.shape
    x = x.reshape(N, H // k, k, W // k, k, C)
    x = jnp.transpose(x, (0, 1, 3, 2, 4, 5))
    return x.reshape(N, H // k, W // k, k * k * C)


def convnext_forward(params, x_nchw):
    x = jnp.transpose(x_nchw, (0, 2, 3, 1)).astype(jnp.float32)     # -> NHWC
    N, H0, W0, _ = x.shape

    # Stem: Conv2d(3, C0, k=4, s=4, bias) + LayerNorm2d fused in one kernel.
    # TODO(synk): patchify could be folded into the stem kernel via index_map.
    H, W = H0 // 4, W0 // 4
    C = params['stem_w'].shape[1]
    p = patchify(x, 4).reshape(N * H * W, -1)
    x4 = stem_fused(p, params).reshape(N, H, W, C)                  # bf16 NHWC

    for stage in params['stages']:
        for blk in stage['blocks']:
            x4 = cn_block_fused(x4, blk, H, W)
        if 'down_w' in stage:
            cout = stage['down_w'].shape[-1]
            pd = patchify(x4, 2)                     # (N, H/2, W/2, 4*C)
            H, W = H // 2, W // 2
            pd = pd.reshape(N * H * W, 4, C)
            x4 = downsample_fused(pd, stage, C).reshape(N, H, W, cout)
            C = cout

    # avgpool(1x1) + LayerNorm2d + Flatten + Linear, fused in one kernel.
    return head_fused(x4.reshape(N, H * W, C), params)


# --------------------------- parameter construction ------------------------

def init_convnext_params(key, block_setting, num_classes):
    keys = iter(jax.random.split(key, 128))
    bf16 = jnp.bfloat16

    def tn(shape, dtype=jnp.float32):            # trunc_normal_(std=0.02)
        w = jax.random.truncated_normal(next(keys), -2.0, 2.0, shape,
                                        jnp.float32) * 0.02
        return w.astype(dtype)

    params = {}
    c0 = block_setting[0][0]
    params['stem_w'] = tn((4 * 4 * 3, c0), bf16)       # (kh,kw,cin) flattened
    params['stem_b'] = jnp.zeros((c0,), jnp.float32)
    params['stem_ln_g'] = jnp.ones((c0,), jnp.float32)
    params['stem_ln_b'] = jnp.zeros((c0,), jnp.float32)

    stages = []
    for (cin, cout, nlayers) in block_setting:
        blocks = []
        for _ in range(nlayers):
            blocks.append(dict(
                dw_w=tn((7, 7, cin)),
                dw_b=jnp.zeros((cin,), jnp.float32),
                ln_g=jnp.ones((cin,), jnp.float32),
                ln_b=jnp.zeros((cin,), jnp.float32),
                w1=tn((cin, 4 * cin), bf16),
                b1=jnp.zeros((4 * cin,), jnp.float32),
                w2=tn((4 * cin, cin), bf16),
                b2=jnp.zeros((cin,), jnp.float32),
                ls=jnp.ones((cin,), jnp.float32) * 1e-6,
            ))
        stage = {'blocks': blocks}
        if cout is not None:
            stage['down_ln_g'] = jnp.ones((cin,), jnp.float32)
            stage['down_ln_b'] = jnp.zeros((cin,), jnp.float32)
            stage['down_w'] = tn((2, 2, cin, cout), bf16)
            stage['down_b'] = jnp.zeros((cout,), jnp.float32)
        stages.append(stage)
    params['stages'] = stages

    clast = block_setting[-1][1] if block_setting[-1][1] is not None \
        else block_setting[-1][0]
    params['head_ln_g'] = jnp.ones((clast,), jnp.float32)
    params['head_ln_b'] = jnp.zeros((clast,), jnp.float32)
    params['head_w'] = tn((clast, num_classes), bf16)
    params['head_b'] = jnp.zeros((num_classes,), jnp.float32)
    return params


# ---------------------------------- main ------------------------------------

if __name__ == "__main__":
    key = jax.random.PRNGKey(0)
    k_param, k_x = jax.random.split(key)

    # small ConvNeXt: block_setting = [CNBlockConfig(16, 32, 2),
    #                                  CNBlockConfig(32, None, 2)], 10 classes
    block_setting = [(16, 32, 2), (32, None, 2)]
    num_classes = 10
    params = init_convnext_params(k_param, block_setting, num_classes)

    x = jax.random.normal(k_x, (2, 3, 32, 32), jnp.float32)   # NCHW input

    fwd = jax.jit(convnext_forward)
    logits = fwd(params, x)
    jax.block_until_ready(logits)
    assert logits.shape == (2, num_classes)
    print("KERNEL_OK")
</pallas_src>

<mosaic_0001>
module attributes {stable_mosaic.version = 11 : i64} {
  func.func @_stem_kernel(%arg0: memref<128x48xf32, #tpu.memory_space<vmem>>, %arg1: memref<48x16xbf16, #tpu.memory_space<vmem>>, %arg2: memref<1x16xf32, #tpu.memory_space<vmem>>, %arg3: memref<1x16xf32, #tpu.memory_space<vmem>>, %arg4: memref<1x16xf32, #tpu.memory_space<vmem>>, %arg5: memref<128x16xbf16, #tpu.memory_space<vmem>>) attributes {dimension_semantics = [], scalar_prefetch = 0 : i64, scratch_operands = 0 : i64, tpu.core_type = #tpu.core_type<tc>} {
    %c0 = arith.constant 0 : index
    %c0_0 = arith.constant 0 : index
    %0 = vector.load %arg0[%c0, %c0_0] : memref<128x48xf32, #tpu.memory_space<vmem>>, vector<128x48xf32>
    %1 = arith.truncf %0 : vector<128x48xf32> to vector<128x48xbf16>
    %c0_1 = arith.constant 0 : index
    %c0_2 = arith.constant 0 : index
    %2 = vector.load %arg1[%c0_1, %c0_2] : memref<48x16xbf16, #tpu.memory_space<vmem>>, vector<48x16xbf16>
    %cst = arith.constant dense<0.000000e+00> : vector<128x16xf32>
    %3 = tpu.matmul %1, %2, %cst {dimension_numbers = #tpu.dot_dimension_numbers<[1], [0], [0], [1], [0, 0, 1, 1], [], []>} : vector<128x48xbf16>, vector<48x16xbf16>, vector<128x16xf32> -> vector<128x16xf32>
    %c0_3 = arith.constant 0 : index
    %c0_4 = arith.constant 0 : index
    %4 = vector.load %arg2[%c0_3, %c0_4] : memref<1x16xf32, #tpu.memory_space<vmem>>, vector<1x16xf32>
    %5 = vector.broadcast %4 : vector<1x16xf32> to vector<128x16xf32>
    %6 = arith.addf %3, %5 : vector<128x16xf32>
    %c0_5 = arith.constant 0 : index
    %c0_6 = arith.constant 0 : index
    %7 = vector.load %arg3[%c0_5, %c0_6] : memref<1x16xf32, #tpu.memory_space<vmem>>, vector<1x16xf32>
    %c0_7 = arith.constant 0 : index
    %c0_8 = arith.constant 0 : index
    %8 = vector.load %arg4[%c0_7, %c0_8] : memref<1x16xf32, #tpu.memory_space<vmem>>, vector<1x16xf32>
    %cst_9 = arith.constant dense<0.000000e+00> : vector<128xf32>
    %9 = vector.multi_reduction <add>, %6, %cst_9 [1] : vector<128x16xf32> to vector<128xf32>
    %10 = vector.shape_cast %9 : vector<128xf32> to vector<128x1xf32>
    %cst_10 = arith.constant 1.600000e+01 : f32
    %11 = vector.broadcast %cst_10 : f32 to vector<128x1xf32>
    %12 = arith.divf %10, %11 : vector<128x1xf32>
    %13 = vector.broadcast %12 : vector<128x1xf32> to vector<128x16xf32>
    %14 = arith.subf %6, %13 : vector<128x16xf32>
    %15 = arith.mulf %14, %14 : vector<128x16xf32>
    %cst_11 = arith.constant dense<0.000000e+00> : vector<128xf32>
    %16 = vector.multi_reduction <add>, %15, %cst_11 [1] : vector<128x16xf32> to vector<128xf32>
    %17 = vector.shape_cast %16 : vector<128xf32> to vector<128x1xf32>
    %cst_12 = arith.constant 1.600000e+01 : f32
    %18 = vector.broadcast %cst_12 : f32 to vector<128x1xf32>
    %19 = arith.divf %17, %18 : vector<128x1xf32>
    %20 = vector.broadcast %12 : vector<128x1xf32> to vector<128x16xf32>
    %21 = arith.subf %6, %20 : vector<128x16xf32>
    %cst_13 = arith.constant 9.99999997E-7 : f32
    %22 = vector.broadcast %cst_13 : f32 to vector<128x1xf32>
    %23 = arith.addf %19, %22 : vector<128x1xf32>
    %24 = math.rsqrt %23 : vector<128x1xf32>
    %25 = vector.broadcast %24 : vector<128x1xf32> to vector<128x16xf32>
    %26 = arith.mulf %21, %25 : vector<128x16xf32>
    %27 = vector.broadcast %7 : vector<1x16xf32> to vector<128x16xf32>
    %28 = arith.mulf %26, %27 : vector<128x16xf32>
    %29 = vector.broadcast %8 : vector<1x16xf32> to vector<128x16xf32>
    %30 = arith.addf %28, %29 : vector<128x16xf32>
    %31 = arith.truncf %30 : vector<128x16xf32> to vector<128x16xbf16>
    %c0_14 = arith.constant 0 : index
    %c0_15 = arith.constant 0 : index
    %32 = vector.load %arg5[%c0_14, %c0_15] : memref<128x16xbf16, #tpu.memory_space<vmem>>, vector<128x16xbf16>
    tpu.vector_store %arg5[%c0_14, %c0_15], %31 {strides = array<i32>} : memref<128x16xbf16, #tpu.memory_space<vmem>>, vector<128x16xbf16>,
    return
  }
}

module attributes {stable_mosaic.version = 11 : i64} {
  func.func @_cnblock_kernel(%arg0: i32, %arg1: memref<1x8x8x16xbf16, #tpu.memory_space<vmem>>, %arg2: memref<7x7x16xf32, #tpu.memory_space<vmem>>, %arg3: memref<1x16xf32, #tpu.memory_space<vmem>>, %arg4: memref<1x16xf32, #tpu.memory_space<vmem>>, %arg5: memref<1x16xf32, #tpu.memory_space<vmem>>, %arg6: memref<16x64xbf16, #tpu.memory_space<vmem>>, %arg7: memref<1x64xf32, #tpu.memory_space<vmem>>, %arg8: memref<64x16xbf16, #tpu.memory_space<vmem>>, %arg9: memref<1x16xf32, #tpu.memory_space<vmem>>, %arg10: memref<1x16xf32, #tpu.memory_space<vmem>>, %arg11: memref<1x8x8x16xbf16, #tpu.memory_space<vmem>>, %arg12: memref<14x14x16xf32, #tpu.memory_space<vmem>>) attributes {dimension_semantics = [#tpu.dimension_semantics<parallel>], iteration_bounds = array<i64: 2>, scalar_prefetch = 0 : i64, scratch_operands = 1 : i64, tpu.core_type = #tpu.core_type<tc>, window_params = [{transform_indices = @transform_0, window_bounds = array<i64: 1, 8, 8, 16>}, {pipeline_mode = #tpu.pipeline_mode<synchronous>, transform_indices = @transform_1, window_bounds = array<i64: 7, 7, 16>}, {pipeline_mode = #tpu.pipeline_mode<synchronous>, transform_indices = @transform_2, window_bounds = array<i64: 1, 16>}, {pipeline_mode = #tpu.pipeline_mode<synchronous>, transform_indices = @transform_3, window_bounds = array<i64: 1, 16>}, {pipeline_mode = #tpu.pipeline_mode<synchronous>, transform_indices = @transform_4, window_bounds = array<i64: 1, 16>}, {pipeline_mode = #tpu.pipeline_mode<synchronous>, transform_indices = @transform_5, window_bounds = array<i64: 16, 64>}, {pipeline_mode = #tpu.pipeline_mode<synchronous>, transform_indices = @transform_6, window_bounds = array<i64: 1, 64>}, {pipeline_mode = #tpu.pipeline_mode<synchronous>, transform_indices = @transform_7, window_bounds = array<i64: 64, 16>}, {pipeline_mode = #tpu.pipeline_mode<synchronous>, transform_indices = @transform_8, window_bounds = array<i64: 1, 16>}, {pipeline_mode = #tpu.pipeline_mode<synchronous>, transform_indices = @transform_9, window_bounds = array<i64: 1, 16>}, {transform_indices = @transform_10, window_bounds = array<i64: 1, 8, 8, 16>}]} {
    %c0 = arith.constant 0 : index
    %c0_0 = arith.constant 0 : index
    %c0_1 = arith.constant 0 : index
    %c0_2 = arith.constant 0 : index
    %0 = vector.load %arg1[%c0, %c0_0, %c0_1, %c0_2] : memref<1x8x8x16xbf16, #tpu.memory_space<vmem>>, vector<1x8x8x16xbf16>
    %1 = vector.shape_cast %0 : vector<1x8x8x16xbf16> to vector<8x8x16xbf16>
    %2 = arith.extf %1 : vector<8x8x16xbf16> to vector<8x8x16xf32>
    %cst = arith.constant 0.000000e+00 : f32
    %3 = vector.broadcast %cst : f32 to vector<3x14x16xf32>
    %c0_3 = arith.constant 0 : index
    %c0_4 = arith.constant 0 : index
    %c0_5 = arith.constant 0 : index
    %4 = vector.load %arg12[%c0_3, %c0_4, %c0_5] : memref<14x14x16xf32, #tpu.memory_space<vmem>>, vector<3x14x16xf32>
    tpu.vector_store %arg12[%c0_3, %c0_4, %c0_5], %3 {strides = array<i32>} : memref<14x14x16xf32, #tpu.memory_space<vmem>>, vector<3x14x16xf32>,
    %cst_6 = arith.constant 0.000000e+00 : f32
    %5 = vector.broadcast %cst_6 : f32 to vector<3x14x16xf32>
    %c11 = arith.constant 11 : index
    %c0_7 = arith.constant 0 : index
    %c0_8 = arith.constant 0 : index
    %6 = vector.load %arg12[%c11, %c0_7, %c0_8] : memref<14x14x16xf32, #tpu.memory_space<vmem>>, vector<3x14x16xf32>
    tpu.vector_store %arg12[%c11, %c0_7, %c0_8], %5 {strides = array<i32>} : memref<14x14x16xf32, #tpu.memory_space<vmem>>, vector<3x14x16xf32>,
    %cst_9 = arith.constant 0.000000e+00 : f32
    %7 = vector.broadcast %cst_9 : f32 to vector<8x3x16xf32>
    %c3 = arith.constant 3 : index
    %c0_10 = arith.constant 0 : index
    %c0_11 = arith.constant 0 : index
    %8 = vector.load %arg12[%c3, %c0_10, %c0_11] : memref<14x14x16xf32, #tpu.memory_space<vmem>>, vector<8x3x16xf32>
    tpu.vector_store %arg12[%c3, %c0_10, %c0_11], %7 {strides = array<i32>} : memref<14x14x16xf32, #tpu.memory_space<vmem>>, vector<8x3x16xf32>,
    %cst_12 = arith.constant 0.000000e+00 : f32
    %9 = vector.broadcast %cst_12 : f32 to vector<8x3x16xf32>
    %c3_13 = arith.constant 3 : index
    %c11_14 = arith.constant 11 : index
    %c0_15 = arith.constant 0 : index
    %10 = vector.load %arg12[%c3_13, %c11_14, %c0_15] : memref<14x14x16xf32, #tpu.memory_space<vmem>>, vector<8x3x16xf32>
    tpu.vector_store %arg12[%c3_13, %c11_14, %c0_15], %9 {strides = array<i32>} : memref<14x14x16xf32, #tpu.memory_space<vmem>>, vector<8x3x16xf32>,
    %c3_16 = arith.constant 3 : index
    %c3_17 = arith.constant 3 : index
    %c0_18 = arith.constant 0 : index
    %11 = vector.load %arg12[%c3_16, %c3_17, %c0_18] : memref<14x14x16xf32, #tpu.memory_space<vmem>>, vector<8x8x16xf32>
    tpu.vector_store %arg12[%c3_16, %c3_17, %c0_18], %2 {strides = array<i32>} : memref<14x14x16xf32, #tpu.memory_space<vmem>>, vector<8x8x16xf32>,
    %c0_19 = arith.constant 0 : index
    %c0_20 = arith.constant 0 : index
    %c0_21 = arith.constant 0 : index
    %12 = vector.load %arg2[%c0_19, %c0_20, %c0_21] : memref<7x7x16xf32, #tpu.memory_space<vmem>>, vector<7x7x16xf32>
    %c0_22 = arith.constant 0 : index
    %c0_23 = arith.constant 0 : index
    %c0_24 = arith.constant 0 : index
    %13 = vector.load %arg12[%c0_22, %c0_23, %c0_24] : memref<14x14x16xf32, #tpu.memory_space<vmem>>, vector<8x8x16xf32>
    %14 = vector.extract_strided_slice %12 {offsets = [0, 0, 0], sizes = [1, 1, 16], strides = [1, 1, 1]} : vector<7x7x16xf32> to vector<1x1x16xf32>
    %15 = vector.shape_cast %14 : vector<1x1x16xf32> to vector<16xf32>
    %16 = vector.shape_cast %15 : vector<16xf32> to vector<1x1x16xf32>
    %17 = vector.broadcast %16 : vector<1x1x16xf32> to vector<8x8x16xf32>
    %18 = arith.mulf %13, %17 : vector<8x8x16xf32>
    %c0_25 = arith.constant 0 : index
    %c1 = arith.constant 1 : index
    %c0_26 = arith.constant 0 : index
    %19 = vector.load %arg12[%c0_25, %c1, %c0_26] : memref<14x14x16xf32, #tpu.memory_space<vmem>>, vector<8x8x16xf32>
    %20 = vector.extract_strided_slice %12 {offsets = [0, 1, 0], sizes = [1, 1, 16], strides = [1, 1, 1]} : vector<7x7x16xf32> to vector<1x1x16xf32>
    %21 = vector.shape_cast %20 : vector<1x1x16xf32> to vector<16xf32>
    %22 = vector.shape_cast %21 : vector<16xf32> to vector<1x1x16xf32>
    %23 = vector.broadcast %22 : vector<1x1x16xf32> to vector<8x8x16xf32>
    %24 = arith.mulf %19, %23 : vector<8x8x16xf32>
    %25 = arith.addf %18, %24 : vector<8x8x16xf32>
    %c0_27 = arith.constant 0 : index
    %c2 = arith.constant 2 : index
    %c0_28 = arith.constant 0 : index
    %26 = vector.load %arg12[%c0_27, %c2, %c0_28] : memref<14x14x16xf32, #tpu.memory_space<vmem>>, vector<8x8x16xf32>
    %27 = vector.extract_strided_slice %12 {offsets = [0, 2, 0], sizes = [1, 1, 16], strides = [1, 1, 1]} : vector<7x7x16xf32> to vector<1x1x16xf32>
    %28 = vector.shape_cast %27 : vector<1x1x16xf32> to vector<16xf32>
    %29 = vector.shape_cast %28 : vector<16xf32> to vector<1x1x16xf32>
    %30 = vector.broadcast %29 : vector<1x1x16xf32> to vector<8x8x16xf32>
    %31 = arith.mulf %26, %30 : vector<8x8x16xf32>
    %32 = arith.addf %25, %31 : vector<8x8x16xf32>
    %c0_29 = arith.constant 0 : index
    %c3_30 = arith.constant 3 : index
    %c0_31 = arith.constant 0 : index
    %33 = vector.load %arg12[%c0_29, %c3_30, %c0_31] : memref<14x14x16xf32, #tpu.memory_space<vmem>>, vector<8x8x16xf32>
    %34 = vector.extract_strided_slice %12 {offsets = [0, 3, 0], sizes = [1, 1, 16], strides = [1, 1, 1]} : vector<7x7x16xf32> to vector<1x1x16xf32>
    %35 = vector.shape_cast %34 : vector<1x1x16xf32> to vector<16xf32>
    %36 = vector.shape_cast %35 : vector<16xf32> to vector<1x1x16xf32>
    %37 = vector.broadcast %36 : vector<1x1x16xf32> to vector<8x8x16xf32>
    %38 = arith.mulf %33, %37 : vector<8x8x16xf32>
    %39 = arith.addf %32, %38 : vector<8x8x16xf32>
    %c0_32 = arith.constant 0 : index
    %c4 = arith.constant 4 : index
    %c0_33 = arith.constant 0 : index
    %40 = vector.load %arg12[%c0_32, %c4, %c0_33] : memref<14x14x16xf32, #tpu.memory_space<vmem>>, vector<8x8x16xf32>
    %41 = vector.extract_strided_slice %12 {offsets = [0, 4, 0], sizes = [1, 1, 16], strides = [1, 1, 1]} : vector<7x7x16xf32> to vector<1x1x16xf32>
    %42 = vector.shape_cast %41 : vector<1x1x16xf32> to vector<16xf32>
    %43 = vector.shape_cast %42 : vector<16xf32> to vector<1x1x16xf32>
    %44 = vector.broadcast %43 : vector<1x1x16xf32> to vector<8x8x16xf32>
    %45 = arith.mulf %40, %44 : vector<8x8x16xf32>
    %46 = arith.addf %39, %45 : vector<8x8x16xf32>
    %c0_34 = arith.constant 0 : index
    %c5 = arith.constant 5 : index
    %c0_35 = arith.constant 0 : index
    %47 = vector.load %arg12[%c0_34, %c5, %c0_35] : memref<14x14x16xf32, #tpu.memory_space<vmem>>, vector<8x8x16xf32>
    %48 = vector.extract_strided_slice %12 {offsets = [0, 5, 0], sizes = [1, 1, 16], strides = [1, 1, 1]} : vector<7x7x16xf32> to vector<1x1x16xf32>
    %49 = vector.shape_cast %48 : vector<1x1x16xf32> to vector<16xf32>
    %50 = vector.shape_cast %49 : vector<16xf32> to vector<1x1x16xf32>
    %51 = vector.broadcast %50 : vector<1x1x16xf32> to vector<8x8x16xf32>
    %52 = arith.mulf %47, %51 : vector<8x8x16xf32>
    %53 = arith.addf %46, %52 : vector<8x8x16xf32>
    %c0_36 = arith.constant 0 : index
    %c6 = arith.constant 6 : index
    %c0_37 = arith.constant 0 : index
    %54 = vector.load %arg12[%c0_36, %c6, %c0_37] : memref<14x14x16xf32, #tpu.memory_space<vmem>>, vector<8x8x16xf32>
    %55 = vector.extract_strided_slice %12 {offsets = [0, 6, 0], sizes = [1, 1, 16], strides = [1, 1, 1]} : vector<7x7x16xf32> to vector<1x1x16xf32>
    %56 = vector.shape_cast %55 : vector<1x1x16xf32> to vector<16xf32>
    %57 = vector.shape_cast %56 : vector<16xf32> to vector<1x1x16xf32>
    %58 = vector.broadcast %57 : vector<1x1x16xf32> to vector<8x8x16xf32>
    %59 = arith.mulf %54, %58 : vector<8x8x16xf32>
    %60 = arith.addf %53, %59 : vector<8x8x16xf32>
    %c1_38 = arith.constant 1 : index
    %c0_39 = arith.constant 0 : index
    %c0_40 = arith.constant 0 : index
    %61 = vector.load %arg12[%c1_38, %c0_39, %c0_40] : memref<14x14x16xf32, #tpu.memory_space<vmem>>, vector<8x8x16xf32>
    %62 = vector.extract_strided_slice %12 {offsets = [1, 0, 0], sizes = [1, 1, 16], strides = [1, 1, 1]} : vector<7x7x16xf32> to vector<1x1x16xf32>
    %63 = vector.shape_cast %62 : vector<1x1x16xf32> to vector<16xf32>
    %64 = vector.shape_cast %63 : vector<16xf32> to vector<1x1x16xf32>
    %65 = vector.broadcast %64 : vector<1x1x16xf32> to vector<8x8x16xf32>
    %66 = arith.mulf %61, %65 : vector<8x8x16xf32>
    %c1_41 = arith.constant 1 : index
    %c1_42 = arith.constant 1 : index
    %c0_43 = arith.constant 0 : index
    %67 = vector.load %arg12[%c1_41, %c1_42, %c0_43] : memref<14x14x16xf32, #tpu.memory_space<vmem>>, vector<8x8x16xf32>
    %68 = vector.extract_strided_slice %12 {offsets = [1, 1, 0], sizes = [1, 1, 16], strides = [1, 1, 1]} : vector<7x7x16xf32> to vector<1x1x16xf32>
    %69 = vector.shape_cast %68 : vector<1x1x16xf32> to vector<16xf32>
    %70 = vector.shape_cast %69 : vector<16xf32> to vector<1x1x16xf32>
    %71 = vector.broadcast %70 : vector<1x1x16xf32> to vector<8x8x16xf32>
    %72 = arith.mulf %67, %71 : vector<8x8x16xf32>
    %73 = arith.addf %66, %72 : vector<8x8x16xf32>
    %c1_44 = arith.constant 1 : index
    %c2_45 = arith.constant 2 : index
    %c0_46 = arith.constant 0 : index
    %74 = vector.load %arg12[%c1_44, %c2_45, %c0_46] : memref<14x14x16xf32, #tpu.memory_space<vmem>>, vector<8x8x16xf32>
    %75 = vector.extract_strided_slice %12 {offsets = [1, 2, 0], sizes = [1, 1, 16], strides = [1, 1, 1]} : vector<7x7x16xf32> to vector<1x1x16xf32>
    %76 = vector.shape_cast %75 : vector<1x1x16xf32> to vector<16xf32>
    %77 = vector.shape_cast %76 : vector<16xf32> to vector<1x1x16xf32>
    %78 = vector.broadcast %77 : vector<1x1x16xf32> to vector<8x8x16xf32>
    %79 = arith.mulf %74, %78 : vector<8x8x16xf32>
    %80 = arith.addf %73, %79 : vector<8x8x16xf32>
    %c1_47 = arith.constant 1 : index
    %c3_48 = arith.constant 3 : index
    %c0_49 = arith.constant 0 : index
    %81 = vector.load %arg12[%c1_47, %c3_48, %c0_49] : memref<14x14x16xf32, #tpu.memory_space<vmem>>, vector<8x8x16xf32>
    %82 = vector.extract_strided_slice %12 {offsets = [1, 3, 0], sizes = [1, 1, 16], strides = [1, 1, 1]} : vector<7x7x16xf32> to vector<1x1x16xf32>
    %83 = vector.shape_cast %82 : vector<1x1x16xf32> to vector<16xf32>
    %84 = vector.shape_cast %83 : vector<16xf32> to vector<1x1x16xf32>
    %85 = vector.broadcast %84 : vector<1x1x16xf32> to vector<8x8x16xf32>
    %86 = arith.mulf %81, %85 : vector<8x8x16xf32>
    %87 = arith.addf %80, %86 : vector<8x8x16xf32>
    %c1_50 = arith.constant 1 : index
    %c4_51 = arith.constant 4 : index
    %c0_52 = arith.constant 0 : index
    %88 = vector.load %arg12[%c1_50, %c4_51, %c0_52] : memref<14x14x16xf32, #tpu.memory_space<vmem>>, vector<8x8x16xf32>
    %89 = vector.extract_strided_slice %12 {offsets = [1, 4, 0], sizes = [1, 1, 16], strides = [1, 1, 1]} : vector<7x7x16xf32> to vector<1x1x16xf32>
    %90 = vector.shape_cast %89 : vector<1x1x16xf32> to vector<16xf32>
    %91 = vector.shape_cast %90 : vector<16xf32> to vector<1x1x16xf32>
    %92 = vector.broadcast %91 : vector<1x1x16xf32> to vector<8x8x16xf32>
    %93 = arith.mulf %88, %92 : vector<8x8x16xf32>
    %94 = arith.addf %87, %93 : vector<8x8x16xf32>
    %c1_53 = arith.constant 1 : index
    %c5_54 = arith.constant 5 : index
    %c0_55 = arith.constant 0 : index
    %95 = vector.load %arg12[%c1_53, %c5_54, %c0_55] : memref<14x14x16xf32, #tpu.memory_space<vmem>>, vector<8x8x16xf32>
    %96 = vector.extract_strided_slice %12 {offsets = [1, 5, 0], sizes = [1, 1, 16], strides = [1, 1, 1]} : vector<7x7x16xf32> to vector<1x1x16xf32>
    %97 = vector.shape_cast %96 : vector<1x1x16xf32> to vector<16xf32>
    %98 = vector.shape_cast %97 : vector<16xf32> to vector<1x1x16xf32>
    %99 = vector.broadcast %98 : vector<1x1x16xf32> to vector<8x8x16xf32>
    %100 = arith.mulf %95, %99 : vector<8x8x16xf32>
    %101 = arith.addf %94, %100 : vector<8x8x16xf32>
    %c1_56 = arith.constant 1 : index
    %c6_57 = arith.constant 6 : index
    %c0_58 = arith.constant 0 : index
    %102 = vector.load %arg12[%c1_56, %c6_57, %c0_58] : memref<14x14x16xf32, #tpu.memory_space<vmem>>, vector<8x8x16xf32>
    %103 = vector.extract_strided_slice %12 {offsets = [1, 6, 0], sizes = [1, 1, 16], strides = [1, 1, 1]} : vector<7x7x16xf32> to vector<1x1x16xf32>
    %104 = vector.shape_cast %103 : vector<1x1x16xf32> to vector<16xf32>
    %105 = vector.shape_cast %104 : vector<16xf32> to vector<1x1x16xf32>
    %106 = vector.broadcast %105 : vector<1x1x16xf32> to vector<8x8x16xf32>
    %107 = arith.mulf %102, %106 : vector<8x8x16xf32>
    %108 = arith.addf %101, %107 : vector<8x8x16xf32>
    %c2_59 = arith.constant 2 : index
    %c0_60 = arith.constant 0 : index
    %c0_61 = arith.constant 0 : index
    %109 = vector.load %arg12[%c2_59, %c0_60, %c0_61] : memref<14x14x16xf32, #tpu.memory_space<vmem>>, vector<8x8x16xf32>
    %110 = vector.extract_strided_slice %12 {offsets = [2, 0, 0], sizes = [1, 1, 16], strides = [1, 1, 1]} : vector<7x7x16xf32> to vector<1x1x16xf32>
    %111 = vector.shape_cast %110 : vector<1x1x16xf32> to vector<16xf32>
    %112 = vector.shape_cast %111 : vector<16xf32> to vector<1x1x16xf32>
    %113 = vector.broadcast %112 : vector<1x1x16xf32> to vector<8x8x16xf32>
    %114 = arith.mulf %109, %113 : vector<8x8x16xf32>
    %c2_62 = arith.constant 2 : index
    %c1_63 = arith.constant 1 : index
    %c0_64 = arith.constant 0 : index
    %115 = vector.load %arg12[%c2_62, %c1_63, %c0_64] : memref<14x14x16xf32, #tpu.memory_space<vmem>>, vector<8x8x16xf32>
    %116 = vector.extract_strided_slice %12 {offsets = [2, 1, 0], sizes = [1, 1, 16], strides = [1, 1, 1]} : vector<7x7x16xf32> to vector<1x1x16xf32>
    %117 = vector.shape_cast %116 : vector<1x1x16xf32> to vector<16xf32>
    %118 = vector.shape_cast %117 : vector<16xf32> to vector<1x1x16xf32>
    %119 = vector.broadcast %118 : vector<1x1x16xf32> to vector<8x8x16xf32>
    %120 = arith.mulf %115, %119 : vector<8x8x16xf32>
    %121 = arith.addf %114, %120 : vector<8x8x16xf32>
    %c2_65 = arith.constant 2 : index
    %c2_66 = arith.constant 2 : index
    %c0_67 = arith.constant 0 : index
    %122 = vector.load %arg12[%c2_65, %c2_66, %c0_67] : memref<14x14x16xf32, #tpu.memory_space<vmem>>, vector<8x8x16xf32>
    %123 = vector.extract_strided_slice %12 {offsets = [2, 2, 0], sizes = [1, 1, 16], strides = [1, 1, 1]} : vector<7x7x16xf32> to vector<1x1x16xf32>
    %124 = vector.shape_cast %123 : vector<1x1x16xf32> to vector<16xf32>
    %125 = vector.shape_cast %124 : vector<16xf32> to vector<1x1x16xf32>
    %126 = vector.broadcast %125 : vector<1x1x16xf32> to vector<8x8x16xf32>
    %127 = arith.mulf %122, %126 : vector<8x8x16xf32>
    %128 = arith.addf %121, %127 : vector<8x8x16xf32>
    %c2_68 = arith.constant 2 : index
    %c3_69 = arith.constant 3 : index
    %c0_70 = arith.constant 0 : index
    %129 = vector.load %arg12[%c2_68, %c3_69, %c0_70] : memref<14x14x16xf32, #tpu.memory_space<vmem>>, vector<8x8x16xf32>
    %130 = vector.extract_strided_slice %12 {offsets = [2, 3, 0], sizes = [1, 1, 16], strides = [1, 1, 1]} : vector<7x7x16xf32> to vector<1x1x16xf32>
    %131 = vector.shape_cast %130 : vector<1x1x16xf32> to vector<16xf32>
    %132 = vector.shape_cast %131 : vector<16xf32> to vector<1x1x16xf32>
    %133 = vector.broadcast %132 : vector<1x1x16xf32> to vector<8x8x16xf32>
    %134 = arith.mulf %129, %133 : vector<8x8x16xf32>
    %135 = arith.addf %128, %134 : vector<8x8x16xf32>
    %c2_71 = arith.constant 2 : index
    %c4_72 = arith.constant 4 : index
    %c0_73 = arith.constant 0 : index
    %136 = vector.load %arg12[%c2_71, %c4_72, %c0_73] : memref<14x14x16xf32, #tpu.memory_space<vmem>>, vector<8x8x16xf32>
    %137 = vector.extract_strided_slice %12 {offsets = [2, 4, 0], sizes = [1, 1, 16], strides = [1, 1, 1]} : vector<7x7x16xf32> to vector<1x1x16xf32>
    %138 = vector.shape_cast %137 : vector<1x1x16xf32> to vector<16xf32>
    %139 = vector.shape_cast %138 : vector<16xf32> to vector<1x1x16xf32>
    %140 = vector.broadcast %139 : vector<1x1x16xf32> to vector<8x8x16xf32>
    %141 = arith.mulf %136, %140 : vector<8x8x16xf32>
    %142 = arith.addf %135, %141 : vector<8x8x16xf32>
    %c2_74 = arith.constant 2 : index
    %c5_75 = arith.constant 5 : index
    %c0_76 = arith.constant 0 : index
    %143 = vector.load %arg12[%c2_74, %c5_75, %c0_76] : memref<14x14x16xf32, #tpu.memory_space<vmem>>, vector<8x8x16xf32>
    %144 = vector.extract_strided_slice %12 {offsets = [2, 5, 0], sizes = [1, 1, 16], strides = [1, 1, 1]} : vector<7x7x16xf32> to vector<1x1x16xf32>
    %145 = vector.shape_cast %144 : vector<1x1x16xf32> to vector<16xf32>
    %146 = vector.shape_cast %145 : vector<16xf32> to vector<1x1x16xf32>
    %147 = vector.broadcast %146 : vector<1x1x16xf32> to vector<8x8x16xf32>
    %148 = arith.mulf %143, %147 : vector<8x8x16xf32>
    %149 = arith.addf %142, %148 : vector<8x8x16xf32>
    %c2_77 = arith.constant 2 : index
    %c6_78 = arith.constant 6 : index
    %c0_79 = arith.constant 0 : index
    %150 = vector.load %arg12[%c2_77, %c6_78, %c0_79] : memref<14x14x16xf32, #tpu.memory_space<vmem>>, vector<8x8x16xf32>
    %151 = vector.extract_strided_slice %12 {offsets = [2, 6, 0], sizes = [1, 1, 16], strides = [1, 1, 1]} : vector<7x7x16xf32> to vector<1x1x16xf32>
    %152 = vector.shape_cast %151 : vector<1x1x16xf32> to vector<16xf32>
    %153 = vector.shape_cast %152 : vector<16xf32> to vector<1x1x16xf32>
    %154 = vector.broadcast %153 : vector<1x1x16xf32> to vector<8x8x16xf32>
    %155 = arith.mulf %150, %154 : vector<8x8x16xf32>
    %156 = arith.addf %149, %155 : vector<8x8x16xf32>
    %c3_80 = arith.constant 3 : index
    %c0_81 = arith.constant 0 : index
    %c0_82 = arith.constant 0 : index
    %157 = vector.load %arg12[%c3_80, %c0_81, %c0_82] : memref<14x14x16xf32, #tpu.memory_space<vmem>>, vector<8x8x16xf32>
    %158 = vector.extract_strided_slice %12 {offsets = [3, 0, 0], sizes = [1, 1, 16], strides = [1, 1, 1]} : vector<7x7x16xf32> to vector<1x1x16xf32>
    %159 = vector.shape_cast %158 : vector<1x1x16xf32> to vector<16xf32>
    %160 = vector.shape_cast %159 : vector<16xf32> to vector<1x1x16xf32>
    %161 = vector.broadcast %160 : vector<1x1x16xf32> to vector<8x8x16xf32>
    %162 = arith.mulf %157, %161 : vector<8x8x16xf32>
    %c3_83 = arith.constant 3 : index
    %c1_84 = arith.constant 1 : index
    %c0_85 = arith.constant 0 : index
    %163 = vector.load %arg12[%c3_83, %c1_84, %c0_85] : memref<14x14x16xf32, #tpu.memory_space<vmem>>, vector<8x8x16xf32>
    %164 = vector.extract_strided_slice %12 {offsets = [3, 1, 0], sizes = [1, 1, 16], strides = [1, 1, 1]} : vector<7x7x16xf32> to vector<1x1x16xf32>
    %165 = vector.shape_cast %164 : vector<1x1x16xf32> to vector<16xf32>
    %166 = vector.shape_cast %165 : vector<16xf32> to vector<1x1x16xf32>
    %167 = vector.broadcast %166 : vector<1x1x16xf32> to vector<8x8x16xf32>
    %168 = arith.mulf %163, %167 : vector<8x8x16xf32>
    %169 = arith.addf %162, %168 : vector<8x8x16xf32>
    %c3_86 = arith.constant 3 : index
    %c2_87 = arith.constant 2 : index
    %c0_88 = arith.constant 0 : index
    %170 = vector.load %arg12[%c3_86, %c2_87, %c0_88] : memref<14x14x16xf32, #tpu.memory_space<vmem>>, vector<8x8x16xf32>
    %171 = vector.extract_strided_slice %12 {offsets = [3, 2, 0], sizes = [1, 1, 16], strides = [1, 1, 1]} : vector<7x7x16xf32> to vector<1x1x16xf32>
    %172 = vector.shape_cast %171 : vector<1x1x16xf32> to vector<16xf32>
    %173 = vector.shape_cast %172 : vector<16xf32> to vector<1x1x16xf32>
    %174 = vector.broadcast %173 : vector<1x1x16xf32> to vector<8x8x16xf32>
    %175 = arith.mulf %170, %174 : vector<8x8x16xf32>
    %176 = arith.addf %169, %175 : vector<8x8x16xf32>
    %c3_89 = arith.constant 3 : index
    %c3_90 = arith.constant 3 : index
    %c0_91 = arith.constant 0 : index
    %177 = vector.load %arg12[%c3_89, %c3_90, %c0_91] : memref<14x14x16xf32, #tpu.memory_space<vmem>>, vector<8x8x16xf32>
    %178 = vector.extract_strided_slice %12 {offsets = [3, 3, 0], sizes = [1, 1, 16], strides = [1, 1, 1]} : vector<7x7x16xf32> to vector<1x1x16xf32>
    %179 = vector.shape_cast %178 : vector<1x1x16xf32> to vector<16xf32>
    %180 = vector.shape_cast %179 : vector<16xf32> to vector<1x1x16xf32>
    %181 = vector.broadcast %180 : vector<1x1x16xf32> to vector<8x8x16xf32>
    %182 = arith.mulf %177, %181 : vector<8x8x16xf32>
    %183 = arith.addf %176, %182 : vector<8x8x16xf32>
    %c3_92 = arith.constant 3 : index
    %c4_93 = arith.constant 4 : index
    %c0_94 = arith.constant 0 : index
    %184 = vector.load %arg12[%c3_92, %c4_93, %c0_94] : memref<14x14x16xf32, #tpu.memory_space<vmem>>, vector<8x8x16xf32>
    %185 = vector.extract_strided_slice %12 {offsets = [3, 4, 0], sizes = [1, 1, 16], strides = [1, 1, 1]} : vector<7x7x16xf32> to vector<1x1x16xf32>
    %186 = vector.shape_cast %185 : vector<1x1x16xf32> to vector<16xf32>
    %187 = vector.shape_cast %186 : vector<16xf32> to vector<1x1x16xf32>
    %188 = vector.broadcast %187 : vector<1x1x16xf32> to vector<8x8x16xf32>
    %189 = arith.mulf %184, %188 : vector<8x8x16xf32>
    %190 = arith.addf %183, %189 : vector<8x8x16xf32>
    %c3_95 = arith.constant 3 : index
    %c5_96 = arith.constant 5 : index
    %c0_97 = arith.constant 0 : index
    %191 = vector.load %arg12[%c3_95, %c5_96, %c0_97] : memref<14x14x16xf32, #tpu.memory_space<vmem>>, vector<8x8x16xf32>
    %192 = vector.extract_strided_slice %12 {offsets = [3, 5, 0], sizes = [1, 1, 16], strides = [1, 1, 1]} : vector<7x7x16xf32> to vector<1x1x16xf32>
    %193 = vector.shape_cast %192 : vector<1x1x16xf32> to vector<16xf32>
    %194 = vector.shape_cast %193 : vector<16xf32> to vector<1x1x16xf32>
    %195 = vector.broadcast %194 : vector<1x1x16xf32> to vector<8x8x16xf32>
    %196 = arith.mulf %191, %195 : vector<8x8x16xf32>
    %197 = arith.addf %190, %196 : vector<8x8x16xf32>
    %c3_98 = arith.constant 3 : index
    %c6_99 = arith.constant 6 : index
    %c0_100 = arith.constant 0 : index
    %198 = vector.load %arg12[%c3_98, %c6_99, %c0_100] : memref<14x14x16xf32, #tpu.memory_space<vmem>>, vector<8x8x16xf32>
    %199 = vector.extract_strided_slice %12 {offsets = [3, 6, 0], sizes = [1, 1, 16], strides = [1, 1, 1]} : vector<7x7x16xf32> to vector<1x1x16xf32>
    %200 = vector.shape_cast %199 : vector<1x1x16xf32> to vector<16xf32>
    %201 = vector.shape_cast %200 : vector<16xf32> to vector<1x1x16xf32>
    %202 = vector.broadcast %201 : vector<1x1x16xf32> to vector<8x8x16xf32>
    %203 = arith.mulf %198, %202 : vector<8x8x16xf32>
    %204 = arith.addf %197, %203 : vector<8x8x16xf32>
    %c4_101 = arith.constant 4 : index
    %c0_102 = arith.constant 0 : index
    %c0_103 = arith.constant 0 : index
    %205 = vector.load %arg12[%c4_101, %c0_102, %c0_103] : memref<14x14x16xf32, #tpu.memory_space<vmem>>, vector<8x8x16xf32>
    %206 = vector.extract_strided_slice %12 {offsets = [4, 0, 0], sizes = [1, 1, 16], strides = [1, 1, 1]} : vector<7x7x16xf32> to vector<1x1x16xf32>
    %207 = vector.shape_cast %206 : vector<1x1x16xf32> to vector<16xf32>
    %208 = vector.shape_cast %207 : vector<16xf32> to vector<1x1x16xf32>
    %209 = vector.broadcast %208 : vector<1x1x16xf32> to vector<8x8x16xf32>
    %210 = arith.mulf %205, %209 : vector<8x8x16xf32>
    %c4_104 = arith.constant 4 : index
    %c1_105 = arith.constant 1 : index
    %c0_106 = arith.constant 0 : index
    %211 = vector.load %arg12[%c4_104, %c1_105, %c0_106] : memref<14x14x16xf32, #tpu.memory_space<vmem>>, vector<8x8x16xf32>
    %212 = vector.extract_strided_slice %12 {offsets = [4, 1, 0], sizes = [1, 1, 16], strides = [1, 1, 1]} : vector<7x7x16xf32> to vector<1x1x16xf32>
    %213 = vector.shape_cast %212 : vector<1x1x16xf32> to vector<16xf32>
    %214 = vector.shape_cast %213 : vector<16xf32> to vector<1x1x16xf32>
    %215 = vector.broadcast %214 : vector<1x1x16xf32> to vector<8x8x16xf32>
    %216 = arith.mulf %211, %215 : vector<8x8x16xf32>
    %217 = arith.addf %210, %216 : vector<8x8x16xf32>
    %c4_107 = arith.constant 4 : index
    %c2_108 = arith.constant 2 : index
    %c0_109 = arith.constant 0 : index
    %218 = vector.load %arg12[%c4_107, %c2_108, %c0_109] : memref<14x14x16xf32, #tpu.memory_space<vmem>>, vector<8x8x16xf32>
    %219 = vector.extract_strided_slice %12 {offsets = [4, 2, 0], sizes = [1, 1, 16], strides = [1, 1, 1]} : vector<7x7x16xf32> to vector<1x1x16xf32>
    %220 = vector.shape_cast %219 : vector<1x1x16xf32> to vector<16xf32>
    %221 = vector.shape_cast %220 : vector<16xf32> to vector<1x1x16xf32>
    %222 = vector.broadcast %221 : vector<1x1x16xf32> to vector<8x8x16xf32>
    %223 = arith.mulf %218, %222 : vector<8x8x16xf32>
    %224 = arith.addf %217, %223 : vector<8x8x16xf32>
    %c4_110 = arith.constant 4 : index
    %c3_111 = arith.constant 3 : index
    %c0_112 = arith.constant 0 : index
    %225 = vector.load %arg12[%c4_110, %c3_111, %c0_112] : memref<14x14x16xf32, #tpu.memory_space<vmem>>, vector<8x8x16xf32>
    %226 = vector.extract_strided_slice %12 {offsets = [4, 3, 0], sizes = [1, 1, 16], strides = [1, 1, 1]} : vector<7x7x16xf32> to vector<1x1x16xf32>
    %227 = vector.shape_cast %226 : vector<1x1x16xf32> to vector<16xf32>
    %228 = vector.shape_cast %227 : vector<16xf32> to vector<1x1x16xf32>
    %229 = vector.broadcast %228 : vector<1x1x16xf32> to vector<8x8x16xf32>
    %230 = arith.mulf %225, %229 : vector<8x8x16xf32>
    %231 = arith.addf %224, %230 : vector<8x8x16xf32>
    %c4_113 = arith.constant 4 : index
    %c4_114 = arith.constant 4 : index
    %c0_115 = arith.constant 0 : index
    %232 = vector.load %arg12[%c4_113, %c4_114, %c0_115] : memref<14x14x16xf32, #tpu.memory_space<vmem>>, vector<8x8x16xf32>
    %233 = vector.extract_strided_slice %12 {offsets = [4, 4, 0], sizes = [1, 1, 16], strides = [1, 1, 1]} : vector<7x7x16xf32> to vector<1x1x16xf32>
    %234 = vector.shape_cast %233 : vector<1x1x16xf32> to vector<16xf32>
    %235 = vector.shape_cast %234 : vector<16xf32> to vector<1x1x16xf32>
    %236 = vector.broadcast %235 : vector<1x1x16xf32> to vector<8x8x16xf32>
    %237 = arith.mulf %232, %236 : vector<8x8x16xf32>
    %238 = arith.addf %231, %237 : vector<8x8x16xf32>
    %c4_116 = arith.constant 4 : index
    %c5_117 = arith.constant 5 : index
    %c0_118 = arith.constant 0 : index
    %239 = vector.load %arg12[%c4_116, %c5_117, %c0_118] : memref<14x14x16xf32, #tpu.memory_space<vmem>>, vector<8x8x16xf32>
    %240 = vector.extract_strided_slice %12 {offsets = [4, 5, 0], sizes = [1, 1, 16], strides = [1, 1, 1]} : vector<7x7x16xf32> to vector<1x1x16xf32>
    %241 = vector.shape_cast %240 : vector<1x1x16xf32> to vector<16xf32>
    %242 = vector.shape_cast %241 : vector<16xf32> to vector<1x1x16xf32>
    %243 = vector.broadcast %242 : vector<1x1x16xf32> to vector<8x8x16xf32>
    %244 = arith.mulf %239, %243 : vector<8x8x16xf32>
    %245 = arith.addf %238, %244 : vector<8x8x16xf32>
    %c4_119 = arith.constant 4 : index
    %c6_120 = arith.constant 6 : index
    %c0_121 = arith.constant 0 : index
    %246 = vector.load %arg12[%c4_119, %c6_120, %c0_121] : memref<14x14x16xf32, #tpu.memory_space<vmem>>, vector<8x8x16xf32>
    %247 = vector.extract_strided_slice %12 {offsets = [4, 6, 0], sizes = [1, 1, 16], strides = [1, 1, 1]} : vector<7x7x16xf32> to vector<1x1x16xf32>
    %248 = vector.shape_cast %247 : vector<1x1x16xf32> to vector<16xf32>
    %249 = vector.shape_cast %248 : vector<16xf32> to vector<1x1x16xf32>
    %250 = vector.broadcast %249 : vector<1x1x16xf32> to vector<8x8x16xf32>
    %251 = arith.mulf %246, %250 : vector<8x8x16xf32>
    %252 = arith.addf %245, %251 : vector<8x8x16xf32>
    %c5_122 = arith.constant 5 : index
    %c0_123 = arith.constant 0 : index
    %c0_124 = arith.constant 0 : index
    %253 = vector.load %arg12[%c5_122, %c0_123, %c0_124] : memref<14x14x16xf32, #tpu.memory_space<vmem>>, vector<8x8x16xf32>
    %254 = vector.extract_strided_slice %12 {offsets = [5, 0, 0], sizes = [1, 1, 16], strides = [1, 1, 1]} : vector<7x7x16xf32> to vector<1x1x16xf32>
    %255 = vector.shape_cast %254 : vector<1x1x16xf32> to vector<16xf32>
    %256 = vector.shape_cast %255 : vector<16xf32> to vector<1x1x16xf32>
    %257 = vector.broadcast %256 : vector<1x1x16xf32> to vector<8x8x16xf32>
    %258 = arith.mulf %253, %257 : vector<8x8x16xf32>
    %c5_125 = arith.constant 5 : index
    %c1_126 = arith.constant 1 : index
    %c0_127 = arith.constant 0 : index
    %259 = vector.load %arg12[%c5_125, %c1_126, %c0_127] : memref<14x14x16xf32, #tpu.memory_space<vmem>>, vector<8x8x16xf32>
    %260 = vector.extract_strided_slice %12 {offsets = [5, 1, 0], sizes = [1, 1, 16], strides = [1, 1, 1]} : vector<7x7x16xf32> to vector<1x1x16xf32>
    %261 = vector.shape_cast %260 : vector<1x1x16xf32> to vector<16xf32>
    %262 = vector.shape_cast %261 : vector<16xf32> to vector<1x1x16xf32>
    %263 = vector.broadcast %262 : vector<1x1x16xf32> to vector<8x8x16xf32>
    %264 = arith.mulf %259, %263 : vector<8x8x16xf32>
    %265 = arith.addf %258, %264 : vector<8x8x16xf32>
    %c5_128 = arith.constant 5 : index
    %c2_129 = arith.constant 2 : index
    %c0_130 = arith.constant 0 : index
    %266 = vector.load %arg12[%c5_128, %c2_129, %c0_130] : memref<14x14x16xf32, #tpu.memory_space<vmem>>, vector<8x8x16xf32>
    %267 = vector.extract_strided_slice %12 {offsets = [5, 2, 0], sizes = [1, 1, 16], strides = [1, 1, 1]} : vector<7x7x16xf32> to vector<1x1x16xf32>
    %268 = vector.shape_cast %267 : vector<1x1x16xf32> to vector<16xf32>
    %269 = vector.shape_cast %268 : vector<16xf32> to vector<1x1x16xf32>
    %270 = vector.broadcast %269 : vector<1x1x16xf32> to vector<8x8x16xf32>
    %271 = arith.mulf %266, %270 : vector<8x8x16xf32>
    %272 = arith.addf %265, %271 : vector<8x8x16xf32>
    %c5_131 = arith.constant 5 : index
    %c3_132 = arith.constant 3 : index
    %c0_133 = arith.constant 0 : index
    %273 = vector.load %arg12[%c5_131, %c3_132, %c0_133] : memref<14x14x16xf32, #tpu.memory_space<vmem>>, vector<8x8x16xf32>
    %274 = vector.extract_strided_slice %12 {offsets = [5, 3, 0], sizes = [1, 1, 16], strides = [1, 1, 1]} : vector<7x7x16xf32> to vector<1x1x16xf32>
    %275 = vector.shape_cast %274 : vector<1x1x16xf32> to vector<16xf32>
    %276 = vector.shape_cast %275 : vector<16xf32> to vector<1x1x16xf32>
    %277 = vector.broadcast %276 : vector<1x1x16xf32> to vector<8x8x16xf32>
    %278 = arith.mulf %273, %277 : vector<8x8x16xf32>
    %279 = arith.addf %272, %278 : vector<8x8x16xf32>
    %c5_134 = arith.constant 5 : index
    %c4_135 = arith.constant 4 : index
    %c0_136 = arith.constant 0 : index
    %280 = vector.load %arg12[%c5_134, %c4_135, %c0_136] : memref<14x14x16xf32, #tpu.memory_space<vmem>>, vector<8x8x16xf32>
    %281 = vector.extract_strided_slice %12 {offsets = [5, 4, 0], sizes = [1, 1, 16], strides = [1, 1, 1]} : vector<7x7x16xf32> to vector<1x1x16xf32>
    %282 = vector.shape_cast %281 : vector<1x1x16xf32> to vector<16xf32>
    %283 = vector.shape_cast %282 : vector<16xf32> to vector<1x1x16xf32>
    %284 = vector.broadcast %283 : vector<1x1x16xf32> to vector<8x8x16xf32>
    %285 = arith.mulf %280, %284 : vector<8x8x16xf32>
    %286 = arith.addf %279, %285 : vector<8x8x16xf32>
    %c5_137 = arith.constant 5 : index
    %c5_138 = arith.constant 5 : index
    %c0_139 = arith.constant 0 : index
    %287 = vector.load %arg12[%c5_137, %c5_138, %c0_139] : memref<14x14x16xf32, #tpu.memory_space<vmem>>, vector<8x8x16xf32>
    %288 = vector.extract_strided_slice %12 {offsets = [5, 5, 0], sizes = [1, 1, 16], strides = [1, 1, 1]} : vector<7x7x16xf32> to vector<1x1x16xf32>
    %289 = vector.shape_cast %288 : vector<1x1x16xf32> to vector<16xf32>
    %290 = vector.shape_cast %289 : vector<16xf32> to vector<1x1x16xf32>
    %291 = vector.broadcast %290 : vector<1x1x16xf32> to vector<8x8x16xf32>
    %292 = arith.mulf %287, %291 : vector<8x8x16xf32>
    %293 = arith.addf %286, %292 : vector<8x8x16xf32>
    %c5_140 = arith.constant 5 : index
    %c6_141 = arith.constant 6 : index
    %c0_142 = arith.constant 0 : index
    %294 = vector.load %arg12[%c5_140, %c6_141, %c0_142] : memref<14x14x16xf32, #tpu.memory_space<vmem>>, vector<8x8x16xf32>
    %295 = vector.extract_strided_slice %12 {offsets = [5, 6, 0], sizes = [1, 1, 16], strides = [1, 1, 1]} : vector<7x7x16xf32> to vector<1x1x16xf32>
    %296 = vector.shape_cast %295 : vector<1x1x16xf32> to vector<16xf32>
    %297 = vector.shape_cast %296 : vector<16xf32> to vector<1x1x16xf32>
    %298 = vector.broadcast %297 : vector<1x1x16xf32> to vector<8x8x16xf32>
    %299 = arith.mulf %294, %298 : vector<8x8x16xf32>
    %300 = arith.addf %293, %299 : vector<8x8x16xf32>
    %c6_143 = arith.constant 6 : index
    %c0_144 = arith.constant 0 : index
    %c0_145 = arith.constant 0 : index
    %301 = vector.load %arg12[%c6_143, %c0_144, %c0_145] : memref<14x14x16xf32, #tpu.memory_space<vmem>>, vector<8x8x16xf32>
    %302 = vector.extract_strided_slice %12 {offsets = [6, 0, 0], sizes = [1, 1, 16], strides = [1, 1, 1]} : vector<7x7x16xf32> to vector<1x1x16xf32>
    %303 = vector.shape_cast %302 : vector<1x1x16xf32> to vector<16xf32>
    %304 = vector.shape_cast %303 : vector<16xf32> to vector<1x1x16xf32>
    %305 = vector.broadcast %304 : vector<1x1x16xf32> to vector<8x8x16xf32>
    %306 = arith.mulf %301, %305 : vector<8x8x16xf32>
    %c6_146 = arith.constant 6 : index
    %c1_147 = arith.constant 1 : index
    %c0_148 = arith.constant 0 : index
    %307 = vector.load %arg12[%c6_146, %c1_147, %c0_148] : memref<14x14x16xf32, #tpu.memory_space<vmem>>, vector<8x8x16xf32>
    %308 = vector.extract_strided_slice %12 {offsets = [6, 1, 0], sizes = [1, 1, 16], strides = [1, 1, 1]} : vector<7x7x16xf32> to vector<1x1x16xf32>
    %309 = vector.shape_cast %308 : vector<1x1x16xf32> to vector<16xf32>
    %310 = vector.shape_cast %309 : vector<16xf32> to vector<1x1x16xf32>
    %311 = vector.broadcast %310 : vector<1x1x16xf32> to vector<8x8x16xf32>
    %312 = arith.mulf %307, %311 : vector<8x8x16xf32>
    %313 = arith.addf %306, %312 : vector<8x8x16xf32>
    %c6_149 = arith.constant 6 : index
    %c2_150 = arith.constant 2 : index
    %c0_151 = arith.constant 0 : index
    %314 = vector.load %arg12[%c6_149, %c2_150, %c0_151] : memref<14x14x16xf32, #tpu.memory_space<vmem>>, vector<8x8x16xf32>
    %315 = vector.extract_strided_slice %12 {offsets = [6, 2, 0], sizes = [1, 1, 16], strides = [1, 1, 1]} : vector<7x7x16xf32> to vector<1x1x16xf32>
    %316 = vector.shape_cast %315 : vector<1x1x16xf32> to vector<16xf32>
    %317 = vector.shape_cast %316 : vector<16xf32> to vector<1x1x16xf32>
    %318 = vector.broadcast %317 : vector<1x1x16xf32> to vector<8x8x16xf32>
    %319 = arith.mulf %314, %318 : vector<8x8x16xf32>
    %320 = arith.addf %313, %319 : vector<8x8x16xf32>
    %c6_152 = arith.constant 6 : index
    %c3_153 = arith.constant 3 : index
    %c0_154 = arith.constant 0 : index
    %321 = vector.load %arg12[%c6_152, %c3_153, %c0_154] : memref<14x14x16xf32, #tpu.memory_space<vmem>>, vector<8x8x16xf32>
    %322 = vector.extract_strided_slice %12 {offsets = [6, 3, 0], sizes = [1, 1, 16], strides = [1, 1, 1]} : vector<7x7x16xf32> to vector<1x1x16xf32>
    %323 = vector.shape_cast %322 : vector<1x1x16xf32> to vector<16xf32>
    %324 = vector.shape_cast %323 : vector<16xf32> to vector<1x1x16xf32>
    %325 = vector.broadcast %324 : vector<1x1x16xf32> to vector<8x8x16xf32>
    %326 = arith.mulf %321, %325 : vector<8x8x16xf32>
    %327 = arith.addf %320, %326 : vector<8x8x16xf32>
    %c6_155 = arith.constant 6 : index
    %c4_156 = arith.constant 4 : index
    %c0_157 = arith.constant 0 : index
    %328 = vector.load %arg12[%c6_155, %c4_156, %c0_157] : memref<14x14x16xf32, #tpu.memory_space<vmem>>, vector<8x8x16xf32>
    %329 = vector.extract_strided_slice %12 {offsets = [6, 4, 0], sizes = [1, 1, 16], strides = [1, 1, 1]} : vector<7x7x16xf32> to vector<1x1x16xf32>
    %330 = vector.shape_cast %329 : vector<1x1x16xf32> to vector<16xf32>
    %331 = vector.shape_cast %330 : vector<16xf32> to vector<1x1x16xf32>
    %332 = vector.broadcast %331 : vector<1x1x16xf32> to vector<8x8x16xf32>
    %333 = arith.mulf %328, %332 : vector<8x8x16xf32>
    %334 = arith.addf %327, %333 : vector<8x8x16xf32>
    %c6_158 = arith.constant 6 : index
    %c5_159 = arith.constant 5 : index
    %c0_160 = arith.constant 0 : index
    %335 = vector.load %arg12[%c6_158, %c5_159, %c0_160] : memref<14x14x16xf32, #tpu.memory_space<vmem>>, vector<8x8x16xf32>
    %336 = vector.extract_strided_slice %12 {offsets = [6, 5, 0], sizes = [1, 1, 16], strides = [1, 1, 1]} : vector<7x7x16xf32> to vector<1x1x16xf32>
    %337 = vector.shape_cast %336 : vector<1x1x16xf32> to vector<16xf32>
    %338 = vector.shape_cast %337 : vector<16xf32> to vector<1x1x16xf32>
    %339 = vector.broadcast %338 : vector<1x1x16xf32> to vector<8x8x16xf32>
    %340 = arith.mulf %335, %339 : vector<8x8x16xf32>
    %341 = arith.addf %334, %340 : vector<8x8x16xf32>
    %c6_161 = arith.constant 6 : index
    %c6_162 = arith.constant 6 : index
    %c0_163 = arith.constant 0 : index
    %342 = vector.load %arg12[%c6_161, %c6_162, %c0_163] : memref<14x14x16xf32, #tpu.memory_space<vmem>>, vector<8x8x16xf32>
    %343 = vector.extract_strided_slice %12 {offsets = [6, 6, 0], sizes = [1, 1, 16], strides = [1, 1, 1]} : vector<7x7x16xf32> to vector<1x1x16xf32>
    %344 = vector.shape_cast %343 : vector<1x1x16xf32> to vector<16xf32>
    %345 = vector.shape_cast %344 : vector<16xf32> to vector<1x1x16xf32>
    %346 = vector.broadcast %345 : vector<1x1x16xf32> to vector<8x8x16xf32>
    %347 = arith.mulf %342, %346 : vector<8x8x16xf32>
    %348 = arith.addf %341, %347 : vector<8x8x16xf32>
    %349 = arith.addf %60, %108 : vector<8x8x16xf32>
    %350 = arith.addf %156, %204 : vector<8x8x16xf32>
    %351 = arith.addf %349, %350 : vector<8x8x16xf32>
    %352 = arith.addf %252, %300 : vector<8x8x16xf32>
    %353 = arith.addf %352, %348 : vector<8x8x16xf32>
    %354 = arith.addf %351, %353 : vector<8x8x16xf32>
    %355 = vector.shape_cast %354 : vector<8x8x16xf32> to vector<64x16xf32>
    %c0_164 = arith.constant 0 : index
    %c0_165 = arith.constant 0 : index
    %356 = vector.load %arg3[%c0_164, %c0_165] : memref<1x16xf32, #tpu.memory_space<vmem>>, vector<1x16xf32>
    %357 = vector.broadcast %356 : vector<1x16xf32> to vector<64x16xf32>
    %358 = arith.addf %355, %357 : vector<64x16xf32>
    %c0_166 = arith.constant 0 : index
    %c0_167 = arith.constant 0 : index
    %359 = vector.load %arg4[%c0_166, %c0_167] : memref<1x16xf32, #tpu.memory_space<vmem>>, vector<1x16xf32>
    %c0_168 = arith.constant 0 : index
    %c0_169 = arith.constant 0 : index
    %360 = vector.load %arg5[%c0_168, %c0_169] : memref<1x16xf32, #tpu.memory_space<vmem>>, vector<1x16xf32>
    %cst_170 = arith.constant dense<0.000000e+00> : vector<64xf32>
    %361 = vector.multi_reduction <add>, %358, %cst_170 [1] : vector<64x16xf32> to vector<64xf32>
    %362 = vector.shape_cast %361 : vector<64xf32> to vector<64x1xf32>
    %cst_171 = arith.constant 1.600000e+01 : f32
    %363 = vector.broadcast %cst_171 : f32 to vector<64x1xf32>
    %364 = arith.divf %362, %363 : vector<64x1xf32>
    %365 = vector.broadcast %364 : vector<64x1xf32> to vector<64x16xf32>
    %366 = arith.subf %358, %365 : vector<64x16xf32>
    %367 = arith.mulf %366, %366 : vector<64x16xf32>
    %cst_172 = arith.constant dense<0.000000e+00> : vector<64xf32>
    %368 = vector.multi_reduction <add>, %367, %cst_172 [1] : vector<64x16xf32> to vector<64xf32>
    %369 = vector.shape_cast %368 : vector<64xf32> to vector<64x1xf32>
    %cst_173 = arith.constant 1.600000e+01 : f32
    %370 = vector.broadcast %cst_173 : f32 to vector<64x1xf32>
    %371 = arith.divf %369, %370 : vector<64x1xf32>
    %372 = vector.broadcast %364 : vector<64x1xf32> to vector<64x16xf32>
    %373 = arith.subf %358, %372 : vector<64x16xf32>
    %cst_174 = arith.constant 9.99999997E-7 : f32
    %374 = vector.broadcast %cst_174 : f32 to vector<64x1xf32>
    %375 = arith.addf %371, %374 : vector<64x1xf32>
    %376 = math.rsqrt %375 : vector<64x1xf32>
    %377 = vector.broadcast %376 : vector<64x1xf32> to vector<64x16xf32>
    %378 = arith.mulf %373, %377 : vector<64x16xf32>
    %379 = vector.broadcast %359 : vector<1x16xf32> to vector<64x16xf32>
    %380 = arith.mulf %378, %379 : vector<64x16xf32>
    %381 = vector.broadcast %360 : vector<1x16xf32> to vector<64x16xf32>
    %382 = arith.addf %380, %381 : vector<64x16xf32>
    %383 = arith.truncf %382 : vector<64x16xf32> to vector<64x16xbf16>
    %c0_175 = arith.constant 0 : index
    %c0_176 = arith.constant 0 : index
    %384 = vector.load %arg6[%c0_175, %c0_176] : memref<16x64xbf16, #tpu.memory_space<vmem>>, vector<16x64xbf16>
    %cst_177 = arith.constant dense<0.000000e+00> : vector<64x64xf32>
    %385 = tpu.matmul %383, %384, %cst_177 {dimension_numbers = #tpu.dot_dimension_numbers<[1], [0], [0], [1], [0, 0, 1, 1], [], []>} : vector<64x16xbf16>, vector<16x64xbf16>, vector<64x64xf32> -> vector<64x64xf32>
    %c0_178 = arith.constant 0 : index
    %c0_179 = arith.constant 0 : index
    %386 = vector.load %arg7[%c0_178, %c0_179] : memref<1x64xf32, #tpu.memory_space<vmem>>, vector<1x64xf32>
    %387 = vector.broadcast %386 : vector<1x64xf32> to vector<64x64xf32>
    %388 = arith.addf %385, %387 : vector<64x64xf32>
    %389 = arith.mulf %388, %388 : vector<64x64xf32>
    %390 = arith.mulf %388, %389 : vector<64x64xf32>
    %cst_180 = arith.constant 4.471500e-02 : f32
    %391 = vector.broadcast %cst_180 : f32 to vector<64x64xf32>
    %392 = arith.mulf %391, %390 : vector<64x64xf32>
    %393 = arith.addf %388, %392 : vector<64x64xf32>
    %cst_181 = arith.constant 0.797884583 : f32
    %394 = vector.broadcast %cst_181 : f32 to vector<64x64xf32>
    %395 = arith.mulf %394, %393 : vector<64x64xf32>
    %396 = math.tanh %395 : vector<64x64xf32>
    %cst_182 = arith.constant 1.000000e+00 : f32
    %397 = vector.broadcast %cst_182 : f32 to vector<64x64xf32>
    %398 = arith.addf %397, %396 : vector<64x64xf32>
    %cst_183 = arith.constant 5.000000e-01 : f32
    %399 = vector.broadcast %cst_183 : f32 to vector<64x64xf32>
    %400 = arith.mulf %399, %398 : vector<64x64xf32>
    %401 = arith.mulf %388, %400 : vector<64x64xf32>
    %402 = arith.truncf %401 : vector<64x64xf32> to vector<64x64xbf16>
    %c0_184 = arith.constant 0 : index
    %c0_185 = arith.constant 0 : index
    %403 = vector.load %arg8[%c0_184, %c0_185] : memref<64x16xbf16, #tpu.memory_space<vmem>>, vector<64x16xbf16>
    %cst_186 = arith.constant dense<0.000000e+00> : vector<64x16xf32>
    %404 = tpu.matmul %402, %403, %cst_186 {dimension_numbers = #tpu.dot_dimension_numbers<[1], [0], [0], [1], [0, 0, 1, 1], [], []>} : vector<64x64xbf16>, vector<64x16xbf16>, vector<64x16xf32> -> vector<64x16xf32>
    %c0_187 = arith.constant 0 : index
    %c0_188 = arith.constant 0 : index
    %405 = vector.load %arg9[%c0_187, %c0_188] : memref<1x16xf32, #tpu.memory_space<vmem>>, vector<1x16xf32>
    %406 = vector.broadcast %405 : vector<1x16xf32> to vector<64x16xf32>
    %407 = arith.addf %404, %406 : vector<64x16xf32>
    %408 = vector.shape_cast %2 : vector<8x8x16xf32> to vector<64x16xf32>
    %c0_189 = arith.constant 0 : index
    %c0_190 = arith.constant 0 : index
    %409 = vector.load %arg10[%c0_189, %c0_190] : memref<1x16xf32, #tpu.memory_space<vmem>>, vector<1x16xf32>
    %410 = vector.broadcast %409 : vector<1x16xf32> to vector<64x16xf32>
    %411 = arith.mulf %410, %407 : vector<64x16xf32>
    %412 = arith.addf %408, %411 : vector<64x16xf32>
    %413 = vector.shape_cast %412 : vector<64x16xf32> to vector<8x8x16xf32>
    %414 = arith.truncf %413 : vector<8x8x16xf32> to vector<8x8x16xbf16>
    %c0_191 = arith.constant 0 : index
    %c0_192 = arith.constant 0 : index
    %c0_193 = arith.constant 0 : index
    %c0_194 = arith.constant 0 : index
    %415 = vector.load %arg11[%c0_191, %c0_192, %c0_193, %c0_194] : memref<1x8x8x16xbf16, #tpu.memory_space<vmem>>, vector<1x8x8x16xbf16>
    %416 = vector.shape_cast %415 : vector<1x8x8x16xbf16> to vector<8x8x16xbf16>
    %417 = vector.shape_cast %414 : vector<8x8x16xbf16> to vector<1x8x8x16xbf16>
    tpu.vector_store %arg11[%c0_191, %c0_192, %c0_193, %c0_194], %417 {strides = array<i32>} : memref<1x8x8x16xbf16, #tpu.memory_space<vmem>>, vector<1x8x8x16xbf16>,
    return
  }
  func.func @transform_0(%arg0: i32) -> (i32, i32, i32, i32) {
    %c0_i32 = arith.constant 0 : i32
    %c0_i32_0 = arith.constant 0 : i32
    %c0_i32_1 = arith.constant 0 : i32
    %c0_i32_2 = arith.constant 0 : i32
    return %arg0, %c0_i32, %c0_i32_0, %c0_i32_1 : i32, i32, i32, i32
  }
  func.func @transform_1(%arg0: i32) -> (i32, i32, i32) {
    %c0_i32 = arith.constant 0 : i32
    %c0_i32_0 = arith.constant 0 : i32
    %c0_i32_1 = arith.constant 0 : i32
    %c0_i32_2 = arith.constant 0 : i32
    return %c0_i32, %c0_i32_0, %c0_i32_1 : i32, i32, i32
  }
  func.func @transform_2(%arg0: i32) -> (i32, i32) {
    %c0_i32 = arith.constant 0 : i32
    %c0_i32_0 = arith.constant 0 : i32
    %c0_i32_1 = arith.constant 0 : i32
    return %c0_i32, %c0_i32_0 : i32, i32
  }
  func.func @transform_3(%arg0: i32) -> (i32, i32) {
    %c0_i32 = arith.constant 0 : i32
    %c0_i32_0 = arith.constant 0 : i32
    %c0_i32_1 = arith.constant 0 : i32
    return %c0_i32, %c0_i32_0 : i32, i32
  }
  func.func @transform_4(%arg0: i32) -> (i32, i32) {
    %c0_i32 = arith.constant 0 : i32
    %c0_i32_0 = arith.constant 0 : i32
    %c0_i32_1 = arith.constant 0 : i32
    return %c0_i32, %c0_i32_0 : i32, i32
  }
  func.func @transform_5(%arg0: i32) -> (i32, i32) {
    %c0_i32 = arith.constant 0 : i32
    %c0_i32_0 = arith.constant 0 : i32
    %c0_i32_1 = arith.constant 0 : i32
    return %c0_i32, %c0_i32_0 : i32, i32
  }
  func.func @transform_6(%arg0: i32) -> (i32, i32) {
    %c0_i32 = arith.constant 0 : i32
    %c0_i32_0 = arith.constant 0 : i32
    %c0_i32_1 = arith.constant 0 : i32
    return %c0_i32, %c0_i32_0 : i32, i32
  }
  func.func @transform_7(%arg0: i32) -> (i32, i32) {
    %c0_i32 = arith.constant 0 : i32
    %c0_i32_0 = arith.constant 0 : i32
    %c0_i32_1 = arith.constant 0 : i32
    return %c0_i32, %c0_i32_0 : i32, i32
  }
  func.func @transform_8(%arg0: i32) -> (i32, i32) {
    %c0_i32 = arith.constant 0 : i32
    %c0_i32_0 = arith.constant 0 : i32
    %c0_i32_1 = arith.constant 0 : i32
    return %c0_i32, %c0_i32_0 : i32, i32
  }
  func.func @transform_9(%arg0: i32) -> (i32, i32) {
    %c0_i32 = arith.constant 0 : i32
    %c0_i32_0 = arith.constant 0 : i32
    %c0_i32_1 = arith.constant 0 : i32
    return %c0_i32, %c0_i32_0 : i32, i32
  }
  func.func @transform_10(%arg0: i32) -> (i32, i32, i32, i32) {
    %c0_i32 = arith.constant 0 : i32
    %c0_i32_0 = arith.constant 0 : i32
    %c0_i32_1 = arith.constant 0 : i32
    %c0_i32_2 = arith.constant 0 : i32
    return %arg0, %c0_i32, %c0_i32_0, %c0_i32_1 : i32, i32, i32, i32
  }
}

module attributes {stable_mosaic.version = 11 : i64} {
  func.func @_downsample_kernel(%arg0: memref<32x4x16xbf16, #tpu.memory_space<vmem>>, %arg1: memref<1x16xf32, #tpu.memory_space<vmem>>, %arg2: memref<1x16xf32, #tpu.memory_space<vmem>>, %arg3: memref<64x32xbf16, #tpu.memory_space<vmem>>, %arg4: memref<1x32xf32, #tpu.memory_space<vmem>>, %arg5: memref<32x32xbf16, #tpu.memory_space<vmem>>) attributes {dimension_semantics = [], scalar_prefetch = 0 : i64, scratch_operands = 0 : i64, tpu.core_type = #tpu.core_type<tc>} {
    %c0 = arith.constant 0 : index
    %c0_0 = arith.constant 0 : index
    %c0_1 = arith.constant 0 : index
    %0 = vector.load %arg0[%c0, %c0_0, %c0_1] : memref<32x4x16xbf16, #tpu.memory_space<vmem>>, vector<32x4x16xbf16>
    %1 = arith.extf %0 : vector<32x4x16xbf16> to vector<32x4x16xf32>
    %c0_2 = arith.constant 0 : index
    %c0_3 = arith.constant 0 : index
    %2 = vector.load %arg1[%c0_2, %c0_3] : memref<1x16xf32, #tpu.memory_space<vmem>>, vector<1x16xf32>
    %c0_4 = arith.constant 0 : index
    %c0_5 = arith.constant 0 : index
    %3 = vector.load %arg2[%c0_4, %c0_5] : memref<1x16xf32, #tpu.memory_space<vmem>>, vector<1x16xf32>
    %cst = arith.constant dense<0.000000e+00> : vector<32x4xf32>
    %4 = vector.multi_reduction <add>, %1, %cst [2] : vector<32x4x16xf32> to vector<32x4xf32>
    %5 = vector.shape_cast %4 : vector<32x4xf32> to vector<32x4x1xf32>
    %cst_6 = arith.constant 1.600000e+01 : f32
    %6 = vector.broadcast %cst_6 : f32 to vector<32x4x1xf32>
    %7 = arith.divf %5, %6 : vector<32x4x1xf32>
    %8 = vector.broadcast %7 : vector<32x4x1xf32> to vector<32x4x16xf32>
    %9 = arith.subf %1, %8 : vector<32x4x16xf32>
    %10 = arith.mulf %9, %9 : vector<32x4x16xf32>
    %cst_7 = arith.constant dense<0.000000e+00> : vector<32x4xf32>
    %11 = vector.multi_reduction <add>, %10, %cst_7 [2] : vector<32x4x16xf32> to vector<32x4xf32>
    %12 = vector.shape_cast %11 : vector<32x4xf32> to vector<32x4x1xf32>
    %cst_8 = arith.constant 1.600000e+01 : f32
    %13 = vector.broadcast %cst_8 : f32 to vector<32x4x1xf32>
    %14 = arith.divf %12, %13 : vector<32x4x1xf32>
    %15 = vector.broadcast %7 : vector<32x4x1xf32> to vector<32x4x16xf32>
    %16 = arith.subf %1, %15 : vector<32x4x16xf32>
    %cst_9 = arith.constant 9.99999997E-7 : f32
    %17 = vector.broadcast %cst_9 : f32 to vector<32x4x1xf32>
    %18 = arith.addf %14, %17 : vector<32x4x1xf32>
    %19 = math.rsqrt %18 : vector<32x4x1xf32>
    %20 = vector.broadcast %19 : vector<32x4x1xf32> to vector<32x4x16xf32>
    %21 = arith.mulf %16, %20 : vector<32x4x16xf32>
    %22 = vector.shape_cast %2 : vector<1x16xf32> to vector<1x1x16xf32>
    %23 = vector.broadcast %22 : vector<1x1x16xf32> to vector<32x4x16xf32>
    %24 = arith.mulf %21, %23 : vector<32x4x16xf32>
    %25 = vector.shape_cast %3 : vector<1x16xf32> to vector<1x1x16xf32>
    %26 = vector.broadcast %25 : vector<1x1x16xf32> to vector<32x4x16xf32>
    %27 = arith.addf %24, %26 : vector<32x4x16xf32>
    %28 = vector.shape_cast %27 : vector<32x4x16xf32> to vector<32x64xf32>
    %29 = arith.truncf %28 : vector<32x64xf32> to vector<32x64xbf16>
    %c0_10 = arith.constant 0 : index
    %c0_11 = arith.constant 0 : index
    %30 = vector.load %arg3[%c0_10, %c0_11] : memref<64x32xbf16, #tpu.memory_space<vmem>>, vector<64x32xbf16>
    %cst_12 = arith.constant dense<0.000000e+00> : vector<32x32xf32>
    %31 = tpu.matmul %29, %30, %cst_12 {dimension_numbers = #tpu.dot_dimension_numbers<[1], [0], [0], [1], [0, 0, 1, 1], [], []>} : vector<32x64xbf16>, vector<64x32xbf16>, vector<32x32xf32> -> vector<32x32xf32>
    %c0_13 = arith.constant 0 : index
    %c0_14 = arith.constant 0 : index
    %32 = vector.load %arg4[%c0_13, %c0_14] : memref<1x32xf32, #tpu.memory_space<vmem>>, vector<1x32xf32>
    %33 = vector.broadcast %32 : vector<1x32xf32> to vector<32x32xf32>
    %34 = arith.addf %31, %33 : vector<32x32xf32>
    %35 = arith.truncf %34 : vector<32x32xf32> to vector<32x32xbf16>
    %c0_15 = arith.constant 0 : index
    %c0_16 = arith.constant 0 : index
    %36 = vector.load %arg5[%c0_15, %c0_16] : memref<32x32xbf16, #tpu.memory_space<vmem>>, vector<32x32xbf16>
    tpu.vector_store %arg5[%c0_15, %c0_16], %35 {strides = array<i32>} : memref<32x32xbf16, #tpu.memory_space<vmem>>, vector<32x32xbf16>,
    return
  }
}

module attributes {stable_mosaic.version = 11 : i64} {
  func.func @_cnblock_kernel(%arg0: i32, %arg1: memref<1x4x4x32xbf16, #tpu.memory_space<vmem>>, %arg2: memref<7x7x32xf32, #tpu.memory_space<vmem>>, %arg3: memref<1x32xf32, #tpu.memory_space<vmem>>, %arg4: memref<1x32xf32, #tpu.memory_space<vmem>>, %arg5: memref<1x32xf32, #tpu.memory_space<vmem>>, %arg6: memref<32x128xbf16, #tpu.memory_space<vmem>>, %arg7: memref<1x128xf32, #tpu.memory_space<vmem>>, %arg8: memref<128x32xbf16, #tpu.memory_space<vmem>>, %arg9: memref<1x32xf32, #tpu.memory_space<vmem>>, %arg10: memref<1x32xf32, #tpu.memory_space<vmem>>, %arg11: memref<1x4x4x32xbf16, #tpu.memory_space<vmem>>, %arg12: memref<10x10x32xf32, #tpu.memory_space<vmem>>) attributes {dimension_semantics = [#tpu.dimension_semantics<parallel>], iteration_bounds = array<i64: 2>, scalar_prefetch = 0 : i64, scratch_operands = 1 : i64, tpu.core_type = #tpu.core_type<tc>, window_params = [{transform_indices = @transform_0, window_bounds = array<i64: 1, 4, 4, 32>}, {pipeline_mode = #tpu.pipeline_mode<synchronous>, transform_indices = @transform_1, window_bounds = array<i64: 7, 7, 32>}, {pipeline_mode = #tpu.pipeline_mode<synchronous>, transform_indices = @transform_2, window_bounds = array<i64: 1, 32>}, {pipeline_mode = #tpu.pipeline_mode<synchronous>, transform_indices = @transform_3, window_bounds = array<i64: 1, 32>}, {pipeline_mode = #tpu.pipeline_mode<synchronous>, transform_indices = @transform_4, window_bounds = array<i64: 1, 32>}, {pipeline_mode = #tpu.pipeline_mode<synchronous>, transform_indices = @transform_5, window_bounds = array<i64: 32, 128>}, {pipeline_mode = #tpu.pipeline_mode<synchronous>, transform_indices = @transform_6, window_bounds = array<i64: 1, 128>}, {pipeline_mode = #tpu.pipeline_mode<synchronous>, transform_indices = @transform_7, window_bounds = array<i64: 128, 32>}, {pipeline_mode = #tpu.pipeline_mode<synchronous>, transform_indices = @transform_8, window_bounds = array<i64: 1, 32>}, {pipeline_mode = #tpu.pipeline_mode<synchronous>, transform_indices = @transform_9, window_bounds = array<i64: 1, 32>}, {transform_indices = @transform_10, window_bounds = array<i64: 1, 4, 4, 32>}]} {
    %c0 = arith.constant 0 : index
    %c0_0 = arith.constant 0 : index
    %c0_1 = arith.constant 0 : index
    %c0_2 = arith.constant 0 : index
    %0 = vector.load %arg1[%c0, %c0_0, %c0_1, %c0_2] : memref<1x4x4x32xbf16, #tpu.memory_space<vmem>>, vector<1x4x4x32xbf16>
    %1 = vector.shape_cast %0 : vector<1x4x4x32xbf16> to vector<4x4x32xbf16>
    %2 = arith.extf %1 : vector<4x4x32xbf16> to vector<4x4x32xf32>
    %cst = arith.constant 0.000000e+00 : f32
    %3 = vector.broadcast %cst : f32 to vector<3x10x32xf32>
    %c0_3 = arith.constant 0 : index
    %c0_4 = arith.constant 0 : index
    %c0_5 = arith.constant 0 : index
    %4 = vector.load %arg12[%c0_3, %c0_4, %c0_5] : memref<10x10x32xf32, #tpu.memory_space<vmem>>, vector<3x10x32xf32>
    tpu.vector_store %arg12[%c0_3, %c0_4, %c0_5], %3 {strides = array<i32>} : memref<10x10x32xf32, #tpu.memory_space<vmem>>, vector<3x10x32xf32>,
    %cst_6 = arith.constant 0.000000e+00 : f32
    %5 = vector.broadcast %cst_6 : f32 to vector<3x10x32xf32>
    %c7 = arith.constant 7 : index
    %c0_7 = arith.constant 0 : index
    %c0_8 = arith.constant 0 : index
    %6 = vector.load %arg12[%c7, %c0_7, %c0_8] : memref<10x10x32xf32, #tpu.memory_space<vmem>>, vector<3x10x32xf32>
    tpu.vector_store %arg12[%c7, %c0_7, %c0_8], %5 {strides = array<i32>} : memref<10x10x32xf32, #tpu.memory_space<vmem>>, vector<3x10x32xf32>,
    %cst_9 = arith.constant 0.000000e+00 : f32
    %7 = vector.broadcast %cst_9 : f32 to vector<4x3x32xf32>
    %c3 = arith.constant 3 : index
    %c0_10 = arith.constant 0 : index
    %c0_11 = arith.constant 0 : index
    %8 = vector.load %arg12[%c3, %c0_10, %c0_11] : memref<10x10x32xf32, #tpu.memory_space<vmem>>, vector<4x3x32xf32>
    tpu.vector_store %arg12[%c3, %c0_10, %c0_11], %7 {strides = array<i32>} : memref<10x10x32xf32, #tpu.memory_space<vmem>>, vector<4x3x32xf32>,
    %cst_12 = arith.constant 0.000000e+00 : f32
    %9 = vector.broadcast %cst_12 : f32 to vector<4x3x32xf32>
    %c3_13 = arith.constant 3 : index
    %c7_14 = arith.constant 7 : index
    %c0_15 = arith.constant 0 : index
    %10 = vector.load %arg12[%c3_13, %c7_14, %c0_15] : memref<10x10x32xf32, #tpu.memory_space<vmem>>, vector<4x3x32xf32>
    tpu.vector_store %arg12[%c3_13, %c7_14, %c0_15], %9 {strides = array<i32>} : memref<10x10x32xf32, #tpu.memory_space<vmem>>, vector<4x3x32xf32>,
    %c3_16 = arith.constant 3 : index
    %c3_17 = arith.constant 3 : index
    %c0_18 = arith.constant 0 : index
    %11 = vector.load %arg12[%c3_16, %c3_17, %c0_18] : memref<10x10x32xf32, #tpu.memory_space<vmem>>, vector<4x4x32xf32>
    tpu.vector_store %arg12[%c3_16, %c3_17, %c0_18], %2 {strides = array<i32>} : memref<10x10x32xf32, #tpu.memory_space<vmem>>, vector<4x4x32xf32>,
    %c0_19 = arith.constant 0 : index
    %c0_20 = arith.constant 0 : index
    %c0_21 = arith.constant 0 : index
    %12 = vector.load %arg2[%c0_19, %c0_20, %c0_21] : memref<7x7x32xf32, #tpu.memory_space<vmem>>, vector<7x7x32xf32>
    %c0_22 = arith.constant 0 : index
    %c0_23 = arith.constant 0 : index
    %c0_24 = arith.constant 0 : index
    %13 = vector.load %arg12[%c0_22, %c0_23, %c0_24] : memref<10x10x32xf32, #tpu.memory_space<vmem>>, vector<4x4x32xf32>
    %14 = vector.extract_strided_slice %12 {offsets = [0, 0, 0], sizes = [1, 1, 32], strides = [1, 1, 1]} : vector<7x7x32xf32> to vector<1x1x32xf32>
    %15 = vector.shape_cast %14 : vector<1x1x32xf32> to vector<32xf32>
    %16 = vector.shape_cast %15 : vector<32xf32> to vector<1x1x32xf32>
    %17 = vector.broadcast %16 : vector<1x1x32xf32> to vector<4x4x32xf32>
    %18 = arith.mulf %13, %17 : vector<4x4x32xf32>
    %c0_25 = arith.constant 0 : index
    %c1 = arith.constant 1 : index
    %c0_26 = arith.constant 0 : index
    %19 = vector.load %arg12[%c0_25, %c1, %c0_26] : memref<10x10x32xf32, #tpu.memory_space<vmem>>, vector<4x4x32xf32>
    %20 = vector.extract_strided_slice %12 {offsets = [0, 1, 0], sizes = [1, 1, 32], strides = [1, 1, 1]} : vector<7x7x32xf32> to vector<1x1x32xf32>
    %21 = vector.shape_cast %20 : vector<1x1x32xf32> to vector<32xf32>
    %22 = vector.shape_cast %21 : vector<32xf32> to vector<1x1x32xf32>
    %23 = vector.broadcast %22 : vector<1x1x32xf32> to vector<4x4x32xf32>
    %24 = arith.mulf %19, %23 : vector<4x4x32xf32>
    %25 = arith.addf %18, %24 : vector<4x4x32xf32>
    %c0_27 = arith.constant 0 : index
    %c2 = arith.constant 2 : index
    %c0_28 = arith.constant 0 : index
    %26 = vector.load %arg12[%c0_27, %c2, %c0_28] : memref<10x10x32xf32, #tpu.memory_space<vmem>>, vector<4x4x32xf32>
    %27 = vector.extract_strided_slice %12 {offsets = [0, 2, 0], sizes = [1, 1, 32], strides = [1, 1, 1]} : vector<7x7x32xf32> to vector<1x1x32xf32>
    %28 = vector.shape_cast %27 : vector<1x1x32xf32> to vector<32xf32>
    %29 = vector.shape_cast %28 : vector<32xf32> to vector<1x1x32xf32>
    %30 = vector.broadcast %29 : vector<1x1x32xf32> to vector<4x4x32xf32>
    %31 = arith.mulf %26, %30 : vector<4x4x32xf32>
    %32 = arith.addf %25, %31 : vector<4x4x32xf32>
    %c0_29 = arith.constant 0 : index
    %c3_30 = arith.constant 3 : index
    %c0_31 = arith.constant 0 : index
    %33 = vector.load %arg12[%c0_29, %c3_30, %c0_31] : memref<10x10x32xf32, #tpu.memory_space<vmem>>, vector<4x4x32xf32>
    %34 = vector.extract_strided_slice %12 {offsets = [0, 3, 0], sizes = [1, 1, 32], strides = [1, 1, 1]} : vector<7x7x32xf32> to vector<1x1x32xf32>
    %35 = vector.shape_cast %34 : vector<1x1x32xf32> to vector<32xf32>
    %36 = vector.shape_cast %35 : vector<32xf32> to vector<1x1x32xf32>
    %37 = vector.broadcast %36 : vector<1x1x32xf32> to vector<4x4x32xf32>
    %38 = arith.mulf %33, %37 : vector<4x4x32xf32>
    %39 = arith.addf %32, %38 : vector<4x4x32xf32>
    %c0_32 = arith.constant 0 : index
    %c4 = arith.constant 4 : index
    %c0_33 = arith.constant 0 : index
    %40 = vector.load %arg12[%c0_32, %c4, %c0_33] : memref<10x10x32xf32, #tpu.memory_space<vmem>>, vector<4x4x32xf32>
    %41 = vector.extract_strided_slice %12 {offsets = [0, 4, 0], sizes = [1, 1, 32], strides = [1, 1, 1]} : vector<7x7x32xf32> to vector<1x1x32xf32>
    %42 = vector.shape_cast %41 : vector<1x1x32xf32> to vector<32xf32>
    %43 = vector.shape_cast %42 : vector<32xf32> to vector<1x1x32xf32>
    %44 = vector.broadcast %43 : vector<1x1x32xf32> to vector<4x4x32xf32>
    %45 = arith.mulf %40, %44 : vector<4x4x32xf32>
    %46 = arith.addf %39, %45 : vector<4x4x32xf32>
    %c0_34 = arith.constant 0 : index
    %c5 = arith.constant 5 : index
    %c0_35 = arith.constant 0 : index
    %47 = vector.load %arg12[%c0_34, %c5, %c0_35] : memref<10x10x32xf32, #tpu.memory_space<vmem>>, vector<4x4x32xf32>
    %48 = vector.extract_strided_slice %12 {offsets = [0, 5, 0], sizes = [1, 1, 32], strides = [1, 1, 1]} : vector<7x7x32xf32> to vector<1x1x32xf32>
    %49 = vector.shape_cast %48 : vector<1x1x32xf32> to vector<32xf32>
    %50 = vector.shape_cast %49 : vector<32xf32> to vector<1x1x32xf32>
    %51 = vector.broadcast %50 : vector<1x1x32xf32> to vector<4x4x32xf32>
    %52 = arith.mulf %47, %51 : vector<4x4x32xf32>
    %53 = arith.addf %46, %52 : vector<4x4x32xf32>
    %c0_36 = arith.constant 0 : index
    %c6 = arith.constant 6 : index
    %c0_37 = arith.constant 0 : index
    %54 = vector.load %arg12[%c0_36, %c6, %c0_37] : memref<10x10x32xf32, #tpu.memory_space<vmem>>, vector<4x4x32xf32>
    %55 = vector.extract_strided_slice %12 {offsets = [0, 6, 0], sizes = [1, 1, 32], strides = [1, 1, 1]} : vector<7x7x32xf32> to vector<1x1x32xf32>
    %56 = vector.shape_cast %55 : vector<1x1x32xf32> to vector<32xf32>
    %57 = vector.shape_cast %56 : vector<32xf32> to vector<1x1x32xf32>
    %58 = vector.broadcast %57 : vector<1x1x32xf32> to vector<4x4x32xf32>
    %59 = arith.mulf %54, %58 : vector<4x4x32xf32>
    %60 = arith.addf %53, %59 : vector<4x4x32xf32>
    %c1_38 = arith.constant 1 : index
    %c0_39 = arith.constant 0 : index
    %c0_40 = arith.constant 0 : index
    %61 = vector.load %arg12[%c1_38, %c0_39, %c0_40] : memref<10x10x32xf32, #tpu.memory_space<vmem>>, vector<4x4x32xf32>
    %62 = vector.extract_strided_slice %12 {offsets = [1, 0, 0], sizes = [1, 1, 32], strides = [1, 1, 1]} : vector<7x7x32xf32> to vector<1x1x32xf32>
    %63 = vector.shape_cast %62 : vector<1x1x32xf32> to vector<32xf32>
    %64 = vector.shape_cast %63 : vector<32xf32> to vector<1x1x32xf32>
    %65 = vector.broadcast %64 : vector<1x1x32xf32> to vector<4x4x32xf32>
    %66 = arith.mulf %61, %65 : vector<4x4x32xf32>
    %c1_41 = arith.constant 1 : index
    %c1_42 = arith.constant 1 : index
    %c0_43 = arith.constant 0 : index
    %67 = vector.load %arg12[%c1_41, %c1_42, %c0_43] : memref<10x10x32xf32, #tpu.memory_space<vmem>>, vector<4x4x32xf32>
    %68 = vector.extract_strided_slice %12 {offsets = [1, 1, 0], sizes = [1, 1, 32], strides = [1, 1, 1]} : vector<7x7x32xf32> to vector<1x1x32xf32>
    %69 = vector.shape_cast %68 : vector<1x1x32xf32> to vector<32xf32>
    %70 = vector.shape_cast %69 : vector<32xf32> to vector<1x1x32xf32>
    %71 = vector.broadcast %70 : vector<1x1x32xf32> to vector<4x4x32xf32>
    %72 = arith.mulf %67, %71 : vector<4x4x32xf32>
    %73 = arith.addf %66, %72 : vector<4x4x32xf32>
    %c1_44 = arith.constant 1 : index
    %c2_45 = arith.constant 2 : index
    %c0_46 = arith.constant 0 : index
    %74 = vector.load %arg12[%c1_44, %c2_45, %c0_46] : memref<10x10x32xf32, #tpu.memory_space<vmem>>, vector<4x4x32xf32>
    %75 = vector.extract_strided_slice %12 {offsets = [1, 2, 0], sizes = [1, 1, 32], strides = [1, 1, 1]} : vector<7x7x32xf32> to vector<1x1x32xf32>
    %76 = vector.shape_cast %75 : vector<1x1x32xf32> to vector<32xf32>
    %77 = vector.shape_cast %76 : vector<32xf32> to vector<1x1x32xf32>
    %78 = vector.broadcast %77 : vector<1x1x32xf32> to vector<4x4x32xf32>
    %79 = arith.mulf %74, %78 : vector<4x4x32xf32>
    %80 = arith.addf %73, %79 : vector<4x4x32xf32>
    %c1_47 = arith.constant 1 : index
    %c3_48 = arith.constant 3 : index
    %c0_49 = arith.constant 0 : index
    %81 = vector.load %arg12[%c1_47, %c3_48, %c0_49] : memref<10x10x32xf32, #tpu.memory_space<vmem>>, vector<4x4x32xf32>
    %82 = vector.extract_strided_slice %12 {offsets = [1, 3, 0], sizes = [1, 1, 32], strides = [1, 1, 1]} : vector<7x7x32xf32> to vector<1x1x32xf32>
    %83 = vector.shape_cast %82 : vector<1x1x32xf32> to vector<32xf32>
    %84 = vector.shape_cast %83 : vector<32xf32> to vector<1x1x32xf32>
    %85 = vector.broadcast %84 : vector<1x1x32xf32> to vector<4x4x32xf32>
    %86 = arith.mulf %81, %85 : vector<4x4x32xf32>
    %87 = arith.addf %80, %86 : vector<4x4x32xf32>
    %c1_50 = arith.constant 1 : index
    %c4_51 = arith.constant 4 : index
    %c0_52 = arith.constant 0 : index
    %88 = vector.load %arg12[%c1_50, %c4_51, %c0_52] : memref<10x10x32xf32, #tpu.memory_space<vmem>>, vector<4x4x32xf32>
    %89 = vector.extract_strided_slice %12 {offsets = [1, 4, 0], sizes = [1, 1, 32], strides = [1, 1, 1]} : vector<7x7x32xf32> to vector<1x1x32xf32>
    %90 = vector.shape_cast %89 : vector<1x1x32xf32> to vector<32xf32>
    %91 = vector.shape_cast %90 : vector<32xf32> to vector<1x1x32xf32>
    %92 = vector.broadcast %91 : vector<1x1x32xf32> to vector<4x4x32xf32>
    %93 = arith.mulf %88, %92 : vector<4x4x32xf32>
    %94 = arith.addf %87, %93 : vector<4x4x32xf32>
    %c1_53 = arith.constant 1 : index
    %c5_54 = arith.constant 5 : index
    %c0_55 = arith.constant 0 : index
    %95 = vector.load %arg12[%c1_53, %c5_54, %c0_55] : memref<10x10x32xf32, #tpu.memory_space<vmem>>, vector<4x4x32xf32>
    %96 = vector.extract_strided_slice %12 {offsets = [1, 5, 0], sizes = [1, 1, 32], strides = [1, 1, 1]} : vector<7x7x32xf32> to vector<1x1x32xf32>
    %97 = vector.shape_cast %96 : vector<1x1x32xf32> to vector<32xf32>
    %98 = vector.shape_cast %97 : vector<32xf32> to vector<1x1x32xf32>
    %99 = vector.broadcast %98 : vector<1x1x32xf32> to vector<4x4x32xf32>
    %100 = arith.mulf %95, %99 : vector<4x4x32xf32>
    %101 = arith.addf %94, %100 : vector<4x4x32xf32>
    %c1_56 = arith.constant 1 : index
    %c6_57 = arith.constant 6 : index
    %c0_58 = arith.constant 0 : index
    %102 = vector.load %arg12[%c1_56, %c6_57, %c0_58] : memref<10x10x32xf32, #tpu.memory_space<vmem>>, vector<4x4x32xf32>
    %103 = vector.extract_strided_slice %12 {offsets = [1, 6, 0], sizes = [1, 1, 32], strides = [1, 1, 1]} : vector<7x7x32xf32> to vector<1x1x32xf32>
    %104 = vector.shape_cast %103 : vector<1x1x32xf32> to vector<32xf32>
    %105 = vector.shape_cast %104 : vector<32xf32> to vector<1x1x32xf32>
    %106 = vector.broadcast %105 : vector<1x1x32xf32> to vector<4x4x32xf32>
    %107 = arith.mulf %102, %106 : vector<4x4x32xf32>
    %108 = arith.addf %101, %107 : vector<4x4x32xf32>
    %c2_59 = arith.constant 2 : index
    %c0_60 = arith.constant 0 : index
    %c0_61 = arith.constant 0 : index
    %109 = vector.load %arg12[%c2_59, %c0_60, %c0_61] : memref<10x10x32xf32, #tpu.memory_space<vmem>>, vector<4x4x32xf32>
    %110 = vector.extract_strided_slice %12 {offsets = [2, 0, 0], sizes = [1, 1, 32], strides = [1, 1, 1]} : vector<7x7x32xf32> to vector<1x1x32xf32>
    %111 = vector.shape_cast %110 : vector<1x1x32xf32> to vector<32xf32>
    %112 = vector.shape_cast %111 : vector<32xf32> to vector<1x1x32xf32>
    %113 = vector.broadcast %112 : vector<1x1x32xf32> to vector<4x4x32xf32>
    %114 = arith.mulf %109, %113 : vector<4x4x32xf32>
    %c2_62 = arith.constant 2 : index
    %c1_63 = arith.constant 1 : index
    %c0_64 = arith.constant 0 : index
    %115 = vector.load %arg12[%c2_62, %c1_63, %c0_64] : memref<10x10x32xf32, #tpu.memory_space<vmem>>, vector<4x4x32xf32>
    %116 = vector.extract_strided_slice %12 {offsets = [2, 1, 0], sizes = [1, 1, 32], strides = [1, 1, 1]} : vector<7x7x32xf32> to vector<1x1x32xf32>
    %117 = vector.shape_cast %116 : vector<1x1x32xf32> to vector<32xf32>
    %118 = vector.shape_cast %117 : vector<32xf32> to vector<1x1x32xf32>
    %119 = vector.broadcast %118 : vector<1x1x32xf32> to vector<4x4x32xf32>
    %120 = arith.mulf %115, %119 : vector<4x4x32xf32>
    %121 = arith.addf %114, %120 : vector<4x4x32xf32>
    %c2_65 = arith.constant 2 : index
    %c2_66 = arith.constant 2 : index
    %c0_67 = arith.constant 0 : index
    %122 = vector.load %arg12[%c2_65, %c2_66, %c0_67] : memref<10x10x32xf32, #tpu.memory_space<vmem>>, vector<4x4x32xf32>
    %123 = vector.extract_strided_slice %12 {offsets = [2, 2, 0], sizes = [1, 1, 32], strides = [1, 1, 1]} : vector<7x7x32xf32> to vector<1x1x32xf32>
    %124 = vector.shape_cast %123 : vector<1x1x32xf32> to vector<32xf32>
    %125 = vector.shape_cast %124 : vector<32xf32> to vector<1x1x32xf32>
    %126 = vector.broadcast %125 : vector<1x1x32xf32> to vector<4x4x32xf32>
    %127 = arith.mulf %122, %126 : vector<4x4x32xf32>
    %128 = arith.addf %121, %127 : vector<4x4x32xf32>
    %c2_68 = arith.constant 2 : index
    %c3_69 = arith.constant 3 : index
    %c0_70 = arith.constant 0 : index
    %129 = vector.load %arg12[%c2_68, %c3_69, %c0_70] : memref<10x10x32xf32, #tpu.memory_space<vmem>>, vector<4x4x32xf32>
    %130 = vector.extract_strided_slice %12 {offsets = [2, 3, 0], sizes = [1, 1, 32], strides = [1, 1, 1]} : vector<7x7x32xf32> to vector<1x1x32xf32>
    %131 = vector.shape_cast %130 : vector<1x1x32xf32> to vector<32xf32>
    %132 = vector.shape_cast %131 : vector<32xf32> to vector<1x1x32xf32>
    %133 = vector.broadcast %132 : vector<1x1x32xf32> to vector<4x4x32xf32>
    %134 = arith.mulf %129, %133 : vector<4x4x32xf32>
    %135 = arith.addf %128, %134 : vector<4x4x32xf32>
    %c2_71 = arith.constant 2 : index
    %c4_72 = arith.constant 4 : index
    %c0_73 = arith.constant 0 : index
    %136 = vector.load %arg12[%c2_71, %c4_72, %c0_73] : memref<10x10x32xf32, #tpu.memory_space<vmem>>, vector<4x4x32xf32>
    %137 = vector.extract_strided_slice %12 {offsets = [2, 4, 0], sizes = [1, 1, 32], strides = [1, 1, 1]} : vector<7x7x32xf32> to vector<1x1x32xf32>
    %138 = vector.shape_cast %137 : vector<1x1x32xf32> to vector<32xf32>
    %139 = vector.shape_cast %138 : vector<32xf32> to vector<1x1x32xf32>
    %140 = vector.broadcast %139 : vector<1x1x32xf32> to vector<4x4x32xf32>
    %141 = arith.mulf %136, %140 : vector<4x4x32xf32>
    %142 = arith.addf %135, %141 : vector<4x4x32xf32>
    %c2_74 = arith.constant 2 : index
    %c5_75 = arith.constant 5 : index
    %c0_76 = arith.constant 0 : index
    %143 = vector.load %arg12[%c2_74, %c5_75, %c0_76] : memref<10x10x32xf32, #tpu.memory_space<vmem>>, vector<4x4x32xf32>
    %144 = vector.extract_strided_slice %12 {offsets = [2, 5, 0], sizes = [1, 1, 32], strides = [1, 1, 1]} : vector<7x7x32xf32> to vector<1x1x32xf32>
    %145 = vector.shape_cast %144 : vector<1x1x32xf32> to vector<32xf32>
    %146 = vector.shape_cast %145 : vector<32xf32> to vector<1x1x32xf32>
    %147 = vector.broadcast %146 : vector<1x1x32xf32> to vector<4x4x32xf32>
    %148 = arith.mulf %143, %147 : vector<4x4x32xf32>
    %149 = arith.addf %142, %148 : vector<4x4x32xf32>
    %c2_77 = arith.constant 2 : index
    %c6_78 = arith.constant 6 : index
    %c0_79 = arith.constant 0 : index
    %150 = vector.load %arg12[%c2_77, %c6_78, %c0_79] : memref<10x10x32xf32, #tpu.memory_space<vmem>>, vector<4x4x32xf32>
    %151 = vector.extract_strided_slice %12 {offsets = [2, 6, 0], sizes = [1, 1, 32], strides = [1, 1, 1]} : vector<7x7x32xf32> to vector<1x1x32xf32>
    %152 = vector.shape_cast %151 : vector<1x1x32xf32> to vector<32xf32>
    %153 = vector.shape_cast %152 : vector<32xf32> to vector<1x1x32xf32>
    %154 = vector.broadcast %153 : vector<1x1x32xf32> to vector<4x4x32xf32>
    %155 = arith.mulf %150, %154 : vector<4x4x32xf32>
    %156 = arith.addf %149, %155 : vector<4x4x32xf32>
    %c3_80 = arith.constant 3 : index
    %c0_81 = arith.constant 0 : index
    %c0_82 = arith.constant 0 : index
    %157 = vector.load %arg12[%c3_80, %c0_81, %c0_82] : memref<10x10x32xf32, #tpu.memory_space<vmem>>, vector<4x4x32xf32>
    %158 = vector.extract_strided_slice %12 {offsets = [3, 0, 0], sizes = [1, 1, 32], strides = [1, 1, 1]} : vector<7x7x32xf32> to vector<1x1x32xf32>
    %159 = vector.shape_cast %158 : vector<1x1x32xf32> to vector<32xf32>
    %160 = vector.shape_cast %159 : vector<32xf32> to vector<1x1x32xf32>
    %161 = vector.broadcast %160 : vector<1x1x32xf32> to vector<4x4x32xf32>
    %162 = arith.mulf %157, %161 : vector<4x4x32xf32>
    %c3_83 = arith.constant 3 : index
    %c1_84 = arith.constant 1 : index
    %c0_85 = arith.constant 0 : index
    %163 = vector.load %arg12[%c3_83, %c1_84, %c0_85] : memref<10x10x32xf32, #tpu.memory_space<vmem>>, vector<4x4x32xf32>
    %164 = vector.extract_strided_slice %12 {offsets = [3, 1, 0], sizes = [1, 1, 32], strides = [1, 1, 1]} : vector<7x7x32xf32> to vector<1x1x32xf32>
    %165 = vector.shape_cast %164 : vector<1x1x32xf32> to vector<32xf32>
    %166 = vector.shape_cast %165 : vector<32xf32> to vector<1x1x32xf32>
    %167 = vector.broadcast %166 : vector<1x1x32xf32> to vector<4x4x32xf32>
    %168 = arith.mulf %163, %167 : vector<4x4x32xf32>
    %169 = arith.addf %162, %168 : vector<4x4x32xf32>
    %c3_86 = arith.constant 3 : index
    %c2_87 = arith.constant 2 : index
    %c0_88 = arith.constant 0 : index
    %170 = vector.load %arg12[%c3_86, %c2_87, %c0_88] : memref<10x10x32xf32, #tpu.memory_space<vmem>>, vector<4x4x32xf32>
    %171 = vector.extract_strided_slice %12 {offsets = [3, 2, 0], sizes = [1, 1, 32], strides = [1, 1, 1]} : vector<7x7x32xf32> to vector<1x1x32xf32>
    %172 = vector.shape_cast %171 : vector<1x1x32xf32> to vector<32xf32>
    %173 = vector.shape_cast %172 : vector<32xf32> to vector<1x1x32xf32>
    %174 = vector.broadcast %173 : vector<1x1x32xf32> to vector<4x4x32xf32>
    %175 = arith.mulf %170, %174 : vector<4x4x32xf32>
    %176 = arith.addf %169, %175 : vector<4x4x32xf32>
    %c3_89 = arith.constant 3 : index
    %c3_90 = arith.constant 3 : index
    %c0_91 = arith.constant 0 : index
    %177 = vector.load %arg12[%c3_89, %c3_90, %c0_91] : memref<10x10x32xf32, #tpu.memory_space<vmem>>, vector<4x4x32xf32>
    %178 = vector.extract_strided_slice %12 {offsets = [3, 3, 0], sizes = [1, 1, 32], strides = [1, 1, 1]} : vector<7x7x32xf32> to vector<1x1x32xf32>
    %179 = vector.shape_cast %178 : vector<1x1x32xf32> to vector<32xf32>
    %180 = vector.shape_cast %179 : vector<32xf32> to vector<1x1x32xf32>
    %181 = vector.broadcast %180 : vector<1x1x32xf32> to vector<4x4x32xf32>
    %182 = arith.mulf %177, %181 : vector<4x4x32xf32>
    %183 = arith.addf %176, %182 : vector<4x4x32xf32>
    %c3_92 = arith.constant 3 : index
    %c4_93 = arith.constant 4 : index
    %c0_94 = arith.constant 0 : index
    %184 = vector.load %arg12[%c3_92, %c4_93, %c0_94] : memref<10x10x32xf32, #tpu.memory_space<vmem>>, vector<4x4x32xf32>
    %185 = vector.extract_strided_slice %12 {offsets = [3, 4, 0], sizes = [1, 1, 32], strides = [1, 1, 1]} : vector<7x7x32xf32> to vector<1x1x32xf32>
    %186 = vector.shape_cast %185 : vector<1x1x32xf32> to vector<32xf32>
    %187 = vector.shape_cast %186 : vector<32xf32> to vector<1x1x32xf32>
    %188 = vector.broadcast %187 : vector<1x1x32xf32> to vector<4x4x32xf32>
    %189 = arith.mulf %184, %188 : vector<4x4x32xf32>
    %190 = arith.addf %183, %189 : vector<4x4x32xf32>
    %c3_95 = arith.constant 3 : index
    %c5_96 = arith.constant 5 : index
    %c0_97 = arith.constant 0 : index
    %191 = vector.load %arg12[%c3_95, %c5_96, %c0_97] : memref<10x10x32xf32, #tpu.memory_space<vmem>>, vector<4x4x32xf32>
    %192 = vector.extract_strided_slice %12 {offsets = [3, 5, 0], sizes = [1, 1, 32], strides = [1, 1, 1]} : vector<7x7x32xf32> to vector<1x1x32xf32>
    %193 = vector.shape_cast %192 : vector<1x1x32xf32> to vector<32xf32>
    %194 = vector.shape_cast %193 : vector<32xf32> to vector<1x1x32xf32>
    %195 = vector.broadcast %194 : vector<1x1x32xf32> to vector<4x4x32xf32>
    %196 = arith.mulf %191, %195 : vector<4x4x32xf32>
    %197 = arith.addf %190, %196 : vector<4x4x32xf32>
    %c3_98 = arith.constant 3 : index
    %c6_99 = arith.constant 6 : index
    %c0_100 = arith.constant 0 : index
    %198 = vector.load %arg12[%c3_98, %c6_99, %c0_100] : memref<10x10x32xf32, #tpu.memory_space<vmem>>, vector<4x4x32xf32>
    %199 = vector.extract_strided_slice %12 {offsets = [3, 6, 0], sizes = [1, 1, 32], strides = [1, 1, 1]} : vector<7x7x32xf32> to vector<1x1x32xf32>
    %200 = vector.shape_cast %199 : vector<1x1x32xf32> to vector<32xf32>
    %201 = vector.shape_cast %200 : vector<32xf32> to vector<1x1x32xf32>
    %202 = vector.broadcast %201 : vector<1x1x32xf32> to vector<4x4x32xf32>
    %203 = arith.mulf %198, %202 : vector<4x4x32xf32>
    %204 = arith.addf %197, %203 : vector<4x4x32xf32>
    %c4_101 = arith.constant 4 : index
    %c0_102 = arith.constant 0 : index
    %c0_103 = arith.constant 0 : index
    %205 = vector.load %arg12[%c4_101, %c0_102, %c0_103] : memref<10x10x32xf32, #tpu.memory_space<vmem>>, vector<4x4x32xf32>
    %206 = vector.extract_strided_slice %12 {offsets = [4, 0, 0], sizes = [1, 1, 32], strides = [1, 1, 1]} : vector<7x7x32xf32> to vector<1x1x32xf32>
    %207 = vector.shape_cast %206 : vector<1x1x32xf32> to vector<32xf32>
    %208 = vector.shape_cast %207 : vector<32xf32> to vector<1x1x32xf32>
    %209 = vector.broadcast %208 : vector<1x1x32xf32> to vector<4x4x32xf32>
    %210 = arith.mulf %205, %209 : vector<4x4x32xf32>
    %c4_104 = arith.constant 4 : index
    %c1_105 = arith.constant 1 : index
    %c0_106 = arith.constant 0 : index
    %211 = vector.load %arg12[%c4_104, %c1_105, %c0_106] : memref<10x10x32xf32, #tpu.memory_space<vmem>>, vector<4x4x32xf32>
    %212 = vector.extract_strided_slice %12 {offsets = [4, 1, 0], sizes = [1, 1, 32], strides = [1, 1, 1]} : vector<7x7x32xf32> to vector<1x1x32xf32>
    %213 = vector.shape_cast %212 : vector<1x1x32xf32> to vector<32xf32>
    %214 = vector.shape_cast %213 : vector<32xf32> to vector<1x1x32xf32>
    %215 = vector.broadcast %214 : vector<1x1x32xf32> to vector<4x4x32xf32>
    %216 = arith.mulf %211, %215 : vector<4x4x32xf32>
    %217 = arith.addf %210, %216 : vector<4x4x32xf32>
    %c4_107 = arith.constant 4 : index
    %c2_108 = arith.constant 2 : index
    %c0_109 = arith.constant 0 : index
    %218 = vector.load %arg12[%c4_107, %c2_108, %c0_109] : memref<10x10x32xf32, #tpu.memory_space<vmem>>, vector<4x4x32xf32>
    %219 = vector.extract_strided_slice %12 {offsets = [4, 2, 0], sizes = [1, 1, 32], strides = [1, 1, 1]} : vector<7x7x32xf32> to vector<1x1x32xf32>
    %220 = vector.shape_cast %219 : vector<1x1x32xf32> to vector<32xf32>
    %221 = vector.shape_cast %220 : vector<32xf32> to vector<1x1x32xf32>
    %222 = vector.broadcast %221 : vector<1x1x32xf32> to vector<4x4x32xf32>
    %223 = arith.mulf %218, %222 : vector<4x4x32xf32>
    %224 = arith.addf %217, %223 : vector<4x4x32xf32>
    %c4_110 = arith.constant 4 : index
    %c3_111 = arith.constant 3 : index
    %c0_112 = arith.constant 0 : index
    %225 = vector.load %arg12[%c4_110, %c3_111, %c0_112] : memref<10x10x32xf32, #tpu.memory_space<vmem>>, vector<4x4x32xf32>
    %226 = vector.extract_strided_slice %12 {offsets = [4, 3, 0], sizes = [1, 1, 32], strides = [1, 1, 1]} : vector<7x7x32xf32> to vector<1x1x32xf32>
    %227 = vector.shape_cast %226 : vector<1x1x32xf32> to vector<32xf32>
    %228 = vector.shape_cast %227 : vector<32xf32> to vector<1x1x32xf32>
    %229 = vector.broadcast %228 : vector<1x1x32xf32> to vector<4x4x32xf32>
    %230 = arith.mulf %225, %229 : vector<4x4x32xf32>
    %231 = arith.addf %224, %230 : vector<4x4x32xf32>
    %c4_113 = arith.constant 4 : index
    %c4_114 = arith.constant 4 : index
    %c0_115 = arith.constant 0 : index
    %232 = vector.load %arg12[%c4_113, %c4_114, %c0_115] : memref<10x10x32xf32, #tpu.memory_space<vmem>>, vector<4x4x32xf32>
    %233 = vector.extract_strided_slice %12 {offsets = [4, 4, 0], sizes = [1, 1, 32], strides = [1, 1, 1]} : vector<7x7x32xf32> to vector<1x1x32xf32>
    %234 = vector.shape_cast %233 : vector<1x1x32xf32> to vector<32xf32>
    %235 = vector.shape_cast %234 : vector<32xf32> to vector<1x1x32xf32>
    %236 = vector.broadcast %235 : vector<1x1x32xf32> to vector<4x4x32xf32>
    %237 = arith.mulf %232, %236 : vector<4x4x32xf32>
    %238 = arith.addf %231, %237 : vector<4x4x32xf32>
    %c4_116 = arith.constant 4 : index
    %c5_117 = arith.constant 5 : index
    %c0_118 = arith.constant 0 : index
    %239 = vector.load %arg12[%c4_116, %c5_117, %c0_118] : memref<10x10x32xf32, #tpu.memory_space<vmem>>, vector<4x4x32xf32>
    %240 = vector.extract_strided_slice %12 {offsets = [4, 5, 0], sizes = [1, 1, 32], strides = [1, 1, 1]} : vector<7x7x32xf32> to vector<1x1x32xf32>
    %241 = vector.shape_cast %240 : vector<1x1x32xf32> to vector<32xf32>
    %242 = vector.shape_cast %241 : vector<32xf32> to vector<1x1x32xf32>
    %243 = vector.broadcast %242 : vector<1x1x32xf32> to vector<4x4x32xf32>
    %244 = arith.mulf %239, %243 : vector<4x4x32xf32>
    %245 = arith.addf %238, %244 : vector<4x4x32xf32>
    %c4_119 = arith.constant 4 : index
    %c6_120 = arith.constant 6 : index
    %c0_121 = arith.constant 0 : index
    %246 = vector.load %arg12[%c4_119, %c6_120, %c0_121] : memref<10x10x32xf32, #tpu.memory_space<vmem>>, vector<4x4x32xf32>
    %247 = vector.extract_strided_slice %12 {offsets = [4, 6, 0], sizes = [1, 1, 32], strides = [1, 1, 1]} : vector<7x7x32xf32> to vector<1x1x32xf32>
    %248 = vector.shape_cast %247 : vector<1x1x32xf32> to vector<32xf32>
    %249 = vector.shape_cast %248 : vector<32xf32> to vector<1x1x32xf32>
    %250 = vector.broadcast %249 : vector<1x1x32xf32> to vector<4x4x32xf32>
    %251 = arith.mulf %246, %250 : vector<4x4x32xf32>
    %252 = arith.addf %245, %251 : vector<4x4x32xf32>
    %c5_122 = arith.constant 5 : index
    %c0_123 = arith.constant 0 : index
    %c0_124 = arith.constant 0 : index
    %253 = vector.load %arg12[%c5_122, %c0_123, %c0_124] : memref<10x10x32xf32, #tpu.memory_space<vmem>>, vector<4x4x32xf32>
    %254 = vector.extract_strided_slice %12 {offsets = [5, 0, 0], sizes = [1, 1, 32], strides = [1, 1, 1]} : vector<7x7x32xf32> to vector<1x1x32xf32>
    %255 = vector.shape_cast %254 : vector<1x1x32xf32> to vector<32xf32>
    %256 = vector.shape_cast %255 : vector<32xf32> to vector<1x1x32xf32>
    %257 = vector.broadcast %256 : vector<1x1x32xf32> to vector<4x4x32xf32>
    %258 = arith.mulf %253, %257 : vector<4x4x32xf32>
    %c5_125 = arith.constant 5 : index
    %c1_126 = arith.constant 1 : index
    %c0_127 = arith.constant 0 : index
    %259 = vector.load %arg12[%c5_125, %c1_126, %c0_127] : memref<10x10x32xf32, #tpu.memory_space<vmem>>, vector<4x4x32xf32>
    %260 = vector.extract_strided_slice %12 {offsets = [5, 1, 0], sizes = [1, 1, 32], strides = [1, 1, 1]} : vector<7x7x32xf32> to vector<1x1x32xf32>
    %261 = vector.shape_cast %260 : vector<1x1x32xf32> to vector<32xf32>
    %262 = vector.shape_cast %261 : vector<32xf32> to vector<1x1x32xf32>
    %263 = vector.broadcast %262 : vector<1x1x32xf32> to vector<4x4x32xf32>
    %264 = arith.mulf %259, %263 : vector<4x4x32xf32>
    %265 = arith.addf %258, %264 : vector<4x4x32xf32>
    %c5_128 = arith.constant 5 : index
    %c2_129 = arith.constant 2 : index
    %c0_130 = arith.constant 0 : index
    %266 = vector.load %arg12[%c5_128, %c2_129, %c0_130] : memref<10x10x32xf32, #tpu.memory_space<vmem>>, vector<4x4x32xf32>
    %267 = vector.extract_strided_slice %12 {offsets = [5, 2, 0], sizes = [1, 1, 32], strides = [1, 1, 1]} : vector<7x7x32xf32> to vector<1x1x32xf32>
    %268 = vector.shape_cast %267 : vector<1x1x32xf32> to vector<32xf32>
    %269 = vector.shape_cast %268 : vector<32xf32> to vector<1x1x32xf32>
    %270 = vector.broadcast %269 : vector<1x1x32xf32> to vector<4x4x32xf32>
    %271 = arith.mulf %266, %270 : vector<4x4x32xf32>
    %272 = arith.addf %265, %271 : vector<4x4x32xf32>
    %c5_131 = arith.constant 5 : index
    %c3_132 = arith.constant 3 : index
    %c0_133 = arith.constant 0 : index
    %273 = vector.load %arg12[%c5_131, %c3_132, %c0_133] : memref<10x10x32xf32, #tpu.memory_space<vmem>>, vector<4x4x32xf32>
    %274 = vector.extract_strided_slice %12 {offsets = [5, 3, 0], sizes = [1, 1, 32], strides = [1, 1, 1]} : vector<7x7x32xf32> to vector<1x1x32xf32>
    %275 = vector.shape_cast %274 : vector<1x1x32xf32> to vector<32xf32>
    %276 = vector.shape_cast %275 : vector<32xf32> to vector<1x1x32xf32>
    %277 = vector.broadcast %276 : vector<1x1x32xf32> to vector<4x4x32xf32>
    %278 = arith.mulf %273, %277 : vector<4x4x32xf32>
    %279 = arith.addf %272, %278 : vector<4x4x32xf32>
    %c5_134 = arith.constant 5 : index
    %c4_135 = arith.constant 4 : index
    %c0_136 = arith.constant 0 : index
    %280 = vector.load %arg12[%c5_134, %c4_135, %c0_136] : memref<10x10x32xf32, #tpu.memory_space<vmem>>, vector<4x4x32xf32>
    %281 = vector.extract_strided_slice %12 {offsets = [5, 4, 0], sizes = [1, 1, 32], strides = [1, 1, 1]} : vector<7x7x32xf32> to vector<1x1x32xf32>
    %282 = vector.shape_cast %281 : vector<1x1x32xf32> to vector<32xf32>
    %283 = vector.shape_cast %282 : vector<32xf32> to vector<1x1x32xf32>
    %284 = vector.broadcast %283 : vector<1x1x32xf32> to vector<4x4x32xf32>
    %285 = arith.mulf %280, %284 : vector<4x4x32xf32>
    %286 = arith.addf %279, %285 : vector<4x4x32xf32>
    %c5_137 = arith.constant 5 : index
    %c5_138 = arith.constant 5 : index
    %c0_139 = arith.constant 0 : index
    %287 = vector.load %arg12[%c5_137, %c5_138, %c0_139] : memref<10x10x32xf32, #tpu.memory_space<vmem>>, vector<4x4x32xf32>
    %288 = vector.extract_strided_slice %12 {offsets = [5, 5, 0], sizes = [1, 1, 32], strides = [1, 1, 1]} : vector<7x7x32xf32> to vector<1x1x32xf32>
    %289 = vector.shape_cast %288 : vector<1x1x32xf32> to vector<32xf32>
    %290 = vector.shape_cast %289 : vector<32xf32> to vector<1x1x32xf32>
    %291 = vector.broadcast %290 : vector<1x1x32xf32> to vector<4x4x32xf32>
    %292 = arith.mulf %287, %291 : vector<4x4x32xf32>
    %293 = arith.addf %286, %292 : vector<4x4x32xf32>
    %c5_140 = arith.constant 5 : index
    %c6_141 = arith.constant 6 : index
    %c0_142 = arith.constant 0 : index
    %294 = vector.load %arg12[%c5_140, %c6_141, %c0_142] : memref<10x10x32xf32, #tpu.memory_space<vmem>>, vector<4x4x32xf32>
    %295 = vector.extract_strided_slice %12 {offsets = [5, 6, 0], sizes = [1, 1, 32], strides = [1, 1, 1]} : vector<7x7x32xf32> to vector<1x1x32xf32>
    %296 = vector.shape_cast %295 : vector<1x1x32xf32> to vector<32xf32>
    %297 = vector.shape_cast %296 : vector<32xf32> to vector<1x1x32xf32>
    %298 = vector.broadcast %297 : vector<1x1x32xf32> to vector<4x4x32xf32>
    %299 = arith.mulf %294, %298 : vector<4x4x32xf32>
    %300 = arith.addf %293, %299 : vector<4x4x32xf32>
    %c6_143 = arith.constant 6 : index
    %c0_144 = arith.constant 0 : index
    %c0_145 = arith.constant 0 : index
    %301 = vector.load %arg12[%c6_143, %c0_144, %c0_145] : memref<10x10x32xf32, #tpu.memory_space<vmem>>, vector<4x4x32xf32>
    %302 = vector.extract_strided_slice %12 {offsets = [6, 0, 0], sizes = [1, 1, 32], strides = [1, 1, 1]} : vector<7x7x32xf32> to vector<1x1x32xf32>
    %303 = vector.shape_cast %302 : vector<1x1x32xf32> to vector<32xf32>
    %304 = vector.shape_cast %303 : vector<32xf32> to vector<1x1x32xf32>
    %305 = vector.broadcast %304 : vector<1x1x32xf32> to vector<4x4x32xf32>
    %306 = arith.mulf %301, %305 : vector<4x4x32xf32>
    %c6_146 = arith.constant 6 : index
    %c1_147 = arith.constant 1 : index
    %c0_148 = arith.constant 0 : index
    %307 = vector.load %arg12[%c6_146, %c1_147, %c0_148] : memref<10x10x32xf32, #tpu.memory_space<vmem>>, vector<4x4x32xf32>
    %308 = vector.extract_strided_slice %12 {offsets = [6, 1, 0], sizes = [1, 1, 32], strides = [1, 1, 1]} : vector<7x7x32xf32> to vector<1x1x32xf32>
    %309 = vector.shape_cast %308 : vector<1x1x32xf32> to vector<32xf32>
    %310 = vector.shape_cast %309 : vector<32xf32> to vector<1x1x32xf32>
    %311 = vector.broadcast %310 : vector<1x1x32xf32> to vector<4x4x32xf32>
    %312 = arith.mulf %307, %311 : vector<4x4x32xf32>
    %313 = arith.addf %306, %312 : vector<4x4x32xf32>
    %c6_149 = arith.constant 6 : index
    %c2_150 = arith.constant 2 : index
    %c0_151 = arith.constant 0 : index
    %314 = vector.load %arg12[%c6_149, %c2_150, %c0_151] : memref<10x10x32xf32, #tpu.memory_space<vmem>>, vector<4x4x32xf32>
    %315 = vector.extract_strided_slice %12 {offsets = [6, 2, 0], sizes = [1, 1, 32], strides = [1, 1, 1]} : vector<7x7x32xf32> to vector<1x1x32xf32>
    %316 = vector.shape_cast %315 : vector<1x1x32xf32> to vector<32xf32>
    %317 = vector.shape_cast %316 : vector<32xf32> to vector<1x1x32xf32>
    %318 = vector.broadcast %317 : vector<1x1x32xf32> to vector<4x4x32xf32>
    %319 = arith.mulf %314, %318 : vector<4x4x32xf32>
    %320 = arith.addf %313, %319 : vector<4x4x32xf32>
    %c6_152 = arith.constant 6 : index
    %c3_153 = arith.constant 3 : index
    %c0_154 = arith.constant 0 : index
    %321 = vector.load %arg12[%c6_152, %c3_153, %c0_154] : memref<10x10x32xf32, #tpu.memory_space<vmem>>, vector<4x4x32xf32>
    %322 = vector.extract_strided_slice %12 {offsets = [6, 3, 0], sizes = [1, 1, 32], strides = [1, 1, 1]} : vector<7x7x32xf32> to vector<1x1x32xf32>
    %323 = vector.shape_cast %322 : vector<1x1x32xf32> to vector<32xf32>
    %324 = vector.shape_cast %323 : vector<32xf32> to vector<1x1x32xf32>
    %325 = vector.broadcast %324 : vector<1x1x32xf32> to vector<4x4x32xf32>
    %326 = arith.mulf %321, %325 : vector<4x4x32xf32>
    %327 = arith.addf %320, %326 : vector<4x4x32xf32>
    %c6_155 = arith.constant 6 : index
    %c4_156 = arith.constant 4 : index
    %c0_157 = arith.constant 0 : index
    %328 = vector.load %arg12[%c6_155, %c4_156, %c0_157] : memref<10x10x32xf32, #tpu.memory_space<vmem>>, vector<4x4x32xf32>
    %329 = vector.extract_strided_slice %12 {offsets = [6, 4, 0], sizes = [1, 1, 32], strides = [1, 1, 1]} : vector<7x7x32xf32> to vector<1x1x32xf32>
    %330 = vector.shape_cast %329 : vector<1x1x32xf32> to vector<32xf32>
    %331 = vector.shape_cast %330 : vector<32xf32> to vector<1x1x32xf32>
    %332 = vector.broadcast %331 : vector<1x1x32xf32> to vector<4x4x32xf32>
    %333 = arith.mulf %328, %332 : vector<4x4x32xf32>
    %334 = arith.addf %327, %333 : vector<4x4x32xf32>
    %c6_158 = arith.constant 6 : index
    %c5_159 = arith.constant 5 : index
    %c0_160 = arith.constant 0 : index
    %335 = vector.load %arg12[%c6_158, %c5_159, %c0_160] : memref<10x10x32xf32, #tpu.memory_space<vmem>>, vector<4x4x32xf32>
    %336 = vector.extract_strided_slice %12 {offsets = [6, 5, 0], sizes = [1, 1, 32], strides = [1, 1, 1]} : vector<7x7x32xf32> to vector<1x1x32xf32>
    %337 = vector.shape_cast %336 : vector<1x1x32xf32> to vector<32xf32>
    %338 = vector.shape_cast %337 : vector<32xf32> to vector<1x1x32xf32>
    %339 = vector.broadcast %338 : vector<1x1x32xf32> to vector<4x4x32xf32>
    %340 = arith.mulf %335, %339 : vector<4x4x32xf32>
    %341 = arith.addf %334, %340 : vector<4x4x32xf32>
    %c6_161 = arith.constant 6 : index
    %c6_162 = arith.constant 6 : index
    %c0_163 = arith.constant 0 : index
    %342 = vector.load %arg12[%c6_161, %c6_162, %c0_163] : memref<10x10x32xf32, #tpu.memory_space<vmem>>, vector<4x4x32xf32>
    %343 = vector.extract_strided_slice %12 {offsets = [6, 6, 0], sizes = [1, 1, 32], strides = [1, 1, 1]} : vector<7x7x32xf32> to vector<1x1x32xf32>
    %344 = vector.shape_cast %343 : vector<1x1x32xf32> to vector<32xf32>
    %345 = vector.shape_cast %344 : vector<32xf32> to vector<1x1x32xf32>
    %346 = vector.broadcast %345 : vector<1x1x32xf32> to vector<4x4x32xf32>
    %347 = arith.mulf %342, %346 : vector<4x4x32xf32>
    %348 = arith.addf %341, %347 : vector<4x4x32xf32>
    %349 = arith.addf %60, %108 : vector<4x4x32xf32>
    %350 = arith.addf %156, %204 : vector<4x4x32xf32>
    %351 = arith.addf %349, %350 : vector<4x4x32xf32>
    %352 = arith.addf %252, %300 : vector<4x4x32xf32>
    %353 = arith.addf %352, %348 : vector<4x4x32xf32>
    %354 = arith.addf %351, %353 : vector<4x4x32xf32>
    %355 = vector.shape_cast %354 : vector<4x4x32xf32> to vector<16x32xf32>
    %c0_164 = arith.constant 0 : index
    %c0_165 = arith.constant 0 : index
    %356 = vector.load %arg3[%c0_164, %c0_165] : memref<1x32xf32, #tpu.memory_space<vmem>>, vector<1x32xf32>
    %357 = vector.broadcast %356 : vector<1x32xf32> to vector<16x32xf32>
    %358 = arith.addf %355, %357 : vector<16x32xf32>
    %c0_166 = arith.constant 0 : index
    %c0_167 = arith.constant 0 : index
    %359 = vector.load %arg4[%c0_166, %c0_167] : memref<1x32xf32, #tpu.memory_space<vmem>>, vector<1x32xf32>
    %c0_168 = arith.constant 0 : index
    %c0_169 = arith.constant 0 : index
    %360 = vector.load %arg5[%c0_168, %c0_169] : memref<1x32xf32, #tpu.memory_space<vmem>>, vector<1x32xf32>
    %cst_170 = arith.constant dense<0.000000e+00> : vector<16xf32>
    %361 = vector.multi_reduction <add>, %358, %cst_170 [1] : vector<16x32xf32> to vector<16xf32>
    %362 = vector.shape_cast %361 : vector<16xf32> to vector<16x1xf32>
    %cst_171 = arith.constant 3.200000e+01 : f32
    %363 = vector.broadcast %cst_171 : f32 to vector<16x1xf32>
    %364 = arith.divf %362, %363 : vector<16x1xf32>
    %365 = vector.broadcast %364 : vector<16x1xf32> to vector<16x32xf32>
    %366 = arith.subf %358, %365 : vector<16x32xf32>
    %367 = arith.mulf %366, %366 : vector<16x32xf32>
    %cst_172 = arith.constant dense<0.000000e+00> : vector<16xf32>
    %368 = vector.multi_reduction <add>, %367, %cst_172 [1] : vector<16x32xf32> to vector<16xf32>
    %369 = vector.shape_cast %368 : vector<16xf32> to vector<16x1xf32>
    %cst_173 = arith.constant 3.200000e+01 : f32
    %370 = vector.broadcast %cst_173 : f32 to vector<16x1xf32>
    %371 = arith.divf %369, %370 : vector<16x1xf32>
    %372 = vector.broadcast %364 : vector<16x1xf32> to vector<16x32xf32>
    %373 = arith.subf %358, %372 : vector<16x32xf32>
    %cst_174 = arith.constant 9.99999997E-7 : f32
    %374 = vector.broadcast %cst_174 : f32 to vector<16x1xf32>
    %375 = arith.addf %371, %374 : vector<16x1xf32>
    %376 = math.rsqrt %375 : vector<16x1xf32>
    %377 = vector.broadcast %376 : vector<16x1xf32> to vector<16x32xf32>
    %378 = arith.mulf %373, %377 : vector<16x32xf32>
    %379 = vector.broadcast %359 : vector<1x32xf32> to vector<16x32xf32>
    %380 = arith.mulf %378, %379 : vector<16x32xf32>
    %381 = vector.broadcast %360 : vector<1x32xf32> to vector<16x32xf32>
    %382 = arith.addf %380, %381 : vector<16x32xf32>
    %383 = arith.truncf %382 : vector<16x32xf32> to vector<16x32xbf16>
    %c0_175 = arith.constant 0 : index
    %c0_176 = arith.constant 0 : index
    %384 = vector.load %arg6[%c0_175, %c0_176] : memref<32x128xbf16, #tpu.memory_space<vmem>>, vector<32x128xbf16>
    %cst_177 = arith.constant dense<0.000000e+00> : vector<16x128xf32>
    %385 = tpu.matmul %383, %384, %cst_177 {dimension_numbers = #tpu.dot_dimension_numbers<[1], [0], [0], [1], [0, 0, 1, 1], [], []>} : vector<16x32xbf16>, vector<32x128xbf16>, vector<16x128xf32> -> vector<16x128xf32>
    %c0_178 = arith.constant 0 : index
    %c0_179 = arith.constant 0 : index
    %386 = vector.load %arg7[%c0_178, %c0_179] : memref<1x128xf32, #tpu.memory_space<vmem>>, vector<1x128xf32>
    %387 = vector.broadcast %386 : vector<1x128xf32> to vector<16x128xf32>
    %388 = arith.addf %385, %387 : vector<16x128xf32>
    %389 = arith.mulf %388, %388 : vector<16x128xf32>
    %390 = arith.mulf %388, %389 : vector<16x128xf32>
    %cst_180 = arith.constant 4.471500e-02 : f32
    %391 = vector.broadcast %cst_180 : f32 to vector<16x128xf32>
    %392 = arith.mulf %391, %390 : vector<16x128xf32>
    %393 = arith.addf %388, %392 : vector<16x128xf32>
    %cst_181 = arith.constant 0.797884583 : f32
    %394 = vector.broadcast %cst_181 : f32 to vector<16x128xf32>
    %395 = arith.mulf %394, %393 : vector<16x128xf32>
    %396 = math.tanh %395 : vector<16x128xf32>
    %cst_182 = arith.constant 1.000000e+00 : f32
    %397 = vector.broadcast %cst_182 : f32 to vector<16x128xf32>
    %398 = arith.addf %397, %396 : vector<16x128xf32>
    %cst_183 = arith.constant 5.000000e-01 : f32
    %399 = vector.broadcast %cst_183 : f32 to vector<16x128xf32>
    %400 = arith.mulf %399, %398 : vector<16x128xf32>
    %401 = arith.mulf %388, %400 : vector<16x128xf32>
    %402 = arith.truncf %401 : vector<16x128xf32> to vector<16x128xbf16>
    %c0_184 = arith.constant 0 : index
    %c0_185 = arith.constant 0 : index
    %403 = vector.load %arg8[%c0_184, %c0_185] : memref<128x32xbf16, #tpu.memory_space<vmem>>, vector<128x32xbf16>
    %cst_186 = arith.constant dense<0.000000e+00> : vector<16x32xf32>
    %404 = tpu.matmul %402, %403, %cst_186 {dimension_numbers = #tpu.dot_dimension_numbers<[1], [0], [0], [1], [0, 0, 1, 1], [], []>} : vector<16x128xbf16>, vector<128x32xbf16>, vector<16x32xf32> -> vector<16x32xf32>
    %c0_187 = arith.constant 0 : index
    %c0_188 = arith.constant 0 : index
    %405 = vector.load %arg9[%c0_187, %c0_188] : memref<1x32xf32, #tpu.memory_space<vmem>>, vector<1x32xf32>
    %406 = vector.broadcast %405 : vector<1x32xf32> to vector<16x32xf32>
    %407 = arith.addf %404, %406 : vector<16x32xf32>
    %408 = vector.shape_cast %2 : vector<4x4x32xf32> to vector<16x32xf32>
    %c0_189 = arith.constant 0 : index
    %c0_190 = arith.constant 0 : index
    %409 = vector.load %arg10[%c0_189, %c0_190] : memref<1x32xf32, #tpu.memory_space<vmem>>, vector<1x32xf32>
    %410 = vector.broadcast %409 : vector<1x32xf32> to vector<16x32xf32>
    %411 = arith.mulf %410, %407 : vector<16x32xf32>
    %412 = arith.addf %408, %411 : vector<16x32xf32>
    %413 = vector.shape_cast %412 : vector<16x32xf32> to vector<4x4x32xf32>
    %414 = arith.truncf %413 : vector<4x4x32xf32> to vector<4x4x32xbf16>
    %c0_191 = arith.constant 0 : index
    %c0_192 = arith.constant 0 : index
    %c0_193 = arith.constant 0 : index
    %c0_194 = arith.constant 0 : index
    %415 = vector.load %arg11[%c0_191, %c0_192, %c0_193, %c0_194] : memref<1x4x4x32xbf16, #tpu.memory_space<vmem>>, vector<1x4x4x32xbf16>
    %416 = vector.shape_cast %415 : vector<1x4x4x32xbf16> to vector<4x4x32xbf16>
    %417 = vector.shape_cast %414 : vector<4x4x32xbf16> to vector<1x4x4x32xbf16>
    tpu.vector_store %arg11[%c0_191, %c0_192, %c0_193, %c0_194], %417 {strides = array<i32>} : memref<1x4x4x32xbf16, #tpu.memory_space<vmem>>, vector<1x4x4x32xbf16>,
    return
  }
  func.func @transform_0(%arg0: i32) -> (i32, i32, i32, i32) {
    %c0_i32 = arith.constant 0 : i32
    %c0_i32_0 = arith.constant 0 : i32
    %c0_i32_1 = arith.constant 0 : i32
    %c0_i32_2 = arith.constant 0 : i32
    return %arg0, %c0_i32, %c0_i32_0, %c0_i32_1 : i32, i32, i32, i32
  }
  func.func @transform_1(%arg0: i32) -> (i32, i32, i32) {
    %c0_i32 = arith.constant 0 : i32
    %c0_i32_0 = arith.constant 0 : i32
    %c0_i32_1 = arith.constant 0 : i32
    %c0_i32_2 = arith.constant 0 : i32
    return %c0_i32, %c0_i32_0, %c0_i32_1 : i32, i32, i32
  }
  func.func @transform_2(%arg0: i32) -> (i32, i32) {
    %c0_i32 = arith.constant 0 : i32
    %c0_i32_0 = arith.constant 0 : i32
    %c0_i32_1 = arith.constant 0 : i32
    return %c0_i32, %c0_i32_0 : i32, i32
  }
  func.func @transform_3(%arg0: i32) -> (i32, i32) {
    %c0_i32 = arith.constant 0 : i32
    %c0_i32_0 = arith.constant 0 : i32
    %c0_i32_1 = arith.constant 0 : i32
    return %c0_i32, %c0_i32_0 : i32, i32
  }
  func.func @transform_4(%arg0: i32) -> (i32, i32) {
    %c0_i32 = arith.constant 0 : i32
    %c0_i32_0 = arith.constant 0 : i32
    %c0_i32_1 = arith.constant 0 : i32
    return %c0_i32, %c0_i32_0 : i32, i32
  }
  func.func @transform_5(%arg0: i32) -> (i32, i32) {
    %c0_i32 = arith.constant 0 : i32
    %c0_i32_0 = arith.constant 0 : i32
    %c0_i32_1 = arith.constant 0 : i32
    return %c0_i32, %c0_i32_0 : i32, i32
  }
  func.func @transform_6(%arg0: i32) -> (i32, i32) {
    %c0_i32 = arith.constant 0 : i32
    %c0_i32_0 = arith.constant 0 : i32
    %c0_i32_1 = arith.constant 0 : i32
    return %c0_i32, %c0_i32_0 : i32, i32
  }
  func.func @transform_7(%arg0: i32) -> (i32, i32) {
    %c0_i32 = arith.constant 0 : i32
    %c0_i32_0 = arith.constant 0 : i32
    %c0_i32_1 = arith.constant 0 : i32
    return %c0_i32, %c0_i32_0 : i32, i32
  }
  func.func @transform_8(%arg0: i32) -> (i32, i32) {
    %c0_i32 = arith.constant 0 : i32
    %c0_i32_0 = arith.constant 0 : i32
    %c0_i32_1 = arith.constant 0 : i32
    return %c0_i32, %c0_i32_0 : i32, i32
  }
  func.func @transform_9(%arg0: i32) -> (i32, i32) {
    %c0_i32 = arith.constant 0 : i32
    %c0_i32_0 = arith.constant 0 : i32
    %c0_i32_1 = arith.constant 0 : i32
    return %c0_i32, %c0_i32_0 : i32, i32
  }
  func.func @transform_10(%arg0: i32) -> (i32, i32, i32, i32) {
    %c0_i32 = arith.constant 0 : i32
    %c0_i32_0 = arith.constant 0 : i32
    %c0_i32_1 = arith.constant 0 : i32
    %c0_i32_2 = arith.constant 0 : i32
    return %arg0, %c0_i32, %c0_i32_0, %c0_i32_1 : i32, i32, i32, i32
  }
}

module attributes {stable_mosaic.version = 11 : i64} {
  func.func @_head_kernel(%arg0: memref<2x16x32xbf16, #tpu.memory_space<vmem>>, %arg1: memref<1x32xf32, #tpu.memory_space<vmem>>, %arg2: memref<1x32xf32, #tpu.memory_space<vmem>>, %arg3: memref<32x10xbf16, #tpu.memory_space<vmem>>, %arg4: memref<1x10xf32, #tpu.memory_space<vmem>>, %arg5: memref<2x10xf32, #tpu.memory_space<vmem>>) attributes {dimension_semantics = [], scalar_prefetch = 0 : i64, scratch_operands = 0 : i64, tpu.core_type = #tpu.core_type<tc>} {
    %c0 = arith.constant 0 : index
    %c0_0 = arith.constant 0 : index
    %c0_1 = arith.constant 0 : index
    %0 = vector.load %arg0[%c0, %c0_0, %c0_1] : memref<2x16x32xbf16, #tpu.memory_space<vmem>>, vector<2x16x32xbf16>
    %1 = arith.extf %0 : vector<2x16x32xbf16> to vector<2x16x32xf32>
    %cst = arith.constant dense<0.000000e+00> : vector<2x32xf32>
    %2 = vector.multi_reduction <add>, %1, %cst [1] : vector<2x16x32xf32> to vector<2x32xf32>
    %cst_2 = arith.constant 1.600000e+01 : f32
    %3 = vector.broadcast %cst_2 : f32 to vector<2x32xf32>
    %4 = arith.divf %2, %3 : vector<2x32xf32>
    %c0_3 = arith.constant 0 : index
    %c0_4 = arith.constant 0 : index
    %5 = vector.load %arg1[%c0_3, %c0_4] : memref<1x32xf32, #tpu.memory_space<vmem>>, vector<1x32xf32>
    %c0_5 = arith.constant 0 : index
    %c0_6 = arith.constant 0 : index
    %6 = vector.load %arg2[%c0_5, %c0_6] : memref<1x32xf32, #tpu.memory_space<vmem>>, vector<1x32xf32>
    %cst_7 = arith.constant dense<0.000000e+00> : vector<2xf32>
    %7 = vector.multi_reduction <add>, %4, %cst_7 [1] : vector<2x32xf32> to vector<2xf32>
    %8 = vector.shape_cast %7 : vector<2xf32> to vector<2x1xf32>
    %cst_8 = arith.constant 3.200000e+01 : f32
    %9 = vector.broadcast %cst_8 : f32 to vector<2x1xf32>
    %10 = arith.divf %8, %9 : vector<2x1xf32>
    %11 = vector.broadcast %10 : vector<2x1xf32> to vector<2x32xf32>
    %12 = arith.subf %4, %11 : vector<2x32xf32>
    %13 = arith.mulf %12, %12 : vector<2x32xf32>
    %cst_9 = arith.constant dense<0.000000e+00> : vector<2xf32>
    %14 = vector.multi_reduction <add>, %13, %cst_9 [1] : vector<2x32xf32> to vector<2xf32>
    %15 = vector.shape_cast %14 : vector<2xf32> to vector<2x1xf32>
    %cst_10 = arith.constant 3.200000e+01 : f32
    %16 = vector.broadcast %cst_10 : f32 to vector<2x1xf32>
    %17 = arith.divf %15, %16 : vector<2x1xf32>
    %18 = vector.broadcast %10 : vector<2x1xf32> to vector<2x32xf32>
    %19 = arith.subf %4, %18 : vector<2x32xf32>
    %cst_11 = arith.constant 9.99999997E-7 : f32
    %20 = vector.broadcast %cst_11 : f32 to vector<2x1xf32>
    %21 = arith.addf %17, %20 : vector<2x1xf32>
    %22 = math.rsqrt %21 : vector<2x1xf32>
    %23 = vector.broadcast %22 : vector<2x1xf32> to vector<2x32xf32>
    %24 = arith.mulf %19, %23 : vector<2x32xf32>
    %25 = vector.broadcast %5 : vector<1x32xf32> to vector<2x32xf32>
    %26 = arith.mulf %24, %25 : vector<2x32xf32>
    %27 = vector.broadcast %6 : vector<1x32xf32> to vector<2x32xf32>
    %28 = arith.addf %26, %27 : vector<2x32xf32>
    %29 = arith.truncf %28 : vector<2x32xf32> to vector<2x32xbf16>
    %c0_12 = arith.constant 0 : index
    %c0_13 = arith.constant 0 : index
    %30 = vector.load %arg3[%c0_12, %c0_13] : memref<32x10xbf16, #tpu.memory_space<vmem>>, vector<32x10xbf16>
    %cst_14 = arith.constant dense<0.000000e+00> : vector<2x10xf32>
    %31 = tpu.matmul %29, %30, %cst_14 {dimension_numbers = #tpu.dot_dimension_numbers<[1], [0], [0], [1], [0, 0, 1, 1], [], []>} : vector<2x32xbf16>, vector<32x10xbf16>, vector<2x10xf32> -> vector<2x10xf32>
    %c0_15 = arith.constant 0 : index
    %c0_16 = arith.constant 0 : index
    %32 = vector.load %arg4[%c0_15, %c0_16] : memref<1x10xf32, #tpu.memory_space<vmem>>, vector<1x10xf32>
    %33 = vector.broadcast %32 : vector<1x10xf32> to vector<2x10xf32>
    %34 = arith.addf %31, %33 : vector<2x10xf32>
    %c0_17 = arith.constant 0 : index
    %c0_18 = arith.constant 0 : index
    %35 = vector.load %arg5[%c0_17, %c0_18] : memref<2x10xf32, #tpu.memory_space<vmem>>, vector<2x10xf32>
    tpu.vector_store %arg5[%c0_17, %c0_18], %34 {strides = array<i32>} : memref<2x10xf32, #tpu.memory_space<vmem>>, vector<2x10xf32>,
    return
  }
}

</mosaic_0001>

<llo_original>
// kernel: convnext_forward.7
$region0: #{convnext_forward.7}
  #allocation0 [shape = 'u32[]', space=smem, size = 0x4, offset = 0x4, fixed_abs, tag = 'smem constant byte address 0x4 - core index']
  #allocation1 [shape = 'u32[144,128]{1,0:T(1,128)}', space=vmem, size = 0x12000, scoped, tag = 'internal scratch']
  %s0 = inlined_call_operand.vmem [shape: f32[128,48], index: 0, kind: input, shape index: {}]
  %s1 = inlined_call_operand.vmem [shape: bf16[48,16], index: 1, kind: input, shape index: {}]
  %s2 = inlined_call_operand.vmem [shape: f32[1,16], index: 2, kind: input, shape index: {}]
  %s3 = inlined_call_operand.vmem [shape: f32[1,16], index: 3, kind: input, shape index: {}]
  %s4 = inlined_call_operand.vmem [shape: f32[1,16], index: 4, kind: input, shape index: {}]
  %s5 = inlined_call_operand.vmem [shape: bf16[128,16], index: 5, kind: output, shape index: {}]
  %s6 = sld [smem:[#allocation0]]
  $region30: #{convnext_forward.7} parent=0
    _
  %s8 = ssub.s32 1, %s6
  %s9 = scalar_select 0, %s8, %s6
  // Predicated region
  $region2: #{convnext_forward.7} parent=0 // pred_check
    _
  $region3: #{convnext_forward.7} parent=0 // pred_check_branch
    %11 = sbr.rel (0) target = $region5
  $region4: #{convnext_forward.7} parent=0 // pred_region
    _
  $region5: #{convnext_forward.7} parent=0 // pred_fallthru
    _
  // Predicated region
  $region6: #{convnext_forward.7} parent=0 // pred_check
    _
  $region7: #{convnext_forward.7} parent=0 // pred_check_branch
    %13 = sbr.rel (0) target = $region9
  $region8: #{convnext_forward.7} parent=0 // pred_region
    _
  $region9: #{convnext_forward.7} parent=0 // pred_fallthru
    _
  // Predicated region
  $region10: #{convnext_forward.7} parent=0 // pred_check
    _
  $region11: #{convnext_forward.7} parent=0 // pred_check_branch
    %15 = sbr.rel (0) target = $region13
  $region12: #{convnext_forward.7} parent=0 // pred_region
    _
  $region13: #{convnext_forward.7} parent=0 // pred_fallthru
    _
  // Predicated region
  $region14: #{convnext_forward.7} parent=0 // pred_check
    _
  $region15: #{convnext_forward.7} parent=0 // pred_check_branch
    %17 = sbr.rel (0) target = $region17
  $region16: #{convnext_forward.7} parent=0 // pred_region
    _
  $region17: #{convnext_forward.7} parent=0 // pred_fallthru
    _
  // Predicated region
  $region18: #{convnext_forward.7} parent=0 // pred_check
    _
  $region19: #{convnext_forward.7} parent=0 // pred_check_branch
    %19 = sbr.rel (0) target = $region21
  $region20: #{convnext_forward.7} parent=0 // pred_region
    _
  $region21: #{convnext_forward.7} parent=0 // pred_fallthru
    _
  %v21 = vld [vmem:[%s0] sm:$0xff]
  %v22 = vld [vmem:[%s0 + $0x8] sm:$0xff]
  %v23 = vld [vmem:[%s0 + $0x10] sm:$0xff]
  %v24 = vld [vmem:[%s0 + $0x18] sm:$0xff]
  %v25 = vld [vmem:[%s0 + $0x20] sm:$0xff]
  %v26 = vld [vmem:[%s0 + $0x28] sm:$0xff]
  %v27 = vld [vmem:[%s0 + $0x30] sm:$0xff]
  %v28 = vld [vmem:[%s0 + $0x38] sm:$0xff]
  %v29 = vld [vmem:[%s0 + $0x40] sm:$0xff]
  %v30 = vld [vmem:[%s0 + $0x48] sm:$0xff]
  %v31 = vld [vmem:[%s0 + $0x50] sm:$0xff]
  %v32 = vld [vmem:[%s0 + $0x58] sm:$0xff]
  %v33 = vld [vmem:[%s0 + $0x60] sm:$0xff]
  %v34 = vld [vmem:[%s0 + $0x68] sm:$0xff]
  %v35 = vld [vmem:[%s0 + $0x70] sm:$0xff]
  %v36 = vld [vmem:[%s0 + $0x78] sm:$0xff]
  %v37 = vpack.c.bf16 %v22, %v21
  %v38 = vpack.c.bf16 %v24, %v23
  %v39 = vpack.c.bf16 %v26, %v25
  %v40 = vpack.c.bf16 %v28, %v27
  %v41 = vpack.c.bf16 %v30, %v29
  %v42 = vpack.c.bf16 %v32, %v31
  %v43 = vpack.c.bf16 %v34, %v33
  %v44 = vpack.c.bf16 %v36, %v35
  %v45 = vld [vmem:[%s1] sm:$0xf]
  %v46 = vld [vmem:[%s1 + $0x4] sm:$0xf]
  %v47 = vld [vmem:[%s1 + $0x8] sm:$0xf]
  %v48 = vld [vmem:[%s1 + $0xc] sm:$0xf]
  %v49 = vld [vmem:[%s1 + $0x10] sm:$0xf]
  %v50 = vld [vmem:[%s1 + $0x14] sm:$0xf]
  %v51 = vld [vmem:[%s2] sm:$0x1]
  %v53 = vlaneseq
  %v54 = vshrl.u32 %v53, 7
  %v55 = vsub.s32 0, %v54
  %v56 = vrot.slane %v51, %v55
  %v64 = vunpack.c.l.b16 %v45
  %v65 = vunpack.c.l.b16 %v46
  %v66 = vunpack.c.l.b16 %v47
  %v67 = vunpack.c.l.b16 %v48
  %v68 = vunpack.c.l.b16 %v49
  %v69 = vunpack.c.l.b16 %v50
  %v70 = vpack.c.b16 %v65, %v64
  %v71 = vpack.c.b16 %v67, %v66
  %v72 = vpack.c.b16 %v69, %v68
  %vm76 = vcmask 392192
  %v78 = vsel %vm76, %v37, 0
  %v81 = vsel %vm76, %v38, 0
  %v84 = vsel %vm76, %v39, 0
  %v87 = vsel %vm76, %v40, 0
  %v90 = vsel %vm76, %v41, 0
  %v93 = vsel %vm76, %v42, 0
  %v96 = vsel %vm76, %v43, 0
  %v99 = vsel %vm76, %v44, 0
  %101 = vmatprep.subr.bf16.mxu0 0
  %102 = vmatpush1.bf16.msra.mxu0 %v70
  %103 = vmatprep.subr.bf16.mxu0 0
  %104 = vmatpush1.bf16.msra.mxu0 %v71
  %105 = vmatprep.subr.bf16.mxu0 0
  %106 = vmatpush1.bf16.msra.mxu0 %v72
  %107 = vmatprep.subr.bf16.mxu0 0
  %108 = vmatpush1.bf16.msra.mxu0 0
  %109 = vmatprep.subr.bf16.mxu0 0
  %110 = vmatpush1.bf16.msra.mxu0 0
  %111 = vmatprep.subr.bf16.mxu0 0
  %112 = vmatpush1.bf16.msra.mxu0 0
  %113 = vmatprep.subr.bf16.mxu0 0
  %114 = vmatpush1.bf16.msra.mxu0 0
  %115 = vmatprep.subr.bf16.mxu0 0
  %116 = vmatpush1.bf16.msra.mxu0 0
  %117 = vmatprep.subr.bf16.mxu0 0
  %118 = vmatpush1.bf16.msra.mxu0 0
  %119 = vmatprep.subr.bf16.mxu0 0
  %120 = vmatpush1.bf16.msra.mxu0 0
  %121 = vmatprep.subr.bf16.mxu0 0
  %122 = vmatpush1.bf16.msra.mxu0 0
  %123 = vmatprep.subr.bf16.mxu0 0
  %124 = vmatpush1.bf16.msra.mxu0 0
  %125 = vmatprep.subr.bf16.mxu0 0
  %126 = vmatpush1.bf16.msra.mxu0 0
  %127 = vmatprep.subr.bf16.mxu0 0
  %128 = vmatpush1.bf16.msra.mxu0 0
  %129 = vmatprep.subr.bf16.mxu0 0
  %130 = vmatpush1.bf16.msra.mxu0 0
  %131 = vmatprep.subr.bf16.mxu0 0
  %132 = vmatpush1.bf16.msra.mxu0 0
  %133 = vmatprep.mubr.bf16.mxu0 0
  %134 = vmatmul.mubr.bf16.gmra.mrb[0].mxu0 %v78
  %v135 = vpop.f32.mrb[0].mxu0
  %v136 = vadd.f32 %v56, %v135
  %v137 = vpop.f32.mrb[0].mxu0
  %v138 = vpop.f32.mrb[0].mxu0
  %v139 = vadd.f32 %v56, %v138
  %v140 = vpop.f32.mrb[0].mxu0
  %141 = vmatprep.mubr.bf16.mxu0 0
  %142 = vmatmul.mubr.bf16.gmra.mrb[0].mxu0 %v81
  %v143 = vpop.f32.mrb[0].mxu0
  %v144 = vadd.f32 %v56, %v143
  %v145 = vpop.f32.mrb[0].mxu0
  %v146 = vpop.f32.mrb[0].mxu0
  %v147 = vadd.f32 %v56, %v146
  %v148 = vpop.f32.mrb[0].mxu0
  %149 = vmatprep.mubr.bf16.mxu0 0
  %150 = vmatmul.mubr.bf16.gmra.mrb[0].mxu0 %v84
  %v151 = vpop.f32.mrb[0].mxu0
  %v152 = vadd.f32 %v56, %v151
  %v153 = vpop.f32.mrb[0].mxu0
  %v154 = vpop.f32.mrb[0].mxu0
  %v155 = vadd.f32 %v56, %v154
  %v156 = vpop.f32.mrb[0].mxu0
  %157 = vmatprep.mubr.bf16.mxu0 0
  %158 = vmatmul.mubr.bf16.gmra.mrb[0].mxu0 %v87
  %v159 = vpop.f32.mrb[0].mxu0
  %v160 = vadd.f32 %v56, %v159
  %v161 = vpop.f32.mrb[0].mxu0
  %v162 = vpop.f32.mrb[0].mxu0
  %v163 = vadd.f32 %v56, %v162
  %v164 = vpop.f32.mrb[0].mxu0
  %165 = vmatprep.mubr.bf16.mxu0 0
  %166 = vmatmul.mubr.bf16.gmra.mrb[0].mxu0 %v90
  %v167 = vpop.f32.mrb[0].mxu0
  %v168 = vadd.f32 %v56, %v167
  %v169 = vpop.f32.mrb[0].mxu0
  %v170 = vpop.f32.mrb[0].mxu0
  %v171 = vadd.f32 %v56, %v170
  %v172 = vpop.f32.mrb[0].mxu0
  %173 = vmatprep.mubr.bf16.mxu0 0
  %174 = vmatmul.mubr.bf16.gmra.mrb[0].mxu0 %v93
  %v175 = vpop.f32.mrb[0].mxu0
  %v176 = vadd.f32 %v56, %v175
  %v177 = vpop.f32.mrb[0].mxu0
  %v178 = vpop.f32.mrb[0].mxu0
  %v179 = vadd.f32 %v56, %v178
  %v180 = vpop.f32.mrb[0].mxu0
  %181 = vmatprep.mubr.bf16.mxu0 0
  %182 = vmatmul.mubr.bf16.gmra.mrb[0].mxu0 %v96
  %v183 = vpop.f32.mrb[0].mxu0
  %v184 = vadd.f32 %v56, %v183
  %v185 = vpop.f32.mrb[0].mxu0
  %v186 = vpop.f32.mrb[0].mxu0
  %v187 = vadd.f32 %v56, %v186
  %v188 = vpop.f32.mrb[0].mxu0
  %189 = vmatprep.mubr.bf16.mxu0 0
  %190 = vmatmul.mubr.bf16.gmra.mrb[0].mxu0 %v99
  %v191 = vpop.f32.mrb[0].mxu0
  %v192 = vadd.f32 %v56, %v191
  %v193 = vpop.f32.mrb[0].mxu0
  %v194 = vpop.f32.mrb[0].mxu0
  %v195 = vadd.f32 %v56, %v194
  %v196 = vpop.f32.mrb[0].mxu0
  %197 = vdwg.mxu0
  %v198 = vld [vmem:[%s3] sm:$0x1]
  %v199 = vld [vmem:[%s4] sm:$0x1]
  %vm200 = vcmask 130048
  %v201 = vsel %vm200, %v136, 0.0
  %202 = vadd.xlane.f32.xlu0 %v201
  %v203 = vpop.xlane.xlu0 %202
  %v204 = vsel %vm200, %v139, 0.0
  %205 = vadd.xlane.f32.xlu0 %v204
  %v206 = vpop.xlane.xlu0 %205
  %v207 = vsel %vm200, %v144, 0.0
  %208 = vadd.xlane.f32.xlu0 %v207
  %v209 = vpop.xlane.xlu0 %208
  %v210 = vsel %vm200, %v147, 0.0
  %211 = vadd.xlane.f32.xlu0 %v210
  %v212 = vpop.xlane.xlu0 %211
  %v213 = vsel %vm200, %v152, 0.0
  %214 = vadd.xlane.f32.xlu0 %v213
  %v215 = vpop.xlane.xlu0 %214
  %v216 = vsel %vm200, %v155, 0.0
  %217 = vadd.xlane.f32.xlu0 %v216
  %v218 = vpop.xlane.xlu0 %217
  %v219 = vsel %vm200, %v160, 0.0
  %220 = vadd.xlane.f32.xlu0 %v219
  %v221 = vpop.xlane.xlu0 %220
  %v222 = vsel %vm200, %v163, 0.0
  %223 = vadd.xlane.f32.xlu0 %v222
  %v224 = vpop.xlane.xlu0 %223
  %v225 = vsel %vm200, %v168, 0.0
  %226 = vadd.xlane.f32.xlu0 %v225
  %v227 = vpop.xlane.xlu0 %226
  %v228 = vsel %vm200, %v171, 0.0
  %229 = vadd.xlane.f32.xlu0 %v228
  %v230 = vpop.xlane.xlu0 %229
  %v231 = vsel %vm200, %v176, 0.0
  %232 = vadd.xlane.f32.xlu0 %v231
  %v233 = vpop.xlane.xlu0 %232
  %v234 = vsel %vm200, %v179, 0.0
  %235 = vadd.xlane.f32.xlu0 %v234
  %v236 = vpop.xlane.xlu0 %235
  %v237 = vsel %vm200, %v184, 0.0
  %238 = vadd.xlane.f32.xlu0 %v237
  %v239 = vpop.xlane.xlu0 %238
  %v240 = vsel %vm200, %v187, 0.0
  %241 = vadd.xlane.f32.xlu0 %v240
  %v242 = vpop.xlane.xlu0 %241
  %v243 = vsel %vm200, %v192, 0.0
  %244 = vadd.xlane.f32.xlu0 %v243
  %v245 = vpop.xlane.xlu0 %244
  %v246 = vsel %vm200, %v195, 0.0
  %247 = vadd.xlane.f32.xlu0 %v246
  %v248 = vpop.xlane.xlu0 %247
  %v249 = vrcp.pop 16.0
  %v250 = vmul.f32 %v203, %v249
  %v251 = vmul.f32 %v206, %v249
  %v252 = vmul.f32 %v209, %v249
  %v253 = vmul.f32 %v212, %v249
  %v254 = vmul.f32 %v215, %v249
  %v255 = vmul.f32 %v218, %v249
  %v256 = vmul.f32 %v221, %v249
  %v257 = vmul.f32 %v224, %v249
  %v258 = vmul.f32 %v227, %v249
  %v259 = vmul.f32 %v230, %v249
  %v260 = vmul.f32 %v233, %v249
  %v261 = vmul.f32 %v236, %v249
  %v262 = vmul.f32 %v239, %v249
  %v263 = vmul.f32 %v242, %v249
  %v264 = vmul.f32 %v245, %v249
  %v265 = vmul.f32 %v248, %v249
  %v266 = vsub.f32 %v136, %v250
  %v267 = vsub.f32 %v139, %v251
  %v268 = vsub.f32 %v144, %v252
  %v269 = vsub.f32 %v147, %v253
  %v270 = vsub.f32 %v152, %v254
  %v271 = vsub.f32 %v155, %v255
  %v272 = vsub.f32 %v160, %v256
  %v273 = vsub.f32 %v163, %v257
  %v274 = vsub.f32 %v168, %v258
  %v275 = vsub.f32 %v171, %v259
  %v276 = vsub.f32 %v176, %v260
  %v277 = vsub.f32 %v179, %v261
  %v278 = vsub.f32 %v184, %v262
  %v279 = vsub.f32 %v187, %v263
  %v280 = vsub.f32 %v192, %v264
  %v281 = vsub.f32 %v195, %v265
  %v282 = vmul.f32 %v266, %v266
  %v283 = vmul.f32 %v267, %v267
  %v284 = vmul.f32 %v268, %v268
  %v285 = vmul.f32 %v269, %v269
  %v286 = vmul.f32 %v270, %v270
  %v287 = vmul.f32 %v271, %v271
  %v288 = vmul.f32 %v272, %v272
  %v289 = vmul.f32 %v273, %v273
  %v290 = vmul.f32 %v274, %v274
  %v291 = vmul.f32 %v275, %v275
  %v292 = vmul.f32 %v276, %v276
  %v293 = vmul.f32 %v277, %v277
  %v294 = vmul.f32 %v278, %v278
  %v295 = vmul.f32 %v279, %v279
  %v296 = vmul.f32 %v280, %v280
  %v297 = vmul.f32 %v281, %v281
  %v298 = vsel %vm200, %v282, 0.0
  %299 = vadd.xlane.f32.xlu0 %v298
  %v300 = vpop.xlane.xlu0 %299
  %v301 = vsel %vm200, %v283, 0.0
  %302 = vadd.xlane.f32.xlu0 %v301
  %v303 = vpop.xlane.xlu0 %302
  %v304 = vsel %vm200, %v284, 0.0
  %305 = vadd.xlane.f32.xlu0 %v304
  %v306 = vpop.xlane.xlu0 %305
  %v307 = vsel %vm200, %v285, 0.0
  %308 = vadd.xlane.f32.xlu0 %v307
  %v309 = vpop.xlane.xlu0 %308
  %v310 = vsel %vm200, %v286, 0.0
  %311 = vadd.xlane.f32.xlu0 %v310
  %v312 = vpop.xlane.xlu0 %311
  %v313 = vsel %vm200, %v287, 0.0
  %314 = vadd.xlane.f32.xlu0 %v313
  %v315 = vpop.xlane.xlu0 %314
  %v316 = vsel %vm200, %v288, 0.0
  %317 = vadd.xlane.f32.xlu0 %v316
  %v318 = vpop.xlane.xlu0 %317
  %v319 = vsel %vm200, %v289, 0.0
  %320 = vadd.xlane.f32.xlu0 %v319
  %v321 = vpop.xlane.xlu0 %320
  %v322 = vsel %vm200, %v290, 0.0
  %323 = vadd.xlane.f32.xlu0 %v322
  %v324 = vpop.xlane.xlu0 %323
  %v325 = vsel %vm200, %v291, 0.0
  %326 = vadd.xlane.f32.xlu0 %v325
  %v327 = vpop.xlane.xlu0 %326
  %v328 = vsel %vm200, %v292, 0.0
  %329 = vadd.xlane.f32.xlu0 %v328
  %v330 = vpop.xlane.xlu0 %329
  %v331 = vsel %vm200, %v293, 0.0
  %332 = vadd.xlane.f32.xlu0 %v331
  %v333 = vpop.xlane.xlu0 %332
  %v334 = vsel %vm200, %v294, 0.0
  %335 = vadd.xlane.f32.xlu0 %v334
  %v336 = vpop.xlane.xlu0 %335
  %v337 = vsel %vm200, %v295, 0.0
  %338 = vadd.xlane.f32.xlu0 %v337
  %v339 = vpop.xlane.xlu0 %338
  %v340 = vsel %vm200, %v296, 0.0
  %341 = vadd.xlane.f32.xlu0 %v340
  %v342 = vpop.xlane.xlu0 %341
  %v343 = vsel %vm200, %v297, 0.0
  %344 = vadd.xlane.f32.xlu0 %v343
  %v345 = vpop.xlane.xlu0 %344
  %v346 = vmul.f32 %v300, %v249
  %v347 = vmul.f32 %v303, %v249
  %v348 = vmul.f32 %v306, %v249
  %v349 = vmul.f32 %v309, %v249
  %v350 = vmul.f32 %v312, %v249
  %v351 = vmul.f32 %v315, %v249
  %v352 = vmul.f32 %v318, %v249
  %v353 = vmul.f32 %v321, %v249
  %v354 = vmul.f32 %v324, %v249
  %v355 = vmul.f32 %v327, %v249
  %v356 = vmul.f32 %v330, %v249
  %v357 = vmul.f32 %v333, %v249
  %v358 = vmul.f32 %v336, %v249
  %v359 = vmul.f32 %v339, %v249
  %v360 = vmul.f32 %v342, %v249
  %v361 = vmul.f32 %v345, %v249
  %v362 = vadd.f32 %v346, 1e-06
  %v363 = vadd.f32 %v347, 1e-06
  %v364 = vadd.f32 %v348, 1e-06
  %v365 = vadd.f32 %v349, 1e-06
  %v366 = vadd.f32 %v350, 1e-06
  %v367 = vadd.f32 %v351, 1e-06
  %v368 = vadd.f32 %v352, 1e-06
  %v369 = vadd.f32 %v353, 1e-06
  %v370 = vadd.f32 %v354, 1e-06
  %v371 = vadd.f32 %v355, 1e-06
  %v372 = vadd.f32 %v356, 1e-06
  %v373 = vadd.f32 %v357, 1e-06
  %v374 = vadd.f32 %v358, 1e-06
  %v375 = vadd.f32 %v359, 1e-06
  %v376 = vadd.f32 %v360, 1e-06
  %v377 = vadd.f32 %v361, 1e-06
  %v378 = vrsqrt.pop %v362
  %v379 = vrsqrt.pop %v363
  %v380 = vrsqrt.pop %v364
  %v381 = vrsqrt.pop %v365
  %v382 = vrsqrt.pop %v366
  %v383 = vrsqrt.pop %v367
  %v384 = vrsqrt.pop %v368
  %v385 = vrsqrt.pop %v369
  %v386 = vrsqrt.pop %v370
  %v387 = vrsqrt.pop %v371
  %v388 = vrsqrt.pop %v372
  %v389 = vrsqrt.pop %v373
  %v390 = vrsqrt.pop %v374
  %v391 = vrsqrt.pop %v375
  %v392 = vrsqrt.pop %v376
  %v393 = vrsqrt.pop %v377
  %v394 = vmul.f32 %v266, %v378
  %v395 = vmul.f32 %v267, %v379
  %v396 = vmul.f32 %v268, %v380
  %v397 = vmul.f32 %v269, %v381
  %v398 = vmul.f32 %v270, %v382
  %v399 = vmul.f32 %v271, %v383
  %v400 = vmul.f32 %v272, %v384
  %v401 = vmul.f32 %v273, %v385
  %v402 = vmul.f32 %v274, %v386
  %v403 = vmul.f32 %v275, %v387
  %v404 = vmul.f32 %v276, %v388
  %v405 = vmul.f32 %v277, %v389
  %v406 = vmul.f32 %v278, %v390
  %v407 = vmul.f32 %v279, %v391
  %v408 = vmul.f32 %v280, %v392
  %v409 = vmul.f32 %v281, %v393
  %v411 = vlaneseq
  %v412 = vshrl.u32 %v411, 7
  %v413 = vsub.s32 0, %v412
  %v414 = vrot.slane %v198, %v413
  %v416 = vmul.f32 %v394, %v414
  %v417 = vmul.f32 %v395, %v414
  %v418 = vmul.f32 %v396, %v414
  %v419 = vmul.f32 %v397, %v414
  %v420 = vmul.f32 %v398, %v414
  %v421 = vmul.f32 %v399, %v414
  %v422 = vmul.f32 %v400, %v414
  %v423 = vmul.f32 %v401, %v414
  %v424 = vmul.f32 %v402, %v414
  %v425 = vmul.f32 %v403, %v414
  %v426 = vmul.f32 %v404, %v414
  %v427 = vmul.f32 %v405, %v414
  %v428 = vmul.f32 %v406, %v414
  %v429 = vmul.f32 %v407, %v414
  %v430 = vmul.f32 %v408, %v414
  %v431 = vmul.f32 %v409, %v414
  %v433 = vlaneseq
  %v434 = vshrl.u32 %v433, 7
  %v435 = vsub.s32 0, %v434
  %v436 = vrot.slane %v199, %v435
  %v438 = vadd.f32 %v416, %v436
  %v439 = vadd.f32 %v417, %v436
  %v440 = vadd.f32 %v418, %v436
  %v441 = vadd.f32 %v419, %v436
  %v442 = vadd.f32 %v420, %v436
  %v443 = vadd.f32 %v421, %v436
  %v444 = vadd.f32 %v422, %v436
  %v445 = vadd.f32 %v423, %v436
  %v446 = vadd.f32 %v424, %v436
  %v447 = vadd.f32 %v425, %v436
  %v448 = vadd.f32 %v426, %v436
  %v449 = vadd.f32 %v427, %v436
  %v450 = vadd.f32 %v428, %v436
  %v451 = vadd.f32 %v429, %v436
  %v452 = vadd.f32 %v430, %v436
  %v453 = vadd.f32 %v431, %v436
  %v454 = vpack.c.bf16 %v439, %v438
  %v455 = vpack.c.bf16 %v441, %v440
  %v456 = vpack.c.bf16 %v443, %v442
  %v457 = vpack.c.bf16 %v445, %v444
  %v458 = vpack.c.bf16 %v447, %v446
  %v459 = vpack.c.bf16 %v449, %v448
  %v460 = vpack.c.bf16 %v451, %v450
  %v461 = vpack.c.bf16 %v453, %v452
  %v470 = vunpack.c.l.b16 %v454
  %v471 = vunpack.c.h.b16 %v454
  %v472 = vunpack.c.l.b16 %v455
  %v473 = vunpack.c.h.b16 %v455
  %v474 = vunpack.c.l.b16 %v456
  %v475 = vunpack.c.h.b16 %v456
  %v476 = vunpack.c.l.b16 %v457
  %v477 = vunpack.c.h.b16 %v457
  %v478 = vunpack.c.l.b16 %v458
  %v479 = vunpack.c.h.b16 %v458
  %v480 = vunpack.c.l.b16 %v459
  %v481 = vunpack.c.h.b16 %v459
  %v482 = vunpack.c.l.b16 %v460
  %v483 = vunpack.c.h.b16 %v460
  %v484 = vunpack.c.l.b16 %v461
  %v485 = vunpack.c.h.b16 %v461
  %v486 = vpack.c.b16 %v470, %v470
  %v487 = vpack.c.b16 %v471, %v471
  %v488 = vpack.c.b16 %v472, %v472
  %v489 = vpack.c.b16 %v473, %v473
  %v490 = vpack.c.b16 %v474, %v474
  %v491 = vpack.c.b16 %v475, %v475
  %v492 = vpack.c.b16 %v476, %v476
  %v493 = vpack.c.b16 %v477, %v477
  %v494 = vpack.c.b16 %v478, %v478
  %v495 = vpack.c.b16 %v479, %v479
  %v496 = vpack.c.b16 %v480, %v480
  %v497 = vpack.c.b16 %v481, %v481
  %v498 = vpack.c.b16 %v482, %v482
  %v499 = vpack.c.b16 %v483, %v483
  %v500 = vpack.c.b16 %v484, %v484
  %v501 = vpack.c.b16 %v485, %v485
  %vm518 = vcmask 125952
  %519 = vst.msk [vmem:[%s5] sm:$0xf] %vm518, %v486
  %520 = vst.msk [vmem:[%s5 + $0x4] sm:$0xf] %vm518, %v487
  %521 = vst.msk [vmem:[%s5 + $0x8] sm:$0xf] %vm518, %v488
  %522 = vst.msk [vmem:[%s5 + $0xc] sm:$0xf] %vm518, %v489
  %523 = vst.msk [vmem:[%s5 + $0x10] sm:$0xf] %vm518, %v490
  %524 = vst.msk [vmem:[%s5 + $0x14] sm:$0xf] %vm518, %v491
  %525 = vst.msk [vmem:[%s5 + $0x18] sm:$0xf] %vm518, %v492
  %526 = vst.msk [vmem:[%s5 + $0x1c] sm:$0xf] %vm518, %v493
  %527 = vst.msk [vmem:[%s5 + $0x20] sm:$0xf] %vm518, %v494
  %528 = vst.msk [vmem:[%s5 + $0x24] sm:$0xf] %vm518, %v495
  %529 = vst.msk [vmem:[%s5 + $0x28] sm:$0xf] %vm518, %v496
  %530 = vst.msk [vmem:[%s5 + $0x2c] sm:$0xf] %vm518, %v497
  %531 = vst.msk [vmem:[%s5 + $0x30] sm:$0xf] %vm518, %v498
  %532 = vst.msk [vmem:[%s5 + $0x34] sm:$0xf] %vm518, %v499
  %533 = vst.msk [vmem:[%s5 + $0x38] sm:$0xf] %vm518, %v500
  %534 = vst.msk [vmem:[%s5 + $0x3c] sm:$0xf] %vm518, %v501
  // Predicated region
  $region22: #{convnext_forward.7} parent=0 // pred_check
    _
  $region23: #{convnext_forward.7} parent=0 // pred_check_branch
    %536 = sbr.rel (0) target = $region25
  $region24: #{convnext_forward.7} parent=0 // pred_region
    _
  $region25: #{convnext_forward.7} parent=0 // pred_fallthru
    _
  // Predicated region
  $region26: #{convnext_forward.7} parent=0 // pred_check
    _
  $region27: #{convnext_forward.7} parent=0 // pred_check_branch
    %538 = sbr.rel (0) target = $region29
  $region28: #{convnext_forward.7} parent=0 // pred_region
    _
  $region29: #{convnext_forward.7} parent=0 // pred_fallthru
    _

// kernel: convnext_forward.10
$region0: #{convnext_forward.10}
  #allocation0 [shape = 'u32[]', space=smem, size = 0x4, offset = 0x4, fixed_abs, tag = 'smem constant byte address 0x4 - core index']
  #allocation1 [shape = 'u32[144,128]{1,0:T(1,128)}', space=vmem, size = 0x12000, scoped, tag = 'internal scratch']
  %s0 = inlined_call_operand.vmem [shape: bf16[32,4,16], index: 0, kind: input, shape index: {}]
  %s1 = inlined_call_operand.vmem [shape: f32[1,16], index: 1, kind: input, shape index: {}]
  %s2 = inlined_call_operand.vmem [shape: f32[1,16], index: 2, kind: input, shape index: {}]
  %s3 = inlined_call_operand.vmem [shape: bf16[64,32], index: 3, kind: input, shape index: {}]
  %s4 = inlined_call_operand.vmem [shape: f32[1,32], index: 4, kind: input, shape index: {}]
  %s5 = inlined_call_operand.vmem [shape: bf16[32,32], index: 5, kind: output, shape index: {}]
  %s6 = sld [smem:[#allocation0]]
  $region30: #{convnext_forward.10} parent=0
    _
  %s8 = ssub.s32 1, %s6
  %s9 = scalar_select 0, %s8, %s6
  // Predicated region
  $region2: #{convnext_forward.10} parent=0 // pred_check
    _
  $region3: #{convnext_forward.10} parent=0 // pred_check_branch
    %11 = sbr.rel (0) target = $region5
  $region4: #{convnext_forward.10} parent=0 // pred_region
    _
  $region5: #{convnext_forward.10} parent=0 // pred_fallthru
    _
  // Predicated region
  $region6: #{convnext_forward.10} parent=0 // pred_check
    _
  $region7: #{convnext_forward.10} parent=0 // pred_check_branch
    %13 = sbr.rel (0) target = $region9
  $region8: #{convnext_forward.10} parent=0 // pred_region
    _
  $region9: #{convnext_forward.10} parent=0 // pred_fallthru
    _
  // Predicated region
  $region10: #{convnext_forward.10} parent=0 // pred_check
    _
  $region11: #{convnext_forward.10} parent=0 // pred_check_branch
    %15 = sbr.rel (0) target = $region13
  $region12: #{convnext_forward.10} parent=0 // pred_region
    _
  $region13: #{convnext_forward.10} parent=0 // pred_fallthru
    _
  // Predicated region
  $region14: #{convnext_forward.10} parent=0 // pred_check
    _
  $region15: #{convnext_forward.10} parent=0 // pred_check_branch
    %17 = sbr.rel (0) target = $region17
  $region16: #{convnext_forward.10} parent=0 // pred_region
    _
  $region17: #{convnext_forward.10} parent=0 // pred_fallthru
    _
  // Predicated region
  $region18: #{convnext_forward.10} parent=0 // pred_check
    _
  $region19: #{convnext_forward.10} parent=0 // pred_check_branch
    %19 = sbr.rel (0) target = $region21
  $region20: #{convnext_forward.10} parent=0 // pred_region
    _
  $region21: #{convnext_forward.10} parent=0 // pred_fallthru
    _
  %v21 = vld [vmem:[%s0] sm:$0x3]
  %v22 = vld [vmem:[%s0 + $0x2] sm:$0x3]
  %v23 = vld [vmem:[%s0 + $0x4] sm:$0x3]
  %v24 = vld [vmem:[%s0 + $0x6] sm:$0x3]
  %v25 = vld [vmem:[%s0 + $0x8] sm:$0x3]
  %v26 = vld [vmem:[%s0 + $0xa] sm:$0x3]
  %v27 = vld [vmem:[%s0 + $0xc] sm:$0x3]
  %v28 = vld [vmem:[%s0 + $0xe] sm:$0x3]
  %v29 = vld [vmem:[%s0 + $0x10] sm:$0x3]
  %v30 = vld [vmem:[%s0 + $0x12] sm:$0x3]
  %v31 = vld [vmem:[%s0 + $0x14] sm:$0x3]
  %v32 = vld [vmem:[%s0 + $0x16] sm:$0x3]
  %v33 = vld [vmem:[%s0 + $0x18] sm:$0x3]
  %v34 = vld [vmem:[%s0 + $0x1a] sm:$0x3]
  %v35 = vld [vmem:[%s0 + $0x1c] sm:$0x3]
  %v36 = vld [vmem:[%s0 + $0x1e] sm:$0x3]
  %v37 = vld [vmem:[%s0 + $0x20] sm:$0x3]
  %v38 = vld [vmem:[%s0 + $0x22] sm:$0x3]
  %v39 = vld [vmem:[%s0 + $0x24] sm:$0x3]
  %v40 = vld [vmem:[%s0 + $0x26] sm:$0x3]
  %v41 = vld [vmem:[%s0 + $0x28] sm:$0x3]
  %v42 = vld [vmem:[%s0 + $0x2a] sm:$0x3]
  %v43 = vld [vmem:[%s0 + $0x2c] sm:$0x3]
  %v44 = vld [vmem:[%s0 + $0x2e] sm:$0x3]
  %v45 = vld [vmem:[%s0 + $0x30] sm:$0x3]
  %v46 = vld [vmem:[%s0 + $0x32] sm:$0x3]
  %v47 = vld [vmem:[%s0 + $0x34] sm:$0x3]
  %v48 = vld [vmem:[%s0 + $0x36] sm:$0x3]
  %v49 = vld [vmem:[%s0 + $0x38] sm:$0x3]
  %v50 = vld [vmem:[%s0 + $0x3a] sm:$0x3]
  %v51 = vld [vmem:[%s0 + $0x3c] sm:$0x3]
  %v52 = vld [vmem:[%s0 + $0x3e] sm:$0x3]
  %v53 = vunpack.c.l.bf16 %v21
  %v54 = vunpack.c.l.bf16 %v22
  %v55 = vunpack.c.l.bf16 %v23
  %v56 = vunpack.c.l.bf16 %v24
  %v57 = vunpack.c.l.bf16 %v25
  %v58 = vunpack.c.l.bf16 %v26
  %v59 = vunpack.c.l.bf16 %v27
  %v60 = vunpack.c.l.bf16 %v28
  %v61 = vunpack.c.l.bf16 %v29
  %v62 = vunpack.c.l.bf16 %v30
  %v63 = vunpack.c.l.bf16 %v31
  %v64 = vunpack.c.l.bf16 %v32
  %v65 = vunpack.c.l.bf16 %v33
  %v66 = vunpack.c.l.bf16 %v34
  %v67 = vunpack.c.l.bf16 %v35
  %v68 = vunpack.c.l.bf16 %v36
  %v69 = vunpack.c.l.bf16 %v37
  %v70 = vunpack.c.l.bf16 %v38
  %v71 = vunpack.c.l.bf16 %v39
  %v72 = vunpack.c.l.bf16 %v40
  %v73 = vunpack.c.l.bf16 %v41
  %v74 = vunpack.c.l.bf16 %v42
  %v75 = vunpack.c.l.bf16 %v43
  %v76 = vunpack.c.l.bf16 %v44
  %v77 = vunpack.c.l.bf16 %v45
  %v78 = vunpack.c.l.bf16 %v46
  %v79 = vunpack.c.l.bf16 %v47
  %v80 = vunpack.c.l.bf16 %v48
  %v81 = vunpack.c.l.bf16 %v49
  %v82 = vunpack.c.l.bf16 %v50
  %v83 = vunpack.c.l.bf16 %v51
  %v84 = vunpack.c.l.bf16 %v52
  %v85 = vld [vmem:[%s1] sm:$0x1]
  %v86 = vld [vmem:[%s2] sm:$0x1]
  %vm87 = vcmask 125952
  %v88 = vsel %vm87, %v53, 0.0
  %89 = vadd.xlane.f32.xlu0 %v88
  %v90 = vpop.xlane.xlu0 %89
  %v91 = vsel %vm87, %v54, 0.0
  %92 = vadd.xlane.f32.xlu0 %v91
  %v93 = vpop.xlane.xlu0 %92
  %v94 = vsel %vm87, %v55, 0.0
  %95 = vadd.xlane.f32.xlu0 %v94
  %v96 = vpop.xlane.xlu0 %95
  %v97 = vsel %vm87, %v56, 0.0
  %98 = vadd.xlane.f32.xlu0 %v97
  %v99 = vpop.xlane.xlu0 %98
  %v100 = vsel %vm87, %v57, 0.0
  %101 = vadd.xlane.f32.xlu0 %v100
  %v102 = vpop.xlane.xlu0 %101
  %v103 = vsel %vm87, %v58, 0.0
  %104 = vadd.xlane.f32.xlu0 %v103
  %v105 = vpop.xlane.xlu0 %104
  %v106 = vsel %vm87, %v59, 0.0
  %107 = vadd.xlane.f32.xlu0 %v106
  %v108 = vpop.xlane.xlu0 %107
  %v109 = vsel %vm87, %v60, 0.0
  %110 = vadd.xlane.f32.xlu0 %v109
  %v111 = vpop.xlane.xlu0 %110
  %v112 = vsel %vm87, %v61, 0.0
  %113 = vadd.xlane.f32.xlu0 %v112
  %v114 = vpop.xlane.xlu0 %113
  %v115 = vsel %vm87, %v62, 0.0
  %116 = vadd.xlane.f32.xlu0 %v115
  %v117 = vpop.xlane.xlu0 %116
  %v118 = vsel %vm87, %v63, 0.0
  %119 = vadd.xlane.f32.xlu0 %v118
  %v120 = vpop.xlane.xlu0 %119
  %v121 = vsel %vm87, %v64, 0.0
  %122 = vadd.xlane.f32.xlu0 %v121
  %v123 = vpop.xlane.xlu0 %122
  %v124 = vsel %vm87, %v65, 0.0
  %125 = vadd.xlane.f32.xlu0 %v124
  %v126 = vpop.xlane.xlu0 %125
  %v127 = vsel %vm87, %v66, 0.0
  %128 = vadd.xlane.f32.xlu0 %v127
  %v129 = vpop.xlane.xlu0 %128
  %v130 = vsel %vm87, %v67, 0.0
  %131 = vadd.xlane.f32.xlu0 %v130
  %v132 = vpop.xlane.xlu0 %131
  %v133 = vsel %vm87, %v68, 0.0
  %134 = vadd.xlane.f32.xlu0 %v133
  %v135 = vpop.xlane.xlu0 %134
  %v136 = vsel %vm87, %v69, 0.0
  %137 = vadd.xlane.f32.xlu0 %v136
  %v138 = vpop.xlane.xlu0 %137
  %v139 = vsel %vm87, %v70, 0.0
  %140 = vadd.xlane.f32.xlu0 %v139
  %v141 = vpop.xlane.xlu0 %140
  %v142 = vsel %vm87, %v71, 0.0
  %143 = vadd.xlane.f32.xlu0 %v142
  %v144 = vpop.xlane.xlu0 %143
  %v145 = vsel %vm87, %v72, 0.0
  %146 = vadd.xlane.f32.xlu0 %v145
  %v147 = vpop.xlane.xlu0 %146
  %v148 = vsel %vm87, %v73, 0.0
  %149 = vadd.xlane.f32.xlu0 %v148
  %v150 = vpop.xlane.xlu0 %149
  %v151 = vsel %vm87, %v74, 0.0
  %152 = vadd.xlane.f32.xlu0 %v151
  %v153 = vpop.xlane.xlu0 %152
  %v154 = vsel %vm87, %v75, 0.0
  %155 = vadd.xlane.f32.xlu0 %v154
  %v156 = vpop.xlane.xlu0 %155
  %v157 = vsel %vm87, %v76, 0.0
  %158 = vadd.xlane.f32.xlu0 %v157
  %v159 = vpop.xlane.xlu0 %158
  %v160 = vsel %vm87, %v77, 0.0
  %161 = vadd.xlane.f32.xlu0 %v160
  %v162 = vpop.xlane.xlu0 %161
  %v163 = vsel %vm87, %v78, 0.0
  %164 = vadd.xlane.f32.xlu0 %v163
  %v165 = vpop.xlane.xlu0 %164
  %v166 = vsel %vm87, %v79, 0.0
  %167 = vadd.xlane.f32.xlu0 %v166
  %v168 = vpop.xlane.xlu0 %167
  %v169 = vsel %vm87, %v80, 0.0
  %170 = vadd.xlane.f32.xlu0 %v169
  %v171 = vpop.xlane.xlu0 %170
  %v172 = vsel %vm87, %v81, 0.0
  %173 = vadd.xlane.f32.xlu0 %v172
  %v174 = vpop.xlane.xlu0 %173
  %v175 = vsel %vm87, %v82, 0.0
  %176 = vadd.xlane.f32.xlu0 %v175
  %v177 = vpop.xlane.xlu0 %176
  %v178 = vsel %vm87, %v83, 0.0
  %179 = vadd.xlane.f32.xlu0 %v178
  %v180 = vpop.xlane.xlu0 %179
  %v181 = vsel %vm87, %v84, 0.0
  %182 = vadd.xlane.f32.xlu0 %v181
  %v183 = vpop.xlane.xlu0 %182
  %v184 = vrcp.pop 16.0
  %v185 = vmul.f32 %v90, %v184
  %v186 = vmul.f32 %v93, %v184
  %v187 = vmul.f32 %v96, %v184
  %v188 = vmul.f32 %v99, %v184
  %v189 = vmul.f32 %v102, %v184
  %v190 = vmul.f32 %v105, %v184
  %v191 = vmul.f32 %v108, %v184
  %v192 = vmul.f32 %v111, %v184
  %v193 = vmul.f32 %v114, %v184
  %v194 = vmul.f32 %v117, %v184
  %v195 = vmul.f32 %v120, %v184
  %v196 = vmul.f32 %v123, %v184
  %v197 = vmul.f32 %v126, %v184
  %v198 = vmul.f32 %v129, %v184
  %v199 = vmul.f32 %v132, %v184
  %v200 = vmul.f32 %v135, %v184
  %v201 = vmul.f32 %v138, %v184
  %v202 = vmul.f32 %v141, %v184
  %v203 = vmul.f32 %v144, %v184
  %v204 = vmul.f32 %v147, %v184
  %v205 = vmul.f32 %v150, %v184
  %v206 = vmul.f32 %v153, %v184
  %v207 = vmul.f32 %v156, %v184
  %v208 = vmul.f32 %v159, %v184
  %v209 = vmul.f32 %v162, %v184
  %v210 = vmul.f32 %v165, %v184
  %v211 = vmul.f32 %v168, %v184
  %v212 = vmul.f32 %v171, %v184
  %v213 = vmul.f32 %v174, %v184
  %v214 = vmul.f32 %v177, %v184
  %v215 = vmul.f32 %v180, %v184
  %v216 = vmul.f32 %v183, %v184
  %v217 = vsub.f32 %v53, %v185
  %v218 = vsub.f32 %v54, %v186
  %v219 = vsub.f32 %v55, %v187
  %v220 = vsub.f32 %v56, %v188
  %v221 = vsub.f32 %v57, %v189
  %v222 = vsub.f32 %v58, %v190
  %v223 = vsub.f32 %v59, %v191
  %v224 = vsub.f32 %v60, %v192
  %v225 = vsub.f32 %v61, %v193
  %v226 = vsub.f32 %v62, %v194
  %v227 = vsub.f32 %v63, %v195
  %v228 = vsub.f32 %v64, %v196
  %v229 = vsub.f32 %v65, %v197
  %v230 = vsub.f32 %v66, %v198
  %v231 = vsub.f32 %v67, %v199
  %v232 = vsub.f32 %v68, %v200
  %v233 = vsub.f32 %v69, %v201
  %v234 = vsub.f32 %v70, %v202
  %v235 = vsub.f32 %v71, %v203
  %v236 = vsub.f32 %v72, %v204
  %v237 = vsub.f32 %v73, %v205
  %v238 = vsub.f32 %v74, %v206
  %v239 = vsub.f32 %v75, %v207
  %v240 = vsub.f32 %v76, %v208
  %v241 = vsub.f32 %v77, %v209
  %v242 = vsub.f32 %v78, %v210
  %v243 = vsub.f32 %v79, %v211
  %v244 = vsub.f32 %v80, %v212
  %v245 = vsub.f32 %v81, %v213
  %v246 = vsub.f32 %v82, %v214
  %v247 = vsub.f32 %v83, %v215
  %v248 = vsub.f32 %v84, %v216
  %v249 = vmul.f32 %v217, %v217
  %v250 = vmul.f32 %v218, %v218
  %v251 = vmul.f32 %v219, %v219
  %v252 = vmul.f32 %v220, %v220
  %v253 = vmul.f32 %v221, %v221
  %v254 = vmul.f32 %v222, %v222
  %v255 = vmul.f32 %v223, %v223
  %v256 = vmul.f32 %v224, %v224
  %v257 = vmul.f32 %v225, %v225
  %v258 = vmul.f32 %v226, %v226
  %v259 = vmul.f32 %v227, %v227
  %v260 = vmul.f32 %v228, %v228
  %v261 = vmul.f32 %v229, %v229
  %v262 = vmul.f32 %v230, %v230
  %v263 = vmul.f32 %v231, %v231
  %v264 = vmul.f32 %v232, %v232
  %v265 = vmul.f32 %v233, %v233
  %v266 = vmul.f32 %v234, %v234
  %v267 = vmul.f32 %v235, %v235
  %v268 = vmul.f32 %v236, %v236
  %v269 = vmul.f32 %v237, %v237
  %v270 = vmul.f32 %v238, %v238
  %v271 = vmul.f32 %v239, %v239
  %v272 = vmul.f32 %v240, %v240
  %v273 = vmul.f32 %v241, %v241
  %v274 = vmul.f32 %v242, %v242
  %v275 = vmul.f32 %v243, %v243
  %v276 = vmul.f32 %v244, %v244
  %v277 = vmul.f32 %v245, %v245
  %v278 = vmul.f32 %v246, %v246
  %v279 = vmul.f32 %v247, %v247
  %v280 = vmul.f32 %v248, %v248
  %v281 = vsel %vm87, %v249, 0.0
  %282 = vadd.xlane.f32.xlu0 %v281
  %v283 = vpop.xlane.xlu0 %282
  %v284 = vsel %vm87, %v250, 0.0
  %285 = vadd.xlane.f32.xlu0 %v284
  %v286 = vpop.xlane.xlu0 %285
  %v287 = vsel %vm87, %v251, 0.0
  %288 = vadd.xlane.f32.xlu0 %v287
  %v289 = vpop.xlane.xlu0 %288
  %v290 = vsel %vm87, %v252, 0.0
  %291 = vadd.xlane.f32.xlu0 %v290
  %v292 = vpop.xlane.xlu0 %291
  %v293 = vsel %vm87, %v253, 0.0
  %294 = vadd.xlane.f32.xlu0 %v293
  %v295 = vpop.xlane.xlu0 %294
  %v296 = vsel %vm87, %v254, 0.0
  %297 = vadd.xlane.f32.xlu0 %v296
  %v298 = vpop.xlane.xlu0 %297
  %v299 = vsel %vm87, %v255, 0.0
  %300 = vadd.xlane.f32.xlu0 %v299
  %v301 = vpop.xlane.xlu0 %300
  %v302 = vsel %vm87, %v256, 0.0
  %303 = vadd.xlane.f32.xlu0 %v302
  %v304 = vpop.xlane.xlu0 %303
  %v305 = vsel %vm87, %v257, 0.0
  %306 = vadd.xlane.f32.xlu0 %v305
  %v307 = vpop.xlane.xlu0 %306
  %v308 = vsel %vm87, %v258, 0.0
  %309 = vadd.xlane.f32.xlu0 %v308
  %v310 = vpop.xlane.xlu0 %309
  %v311 = vsel %vm87, %v259, 0.0
  %312 = vadd.xlane.f32.xlu0 %v311
  %v313 = vpop.xlane.xlu0 %312
  %v314 = vsel %vm87, %v260, 0.0
  %315 = vadd.xlane.f32.xlu0 %v314
  %v316 = vpop.xlane.xlu0 %315
  %v317 = vsel %vm87, %v261, 0.0
  %318 = vadd.xlane.f32.xlu0 %v317
  %v319 = vpop.xlane.xlu0 %318
  %v320 = vsel %vm87, %v262, 0.0
  %321 = vadd.xlane.f32.xlu0 %v320
  %v322 = vpop.xlane.xlu0 %321
  %v323 = vsel %vm87, %v263, 0.0
  %324 = vadd.xlane.f32.xlu0 %v323
  %v325 = vpop.xlane.xlu0 %324
  %v326 = vsel %vm87, %v264, 0.0
  %327 = vadd.xlane.f32.xlu0 %v326
  %v328 = vpop.xlane.xlu0 %327
  %v329 = vsel %vm87, %v265, 0.0
  %330 = vadd.xlane.f32.xlu0 %v329
  %v331 = vpop.xlane.xlu0 %330
  %v332 = vsel %vm87, %v266, 0.0
  %333 = vadd.xlane.f32.xlu0 %v332
  %v334 = vpop.xlane.xlu0 %333
  %v335 = vsel %vm87, %v267, 0.0
  %336 = vadd.xlane.f32.xlu0 %v335
  %v337 = vpop.xlane.xlu0 %336
  %v338 = vsel %vm87, %v268, 0.0
  %339 = vadd.xlane.f32.xlu0 %v338
  %v340 = vpop.xlane.xlu0 %339
  %v341 = vsel %vm87, %v269, 0.0
  %342 = vadd.xlane.f32.xlu0 %v341
  %v343 = vpop.xlane.xlu0 %342
  %v344 = vsel %vm87, %v270, 0.0
  %345 = vadd.xlane.f32.xlu0 %v344
  %v346 = vpop.xlane.xlu0 %345
  %v347 = vsel %vm87, %v271, 0.0
  %348 = vadd.xlane.f32.xlu0 %v347
  %v349 = vpop.xlane.xlu0 %348
  %v350 = vsel %vm87, %v272, 0.0
  %351 = vadd.xlane.f32.xlu0 %v350
  %v352 = vpop.xlane.xlu0 %351
  %v353 = vsel %vm87, %v273, 0.0
  %354 = vadd.xlane.f32.xlu0 %v353
  %v355 = vpop.xlane.xlu0 %354
  %v356 = vsel %vm87, %v274, 0.0
  %357 = vadd.xlane.f32.xlu0 %v356
  %v358 = vpop.xlane.xlu0 %357
  %v359 = vsel %vm87, %v275, 0.0
  %360 = vadd.xlane.f32.xlu0 %v359
  %v361 = vpop.xlane.xlu0 %360
  %v362 = vsel %vm87, %v276, 0.0
  %363 = vadd.xlane.f32.xlu0 %v362
  %v364 = vpop.xlane.xlu0 %363
  %v365 = vsel %vm87, %v277, 0.0
  %366 = vadd.xlane.f32.xlu0 %v365
  %v367 = vpop.xlane.xlu0 %366
  %v368 = vsel %vm87, %v278, 0.0
  %369 = vadd.xlane.f32.xlu0 %v368
  %v370 = vpop.xlane.xlu0 %369
  %v371 = vsel %vm87, %v279, 0.0
  %372 = vadd.xlane.f32.xlu0 %v371
  %v373 = vpop.xlane.xlu0 %372
  %v374 = vsel %vm87, %v280, 0.0
  %375 = vadd.xlane.f32.xlu0 %v374
  %v376 = vpop.xlane.xlu0 %375
  %v377 = vmul.f32 %v283, %v184
  %v378 = vmul.f32 %v286, %v184
  %v379 = vmul.f32 %v289, %v184
  %v380 = vmul.f32 %v292, %v184
  %v381 = vmul.f32 %v295, %v184
  %v382 = vmul.f32 %v298, %v184
  %v383 = vmul.f32 %v301, %v184
  %v384 = vmul.f32 %v304, %v184
  %v385 = vmul.f32 %v307, %v184
  %v386 = vmul.f32 %v310, %v184
  %v387 = vmul.f32 %v313, %v184
  %v388 = vmul.f32 %v316, %v184
  %v389 = vmul.f32 %v319, %v184
  %v390 = vmul.f32 %v322, %v184
  %v391 = vmul.f32 %v325, %v184
  %v392 = vmul.f32 %v328, %v184
  %v393 = vmul.f32 %v331, %v184
  %v394 = vmul.f32 %v334, %v184
  %v395 = vmul.f32 %v337, %v184
  %v396 = vmul.f32 %v340, %v184
  %v397 = vmul.f32 %v343, %v184
  %v398 = vmul.f32 %v346, %v184
  %v399 = vmul.f32 %v349, %v184
  %v400 = vmul.f32 %v352, %v184
  %v401 = vmul.f32 %v355, %v184
  %v402 = vmul.f32 %v358, %v184
  %v403 = vmul.f32 %v361, %v184
  %v404 = vmul.f32 %v364, %v184
  %v405 = vmul.f32 %v367, %v184
  %v406 = vmul.f32 %v370, %v184
  %v407 = vmul.f32 %v373, %v184
  %v408 = vmul.f32 %v376, %v184
  %v409 = vadd.f32 %v377, 1e-06
  %v410 = vadd.f32 %v378, 1e-06
  %v411 = vadd.f32 %v379, 1e-06
  %v412 = vadd.f32 %v380, 1e-06
  %v413 = vadd.f32 %v381, 1e-06
  %v414 = vadd.f32 %v382, 1e-06
  %v415 = vadd.f32 %v383, 1e-06
  %v416 = vadd.f32 %v384, 1e-06
  %v417 = vadd.f32 %v385, 1e-06
  %v418 = vadd.f32 %v386, 1e-06
  %v419 = vadd.f32 %v387, 1e-06
  %v420 = vadd.f32 %v388, 1e-06
  %v421 = vadd.f32 %v389, 1e-06
  %v422 = vadd.f32 %v390, 1e-06
  %v423 = vadd.f32 %v391, 1e-06
  %v424 = vadd.f32 %v392, 1e-06
  %v425 = vadd.f32 %v393, 1e-06
  %v426 = vadd.f32 %v394, 1e-06
  %v427 = vadd.f32 %v395, 1e-06
  %v428 = vadd.f32 %v396, 1e-06
  %v429 = vadd.f32 %v397, 1e-06
  %v430 = vadd.f32 %v398, 1e-06
  %v431 = vadd.f32 %v399, 1e-06
  %v432 = vadd.f32 %v400, 1e-06
  %v433 = vadd.f32 %v401, 1e-06
  %v434 = vadd.f32 %v402, 1e-06
  %v435 = vadd.f32 %v403, 1e-06
  %v436 = vadd.f32 %v404, 1e-06
  %v437 = vadd.f32 %v405, 1e-06
  %v438 = vadd.f32 %v406, 1e-06
  %v439 = vadd.f32 %v407, 1e-06
  %v440 = vadd.f32 %v408, 1e-06
  %v441 = vrsqrt.pop %v409
  %v442 = vrsqrt.pop %v410
  %v443 = vrsqrt.pop %v411
  %v444 = vrsqrt.pop %v412
  %v445 = vrsqrt.pop %v413
  %v446 = vrsqrt.pop %v414
  %v447 = vrsqrt.pop %v415
  %v448 = vrsqrt.pop %v416
  %v449 = vrsqrt.pop %v417
  %v450 = vrsqrt.pop %v418
  %v451 = vrsqrt.pop %v419
  %v452 = vrsqrt.pop %v420
  %v453 = vrsqrt.pop %v421
  %v454 = vrsqrt.pop %v422
  %v455 = vrsqrt.pop %v423
  %v456 = vrsqrt.pop %v424
  %v457 = vrsqrt.pop %v425
  %v458 = vrsqrt.pop %v426
  %v459 = vrsqrt.pop %v427
  %v460 = vrsqrt.pop %v428
  %v461 = vrsqrt.pop %v429
  %v462 = vrsqrt.pop %v430
  %v463 = vrsqrt.pop %v431
  %v464 = vrsqrt.pop %v432
  %v465 = vrsqrt.pop %v433
  %v466 = vrsqrt.pop %v434
  %v467 = vrsqrt.pop %v435
  %v468 = vrsqrt.pop %v436
  %v469 = vrsqrt.pop %v437
  %v470 = vrsqrt.pop %v438
  %v471 = vrsqrt.pop %v439
  %v472 = vrsqrt.pop %v440
  %v473 = vmul.f32 %v217, %v441
  %v474 = vmul.f32 %v218, %v442
  %v475 = vmul.f32 %v219, %v443
  %v476 = vmul.f32 %v220, %v444
  %v477 = vmul.f32 %v221, %v445
  %v478 = vmul.f32 %v222, %v446
  %v479 = vmul.f32 %v223, %v447
  %v480 = vmul.f32 %v224, %v448
  %v481 = vmul.f32 %v225, %v449
  %v482 = vmul.f32 %v226, %v450
  %v483 = vmul.f32 %v227, %v451
  %v484 = vmul.f32 %v228, %v452
  %v485 = vmul.f32 %v229, %v453
  %v486 = vmul.f32 %v230, %v454
  %v487 = vmul.f32 %v231, %v455
  %v488 = vmul.f32 %v232, %v456
  %v489 = vmul.f32 %v233, %v457
  %v490 = vmul.f32 %v234, %v458
  %v491 = vmul.f32 %v235, %v459
  %v492 = vmul.f32 %v236, %v460
  %v493 = vmul.f32 %v237, %v461
  %v494 = vmul.f32 %v238, %v462
  %v495 = vmul.f32 %v239, %v463
  %v496 = vmul.f32 %v240, %v464
  %v497 = vmul.f32 %v241, %v465
  %v498 = vmul.f32 %v242, %v466
  %v499 = vmul.f32 %v243, %v467
  %v500 = vmul.f32 %v244, %v468
  %v501 = vmul.f32 %v245, %v469
  %v502 = vmul.f32 %v246, %v470
  %v503 = vmul.f32 %v247, %v471
  %v504 = vmul.f32 %v248, %v472
  %v506 = vlaneseq
  %v507 = vshrl.u32 %v506, 7
  %v508 = vsub.s32 0, %v507
  %v509 = vrot.slane %v85, %v508
  %v511 = vmul.f32 %v473, %v509
  %v512 = vmul.f32 %v474, %v509
  %v513 = vmul.f32 %v475, %v509
  %v514 = vmul.f32 %v476, %v509
  %v515 = vmul.f32 %v477, %v509
  %v516 = vmul.f32 %v478, %v509
  %v517 = vmul.f32 %v479, %v509
  %v518 = vmul.f32 %v480, %v509
  %v519 = vmul.f32 %v481, %v509
  %v520 = vmul.f32 %v482, %v509
  %v521 = vmul.f32 %v483, %v509
  %v522 = vmul.f32 %v484, %v509
  %v523 = vmul.f32 %v485, %v509
  %v524 = vmul.f32 %v486, %v509
  %v525 = vmul.f32 %v487, %v509
  %v526 = vmul.f32 %v488, %v509
  %v527 = vmul.f32 %v489, %v509
  %v528 = vmul.f32 %v490, %v509
  %v529 = vmul.f32 %v491, %v509
  %v530 = vmul.f32 %v492, %v509
  %v531 = vmul.f32 %v493, %v509
  %v532 = vmul.f32 %v494, %v509
  %v533 = vmul.f32 %v495, %v509
  %v534 = vmul.f32 %v496, %v509
  %v535 = vmul.f32 %v497, %v509
  %v536 = vmul.f32 %v498, %v509
  %v537 = vmul.f32 %v499, %v509
  %v538 = vmul.f32 %v500, %v509
  %v539 = vmul.f32 %v501, %v509
  %v540 = vmul.f32 %v502, %v509
  %v541 = vmul.f32 %v503, %v509
  %v542 = vmul.f32 %v504, %v509
  %v544 = vlaneseq
  %v545 = vshrl.u32 %v544, 7
  %v546 = vsub.s32 0, %v545
  %v547 = vrot.slane %v86, %v546
  %v549 = vadd.f32 %v511, %v547
  %v550 = vadd.f32 %v512, %v547
  %v551 = vadd.f32 %v513, %v547
  %v552 = vadd.f32 %v514, %v547
  %v553 = vadd.f32 %v515, %v547
  %v554 = vadd.f32 %v516, %v547
  %v555 = vadd.f32 %v517, %v547
  %v556 = vadd.f32 %v518, %v547
  %v557 = vadd.f32 %v519, %v547
  %v558 = vadd.f32 %v520, %v547
  %v559 = vadd.f32 %v521, %v547
  %v560 = vadd.f32 %v522, %v547
  %v561 = vadd.f32 %v523, %v547
  %v562 = vadd.f32 %v524, %v547
  %v563 = vadd.f32 %v525, %v547
  %v564 = vadd.f32 %v526, %v547
  %v565 = vadd.f32 %v527, %v547
  %v566 = vadd.f32 %v528, %v547
  %v567 = vadd.f32 %v529, %v547
  %v568 = vadd.f32 %v530, %v547
  %v569 = vadd.f32 %v531, %v547
  %v570 = vadd.f32 %v532, %v547
  %v571 = vadd.f32 %v533, %v547
  %v572 = vadd.f32 %v534, %v547
  %v573 = vadd.f32 %v535, %v547
  %v574 = vadd.f32 %v536, %v547
  %v575 = vadd.f32 %v537, %v547
  %v576 = vadd.f32 %v538, %v547
  %v577 = vadd.f32 %v539, %v547
  %v578 = vadd.f32 %v540, %v547
  %v579 = vadd.f32 %v541, %v547
  %v580 = vadd.f32 %v542, %v547
  %v581 = vcombine.low %v549, %v551
  %v583 = vunpack.c.l.s4 1983009808
  %v584 = vunpack.c.0.s8 %v583
  %v585 = vlaneseq
  %v586 = vshrl.u32 %v585, 7
  %v587 = vsub.s32 %v584, %v586
  %v588 = vrot.slane %v581, %v587
  %v589 = vcombine.low %v550, %v552
  %v591 = vunpack.c.l.s4 1983009808
  %v592 = vunpack.c.0.s8 %v591
  %v593 = vlaneseq
  %v594 = vshrl.u32 %v593, 7
  %v595 = vsub.s32 %v592, %v594
  %v596 = vrot.slane %v589, %v595
  %v597 = vcombine.low %v588, %v596
  %v598 = vcombine.high %v588, %v596
  %v600 = vunpack.c.l.s4 1934713408
  %v601 = vunpack.c.0.s8 %v600
  %v602 = vlaneseq
  %v603 = vshrl.u32 %v602, 7
  %v604 = vsub.s32 %v601, %v603
  %v605 = vrot.slane %v597, %v604
  %v607 = vunpack.c.l.s4 1934713408
  %v608 = vunpack.c.0.s8 %v607
  %v609 = vlaneseq
  %v610 = vshrl.u32 %v609, 7
  %v611 = vsub.s32 %v608, %v610
  %v612 = vrot.slane %v598, %v611
  %v613 = vcombine.high %v605, 0.0
  %v614 = vcombine.high %v612, 0.0
  %v615 = vcombine.low %v553, %v555
  %v617 = vunpack.c.l.s4 1983009808
  %v618 = vunpack.c.0.s8 %v617
  %v619 = vlaneseq
  %v620 = vshrl.u32 %v619, 7
  %v621 = vsub.s32 %v618, %v620
  %v622 = vrot.slane %v615, %v621
  %v623 = vcombine.low %v554, %v556
  %v625 = vunpack.c.l.s4 1983009808
  %v626 = vunpack.c.0.s8 %v625
  %v627 = vlaneseq
  %v628 = vshrl.u32 %v627, 7
  %v629 = vsub.s32 %v626, %v628
  %v630 = vrot.slane %v623, %v629
  %v631 = vcombine.low %v622, %v630
  %v632 = vcombine.high %v622, %v630
  %v634 = vunpack.c.l.s4 1934713408
  %v635 = vunpack.c.0.s8 %v634
  %v636 = vlaneseq
  %v637 = vshrl.u32 %v636, 7
  %v638 = vsub.s32 %v635, %v637
  %v639 = vrot.slane %v631, %v638
  %v641 = vunpack.c.l.s4 1934713408
  %v642 = vunpack.c.0.s8 %v641
  %v643 = vlaneseq
  %v644 = vshrl.u32 %v643, 7
  %v645 = vsub.s32 %v642, %v644
  %v646 = vrot.slane %v632, %v645
  %v647 = vcombine.high %v639, 0.0
  %v648 = vcombine.high %v646, 0.0
  %v649 = vcombine.low %v557, %v559
  %v651 = vunpack.c.l.s4 1983009808
  %v652 = vunpack.c.0.s8 %v651
  %v653 = vlaneseq
  %v654 = vshrl.u32 %v653, 7
  %v655 = vsub.s32 %v652, %v654
  %v656 = vrot.slane %v649, %v655
  %v657 = vcombine.low %v558, %v560
  %v659 = vunpack.c.l.s4 1983009808
  %v660 = vunpack.c.0.s8 %v659
  %v661 = vlaneseq
  %v662 = vshrl.u32 %v661, 7
  %v663 = vsub.s32 %v660, %v662
  %v664 = vrot.slane %v657, %v663
  %v665 = vcombine.low %v656, %v664
  %v666 = vcombine.high %v656, %v664
  %v668 = vunpack.c.l.s4 1934713408
  %v669 = vunpack.c.0.s8 %v668
  %v670 = vlaneseq
  %v671 = vshrl.u32 %v670, 7
  %v672 = vsub.s32 %v669, %v671
  %v673 = vrot.slane %v665, %v672
  %v675 = vunpack.c.l.s4 1934713408
  %v676 = vunpack.c.0.s8 %v675
  %v677 = vlaneseq
  %v678 = vshrl.u32 %v677, 7
  %v679 = vsub.s32 %v676, %v678
  %v680 = vrot.slane %v666, %v679
  %v681 = vcombine.high %v673, 0.0
  %v682 = vcombine.high %v680, 0.0
  %v683 = vcombine.low %v561, %v563
  %v685 = vunpack.c.l.s4 1983009808
  %v686 = vunpack.c.0.s8 %v685
  %v687 = vlaneseq
  %v688 = vshrl.u32 %v687, 7
  %v689 = vsub.s32 %v686, %v688
  %v690 = vrot.slane %v683, %v689
  %v691 = vcombine.low %v562, %v564
  %v693 = vunpack.c.l.s4 1983009808
  %v694 = vunpack.c.0.s8 %v693
  %v695 = vlaneseq
  %v696 = vshrl.u32 %v695, 7
  %v697 = vsub.s32 %v694, %v696
  %v698 = vrot.slane %v691, %v697
  %v699 = vcombine.low %v690, %v698
  %v700 = vcombine.high %v690, %v698
  %v702 = vunpack.c.l.s4 1934713408
  %v703 = vunpack.c.0.s8 %v702
  %v704 = vlaneseq
  %v705 = vshrl.u32 %v704, 7
  %v706 = vsub.s32 %v703, %v705
  %v707 = vrot.slane %v699, %v706
  %v709 = vunpack.c.l.s4 1934713408
  %v710 = vunpack.c.0.s8 %v709
  %v711 = vlaneseq
  %v712 = vshrl.u32 %v711, 7
  %v713 = vsub.s32 %v710, %v712
  %v714 = vrot.slane %v700, %v713
  %v715 = vcombine.high %v707, 0.0
  %v716 = vcombine.high %v714, 0.0
  %v717 = vcombine.low %v565, %v567
  %v719 = vunpack.c.l.s4 1983009808
  %v720 = vunpack.c.0.s8 %v719
  %v721 = vlaneseq
  %v722 = vshrl.u32 %v721, 7
  %v723 = vsub.s32 %v720, %v722
  %v724 = vrot.slane %v717, %v723
  %v725 = vcombine.low %v566, %v568
  %v727 = vunpack.c.l.s4 1983009808
  %v728 = vunpack.c.0.s8 %v727
  %v729 = vlaneseq
  %v730 = vshrl.u32 %v729, 7
  %v731 = vsub.s32 %v728, %v730
  %v732 = vrot.slane %v725, %v731
  %v733 = vcombine.low %v724, %v732
  %v734 = vcombine.high %v724, %v732
  %v736 = vunpack.c.l.s4 1934713408
  %v737 = vunpack.c.0.s8 %v736
  %v738 = vlaneseq
  %v739 = vshrl.u32 %v738, 7
  %v740 = vsub.s32 %v737, %v739
  %v741 = vrot.slane %v733, %v740
  %v743 = vunpack.c.l.s4 1934713408
  %v744 = vunpack.c.0.s8 %v743
  %v745 = vlaneseq
  %v746 = vshrl.u32 %v745, 7
  %v747 = vsub.s32 %v744, %v746
  %v748 = vrot.slane %v734, %v747
  %v749 = vcombine.high %v741, 0.0
  %v750 = vcombine.high %v748, 0.0
  %v751 = vcombine.low %v569, %v571
  %v753 = vunpack.c.l.s4 1983009808
  %v754 = vunpack.c.0.s8 %v753
  %v755 = vlaneseq
  %v756 = vshrl.u32 %v755, 7
  %v757 = vsub.s32 %v754, %v756
  %v758 = vrot.slane %v751, %v757
  %v759 = vcombine.low %v570, %v572
  %v761 = vunpack.c.l.s4 1983009808
  %v762 = vunpack.c.0.s8 %v761
  %v763 = vlaneseq
  %v764 = vshrl.u32 %v763, 7
  %v765 = vsub.s32 %v762, %v764
  %v766 = vrot.slane %v759, %v765
  %v767 = vcombine.low %v758, %v766
  %v768 = vcombine.high %v758, %v766
  %v770 = vunpack.c.l.s4 1934713408
  %v771 = vunpack.c.0.s8 %v770
  %v772 = vlaneseq
  %v773 = vshrl.u32 %v772, 7
  %v774 = vsub.s32 %v771, %v773
  %v775 = vrot.slane %v767, %v774
  %v777 = vunpack.c.l.s4 1934713408
  %v778 = vunpack.c.0.s8 %v777
  %v779 = vlaneseq
  %v780 = vshrl.u32 %v779, 7
  %v781 = vsub.s32 %v778, %v780
  %v782 = vrot.slane %v768, %v781
  %v783 = vcombine.high %v775, 0.0
  %v784 = vcombine.high %v782, 0.0
  %v785 = vcombine.low %v573, %v575
  %v787 = vunpack.c.l.s4 1983009808
  %v788 = vunpack.c.0.s8 %v787
  %v789 = vlaneseq
  %v790 = vshrl.u32 %v789, 7
  %v791 = vsub.s32 %v788, %v790
  %v792 = vrot.slane %v785, %v791
  %v793 = vcombine.low %v574, %v576
  %v795 = vunpack.c.l.s4 1983009808
  %v796 = vunpack.c.0.s8 %v795
  %v797 = vlaneseq
  %v798 = vshrl.u32 %v797, 7
  %v799 = vsub.s32 %v796, %v798
  %v800 = vrot.slane %v793, %v799
  %v801 = vcombine.low %v792, %v800
  %v802 = vcombine.high %v792, %v800
  %v804 = vunpack.c.l.s4 1934713408
  %v805 = vunpack.c.0.s8 %v804
  %v806 = vlaneseq
  %v807 = vshrl.u32 %v806, 7
  %v808 = vsub.s32 %v805, %v807
  %v809 = vrot.slane %v801, %v808
  %v811 = vunpack.c.l.s4 1934713408
  %v812 = vunpack.c.0.s8 %v811
  %v813 = vlaneseq
  %v814 = vshrl.u32 %v813, 7
  %v815 = vsub.s32 %v812, %v814
  %v816 = vrot.slane %v802, %v815
  %v817 = vcombine.high %v809, 0.0
  %v818 = vcombine.high %v816, 0.0
  %v819 = vcombine.low %v577, %v579
  %v821 = vunpack.c.l.s4 1983009808
  %v822 = vunpack.c.0.s8 %v821
  %v823 = vlaneseq
  %v824 = vshrl.u32 %v823, 7
  %v825 = vsub.s32 %v822, %v824
  %v826 = vrot.slane %v819, %v825
  %v827 = vcombine.low %v578, %v580
  %v829 = vunpack.c.l.s4 1983009808
  %v830 = vunpack.c.0.s8 %v829
  %v831 = vlaneseq
  %v832 = vshrl.u32 %v831, 7
  %v833 = vsub.s32 %v830, %v832
  %v834 = vrot.slane %v827, %v833
  %v835 = vcombine.low %v826, %v834
  %v836 = vcombine.high %v826, %v834
  %v838 = vunpack.c.l.s4 1934713408
  %v839 = vunpack.c.0.s8 %v838
  %v840 = vlaneseq
  %v841 = vshrl.u32 %v840, 7
  %v842 = vsub.s32 %v839, %v841
  %v843 = vrot.slane %v835, %v842
  %v845 = vunpack.c.l.s4 1934713408
  %v846 = vunpack.c.0.s8 %v845
  %v847 = vlaneseq
  %v848 = vshrl.u32 %v847, 7
  %v849 = vsub.s32 %v846, %v848
  %v850 = vrot.slane %v836, %v849
  %v851 = vcombine.high %v843, 0.0
  %v852 = vcombine.high %v850, 0.0
  %v861 = vcombine.low %v605, %v639
  %v862 = vcombine.low %v673, %v707
  %v863 = vcombine.low %v741, %v775
  %v864 = vcombine.low %v809, %v843
  %v877 = vcombine.low %v613, %v647
  %v878 = vcombine.low %v681, %v715
  %v879 = vcombine.low %v749, %v783
  %v880 = vcombine.low %v817, %v851
  %881 = vrot.lane.b32.xlu0 %v877, 16
  %v882 = vpop.permute.xlu0 %881
  %883 = vrot.lane.b32.xlu0 %v878, 16
  %v884 = vpop.permute.xlu0 %883
  %885 = vrot.lane.b32.xlu0 %v879, 16
  %v886 = vpop.permute.xlu0 %885
  %887 = vrot.lane.b32.xlu0 %v880, 16
  %v888 = vpop.permute.xlu0 %887
  %v901 = vcombine.low %v612, %v646
  %v902 = vcombine.low %v680, %v714
  %v903 = vcombine.low %v748, %v782
  %v904 = vcombine.low %v816, %v850
  %905 = vrot.lane.b32.xlu0 %v901, 32
  %v906 = vpop.permute.xlu0 %905
  %907 = vrot.lane.b32.xlu0 %v902, 32
  %v908 = vpop.permute.xlu0 %907
  %909 = vrot.lane.b32.xlu0 %v903, 32
  %v910 = vpop.permute.xlu0 %909
  %911 = vrot.lane.b32.xlu0 %v904, 32
  %v912 = vpop.permute.xlu0 %911
  %v925 = vcombine.low %v614, %v648
  %v926 = vcombine.low %v682, %v716
  %v927 = vcombine.low %v750, %v784
  %v928 = vcombine.low %v818, %v852
  %929 = vrot.lane.b32.xlu0 %v925, 48
  %v930 = vpop.permute.xlu0 %929
  %931 = vrot.lane.b32.xlu0 %v926, 48
  %v932 = vpop.permute.xlu0 %931
  %933 = vrot.lane.b32.xlu0 %v927, 48
  %v934 = vpop.permute.xlu0 %933
  %935 = vrot.lane.b32.xlu0 %v928, 48
  %v936 = vpop.permute.xlu0 %935
  %vm941 = vcmask 130048
  %v942 = vsel %vm941, %v861, %v882
  %v943 = vsel %vm941, %v862, %v884
  %v944 = vsel %vm941, %v863, %v886
  %v945 = vsel %vm941, %v864, %v888
  %vm946 = vcmask 261120
  %v947 = vsel %vm946, %v942, %v906
  %v948 = vsel %vm946, %v943, %v908
  %v949 = vsel %vm946, %v944, %v910
  %v950 = vsel %vm946, %v945, %v912
  %vm951 = vcmask 392192
  %v952 = vsel %vm951, %v947, %v930
  %v953 = vsel %vm951, %v948, %v932
  %v954 = vsel %vm951, %v949, %v934
  %v955 = vsel %vm951, %v950, %v936
  %v956 = vpack.c.bf16 %v953, %v952
  %v957 = vpack.c.bf16 %v955, %v954
  %v958 = vld [vmem:[%s3] sm:$0xf]
  %v959 = vld [vmem:[%s3 + $0x4] sm:$0xf]
  %v960 = vld [vmem:[%s3 + $0x8] sm:$0xf]
  %v961 = vld [vmem:[%s3 + $0xc] sm:$0xf]
  %v962 = vld [vmem:[%s3 + $0x10] sm:$0xf]
  %v963 = vld [vmem:[%s3 + $0x14] sm:$0xf]
  %v964 = vld [vmem:[%s3 + $0x18] sm:$0xf]
  %v965 = vld [vmem:[%s3 + $0x1c] sm:$0xf]
  %v966 = vld [vmem:[%s4] sm:$0x1]
  %v968 = vlaneseq
  %v969 = vshrl.u32 %v968, 7
  %v970 = vsub.s32 0, %v969
  %v971 = vrot.slane %v966, %v970
  %v981 = vunpack.c.l.b16 %v958
  %v982 = vunpack.c.l.b16 %v959
  %v983 = vunpack.c.l.b16 %v960
  %v984 = vunpack.c.l.b16 %v961
  %v985 = vunpack.c.l.b16 %v962
  %v986 = vunpack.c.l.b16 %v963
  %v987 = vunpack.c.l.b16 %v964
  %v988 = vunpack.c.l.b16 %v965
  %v989 = vpack.c.b16 %v982, %v981
  %v990 = vpack.c.b16 %v984, %v983
  %v991 = vpack.c.b16 %v986, %v985
  %v992 = vpack.c.b16 %v988, %v987
  %vm997 = vcmask 523264
  %v999 = vsel %vm997, %v956, 0
  %v1002 = vsel %vm997, %v957, 0
  %1004 = vmatprep.subr.bf16.mxu0 0
  %1005 = vmatpush1.bf16.msra.mxu0 %v989
  %1006 = vmatprep.subr.bf16.mxu0 0
  %1007 = vmatpush1.bf16.msra.mxu0 %v990
  %1008 = vmatprep.subr.bf16.mxu0 0
  %1009 = vmatpush1.bf16.msra.mxu0 %v991
  %1010 = vmatprep.subr.bf16.mxu0 0
  %1011 = vmatpush1.bf16.msra.mxu0 %v992
  %1012 = vmatprep.subr.bf16.mxu0 0
  %1013 = vmatpush1.bf16.msra.mxu0 0
  %1014 = vmatprep.subr.bf16.mxu0 0
  %1015 = vmatpush1.bf16.msra.mxu0 0
  %1016 = vmatprep.subr.bf16.mxu0 0
  %1017 = vmatpush1.bf16.msra.mxu0 0
  %1018 = vmatprep.subr.bf16.mxu0 0
  %1019 = vmatpush1.bf16.msra.mxu0 0
  %1020 = vmatprep.subr.bf16.mxu0 0
  %1021 = vmatpush1.bf16.msra.mxu0 0
  %1022 = vmatprep.subr.bf16.mxu0 0
  %1023 = vmatpush1.bf16.msra.mxu0 0
  %1024 = vmatprep.subr.bf16.mxu0 0
  %1025 = vmatpush1.bf16.msra.mxu0 0
  %1026 = vmatprep.subr.bf16.mxu0 0
  %1027 = vmatpush1.bf16.msra.mxu0 0
  %1028 = vmatprep.subr.bf16.mxu0 0
  %1029 = vmatpush1.bf16.msra.mxu0 0
  %1030 = vmatprep.subr.bf16.mxu0 0
  %1031 = vmatpush1.bf16.msra.mxu0 0
  %1032 = vmatprep.subr.bf16.mxu0 0
  %1033 = vmatpush1.bf16.msra.mxu0 0
  %1034 = vmatprep.subr.bf16.mxu0 0
  %1035 = vmatpush1.bf16.msra.mxu0 0
  %1036 = vmatprep.mubr.bf16.mxu0 0
  %1037 = vmatmul.mubr.bf16.gmra.mrb[0].mxu0 %v999
  %v1038 = vpop.f32.mrb[0].mxu0
  %v1039 = vadd.f32 %v971, %v1038
  %v1040 = vpop.f32.mrb[0].mxu0
  %v1041 = vpop.f32.mrb[0].mxu0
  %v1042 = vadd.f32 %v971, %v1041
  %v1043 = vpop.f32.mrb[0].mxu0
  %1044 = vmatprep.mubr.bf16.mxu0 0
  %1045 = vmatmul.mubr.bf16.gmra.mrb[0].mxu0 %v1002
  %v1046 = vpop.f32.mrb[0].mxu0
  %v1047 = vadd.f32 %v971, %v1046
  %v1048 = vpop.f32.mrb[0].mxu0
  %v1049 = vpop.f32.mrb[0].mxu0
  %v1050 = vadd.f32 %v971, %v1049
  %v1051 = vpop.f32.mrb[0].mxu0
  %1052 = vdwg.mxu0
  %v1053 = vpack.c.bf16 %v1042, %v1039
  %v1054 = vpack.c.bf16 %v1050, %v1047
  %v1057 = vunpack.c.l.b16 %v1053
  %v1058 = vunpack.c.h.b16 %v1053
  %v1059 = vunpack.c.l.b16 %v1054
  %v1060 = vunpack.c.h.b16 %v1054
  %v1061 = vpack.c.b16 %v1057, %v1057
  %v1062 = vpack.c.b16 %v1058, %v1058
  %v1063 = vpack.c.b16 %v1059, %v1059
  %v1064 = vpack.c.b16 %v1060, %v1060
  %vm1069 = vcmask 257024
  %1070 = vst.msk [vmem:[%s5] sm:$0xf] %vm1069, %v1061
  %1071 = vst.msk [vmem:[%s5 + $0x4] sm:$0xf] %vm1069, %v1062
  %1072 = vst.msk [vmem:[%s5 + $0x8] sm:$0xf] %vm1069, %v1063
  %1073 = vst.msk [vmem:[%s5 + $0xc] sm:$0xf] %vm1069, %v1064
  // Predicated region
  $region22: #{convnext_forward.10} parent=0 // pred_check
    _
  $region23: #{convnext_forward.10} parent=0 // pred_check_branch
    %1075 = sbr.rel (0) target = $region25
  $region24: #{convnext_forward.10} parent=0 // pred_region
    _
  $region25: #{convnext_forward.10} parent=0 // pred_fallthru
    _
  // Predicated region
  $region26: #{convnext_forward.10} parent=0 // pred_check
    _
  $region27: #{convnext_forward.10} parent=0 // pred_check_branch
    %1077 = sbr.rel (0) target = $region29
  $region28: #{convnext_forward.10} parent=0 // pred_region
    _
  $region29: #{convnext_forward.10} parent=0 // pred_fallthru
    _

// kernel: convnext_forward.13
$region0: #{convnext_forward.13}
  #allocation0 [shape = 'u32[]', space=smem, size = 0x4, offset = 0x4, fixed_abs, tag = 'smem constant byte address 0x4 - core index']
  #allocation1 [shape = 'u32[144,128]{1,0:T(1,128)}', space=vmem, size = 0x12000, scoped, tag = 'internal scratch']
  %s0 = inlined_call_operand.vmem [shape: bf16[2,16,32], index: 0, kind: input, shape index: {}]
  %s1 = inlined_call_operand.vmem [shape: f32[1,32], index: 1, kind: input, shape index: {}]
  %s2 = inlined_call_operand.vmem [shape: f32[1,32], index: 2, kind: input, shape index: {}]
  %s3 = inlined_call_operand.vmem [shape: bf16[32,10], index: 3, kind: input, shape index: {}]
  %s4 = inlined_call_operand.vmem [shape: f32[1,10], index: 4, kind: input, shape index: {}]
  %s5 = inlined_call_operand.hbm [shape: f32[2,10], index: 5, kind: output, shape index: {}]
  %s6 = sld [smem:[#allocation0]]
  $region30: #{convnext_forward.13} parent=0
    _
  %s8 = ssub.s32 1, %s6
  %s9 = scalar_select 0, %s8, %s6
  $region1: #{convnext_forward.13} parent=0
    #allocation2 [shape = 'u8[1024]{0}', space=vmem, size = 0x400, scoped, tag = 'output window, operand 0, single buffered']
    #allocation3 [shape = 's32[1]{0}', space=sflag, size = 0x4, scoped, tag = 'scoped memory for convnext_forward.13']
    %10 = vsyncpa [#allocation3], 0
    // Predicated region
    $region2: #{convnext_forward.13} parent=1 // pred_check
      _
    $region3: #{convnext_forward.13} parent=1 // pred_check_branch
      %12 = sbr.rel (0) target = $region5
    $region4: #{convnext_forward.13} parent=1 // pred_region
      _
    $region5: #{convnext_forward.13} parent=1 // pred_fallthru
      _
    // Predicated region
    $region6: #{convnext_forward.13} parent=1 // pred_check
      _
    $region7: #{convnext_forward.13} parent=1 // pred_check_branch
      %14 = sbr.rel (0) target = $region9
    $region8: #{convnext_forward.13} parent=1 // pred_region
      _
    $region9: #{convnext_forward.13} parent=1 // pred_fallthru
      _
    // Predicated region
    $region10: #{convnext_forward.13} parent=1 // pred_check
      _
    $region11: #{convnext_forward.13} parent=1 // pred_check_branch
      %16 = sbr.rel (0) target = $region13
    $region12: #{convnext_forward.13} parent=1 // pred_region
      _
    $region13: #{convnext_forward.13} parent=1 // pred_fallthru
      _
    // Predicated region
    $region14: #{convnext_forward.13} parent=1 // pred_check
      _
    $region15: #{convnext_forward.13} parent=1 // pred_check_branch
      %18 = sbr.rel (0) target = $region17
    $region16: #{convnext_forward.13} parent=1 // pred_region
      _
    $region17: #{convnext_forward.13} parent=1 // pred_fallthru
      _
    // Predicated region
    $region18: #{convnext_forward.13} parent=1 // pred_check
      _
    $region19: #{convnext_forward.13} parent=1 // pred_check_branch
      %20 = sbr.rel (0) target = $region21
    $region20: #{convnext_forward.13} parent=1 // pred_region
      _
    $region21: #{convnext_forward.13} parent=1 // pred_fallthru
      _
    %v22 = vld [vmem:[%s0] sm:$0xf]
    %v23 = vld [vmem:[%s0 + $0x4] sm:$0xf]
    %v24 = vld [vmem:[%s0 + $0x8] sm:$0xf]
    %v25 = vld [vmem:[%s0 + $0xc] sm:$0xf]
    %v26 = vunpack.c.l.bf16 %v22
    %v27 = vunpack.c.l.bf16 %v23
    %v28 = vunpack.c.l.bf16 %v24
    %v29 = vunpack.c.l.bf16 %v25
    %vm30 = vcmask 261120
    %v31 = vsel %vm30, %v26, 0.0
    %v32 = vsel %vm30, %v27, 0.0
    %v33 = vadd.f32 %v31, %v32
    %v34 = vrot.slane %v33, 4
    %v35 = vadd.f32 %v33, %v34
    %v36 = vrot.slane %v35, 2
    %v37 = vadd.f32 %v35, %v36
    %v38 = vrot.slane %v37, 1
    %v39 = vadd.f32 %v37, %v38
    %v40 = vsel %vm30, %v28, 0.0
    %v41 = vsel %vm30, %v29, 0.0
    %v42 = vadd.f32 %v40, %v41
    %v43 = vrot.slane %v42, 4
    %v44 = vadd.f32 %v42, %v43
    %v45 = vrot.slane %v44, 2
    %v46 = vadd.f32 %v44, %v45
    %v47 = vrot.slane %v46, 1
    %v48 = vadd.f32 %v46, %v47
    %v49 = vrcp.pop 16.0
    %v50 = vmul.f32 %v39, %v49
    %v51 = vmul.f32 %v48, %v49
    %v52 = vld [vmem:[%s1] sm:$0x1]
    %v53 = vld [vmem:[%s2] sm:$0x1]
    %vm56 = vcmask 1041409
    %v57 = vsel %vm56, %v51, %v50
    %vm59 = vcmask 254976
    %v60 = vsel %vm59, %v57, 0.0
    %61 = vadd.xlane.f32.xlu0 %v60
    %v62 = vpop.xlane.xlu0 %61
    %v63 = vrcp.pop 32.0
    %v64 = vmul.f32 %v62, %v63
    %v66 = vrot.slane %v64, 1
    %v69 = vsub.f32 %v50, %v64
    %v70 = vsub.f32 %v51, %v66
    %v71 = vmul.f32 %v69, %v69
    %v72 = vmul.f32 %v70, %v70
    %v75 = vrot.slane %v72, 7
    %v76 = vsel %vm56, %v75, %v71
    %v78 = vsel %vm59, %v76, 0.0
    %79 = vadd.xlane.f32.xlu0 %v78
    %v80 = vpop.xlane.xlu0 %79
    %v81 = vmul.f32 %v80, %v63
    %v82 = vadd.f32 %v81, 1e-06
    %v83 = vrsqrt.pop %v82
    %v85 = vrot.slane %v83, 1
    %v88 = vmul.f32 %v69, %v83
    %v89 = vmul.f32 %v70, %v85
    %v91 = vlaneseq
    %v92 = vshrl.u32 %v91, 7
    %v93 = vsub.s32 0, %v92
    %v94 = vrot.slane %v52, %v93
    %v96 = vmul.f32 %v88, %v94
    %v97 = vmul.f32 %v89, %v94
    %v99 = vlaneseq
    %v100 = vshrl.u32 %v99, 7
    %v101 = vsub.s32 0, %v100
    %v102 = vrot.slane %v53, %v101
    %v104 = vadd.f32 %v96, %v102
    %v105 = vadd.f32 %v97, %v102
    %v106 = vpack.c.bf16 %v104, %v104
    %v107 = vpack.c.bf16 %v105, %v105
    %v108 = vld [vmem:[%s3] sm:$0xf]
    %v109 = vld [vmem:[%s3 + $0x4] sm:$0xf]
    %v110 = vld [vmem:[%s3 + $0x8] sm:$0xf]
    %v111 = vld [vmem:[%s3 + $0xc] sm:$0xf]
    %v112 = vld [vmem:[%s4] sm:$0x1]
    %v114 = vlaneseq
    %v115 = vshrl.u32 %v114, 7
    %v116 = vsub.s32 0, %v115
    %v117 = vrot.slane %v112, %v116
    %v121 = vunpack.c.l.b16 %v106
    %v122 = vunpack.c.l.b16 %v107
    %v123 = vrot.slane %v122, 7
    %v124 = vsel %vm56, %v123, %v121
    %v125 = vpack.c.b16 %v124, %v124
    %v130 = vunpack.c.l.b16 %v108
    %v131 = vunpack.c.l.b16 %v109
    %v132 = vunpack.c.l.b16 %v110
    %v133 = vunpack.c.l.b16 %v111
    %v134 = vpack.c.b16 %v131, %v130
    %v135 = vpack.c.b16 %v133, %v132
    %v139 = vsel %vm30, %v125, 0
    %141 = vmatprep.subr.bf16.mxu0 0
    %142 = vmatpush1.bf16.msra.mxu0 %v134
    %143 = vmatprep.subr.bf16.mxu0 0
    %144 = vmatpush1.bf16.msra.mxu0 %v135
    %145 = vmatprep.subr.bf16.mxu0 0
    %146 = vmatpush1.bf16.msra.mxu0 0
    %147 = vmatprep.subr.bf16.mxu0 0
    %148 = vmatpush1.bf16.msra.mxu0 0
    %149 = vmatprep.subr.bf16.mxu0 0
    %150 = vmatpush1.bf16.msra.mxu0 0
    %151 = vmatprep.subr.bf16.mxu0 0
    %152 = vmatpush1.bf16.msra.mxu0 0
    %153 = vmatprep.subr.bf16.mxu0 0
    %154 = vmatpush1.bf16.msra.mxu0 0
    %155 = vmatprep.subr.bf16.mxu0 0
    %156 = vmatpush1.bf16.msra.mxu0 0
    %157 = vmatprep.subr.bf16.mxu0 0
    %158 = vmatpush1.bf16.msra.mxu0 0
    %159 = vmatprep.subr.bf16.mxu0 0
    %160 = vmatpush1.bf16.msra.mxu0 0
    %161 = vmatprep.subr.bf16.mxu0 0
    %162 = vmatpush1.bf16.msra.mxu0 0
    %163 = vmatprep.subr.bf16.mxu0 0
    %164 = vmatpush1.bf16.msra.mxu0 0
    %165 = vmatprep.subr.bf16.mxu0 0
    %166 = vmatpush1.bf16.msra.mxu0 0
    %167 = vmatprep.subr.bf16.mxu0 0
    %168 = vmatpush1.bf16.msra.mxu0 0
    %169 = vmatprep.subr.bf16.mxu0 0
    %170 = vmatpush1.bf16.msra.mxu0 0
    %171 = vmatprep.subr.bf16.mxu0 0
    %172 = vmatpush1.bf16.msra.mxu0 0
    %173 = vmatprep.mubr.bf16.mxu0 0
    %174 = vmatmul.mubr.bf16.gmra.mrb[0].mxu0 %v139
    %v175 = vpop.f32.mrb[0].mxu0
    %v176 = vadd.f32 %v117, %v175
    %v177 = vpop.f32.mrb[0].mxu0
    %v178 = vpop.f32.mrb[0].mxu0
    %v179 = vpop.f32.mrb[0].mxu0
    %180 = vdwg.mxu0
    %vm181 = vcmask 74752
    %182 = vst.msk [vmem:[#allocation2] sm:$0x3] %vm181, %v176
    // Predicated region
    $region22: #{convnext_forward.13} parent=1 // pred_check
      _
    $region23: #{convnext_forward.13} parent=1 // pred_check_branch
      %184 = sbr.rel (0) target = $region25
    $region24: #{convnext_forward.13} parent=1 // pred_region
      %s186 = ssub.s32 32, 32
      %187 = vsyncadd [#allocation3], %s186
      %s189 = sshll.u32 [#allocation2], 4
      %s190 = int_to_ptr.vmem [resolvable:$true] %s189
      %192 = dma.vmem_to_hbm [thread:$0]  %s190, 32, %s5, [#allocation3]
    $region25: #{convnext_forward.13} parent=1 // pred_fallthru
      _
    // Predicated region
    $region26: #{convnext_forward.13} parent=1 // pred_check
      _
    $region27: #{convnext_forward.13} parent=1 // pred_check_branch
      %194 = sbr.rel (0) target = $region29
    $region28: #{convnext_forward.13} parent=1 // pred_region
      %195 = dma.done [#allocation3], 32
    $region29: #{convnext_forward.13} parent=1 // pred_fallthru
      _
    %196 = vsyncpa [#allocation3], 1

// kernel: convnext_forward.11
$region0: #{convnext_forward.11}
  #allocation0 [shape = 'u32[]', space=smem, size = 0x4, offset = 0x4, fixed_abs, tag = 'smem constant byte address 0x4 - core index']
  #allocation1 [shape = 'u32[144,128]{1,0:T(1,128)}', space=vmem, size = 0x12000, scoped, tag = 'internal scratch']
  #allocation2 [shape = 'f32[10,10,32]{2,1,0:T(8,128)}', space=vmem, size = 0x14000, scoped, tag = 'scratch operand']
  %s0 = inlined_call_operand.vmem [shape: bf16[2,4,4,32], index: 0, kind: input, shape index: {}, may-alias: {0,10}]
  %s1 = inlined_call_operand.vmem [shape: f32[7,7,32], index: 1, kind: input, shape index: {}]
  %s2 = inlined_call_operand.vmem [shape: f32[1,32], index: 2, kind: input, shape index: {}]
  %s3 = inlined_call_operand.vmem [shape: f32[1,32], index: 3, kind: input, shape index: {}]
  %s4 = inlined_call_operand.vmem [shape: f32[1,32], index: 4, kind: input, shape index: {}]
  %s5 = inlined_call_operand.vmem [shape: bf16[32,128], index: 5, kind: input, shape index: {}]
  %s6 = inlined_call_operand.vmem [shape: f32[1,128], index: 6, kind: input, shape index: {}]
  %s7 = inlined_call_operand.vmem [shape: bf16[128,32], index: 7, kind: input, shape index: {}]
  %s8 = inlined_call_operand.vmem [shape: f32[1,32], index: 8, kind: input, shape index: {}]
  %s9 = inlined_call_operand.vmem [shape: f32[1,32], index: 9, kind: input, shape index: {}]
  %s10 = inlined_call_operand.vmem [shape: bf16[2,4,4,32], index: 10, kind: output, shape index: {}, may-alias: {0,10}]
  %s11 = sld [smem:[#allocation0]]
  $region73: #{convnext_forward.11} parent=0
    _
  %s13 = ssub.s32 1, %s11
  %s14 = scalar_select 0, %s13, %s11
  loop: start=0, step=1, limit=4
  $region2: #{convnext_forward.11} parent=0 // loop_pre_header
    _
  $region3: #{convnext_forward.11} parent=0 // loop_header
    %s16 = sphi 0, %s20
    %p17 = scmp.ge.s32.totalorder %s16, 4
    %s26 = sphi 0, %s28
    %s29 = sphi 0, %s26
    %s30 = sphi 0, %s29
    %s46 = sphi 0, %s30
    %s50 = sphi 0, %s50
    %s52 = sphi 0, %s50
    %s53 = sphi 0, %s52
    %s67 = sphi 0, %s53
    %s71 = sphi 0, %s71
    %s73 = sphi 0, %s71
    %s74 = sphi 0, %s73
    %s88 = sphi 0, %s74
    %s92 = sphi 0, %s92
    %s94 = sphi 0, %s92
    %s95 = sphi 0, %s94
    %s109 = sphi 0, %s95
    %s113 = sphi 0, %s113
    %s115 = sphi 0, %s113
    %s116 = sphi 0, %s115
    %s130 = sphi 0, %s116
    %s134 = sphi 0, %s134
    %s136 = sphi 0, %s134
    %s137 = sphi 0, %s136
    %s151 = sphi 0, %s137
    %s155 = sphi 0, %s155
    %s157 = sphi 0, %s155
    %s158 = sphi 0, %s157
    %s172 = sphi 0, %s158
    %s176 = sphi 0, %s176
    %s178 = sphi 0, %s176
    %s179 = sphi 0, %s178
    %s193 = sphi 0, %s179
    %s197 = sphi 0, %s197
    %s199 = sphi 0, %s197
    %s200 = sphi 0, %s199
    %s214 = sphi 0, %s200
    %s218 = sphi 0, %s218
    %s220 = sphi 0, %s218
    %s221 = sphi 0, %s220
    %s235 = sphi 0, %s221
    %s241 = sphi 0, %s243
    %s244 = sphi 0, %s241
    %s245 = sphi 0, %s244
    %s261 = sphi 0, %s245
  $region4: #{convnext_forward.11} parent=0 // loop_header_branch
    %19 = sbr.rel (%p17) target = $region8
  $region5: #{convnext_forward.11} parent=0 // loop_body
    %s21 = ssub.s32 %s16, 1
    %s22 = ssub.s32 %s16, 2
    %s23 = sadd.s32 %s16, 1
    %s24 = ssub.s32 %s16, %s23
    %p25 = scmp.eq.s32.totalorder %s24, 0
    %s27 = sadd.s32 %s26, 1
    %s28 = scalar_select %p25, %s26, %s27
    %p31 = pneg %p25
    %p32 = scmp.eq.s32.totalorder %s16, 1
    %p33 = por %p31, %p32
    %p34 = scmp.ne.s32.totalorder %s26, %s29
    %p35 = scmp.eq.s32.totalorder %s16, 0
    %p36 = por %p34, %p35
    %p37 = scmp.ne.s32.totalorder %s26, %s29
    %p38 = scmp.eq.s32.totalorder %s21, 1
    %p39 = por %p37, %p38
    %p40 = scmp.ne.s32.totalorder %s29, %s30
    %p41 = scmp.eq.s32.totalorder %s21, 0
    %p42 = por %p40, %p41
    %p43 = scmp.ne.s32.totalorder %s29, %s30
    %p44 = scmp.eq.s32.totalorder %s22, 1
    %p45 = por %p43, %p44
    %p47 = scmp.ne.s32.totalorder %s30, %s46
    %p48 = scmp.eq.s32.totalorder %s22, 0
    %p49 = por %p47, %p48
    %s51 = sadd.s32 %s50, 1
    %p54 = scmp.eq.s32.totalorder %s16, 1
    %p55 = scmp.ne.s32.totalorder %s50, %s52
    %p56 = scmp.eq.s32.totalorder %s16, 0
    %p57 = por %p55, %p56
    %p58 = scmp.ne.s32.totalorder %s50, %s52
    %p59 = scmp.eq.s32.totalorder %s21, 1
    %p60 = por %p58, %p59
    %p61 = scmp.ne.s32.totalorder %s52, %s53
    %p62 = scmp.eq.s32.totalorder %s21, 0
    %p63 = por %p61, %p62
    %p64 = scmp.ne.s32.totalorder %s52, %s53
    %p65 = scmp.eq.s32.totalorder %s22, 1
    %p66 = por %p64, %p65
    %p68 = scmp.ne.s32.totalorder %s53, %s67
    %p69 = scmp.eq.s32.totalorder %s22, 0
    %p70 = por %p68, %p69
    %s72 = sadd.s32 %s71, 1
    %p75 = scmp.eq.s32.totalorder %s16, 1
    %p76 = scmp.ne.s32.totalorder %s71, %s73
    %p77 = scmp.eq.s32.totalorder %s16, 0
    %p78 = por %p76, %p77
    %p79 = scmp.ne.s32.totalorder %s71, %s73
    %p80 = scmp.eq.s32.totalorder %s21, 1
    %p81 = por %p79, %p80
    %p82 = scmp.ne.s32.totalorder %s73, %s74
    %p83 = scmp.eq.s32.totalorder %s21, 0
    %p84 = por %p82, %p83
    %p85 = scmp.ne.s32.totalorder %s73, %s74
    %p86 = scmp.eq.s32.totalorder %s22, 1
    %p87 = por %p85, %p86
    %p89 = scmp.ne.s32.totalorder %s74, %s88
    %p90 = scmp.eq.s32.totalorder %s22, 0
    %p91 = por %p89, %p90
    %s93 = sadd.s32 %s92, 1
    %p96 = scmp.eq.s32.totalorder %s16, 1
    %p97 = scmp.ne.s32.totalorder %s92, %s94
    %p98 = scmp.eq.s32.totalorder %s16, 0
    %p99 = por %p97, %p98
    %p100 = scmp.ne.s32.totalorder %s92, %s94
    %p101 = scmp.eq.s32.totalorder %s21, 1
    %p102 = por %p100, %p101
    %p103 = scmp.ne.s32.totalorder %s94, %s95
    %p104 = scmp.eq.s32.totalorder %s21, 0
    %p105 = por %p103, %p104
    %p106 = scmp.ne.s32.totalorder %s94, %s95
    %p107 = scmp.eq.s32.totalorder %s22, 1
    %p108 = por %p106, %p107
    %p110 = scmp.ne.s32.totalorder %s95, %s109
    %p111 = scmp.eq.s32.totalorder %s22, 0
    %p112 = por %p110, %p111
    %s114 = sadd.s32 %s113, 1
    %p117 = scmp.eq.s32.totalorder %s16, 1
    %p118 = scmp.ne.s32.totalorder %s113, %s115
    %p119 = scmp.eq.s32.totalorder %s16, 0
    %p120 = por %p118, %p119
    %p121 = scmp.ne.s32.totalorder %s113, %s115
    %p122 = scmp.eq.s32.totalorder %s21, 1
    %p123 = por %p121, %p122
    %p124 = scmp.ne.s32.totalorder %s115, %s116
    %p125 = scmp.eq.s32.totalorder %s21, 0
    %p126 = por %p124, %p125
    %p127 = scmp.ne.s32.totalorder %s115, %s116
    %p128 = scmp.eq.s32.totalorder %s22, 1
    %p129 = por %p127, %p128
    %p131 = scmp.ne.s32.totalorder %s116, %s130
    %p132 = scmp.eq.s32.totalorder %s22, 0
    %p133 = por %p131, %p132
    %s135 = sadd.s32 %s134, 1
    %p138 = scmp.eq.s32.totalorder %s16, 1
    %p139 = scmp.ne.s32.totalorder %s134, %s136
    %p140 = scmp.eq.s32.totalorder %s16, 0
    %p141 = por %p139, %p140
    %p142 = scmp.ne.s32.totalorder %s134, %s136
    %p143 = scmp.eq.s32.totalorder %s21, 1
    %p144 = por %p142, %p143
    %p145 = scmp.ne.s32.totalorder %s136, %s137
    %p146 = scmp.eq.s32.totalorder %s21, 0
    %p147 = por %p145, %p146
    %p148 = scmp.ne.s32.totalorder %s136, %s137
    %p149 = scmp.eq.s32.totalorder %s22, 1
    %p150 = por %p148, %p149
    %p152 = scmp.ne.s32.totalorder %s137, %s151
    %p153 = scmp.eq.s32.totalorder %s22, 0
    %p154 = por %p152, %p153
    %s156 = sadd.s32 %s155, 1
    %p159 = scmp.eq.s32.totalorder %s16, 1
    %p160 = scmp.ne.s32.totalorder %s155, %s157
    %p161 = scmp.eq.s32.totalorder %s16, 0
    %p162 = por %p160, %p161
    %p163 = scmp.ne.s32.totalorder %s155, %s157
    %p164 = scmp.eq.s32.totalorder %s21, 1
    %p165 = por %p163, %p164
    %p166 = scmp.ne.s32.totalorder %s157, %s158
    %p167 = scmp.eq.s32.totalorder %s21, 0
    %p168 = por %p166, %p167
    %p169 = scmp.ne.s32.totalorder %s157, %s158
    %p170 = scmp.eq.s32.totalorder %s22, 1
    %p171 = por %p169, %p170
    %p173 = scmp.ne.s32.totalorder %s158, %s172
    %p174 = scmp.eq.s32.totalorder %s22, 0
    %p175 = por %p173, %p174
    %s177 = sadd.s32 %s176, 1
    %p180 = scmp.eq.s32.totalorder %s16, 1
    %p181 = scmp.ne.s32.totalorder %s176, %s178
    %p182 = scmp.eq.s32.totalorder %s16, 0
    %p183 = por %p181, %p182
    %p184 = scmp.ne.s32.totalorder %s176, %s178
    %p185 = scmp.eq.s32.totalorder %s21, 1
    %p186 = por %p184, %p185
    %p187 = scmp.ne.s32.totalorder %s178, %s179
    %p188 = scmp.eq.s32.totalorder %s21, 0
    %p189 = por %p187, %p188
    %p190 = scmp.ne.s32.totalorder %s178, %s179
    %p191 = scmp.eq.s32.totalorder %s22, 1
    %p192 = por %p190, %p191
    %p194 = scmp.ne.s32.totalorder %s179, %s193
    %p195 = scmp.eq.s32.totalorder %s22, 0
    %p196 = por %p194, %p195
    %s198 = sadd.s32 %s197, 1
    %p201 = scmp.eq.s32.totalorder %s16, 1
    %p202 = scmp.ne.s32.totalorder %s197, %s199
    %p203 = scmp.eq.s32.totalorder %s16, 0
    %p204 = por %p202, %p203
    %p205 = scmp.ne.s32.totalorder %s197, %s199
    %p206 = scmp.eq.s32.totalorder %s21, 1
    %p207 = por %p205, %p206
    %p208 = scmp.ne.s32.totalorder %s199, %s200
    %p209 = scmp.eq.s32.totalorder %s21, 0
    %p210 = por %p208, %p209
    %p211 = scmp.ne.s32.totalorder %s199, %s200
    %p212 = scmp.eq.s32.totalorder %s22, 1
    %p213 = por %p211, %p212
    %p215 = scmp.ne.s32.totalorder %s200, %s214
    %p216 = scmp.eq.s32.totalorder %s22, 0
    %p217 = por %p215, %p216
    %s219 = sadd.s32 %s218, 1
    %p222 = scmp.eq.s32.totalorder %s16, 1
    %p223 = scmp.ne.s32.totalorder %s218, %s220
    %p224 = scmp.eq.s32.totalorder %s16, 0
    %p225 = por %p223, %p224
    %p226 = scmp.ne.s32.totalorder %s218, %s220
    %p227 = scmp.eq.s32.totalorder %s21, 1
    %p228 = por %p226, %p227
    %p229 = scmp.ne.s32.totalorder %s220, %s221
    %p230 = scmp.eq.s32.totalorder %s21, 0
    %p231 = por %p229, %p230
    %p232 = scmp.ne.s32.totalorder %s220, %s221
    %p233 = scmp.eq.s32.totalorder %s22, 1
    %p234 = por %p232, %p233
    %p236 = scmp.ne.s32.totalorder %s221, %s235
    %p237 = scmp.eq.s32.totalorder %s22, 0
    %p238 = por %p236, %p237
    %s239 = ssub.s32 %s16, %s23
    %p240 = scmp.eq.s32.totalorder %s239, 0
    %s242 = sadd.s32 %s241, 1
    %s243 = scalar_select %p240, %s241, %s242
    %p246 = pneg %p240
    %p247 = scmp.eq.s32.totalorder %s16, 1
    %p248 = por %p246, %p247
    %p249 = scmp.ne.s32.totalorder %s241, %s244
    %p250 = scmp.eq.s32.totalorder %s16, 0
    %p251 = por %p249, %p250
    %p252 = scmp.ne.s32.totalorder %s241, %s244
    %p253 = scmp.eq.s32.totalorder %s21, 1
    %p254 = por %p252, %p253
    %p255 = scmp.ne.s32.totalorder %s244, %s245
    %p256 = scmp.eq.s32.totalorder %s21, 0
    %p257 = por %p255, %p256
    %p258 = scmp.ne.s32.totalorder %s244, %s245
    %p259 = scmp.eq.s32.totalorder %s22, 1
    %p260 = por %p258, %p259
    %p262 = scmp.ne.s32.totalorder %s245, %s261
    %p263 = scmp.eq.s32.totalorder %s22, 0
    %p264 = por %p262, %p263
    %p265 = scmp.le.s32.totalorder 1, %s16
    %p266 = scmp.lt.s32.totalorder %s16, 3
    %p267 = pnand %p265, %p266
    %p268 = pneg %p267
    // Predicated region
    $region9: #{convnext_forward.11} parent=5 // pred_check
      _
    $region10: #{convnext_forward.11} parent=5 // pred_check_branch
      %270 = sbr.rel (%p267) target = $region12
    $region11: #{convnext_forward.11} parent=5 // pred_region
      %s271 = ssub.s32 %s16, 1
      // Predicated region
      $region13: #{convnext_forward.11} parent=11 // pred_check
        %p272 = pneg %p63
      $region14: #{convnext_forward.11} parent=11 // pred_check_branch
        %274 = sbr.rel (%p272) target = $region16
      $region15: #{convnext_forward.11} parent=11 // pred_region
        _
      $region16: #{convnext_forward.11} parent=11 // pred_fallthru
        _
      // Predicated region
      $region17: #{convnext_forward.11} parent=11 // pred_check
        %p275 = pneg %p84
      $region18: #{convnext_forward.11} parent=11 // pred_check_branch
        %277 = sbr.rel (%p275) target = $region20
      $region19: #{convnext_forward.11} parent=11 // pred_region
        _
      $region20: #{convnext_forward.11} parent=11 // pred_fallthru
        _
      // Predicated region
      $region21: #{convnext_forward.11} parent=11 // pred_check
        %p278 = pneg %p105
      $region22: #{convnext_forward.11} parent=11 // pred_check_branch
        %280 = sbr.rel (%p278) target = $region24
      $region23: #{convnext_forward.11} parent=11 // pred_region
        _
      $region24: #{convnext_forward.11} parent=11 // pred_fallthru
        _
      // Predicated region
      $region25: #{convnext_forward.11} parent=11 // pred_check
        %p281 = pneg %p126
      $region26: #{convnext_forward.11} parent=11 // pred_check_branch
        %283 = sbr.rel (%p281) target = $region28
      $region27: #{convnext_forward.11} parent=11 // pred_region
        _
      $region28: #{convnext_forward.11} parent=11 // pred_fallthru
        _
      // Predicated region
      $region29: #{convnext_forward.11} parent=11 // pred_check
        %p284 = pneg %p147
      $region30: #{convnext_forward.11} parent=11 // pred_check_branch
        %286 = sbr.rel (%p284) target = $region32
      $region31: #{convnext_forward.11} parent=11 // pred_region
        _
      $region32: #{convnext_forward.11} parent=11 // pred_fallthru
        _
      // Predicated region
      $region33: #{convnext_forward.11} parent=11 // pred_check
        %p287 = pneg %p168
      $region34: #{convnext_forward.11} parent=11 // pred_check_branch
        %289 = sbr.rel (%p287) target = $region36
      $region35: #{convnext_forward.11} parent=11 // pred_region
        _
      $region36: #{convnext_forward.11} parent=11 // pred_fallthru
        _
      // Predicated region
      $region37: #{convnext_forward.11} parent=11 // pred_check
        %p290 = pneg %p189
      $region38: #{convnext_forward.11} parent=11 // pred_check_branch
        %292 = sbr.rel (%p290) target = $region40
      $region39: #{convnext_forward.11} parent=11 // pred_region
        _
      $region40: #{convnext_forward.11} parent=11 // pred_fallthru
        _
      // Predicated region
      $region41: #{convnext_forward.11} parent=11 // pred_check
        %p293 = pneg %p210
      $region42: #{convnext_forward.11} parent=11 // pred_check_branch
        %295 = sbr.rel (%p293) target = $region44
      $region43: #{convnext_forward.11} parent=11 // pred_region
        _
      $region44: #{convnext_forward.11} parent=11 // pred_fallthru
        _
      // Predicated region
      $region45: #{convnext_forward.11} parent=11 // pred_check
        %p296 = pneg %p231
      $region46: #{convnext_forward.11} parent=11 // pred_check_branch
        %298 = sbr.rel (%p296) target = $region48
      $region47: #{convnext_forward.11} parent=11 // pred_region
        _
      $region48: #{convnext_forward.11} parent=11 // pred_fallthru
        _
    $region12: #{convnext_forward.11} parent=5 // pred_fallthru
      _
    %p299 = scmp.lt.s32.totalorder %s16, 2
    // Predicated region
    $region49: #{convnext_forward.11} parent=5 // pred_check
      %p300 = pneg %p299
    $region50: #{convnext_forward.11} parent=5 // pred_check_branch
      %302 = sbr.rel (%p300) target = $region52
    $region51: #{convnext_forward.11} parent=5 // pred_region
      // Predicated region
      $region53: #{convnext_forward.11} parent=51 // pred_check
        %p303 = pneg %p36
      $region54: #{convnext_forward.11} parent=51 // pred_check_branch
        %305 = sbr.rel (%p303) target = $region56
      $region55: #{convnext_forward.11} parent=51 // pred_region
        %p306 = scmp.lt.s32.totalorder %s16, 1
        %s307 = scalar_select %p306, %s16, 1
        %s308 = smul.addr %s307, 4
        %s309 = smul.addr %s308, 2
        %s310 = scalar_lea.vmem %s0, %s309
      $region56: #{convnext_forward.11} parent=51 // pred_fallthru
        _
    $region52: #{convnext_forward.11} parent=5 // pred_fallthru
      _
    %p311 = scmp.le.s32.totalorder 1, %s16
    %p312 = scmp.lt.s32.totalorder %s16, 3
    %p313 = pnand %p311, %p312
    %p314 = pneg %p313
    // Predicated region
    $region57: #{convnext_forward.11} parent=5 // pred_check
      _
    $region58: #{convnext_forward.11} parent=5 // pred_check_branch
      %316 = sbr.rel (%p313) target = $region60
    $region59: #{convnext_forward.11} parent=5 // pred_region
      %s317 = ssub.s32 %s16, 1
      %p318 = scmp.lt.s32.totalorder %s21, 1
      %s319 = scalar_select %p318, %s21, 1
      %s320 = smul.addr %s319, 4
      %s321 = smul.addr %s320, 2
      %s322 = scalar_lea.vmem %s0, %s321
      %p323 = pneg %p42
      %p324 = pneg %p39
      %p325 = pneg %p63
      %p326 = pneg %p60
      %p327 = pneg %p84
      %p328 = pneg %p81
      %p329 = pneg %p105
      %p330 = pneg %p102
      %p331 = pneg %p126
      %p332 = pneg %p123
      %p333 = pneg %p147
      %p334 = pneg %p144
      %p335 = pneg %p168
      %p336 = pneg %p165
      %p337 = pneg %p189
      %p338 = pneg %p186
      %p339 = pneg %p210
      %p340 = pneg %p207
      %p341 = pneg %p231
      %p342 = pneg %p228
      %p343 = pneg %p257
      %p344 = pneg %p254
      %p345 = scmp.lt.s32.totalorder %s21, 1
      %s346 = scalar_select %p345, %s21, 1
      %s347 = smul.addr %s346, 4
      %s348 = smul.addr %s347, 2
      %s349 = scalar_lea.vmem %s10, %s348
      %p350 = scmp.lt.s32.totalorder %s21, 1
      %s351 = scalar_select %p350, %s21, 1
      %s352 = smul.addr %s351, 4
      %s353 = smul.addr %s352, 2
      %s354 = scalar_lea.vmem %s0, %s353
      %p355 = scmp.lt.s32.totalorder %s21, 1
      %s356 = scalar_select %p355, %s21, 1
      %s357 = smul.addr %s356, 4
      %s358 = smul.addr %s357, 2
      %s359 = scalar_lea.vmem %s10, %s358
      %v361 = vld [vmem:[%s354] sm:$0x3]
      %v362 = vld [vmem:[%s354 + $0x2] sm:$0x3]
      %v363 = vld [vmem:[%s354 + $0x4] sm:$0x3]
      %v364 = vld [vmem:[%s354 + $0x6] sm:$0x3]
      %v365 = vunpack.c.l.bf16 %v361
      %v366 = vunpack.c.l.bf16 %v362
      %v367 = vunpack.c.l.bf16 %v363
      %v368 = vunpack.c.l.bf16 %v364
      %vm369 = vcmask 261120
      %370 = vst.msk [vmem:[#allocation2] sm:$0xff] %vm369, 0.0
      %vm371 = vcmask 254976
      %372 = vst.msk [vmem:[#allocation2 + $0x8] sm:$0x3] %vm371, 0.0
      %373 = vst.msk [vmem:[#allocation2 + $0x10] sm:$0xff] %vm369, 0.0
      %374 = vst.msk [vmem:[#allocation2 + $0x18] sm:$0x3] %vm371, 0.0
      %375 = vst.msk [vmem:[#allocation2 + $0x20] sm:$0xff] %vm369, 0.0
      %376 = vst.msk [vmem:[#allocation2 + $0x28] sm:$0x3] %vm371, 0.0
      %s377 = scalar_lea.vmem [#allocation2], 112
      %378 = vst.msk [vmem:[%s377] sm:$0xff] %vm369, 0.0
      %379 = vst.msk [vmem:[%s377 + $0x8] sm:$0x3] %vm371, 0.0
      %380 = vst.msk [vmem:[%s377 + $0x10] sm:$0xff] %vm369, 0.0
      %381 = vst.msk [vmem:[%s377 + $0x18] sm:$0x3] %vm371, 0.0
      %382 = vst.msk [vmem:[%s377 + $0x20] sm:$0xff] %vm369, 0.0
      %383 = vst.msk [vmem:[%s377 + $0x28] sm:$0x3] %vm371, 0.0
      %s384 = scalar_lea.vmem [#allocation2], 48
      %vm385 = vcmask 256000
      %386 = vst.msk [vmem:[%s384] sm:$0x7] %vm385, 0.0
      %387 = vst.msk [vmem:[%s384 + $0x10] sm:$0x7] %vm385, 0.0
      %388 = vst.msk [vmem:[%s384 + $0x20] sm:$0x7] %vm385, 0.0
      %389 = vst.msk [vmem:[%s384 + $0x30] sm:$0x7] %vm385, 0.0
      %390 = vst.msk [vmem:[%s384 + $0x7] sm:$0x7] %vm385, 0.0
      %391 = vst.msk [vmem:[%s384 + $0x17] sm:$0x7] %vm385, 0.0
      %392 = vst.msk [vmem:[%s384 + $0x27] sm:$0x7] %vm385, 0.0
      %393 = vst.msk [vmem:[%s384 + $0x37] sm:$0x7] %vm385, 0.0
      %vm394 = vcmask 257024
      %395 = vst.msk [vmem:[%s384 + $0x3] sm:$0xf] %vm394, %v365
      %396 = vst.msk [vmem:[%s384 + $0x13] sm:$0xf] %vm394, %v366
      %397 = vst.msk [vmem:[%s384 + $0x23] sm:$0xf] %vm394, %v367
      %398 = vst.msk [vmem:[%s384 + $0x33] sm:$0xf] %vm394, %v368
      %v399 = vld [vmem:[%s1] sm:$0x7f]
      %v400 = vld [vmem:[%s1 + $0x8] sm:$0x7f]
      %v401 = vld [vmem:[%s1 + $0x10] sm:$0x7f]
      %v402 = vld [vmem:[%s1 + $0x18] sm:$0x7f]
      %v403 = vld [vmem:[%s1 + $0x20] sm:$0x7f]
      %v404 = vld [vmem:[%s1 + $0x28] sm:$0x7f]
      %v405 = vld [vmem:[%s1 + $0x30] sm:$0x7f]
      %v406 = vld [vmem:[#allocation2] sm:$0xf]
      %v407 = vld [vmem:[#allocation2 + $0x10] sm:$0xf]
      %v408 = vld [vmem:[#allocation2 + $0x20] sm:$0xf]
      %v409 = vld [vmem:[#allocation2 + $0x30] sm:$0xf]
      %v410 = vlaneseq
      %v411 = vshrl.u32 %v410, 7
      %v412 = vsub.s32 0, %v411
      %v413 = vrot.slane %v399, %v412
      %v414 = vmul.f32 %v406, %v413
      %v415 = vmul.f32 %v407, %v413
      %v416 = vmul.f32 %v408, %v413
      %v417 = vmul.f32 %v409, %v413
      %v418 = vld [vmem:[#allocation2 + $0x1] sm:$0xf]
      %v419 = vld [vmem:[#allocation2 + $0x11] sm:$0xf]
      %v420 = vld [vmem:[#allocation2 + $0x21] sm:$0xf]
      %v421 = vld [vmem:[#allocation2 + $0x31] sm:$0xf]
      %v422 = vlaneseq
      %v423 = vshrl.u32 %v422, 7
      %v424 = vsub.s32 1, %v423
      %v425 = vrot.slane %v399, %v424
      %v426 = vmul.f32 %v418, %v425
      %v427 = vmul.f32 %v419, %v425
      %v428 = vmul.f32 %v420, %v425
      %v429 = vmul.f32 %v421, %v425
      %v430 = vadd.f32 %v414, %v426
      %v431 = vadd.f32 %v415, %v427
      %v432 = vadd.f32 %v416, %v428
      %v433 = vadd.f32 %v417, %v429
      %v434 = vld [vmem:[#allocation2 + $0x2] sm:$0xf]
      %v435 = vld [vmem:[#allocation2 + $0x12] sm:$0xf]
      %v436 = vld [vmem:[#allocation2 + $0x22] sm:$0xf]
      %v437 = vld [vmem:[#allocation2 + $0x32] sm:$0xf]
      %v438 = vlaneseq
      %v439 = vshrl.u32 %v438, 7
      %v440 = vsub.s32 2, %v439
      %v441 = vrot.slane %v399, %v440
      %v442 = vmul.f32 %v434, %v441
      %v443 = vmul.f32 %v435, %v441
      %v444 = vmul.f32 %v436, %v441
      %v445 = vmul.f32 %v437, %v441
      %v446 = vadd.f32 %v430, %v442
      %v447 = vadd.f32 %v431, %v443
      %v448 = vadd.f32 %v432, %v444
      %v449 = vadd.f32 %v433, %v445
      %v450 = vld [vmem:[#allocation2 + $0x3] sm:$0xf]
      %v451 = vld [vmem:[#allocation2 + $0x13] sm:$0xf]
      %v452 = vld [vmem:[#allocation2 + $0x23] sm:$0xf]
      %v453 = vld [vmem:[#allocation2 + $0x33] sm:$0xf]
      %v454 = vlaneseq
      %v455 = vshrl.u32 %v454, 7
      %v456 = vsub.s32 3, %v455
      %v457 = vrot.slane %v399, %v456
      %v458 = vmul.f32 %v450, %v457
      %v459 = vmul.f32 %v451, %v457
      %v460 = vmul.f32 %v452, %v457
      %v461 = vmul.f32 %v453, %v457
      %v462 = vadd.f32 %v446, %v458
      %v463 = vadd.f32 %v447, %v459
      %v464 = vadd.f32 %v448, %v460
      %v465 = vadd.f32 %v449, %v461
      %v466 = vld [vmem:[#allocation2 + $0x4] sm:$0xf]
      %v467 = vld [vmem:[#allocation2 + $0x14] sm:$0xf]
      %v468 = vld [vmem:[#allocation2 + $0x24] sm:$0xf]
      %v469 = vld [vmem:[#allocation2 + $0x34] sm:$0xf]
      %v470 = vlaneseq
      %v471 = vshrl.u32 %v470, 7
      %v472 = vsub.s32 4, %v471
      %v473 = vrot.slane %v399, %v472
      %v474 = vmul.f32 %v466, %v473
      %v475 = vmul.f32 %v467, %v473
      %v476 = vmul.f32 %v468, %v473
      %v477 = vmul.f32 %v469, %v473
      %v478 = vadd.f32 %v462, %v474
      %v479 = vadd.f32 %v463, %v475
      %v480 = vadd.f32 %v464, %v476
      %v481 = vadd.f32 %v465, %v477
      %v482 = vld [vmem:[#allocation2 + $0x5] sm:$0xf]
      %v483 = vld [vmem:[#allocation2 + $0x15] sm:$0xf]
      %v484 = vld [vmem:[#allocation2 + $0x25] sm:$0xf]
      %v485 = vld [vmem:[#allocation2 + $0x35] sm:$0xf]
      %v486 = vlaneseq
      %v487 = vshrl.u32 %v486, 7
      %v488 = vsub.s32 5, %v487
      %v489 = vrot.slane %v399, %v488
      %v490 = vmul.f32 %v482, %v489
      %v491 = vmul.f32 %v483, %v489
      %v492 = vmul.f32 %v484, %v489
      %v493 = vmul.f32 %v485, %v489
      %v494 = vadd.f32 %v478, %v490
      %v495 = vadd.f32 %v479, %v491
      %v496 = vadd.f32 %v480, %v492
      %v497 = vadd.f32 %v481, %v493
      %v498 = vld [vmem:[#allocation2 + $0x6] sm:$0xf]
      %v499 = vld [vmem:[#allocation2 + $0x16] sm:$0xf]
      %v500 = vld [vmem:[#allocation2 + $0x26] sm:$0xf]
      %v501 = vld [vmem:[#allocation2 + $0x36] sm:$0xf]
      %v502 = vlaneseq
      %v503 = vshrl.u32 %v502, 7
      %v504 = vsub.s32 6, %v503
      %v505 = vrot.slane %v399, %v504
      %v506 = vmul.f32 %v498, %v505
      %v507 = vmul.f32 %v499, %v505
      %v508 = vmul.f32 %v500, %v505
      %v509 = vmul.f32 %v501, %v505
      %v510 = vadd.f32 %v494, %v506
      %v511 = vadd.f32 %v495, %v507
      %v512 = vadd.f32 %v496, %v508
      %v513 = vadd.f32 %v497, %v509
      %s514 = scalar_lea.vmem [#allocation2], 16
      %v515 = vld [vmem:[%s514] sm:$0xf]
      %v516 = vld [vmem:[%s514 + $0x10] sm:$0xf]
      %v517 = vld [vmem:[%s514 + $0x20] sm:$0xf]
      %v518 = vld [vmem:[%s514 + $0x30] sm:$0xf]
      %v519 = vlaneseq
      %v520 = vshrl.u32 %v519, 7
      %v521 = vsub.s32 0, %v520
      %v522 = vrot.slane %v400, %v521
      %v523 = vmul.f32 %v515, %v522
      %v524 = vmul.f32 %v516, %v522
      %v525 = vmul.f32 %v517, %v522
      %v526 = vmul.f32 %v518, %v522
      %v527 = vld [vmem:[%s514 + $0x1] sm:$0xf]
      %v528 = vld [vmem:[%s514 + $0x11] sm:$0xf]
      %v529 = vld [vmem:[%s514 + $0x21] sm:$0xf]
      %v530 = vld [vmem:[%s514 + $0x31] sm:$0xf]
      %v531 = vlaneseq
      %v532 = vshrl.u32 %v531, 7
      %v533 = vsub.s32 1, %v532
      %v534 = vrot.slane %v400, %v533
      %v535 = vmul.f32 %v527, %v534
      %v536 = vmul.f32 %v528, %v534
      %v537 = vmul.f32 %v529, %v534
      %v538 = vmul.f32 %v530, %v534
      %v539 = vadd.f32 %v523, %v535
      %v540 = vadd.f32 %v524, %v536
      %v541 = vadd.f32 %v525, %v537
      %v542 = vadd.f32 %v526, %v538
      %v543 = vld [vmem:[%s514 + $0x2] sm:$0xf]
      %v544 = vld [vmem:[%s514 + $0x12] sm:$0xf]
      %v545 = vld [vmem:[%s514 + $0x22] sm:$0xf]
      %v546 = vld [vmem:[%s514 + $0x32] sm:$0xf]
      %v547 = vlaneseq
      %v548 = vshrl.u32 %v547, 7
      %v549 = vsub.s32 2, %v548
      %v550 = vrot.slane %v400, %v549
      %v551 = vmul.f32 %v543, %v550
      %v552 = vmul.f32 %v544, %v550
      %v553 = vmul.f32 %v545, %v550
      %v554 = vmul.f32 %v546, %v550
      %v555 = vadd.f32 %v539, %v551
      %v556 = vadd.f32 %v540, %v552
      %v557 = vadd.f32 %v541, %v553
      %v558 = vadd.f32 %v542, %v554
      %v559 = vld [vmem:[%s514 + $0x3] sm:$0xf]
      %v560 = vld [vmem:[%s514 + $0x13] sm:$0xf]
      %v561 = vld [vmem:[%s514 + $0x23] sm:$0xf]
      %v562 = vld [vmem:[%s514 + $0x33] sm:$0xf]
      %v563 = vlaneseq
      %v564 = vshrl.u32 %v563, 7
      %v565 = vsub.s32 3, %v564
      %v566 = vrot.slane %v400, %v565
      %v567 = vmul.f32 %v559, %v566
      %v568 = vmul.f32 %v560, %v566
      %v569 = vmul.f32 %v561, %v566
      %v570 = vmul.f32 %v562, %v566
      %v571 = vadd.f32 %v555, %v567
      %v572 = vadd.f32 %v556, %v568
      %v573 = vadd.f32 %v557, %v569
      %v574 = vadd.f32 %v558, %v570
      %v575 = vld [vmem:[%s514 + $0x4] sm:$0xf]
      %v576 = vld [vmem:[%s514 + $0x14] sm:$0xf]
      %v577 = vld [vmem:[%s514 + $0x24] sm:$0xf]
      %v578 = vld [vmem:[%s514 + $0x34] sm:$0xf]
      %v579 = vlaneseq
      %v580 = vshrl.u32 %v579, 7
      %v581 = vsub.s32 4, %v580
      %v582 = vrot.slane %v400, %v581
      %v583 = vmul.f32 %v575, %v582
      %v584 = vmul.f32 %v576, %v582
      %v585 = vmul.f32 %v577, %v582
      %v586 = vmul.f32 %v578, %v582
      %v587 = vadd.f32 %v571, %v583
      %v588 = vadd.f32 %v572, %v584
      %v589 = vadd.f32 %v573, %v585
      %v590 = vadd.f32 %v574, %v586
      %v591 = vld [vmem:[%s514 + $0x5] sm:$0xf]
      %v592 = vld [vmem:[%s514 + $0x15] sm:$0xf]
      %v593 = vld [vmem:[%s514 + $0x25] sm:$0xf]
      %v594 = vld [vmem:[%s514 + $0x35] sm:$0xf]
      %v595 = vlaneseq
      %v596 = vshrl.u32 %v595, 7
      %v597 = vsub.s32 5, %v596
      %v598 = vrot.slane %v400, %v597
      %v599 = vmul.f32 %v591, %v598
      %v600 = vmul.f32 %v592, %v598
      %v601 = vmul.f32 %v593, %v598
      %v602 = vmul.f32 %v594, %v598
      %v603 = vadd.f32 %v587, %v599
      %v604 = vadd.f32 %v588, %v600
      %v605 = vadd.f32 %v589, %v601
      %v606 = vadd.f32 %v590, %v602
      %v607 = vld [vmem:[%s514 + $0x6] sm:$0xf]
      %v608 = vld [vmem:[%s514 + $0x16] sm:$0xf]
      %v609 = vld [vmem:[%s514 + $0x26] sm:$0xf]
      %v610 = vld [vmem:[%s514 + $0x36] sm:$0xf]
      %v611 = vlaneseq
      %v612 = vshrl.u32 %v611, 7
      %v613 = vsub.s32 6, %v612
      %v614 = vrot.slane %v400, %v613
      %v615 = vmul.f32 %v607, %v614
      %v616 = vmul.f32 %v608, %v614
      %v617 = vmul.f32 %v609, %v614
      %v618 = vmul.f32 %v610, %v614
      %v619 = vadd.f32 %v603, %v615
      %v620 = vadd.f32 %v604, %v616
      %v621 = vadd.f32 %v605, %v617
      %v622 = vadd.f32 %v606, %v618
      %s623 = scalar_lea.vmem [#allocation2], 32
      %v624 = vld [vmem:[%s623] sm:$0xf]
      %v625 = vld [vmem:[%s623 + $0x10] sm:$0xf]
      %v626 = vld [vmem:[%s623 + $0x20] sm:$0xf]
      %v627 = vld [vmem:[%s623 + $0x30] sm:$0xf]
      %v628 = vlaneseq
      %v629 = vshrl.u32 %v628, 7
      %v630 = vsub.s32 0, %v629
      %v631 = vrot.slane %v401, %v630
      %v632 = vmul.f32 %v624, %v631
      %v633 = vmul.f32 %v625, %v631
      %v634 = vmul.f32 %v626, %v631
      %v635 = vmul.f32 %v627, %v631
      %v636 = vld [vmem:[%s623 + $0x1] sm:$0xf]
      %v637 = vld [vmem:[%s623 + $0x11] sm:$0xf]
      %v638 = vld [vmem:[%s623 + $0x21] sm:$0xf]
      %v639 = vld [vmem:[%s623 + $0x31] sm:$0xf]
      %v640 = vlaneseq
      %v641 = vshrl.u32 %v640, 7
      %v642 = vsub.s32 1, %v641
      %v643 = vrot.slane %v401, %v642
      %v644 = vmul.f32 %v636, %v643
      %v645 = vmul.f32 %v637, %v643
      %v646 = vmul.f32 %v638, %v643
      %v647 = vmul.f32 %v639, %v643
      %v648 = vadd.f32 %v632, %v644
      %v649 = vadd.f32 %v633, %v645
      %v650 = vadd.f32 %v634, %v646
      %v651 = vadd.f32 %v635, %v647
      %v652 = vld [vmem:[%s623 + $0x2] sm:$0xf]
      %v653 = vld [vmem:[%s623 + $0x12] sm:$0xf]
      %v654 = vld [vmem:[%s623 + $0x22] sm:$0xf]
      %v655 = vld [vmem:[%s623 + $0x32] sm:$0xf]
      %v656 = vlaneseq
      %v657 = vshrl.u32 %v656, 7
      %v658 = vsub.s32 2, %v657
      %v659 = vrot.slane %v401, %v658
      %v660 = vmul.f32 %v652, %v659
      %v661 = vmul.f32 %v653, %v659
      %v662 = vmul.f32 %v654, %v659
      %v663 = vmul.f32 %v655, %v659
      %v664 = vadd.f32 %v648, %v660
      %v665 = vadd.f32 %v649, %v661
      %v666 = vadd.f32 %v650, %v662
      %v667 = vadd.f32 %v651, %v663
      %v668 = vld [vmem:[%s623 + $0x3] sm:$0xf]
      %v669 = vld [vmem:[%s623 + $0x13] sm:$0xf]
      %v670 = vld [vmem:[%s623 + $0x23] sm:$0xf]
      %v671 = vld [vmem:[%s623 + $0x33] sm:$0xf]
      %v672 = vlaneseq
      %v673 = vshrl.u32 %v672, 7
      %v674 = vsub.s32 3, %v673
      %v675 = vrot.slane %v401, %v674
      %v676 = vmul.f32 %v668, %v675
      %v677 = vmul.f32 %v669, %v675
      %v678 = vmul.f32 %v670, %v675
      %v679 = vmul.f32 %v671, %v675
      %v680 = vadd.f32 %v664, %v676
      %v681 = vadd.f32 %v665, %v677
      %v682 = vadd.f32 %v666, %v678
      %v683 = vadd.f32 %v667, %v679
      %v684 = vld [vmem:[%s623 + $0x4] sm:$0xf]
      %v685 = vld [vmem:[%s623 + $0x14] sm:$0xf]
      %v686 = vld [vmem:[%s623 + $0x24] sm:$0xf]
      %v687 = vld [vmem:[%s623 + $0x34] sm:$0xf]
      %v688 = vlaneseq
      %v689 = vshrl.u32 %v688, 7
      %v690 = vsub.s32 4, %v689
      %v691 = vrot.slane %v401, %v690
      %v692 = vmul.f32 %v684, %v691
      %v693 = vmul.f32 %v685, %v691
      %v694 = vmul.f32 %v686, %v691
      %v695 = vmul.f32 %v687, %v691
      %v696 = vadd.f32 %v680, %v692
      %v697 = vadd.f32 %v681, %v693
      %v698 = vadd.f32 %v682, %v694
      %v699 = vadd.f32 %v683, %v695
      %v700 = vld [vmem:[%s623 + $0x5] sm:$0xf]
      %v701 = vld [vmem:[%s623 + $0x15] sm:$0xf]
      %v702 = vld [vmem:[%s623 + $0x25] sm:$0xf]
      %v703 = vld [vmem:[%s623 + $0x35] sm:$0xf]
      %v704 = vlaneseq
      %v705 = vshrl.u32 %v704, 7
      %v706 = vsub.s32 5, %v705
      %v707 = vrot.slane %v401, %v706
      %v708 = vmul.f32 %v700, %v707
      %v709 = vmul.f32 %v701, %v707
      %v710 = vmul.f32 %v702, %v707
      %v711 = vmul.f32 %v703, %v707
      %v712 = vadd.f32 %v696, %v708
      %v713 = vadd.f32 %v697, %v709
      %v714 = vadd.f32 %v698, %v710
      %v715 = vadd.f32 %v699, %v711
      %v716 = vld [vmem:[%s623 + $0x6] sm:$0xf]
      %v717 = vld [vmem:[%s623 + $0x16] sm:$0xf]
      %v718 = vld [vmem:[%s623 + $0x26] sm:$0xf]
      %v719 = vld [vmem:[%s623 + $0x36] sm:$0xf]
      %v720 = vlaneseq
      %v721 = vshrl.u32 %v720, 7
      %v722 = vsub.s32 6, %v721
      %v723 = vrot.slane %v401, %v722
      %v724 = vmul.f32 %v716, %v723
      %v725 = vmul.f32 %v717, %v723
      %v726 = vmul.f32 %v718, %v723
      %v727 = vmul.f32 %v719, %v723
      %v728 = vadd.f32 %v712, %v724
      %v729 = vadd.f32 %v713, %v725
      %v730 = vadd.f32 %v714, %v726
      %v731 = vadd.f32 %v715, %v727
      %v732 = vld [vmem:[%s384] sm:$0xf]
      %v733 = vld [vmem:[%s384 + $0x10] sm:$0xf]
      %v734 = vld [vmem:[%s384 + $0x20] sm:$0xf]
      %v735 = vld [vmem:[%s384 + $0x30] sm:$0xf]
      %v736 = vlaneseq
      %v737 = vshrl.u32 %v736, 7
      %v738 = vsub.s32 0, %v737
      %v739 = vrot.slane %v402, %v738
      %v740 = vmul.f32 %v732, %v739
      %v741 = vmul.f32 %v733, %v739
      %v742 = vmul.f32 %v734, %v739
      %v743 = vmul.f32 %v735, %v739
      %v744 = vld [vmem:[%s384 + $0x1] sm:$0xf]
      %v745 = vld [vmem:[%s384 + $0x11] sm:$0xf]
      %v746 = vld [vmem:[%s384 + $0x21] sm:$0xf]
      %v747 = vld [vmem:[%s384 + $0x31] sm:$0xf]
      %v748 = vlaneseq
      %v749 = vshrl.u32 %v748, 7
      %v750 = vsub.s32 1, %v749
      %v751 = vrot.slane %v402, %v750
      %v752 = vmul.f32 %v744, %v751
      %v753 = vmul.f32 %v745, %v751
      %v754 = vmul.f32 %v746, %v751
      %v755 = vmul.f32 %v747, %v751
      %v756 = vadd.f32 %v740, %v752
      %v757 = vadd.f32 %v741, %v753
      %v758 = vadd.f32 %v742, %v754
      %v759 = vadd.f32 %v743, %v755
      %v760 = vld [vmem:[%s384 + $0x2] sm:$0xf]
      %v761 = vld [vmem:[%s384 + $0x12] sm:$0xf]
      %v762 = vld [vmem:[%s384 + $0x22] sm:$0xf]
      %v763 = vld [vmem:[%s384 + $0x32] sm:$0xf]
      %v764 = vlaneseq
      %v765 = vshrl.u32 %v764, 7
      %v766 = vsub.s32 2, %v765
      %v767 = vrot.slane %v402, %v766
      %v768 = vmul.f32 %v760, %v767
      %v769 = vmul.f32 %v761, %v767
      %v770 = vmul.f32 %v762, %v767
      %v771 = vmul.f32 %v763, %v767
      %v772 = vadd.f32 %v756, %v768
      %v773 = vadd.f32 %v757, %v769
      %v774 = vadd.f32 %v758, %v770
      %v775 = vadd.f32 %v759, %v771
      %v776 = vld [vmem:[%s384 + $0x3] sm:$0xf]
      %v777 = vld [vmem:[%s384 + $0x13] sm:$0xf]
      %v778 = vld [vmem:[%s384 + $0x23] sm:$0xf]
      %v779 = vld [vmem:[%s384 + $0x33] sm:$0xf]
      %v780 = vlaneseq
      %v781 = vshrl.u32 %v780, 7
      %v782 = vsub.s32 3, %v781
      %v783 = vrot.slane %v402, %v782
      %v784 = vmul.f32 %v776, %v783
      %v785 = vmul.f32 %v777, %v783
      %v786 = vmul.f32 %v778, %v783
      %v787 = vmul.f32 %v779, %v783
      %v788 = vadd.f32 %v772, %v784
      %v789 = vadd.f32 %v773, %v785
      %v790 = vadd.f32 %v774, %v786
      %v791 = vadd.f32 %v775, %v787
      %v792 = vld [vmem:[%s384 + $0x4] sm:$0xf]
      %v793 = vld [vmem:[%s384 + $0x14] sm:$0xf]
      %v794 = vld [vmem:[%s384 + $0x24] sm:$0xf]
      %v795 = vld [vmem:[%s384 + $0x34] sm:$0xf]
      %v796 = vlaneseq
      %v797 = vshrl.u32 %v796, 7
      %v798 = vsub.s32 4, %v797
      %v799 = vrot.slane %v402, %v798
      %v800 = vmul.f32 %v792, %v799
      %v801 = vmul.f32 %v793, %v799
      %v802 = vmul.f32 %v794, %v799
      %v803 = vmul.f32 %v795, %v799
      %v804 = vadd.f32 %v788, %v800
      %v805 = vadd.f32 %v789, %v801
      %v806 = vadd.f32 %v790, %v802
      %v807 = vadd.f32 %v791, %v803
      %v808 = vld [vmem:[%s384 + $0x5] sm:$0xf]
      %v809 = vld [vmem:[%s384 + $0x15] sm:$0xf]
      %v810 = vld [vmem:[%s384 + $0x25] sm:$0xf]
      %v811 = vld [vmem:[%s384 + $0x35] sm:$0xf]
      %v812 = vlaneseq
      %v813 = vshrl.u32 %v812, 7
      %v814 = vsub.s32 5, %v813
      %v815 = vrot.slane %v402, %v814
      %v816 = vmul.f32 %v808, %v815
      %v817 = vmul.f32 %v809, %v815
      %v818 = vmul.f32 %v810, %v815
      %v819 = vmul.f32 %v811, %v815
      %v820 = vadd.f32 %v804, %v816
      %v821 = vadd.f32 %v805, %v817
      %v822 = vadd.f32 %v806, %v818
      %v823 = vadd.f32 %v807, %v819
      %v824 = vld [vmem:[%s384 + $0x6] sm:$0xf]
      %v825 = vld [vmem:[%s384 + $0x16] sm:$0xf]
      %v826 = vld [vmem:[%s384 + $0x26] sm:$0xf]
      %v827 = vld [vmem:[%s384 + $0x36] sm:$0xf]
      %v828 = vlaneseq
      %v829 = vshrl.u32 %v828, 7
      %v830 = vsub.s32 6, %v829
      %v831 = vrot.slane %v402, %v830
      %v832 = vmul.f32 %v824, %v831
      %v833 = vmul.f32 %v825, %v831
      %v834 = vmul.f32 %v826, %v831
      %v835 = vmul.f32 %v827, %v831
      %v836 = vadd.f32 %v820, %v832
      %v837 = vadd.f32 %v821, %v833
      %v838 = vadd.f32 %v822, %v834
      %v839 = vadd.f32 %v823, %v835
      %s840 = scalar_lea.vmem [#allocation2], 64
      %v841 = vld [vmem:[%s840] sm:$0xf]
      %v842 = vld [vmem:[%s840 + $0x10] sm:$0xf]
      %v843 = vld [vmem:[%s840 + $0x20] sm:$0xf]
      %v844 = vld [vmem:[%s840 + $0x30] sm:$0xf]
      %v845 = vlaneseq
      %v846 = vshrl.u32 %v845, 7
      %v847 = vsub.s32 0, %v846
      %v848 = vrot.slane %v403, %v847
      %v849 = vmul.f32 %v841, %v848
      %v850 = vmul.f32 %v842, %v848
      %v851 = vmul.f32 %v843, %v848
      %v852 = vmul.f32 %v844, %v848
      %v853 = vld [vmem:[%s840 + $0x1] sm:$0xf]
      %v854 = vld [vmem:[%s840 + $0x11] sm:$0xf]
      %v855 = vld [vmem:[%s840 + $0x21] sm:$0xf]
      %v856 = vld [vmem:[%s840 + $0x31] sm:$0xf]
      %v857 = vlaneseq
      %v858 = vshrl.u32 %v857, 7
      %v859 = vsub.s32 1, %v858
      %v860 = vrot.slane %v403, %v859
      %v861 = vmul.f32 %v853, %v860
      %v862 = vmul.f32 %v854, %v860
      %v863 = vmul.f32 %v855, %v860
      %v864 = vmul.f32 %v856, %v860
      %v865 = vadd.f32 %v849, %v861
      %v866 = vadd.f32 %v850, %v862
      %v867 = vadd.f32 %v851, %v863
      %v868 = vadd.f32 %v852, %v864
      %v869 = vld [vmem:[%s840 + $0x2] sm:$0xf]
      %v870 = vld [vmem:[%s840 + $0x12] sm:$0xf]
      %v871 = vld [vmem:[%s840 + $0x22] sm:$0xf]
      %v872 = vld [vmem:[%s840 + $0x32] sm:$0xf]
      %v873 = vlaneseq
      %v874 = vshrl.u32 %v873, 7
      %v875 = vsub.s32 2, %v874
      %v876 = vrot.slane %v403, %v875
      %v877 = vmul.f32 %v869, %v876
      %v878 = vmul.f32 %v870, %v876
      %v879 = vmul.f32 %v871, %v876
      %v880 = vmul.f32 %v872, %v876
      %v881 = vadd.f32 %v865, %v877
      %v882 = vadd.f32 %v866, %v878
      %v883 = vadd.f32 %v867, %v879
      %v884 = vadd.f32 %v868, %v880
      %v885 = vld [vmem:[%s840 + $0x3] sm:$0xf]
      %v886 = vld [vmem:[%s840 + $0x13] sm:$0xf]
      %v887 = vld [vmem:[%s840 + $0x23] sm:$0xf]
      %v888 = vld [vmem:[%s840 + $0x33] sm:$0xf]
      %v889 = vlaneseq
      %v890 = vshrl.u32 %v889, 7
      %v891 = vsub.s32 3, %v890
      %v892 = vrot.slane %v403, %v891
      %v893 = vmul.f32 %v885, %v892
      %v894 = vmul.f32 %v886, %v892
      %v895 = vmul.f32 %v887, %v892
      %v896 = vmul.f32 %v888, %v892
      %v897 = vadd.f32 %v881, %v893
      %v898 = vadd.f32 %v882, %v894
      %v899 = vadd.f32 %v883, %v895
      %v900 = vadd.f32 %v884, %v896
      %v901 = vld [vmem:[%s840 + $0x4] sm:$0xf]
      %v902 = vld [vmem:[%s840 + $0x14] sm:$0xf]
      %v903 = vld [vmem:[%s840 + $0x24] sm:$0xf]
      %v904 = vld [vmem:[%s840 + $0x34] sm:$0xf]
      %v905 = vlaneseq
      %v906 = vshrl.u32 %v905, 7
      %v907 = vsub.s32 4, %v906
      %v908 = vrot.slane %v403, %v907
      %v909 = vmul.f32 %v901, %v908
      %v910 = vmul.f32 %v902, %v908
      %v911 = vmul.f32 %v903, %v908
      %v912 = vmul.f32 %v904, %v908
      %v913 = vadd.f32 %v897, %v909
      %v914 = vadd.f32 %v898, %v910
      %v915 = vadd.f32 %v899, %v911
      %v916 = vadd.f32 %v900, %v912
      %v917 = vld [vmem:[%s840 + $0x5] sm:$0xf]
      %v918 = vld [vmem:[%s840 + $0x15] sm:$0xf]
      %v919 = vld [vmem:[%s840 + $0x25] sm:$0xf]
      %v920 = vld [vmem:[%s840 + $0x35] sm:$0xf]
      %v921 = vlaneseq
      %v922 = vshrl.u32 %v921, 7
      %v923 = vsub.s32 5, %v922
      %v924 = vrot.slane %v403, %v923
      %v925 = vmul.f32 %v917, %v924
      %v926 = vmul.f32 %v918, %v924
      %v927 = vmul.f32 %v919, %v924
      %v928 = vmul.f32 %v920, %v924
      %v929 = vadd.f32 %v913, %v925
      %v930 = vadd.f32 %v914, %v926
      %v931 = vadd.f32 %v915, %v927
      %v932 = vadd.f32 %v916, %v928
      %v933 = vld [vmem:[%s840 + $0x6] sm:$0xf]
      %v934 = vld [vmem:[%s840 + $0x16] sm:$0xf]
      %v935 = vld [vmem:[%s840 + $0x26] sm:$0xf]
      %v936 = vld [vmem:[%s840 + $0x36] sm:$0xf]
      %v937 = vlaneseq
      %v938 = vshrl.u32 %v937, 7
      %v939 = vsub.s32 6, %v938
      %v940 = vrot.slane %v403, %v939
      %v941 = vmul.f32 %v933, %v940
      %v942 = vmul.f32 %v934, %v940
      %v943 = vmul.f32 %v935, %v940
      %v944 = vmul.f32 %v936, %v940
      %v945 = vadd.f32 %v929, %v941
      %v946 = vadd.f32 %v930, %v942
      %v947 = vadd.f32 %v931, %v943
      %v948 = vadd.f32 %v932, %v944
      %s949 = scalar_lea.vmem [#allocation2], 80
      %v950 = vld [vmem:[%s949] sm:$0xf]
      %v951 = vld [vmem:[%s949 + $0x10] sm:$0xf]
      %v952 = vld [vmem:[%s949 + $0x20] sm:$0xf]
      %v953 = vld [vmem:[%s949 + $0x30] sm:$0xf]
      %v954 = vlaneseq
      %v955 = vshrl.u32 %v954, 7
      %v956 = vsub.s32 0, %v955
      %v957 = vrot.slane %v404, %v956
      %v958 = vmul.f32 %v950, %v957
      %v959 = vmul.f32 %v951, %v957
      %v960 = vmul.f32 %v952, %v957
      %v961 = vmul.f32 %v953, %v957
      %v962 = vld [vmem:[%s949 + $0x1] sm:$0xf]
      %v963 = vld [vmem:[%s949 + $0x11] sm:$0xf]
      %v964 = vld [vmem:[%s949 + $0x21] sm:$0xf]
      %v965 = vld [vmem:[%s949 + $0x31] sm:$0xf]
      %v966 = vlaneseq
      %v967 = vshrl.u32 %v966, 7
      %v968 = vsub.s32 1, %v967
      %v969 = vrot.slane %v404, %v968
      %v970 = vmul.f32 %v962, %v969
      %v971 = vmul.f32 %v963, %v969
      %v972 = vmul.f32 %v964, %v969
      %v973 = vmul.f32 %v965, %v969
      %v974 = vadd.f32 %v958, %v970
      %v975 = vadd.f32 %v959, %v971
      %v976 = vadd.f32 %v960, %v972
      %v977 = vadd.f32 %v961, %v973
      %v978 = vld [vmem:[%s949 + $0x2] sm:$0xf]
      %v979 = vld [vmem:[%s949 + $0x12] sm:$0xf]
      %v980 = vld [vmem:[%s949 + $0x22] sm:$0xf]
      %v981 = vld [vmem:[%s949 + $0x32] sm:$0xf]
      %v982 = vlaneseq
      %v983 = vshrl.u32 %v982, 7
      %v984 = vsub.s32 2, %v983
      %v985 = vrot.slane %v404, %v984
      %v986 = vmul.f32 %v978, %v985
      %v987 = vmul.f32 %v979, %v985
      %v988 = vmul.f32 %v980, %v985
      %v989 = vmul.f32 %v981, %v985
      %v990 = vadd.f32 %v974, %v986
      %v991 = vadd.f32 %v975, %v987
      %v992 = vadd.f32 %v976, %v988
      %v993 = vadd.f32 %v977, %v989
      %v994 = vld [vmem:[%s949 + $0x3] sm:$0xf]
      %v995 = vld [vmem:[%s949 + $0x13] sm:$0xf]
      %v996 = vld [vmem:[%s949 + $0x23] sm:$0xf]
      %v997 = vld [vmem:[%s949 + $0x33] sm:$0xf]
      %v998 = vlaneseq
      %v999 = vshrl.u32 %v998, 7
      %v1000 = vsub.s32 3, %v999
      %v1001 = vrot.slane %v404, %v1000
      %v1002 = vmul.f32 %v994, %v1001
      %v1003 = vmul.f32 %v995, %v1001
      %v1004 = vmul.f32 %v996, %v1001
      %v1005 = vmul.f32 %v997, %v1001
      %v1006 = vadd.f32 %v990, %v1002
      %v1007 = vadd.f32 %v991, %v1003
      %v1008 = vadd.f32 %v992, %v1004
      %v1009 = vadd.f32 %v993, %v1005
      %v1010 = vld [vmem:[%s949 + $0x4] sm:$0xf]
      %v1011 = vld [vmem:[%s949 + $0x14] sm:$0xf]
      %v1012 = vld [vmem:[%s949 + $0x24] sm:$0xf]
      %v1013 = vld [vmem:[%s949 + $0x34] sm:$0xf]
      %v1014 = vlaneseq
      %v1015 = vshrl.u32 %v1014, 7
      %v1016 = vsub.s32 4, %v1015
      %v1017 = vrot.slane %v404, %v1016
      %v1018 = vmul.f32 %v1010, %v1017
      %v1019 = vmul.f32 %v1011, %v1017
      %v1020 = vmul.f32 %v1012, %v1017
      %v1021 = vmul.f32 %v1013, %v1017
      %v1022 = vadd.f32 %v1006, %v1018
      %v1023 = vadd.f32 %v1007, %v1019
      %v1024 = vadd.f32 %v1008, %v1020
      %v1025 = vadd.f32 %v1009, %v1021
      %v1026 = vld [vmem:[%s949 + $0x5] sm:$0xf]
      %v1027 = vld [vmem:[%s949 + $0x15] sm:$0xf]
      %v1028 = vld [vmem:[%s949 + $0x25] sm:$0xf]
      %v1029 = vld [vmem:[%s949 + $0x35] sm:$0xf]
      %v1030 = vlaneseq
      %v1031 = vshrl.u32 %v1030, 7
      %v1032 = vsub.s32 5, %v1031
      %v1033 = vrot.slane %v404, %v1032
      %v1034 = vmul.f32 %v1026, %v1033
      %v1035 = vmul.f32 %v1027, %v1033
      %v1036 = vmul.f32 %v1028, %v1033
      %v1037 = vmul.f32 %v1029, %v1033
      %v1038 = vadd.f32 %v1022, %v1034
      %v1039 = vadd.f32 %v1023, %v1035
      %v1040 = vadd.f32 %v1024, %v1036
      %v1041 = vadd.f32 %v1025, %v1037
      %v1042 = vld [vmem:[%s949 + $0x6] sm:$0xf]
      %v1043 = vld [vmem:[%s949 + $0x16] sm:$0xf]
      %v1044 = vld [vmem:[%s949 + $0x26] sm:$0xf]
      %v1045 = vld [vmem:[%s949 + $0x36] sm:$0xf]
      %v1046 = vlaneseq
      %v1047 = vshrl.u32 %v1046, 7
      %v1048 = vsub.s32 6, %v1047
      %v1049 = vrot.slane %v404, %v1048
      %v1050 = vmul.f32 %v1042, %v1049
      %v1051 = vmul.f32 %v1043, %v1049
      %v1052 = vmul.f32 %v1044, %v1049
      %v1053 = vmul.f32 %v1045, %v1049
      %v1054 = vadd.f32 %v1038, %v1050
      %v1055 = vadd.f32 %v1039, %v1051
      %v1056 = vadd.f32 %v1040, %v1052
      %v1057 = vadd.f32 %v1041, %v1053
      %s1058 = scalar_lea.vmem [#allocation2], 96
      %v1059 = vld [vmem:[%s1058] sm:$0xf]
      %v1060 = vld [vmem:[%s1058 + $0x10] sm:$0xf]
      %v1061 = vld [vmem:[%s1058 + $0x20] sm:$0xf]
      %v1062 = vld [vmem:[%s1058 + $0x30] sm:$0xf]
      %v1063 = vlaneseq
      %v1064 = vshrl.u32 %v1063, 7
      %v1065 = vsub.s32 0, %v1064
      %v1066 = vrot.slane %v405, %v1065
      %v1067 = vmul.f32 %v1059, %v1066
      %v1068 = vmul.f32 %v1060, %v1066
      %v1069 = vmul.f32 %v1061, %v1066
      %v1070 = vmul.f32 %v1062, %v1066
      %v1071 = vld [vmem:[%s1058 + $0x1] sm:$0xf]
      %v1072 = vld [vmem:[%s1058 + $0x11] sm:$0xf]
      %v1073 = vld [vmem:[%s1058 + $0x21] sm:$0xf]
      %v1074 = vld [vmem:[%s1058 + $0x31] sm:$0xf]
      %v1075 = vlaneseq
      %v1076 = vshrl.u32 %v1075, 7
      %v1077 = vsub.s32 1, %v1076
      %v1078 = vrot.slane %v405, %v1077
      %v1079 = vmul.f32 %v1071, %v1078
      %v1080 = vmul.f32 %v1072, %v1078
      %v1081 = vmul.f32 %v1073, %v1078
      %v1082 = vmul.f32 %v1074, %v1078
      %v1083 = vadd.f32 %v1067, %v1079
      %v1084 = vadd.f32 %v1068, %v1080
      %v1085 = vadd.f32 %v1069, %v1081
      %v1086 = vadd.f32 %v1070, %v1082
      %v1087 = vld [vmem:[%s1058 + $0x2] sm:$0xf]
      %v1088 = vld [vmem:[%s1058 + $0x12] sm:$0xf]
      %v1089 = vld [vmem:[%s1058 + $0x22] sm:$0xf]
      %v1090 = vld [vmem:[%s1058 + $0x32] sm:$0xf]
      %v1091 = vlaneseq
      %v1092 = vshrl.u32 %v1091, 7
      %v1093 = vsub.s32 2, %v1092
      %v1094 = vrot.slane %v405, %v1093
      %v1095 = vmul.f32 %v1087, %v1094
      %v1096 = vmul.f32 %v1088, %v1094
      %v1097 = vmul.f32 %v1089, %v1094
      %v1098 = vmul.f32 %v1090, %v1094
      %v1099 = vadd.f32 %v1083, %v1095
      %v1100 = vadd.f32 %v1084, %v1096
      %v1101 = vadd.f32 %v1085, %v1097
      %v1102 = vadd.f32 %v1086, %v1098
      %v1103 = vld [vmem:[%s1058 + $0x3] sm:$0xf]
      %v1104 = vld [vmem:[%s1058 + $0x13] sm:$0xf]
      %v1105 = vld [vmem:[%s1058 + $0x23] sm:$0xf]
      %v1106 = vld [vmem:[%s1058 + $0x33] sm:$0xf]
      %v1107 = vlaneseq
      %v1108 = vshrl.u32 %v1107, 7
      %v1109 = vsub.s32 3, %v1108
      %v1110 = vrot.slane %v405, %v1109
      %v1111 = vmul.f32 %v1103, %v1110
      %v1112 = vmul.f32 %v1104, %v1110
      %v1113 = vmul.f32 %v1105, %v1110
      %v1114 = vmul.f32 %v1106, %v1110
      %v1115 = vadd.f32 %v1099, %v1111
      %v1116 = vadd.f32 %v1100, %v1112
      %v1117 = vadd.f32 %v1101, %v1113
      %v1118 = vadd.f32 %v1102, %v1114
      %v1119 = vld [vmem:[%s1058 + $0x4] sm:$0xf]
      %v1120 = vld [vmem:[%s1058 + $0x14] sm:$0xf]
      %v1121 = vld [vmem:[%s1058 + $0x24] sm:$0xf]
      %v1122 = vld [vmem:[%s1058 + $0x34] sm:$0xf]
      %v1123 = vlaneseq
      %v1124 = vshrl.u32 %v1123, 7
      %v1125 = vsub.s32 4, %v1124
      %v1126 = vrot.slane %v405, %v1125
      %v1127 = vmul.f32 %v1119, %v1126
      %v1128 = vmul.f32 %v1120, %v1126
      %v1129 = vmul.f32 %v1121, %v1126
      %v1130 = vmul.f32 %v1122, %v1126
      %v1131 = vadd.f32 %v1115, %v1127
      %v1132 = vadd.f32 %v1116, %v1128
      %v1133 = vadd.f32 %v1117, %v1129
      %v1134 = vadd.f32 %v1118, %v1130
      %v1135 = vld [vmem:[%s1058 + $0x5] sm:$0xf]
      %v1136 = vld [vmem:[%s1058 + $0x15] sm:$0xf]
      %v1137 = vld [vmem:[%s1058 + $0x25] sm:$0xf]
      %v1138 = vld [vmem:[%s1058 + $0x35] sm:$0xf]
      %v1139 = vlaneseq
      %v1140 = vshrl.u32 %v1139, 7
      %v1141 = vsub.s32 5, %v1140
      %v1142 = vrot.slane %v405, %v1141
      %v1143 = vmul.f32 %v1135, %v1142
      %v1144 = vmul.f32 %v1136, %v1142
      %v1145 = vmul.f32 %v1137, %v1142
      %v1146 = vmul.f32 %v1138, %v1142
      %v1147 = vadd.f32 %v1131, %v1143
      %v1148 = vadd.f32 %v1132, %v1144
      %v1149 = vadd.f32 %v1133, %v1145
      %v1150 = vadd.f32 %v1134, %v1146
      %v1151 = vld [vmem:[%s1058 + $0x6] sm:$0xf]
      %v1152 = vld [vmem:[%s1058 + $0x16] sm:$0xf]
      %v1153 = vld [vmem:[%s1058 + $0x26] sm:$0xf]
      %v1154 = vld [vmem:[%s1058 + $0x36] sm:$0xf]
      %v1155 = vlaneseq
      %v1156 = vshrl.u32 %v1155, 7
      %v1157 = vsub.s32 6, %v1156
      %v1158 = vrot.slane %v405, %v1157
      %v1159 = vmul.f32 %v1151, %v1158
      %v1160 = vmul.f32 %v1152, %v1158
      %v1161 = vmul.f32 %v1153, %v1158
      %v1162 = vmul.f32 %v1154, %v1158
      %v1163 = vadd.f32 %v1147, %v1159
      %v1164 = vadd.f32 %v1148, %v1160
      %v1165 = vadd.f32 %v1149, %v1161
      %v1166 = vadd.f32 %v1150, %v1162
      %v1167 = vadd.f32 %v510, %v619
      %v1168 = vadd.f32 %v511, %v620
      %v1169 = vadd.f32 %v512, %v621
      %v1170 = vadd.f32 %v513, %v622
      %v1171 = vadd.f32 %v728, %v836
      %v1172 = vadd.f32 %v729, %v837
      %v1173 = vadd.f32 %v730, %v838
      %v1174 = vadd.f32 %v731, %v839
      %v1175 = vadd.f32 %v1167, %v1171
      %v1176 = vadd.f32 %v1168, %v1172
      %v1177 = vadd.f32 %v1169, %v1173
      %v1178 = vadd.f32 %v1170, %v1174
      %v1179 = vadd.f32 %v945, %v1054
      %v1180 = vadd.f32 %v946, %v1055
      %v1181 = vadd.f32 %v947, %v1056
      %v1182 = vadd.f32 %v948, %v1057
      %v1183 = vadd.f32 %v1179, %v1163
      %v1184 = vadd.f32 %v1180, %v1164
      %v1185 = vadd.f32 %v1181, %v1165
      %v1186 = vadd.f32 %v1182, %v1166
      %v1187 = vadd.f32 %v1175, %v1183
      %v1188 = vadd.f32 %v1176, %v1184
      %v1189 = vadd.f32 %v1177, %v1185
      %v1190 = vadd.f32 %v1178, %v1186
      %v1191 = vld [vmem:[%s2] sm:$0x1]
      %v1193 = vlaneseq
      %v1194 = vshrl.u32 %v1193, 7
      %v1195 = vsub.s32 0, %v1194
      %v1196 = vrot.slane %v1191, %v1195
      %v1198 = vcombine.high %v1196, %v1196
      %v1200 = vadd.f32 %v1187, %v1196
      %v1201 = vadd.f32 %v1188, %v1198
      %v1202 = vadd.f32 %v1189, %v1196
      %v1203 = vadd.f32 %v1190, %v1198
      %v1204 = vld [vmem:[%s3] sm:$0x1]
      %v1205 = vld [vmem:[%s4] sm:$0x1]
      %v1210 = vcombine.low %v1200, %v1201
      %v1211 = vcombine.low %v1202, %v1203
      %v1214 = vsel %vm369, %v1210, 0.0
      %1215 = vadd.xlane.f32.xlu0 %v1214
      %v1216 = vpop.xlane.xlu0 %1215
      %v1217 = vsel %vm369, %v1211, 0.0
      %1218 = vadd.xlane.f32.xlu0 %v1217
      %v1219 = vpop.xlane.xlu0 %1218
      %v1220 = vrcp.pop 32.0
      %v1221 = vmul.f32 %v1216, %v1220
      %v1222 = vmul.f32 %v1219, %v1220
      %v1226 = vunpack.c.l.s4 839922192
      %v1227 = vunpack.c.0.s8 %v1226
      %v1228 = vlaneseq
      %v1229 = vshrl.u32 %v1228, 7
      %v1230 = vsub.s32 %v1227, %v1229
      %v1231 = vrot.slane %v1221, %v1230
      %v1233 = vunpack.c.l.s4 1985246804
      %v1234 = vunpack.c.0.s8 %v1233
      %v1235 = vlaneseq
      %v1236 = vshrl.u32 %v1235, 7
      %v1237 = vsub.s32 %v1234, %v1236
      %v1238 = vrot.slane %v1221, %v1237
      %v1240 = vunpack.c.l.s4 839922192
      %v1241 = vunpack.c.0.s8 %v1240
      %v1242 = vlaneseq
      %v1243 = vshrl.u32 %v1242, 7
      %v1244 = vsub.s32 %v1241, %v1243
      %v1245 = vrot.slane %v1222, %v1244
      %v1247 = vunpack.c.l.s4 1985246804
      %v1248 = vunpack.c.0.s8 %v1247
      %v1249 = vlaneseq
      %v1250 = vshrl.u32 %v1249, 7
      %v1251 = vsub.s32 %v1248, %v1250
      %v1252 = vrot.slane %v1222, %v1251
      %v1257 = vsub.f32 %v1200, %v1231
      %v1258 = vsub.f32 %v1201, %v1238
      %v1259 = vsub.f32 %v1202, %v1245
      %v1260 = vsub.f32 %v1203, %v1252
      %v1261 = vmul.f32 %v1257, %v1257
      %v1262 = vmul.f32 %v1258, %v1258
      %v1263 = vmul.f32 %v1259, %v1259
      %v1264 = vmul.f32 %v1260, %v1260
      %v1269 = vcombine.low %v1261, %v1262
      %v1270 = vcombine.low %v1263, %v1264
      %v1273 = vsel %vm369, %v1269, 0.0
      %1274 = vadd.xlane.f32.xlu0 %v1273
      %v1275 = vpop.xlane.xlu0 %1274
      %v1276 = vsel %vm369, %v1270, 0.0
      %1277 = vadd.xlane.f32.xlu0 %v1276
      %v1278 = vpop.xlane.xlu0 %1277
      %v1279 = vmul.f32 %v1275, %v1220
      %v1280 = vmul.f32 %v1278, %v1220
      %v1281 = vadd.f32 %v1279, 1e-06
      %v1282 = vadd.f32 %v1280, 1e-06
      %v1283 = vrsqrt.pop %v1281
      %v1284 = vrsqrt.pop %v1282
      %v1288 = vunpack.c.l.s4 839922192
      %v1289 = vunpack.c.0.s8 %v1288
      %v1290 = vlaneseq
      %v1291 = vshrl.u32 %v1290, 7
      %v1292 = vsub.s32 %v1289, %v1291
      %v1293 = vrot.slane %v1283, %v1292
      %v1295 = vunpack.c.l.s4 1985246804
      %v1296 = vunpack.c.0.s8 %v1295
      %v1297 = vlaneseq
      %v1298 = vshrl.u32 %v1297, 7
      %v1299 = vsub.s32 %v1296, %v1298
      %v1300 = vrot.slane %v1283, %v1299
      %v1302 = vunpack.c.l.s4 839922192
      %v1303 = vunpack.c.0.s8 %v1302
      %v1304 = vlaneseq
      %v1305 = vshrl.u32 %v1304, 7
      %v1306 = vsub.s32 %v1303, %v1305
      %v1307 = vrot.slane %v1284, %v1306
      %v1309 = vunpack.c.l.s4 1985246804
      %v1310 = vunpack.c.0.s8 %v1309
      %v1311 = vlaneseq
      %v1312 = vshrl.u32 %v1311, 7
      %v1313 = vsub.s32 %v1310, %v1312
      %v1314 = vrot.slane %v1284, %v1313
      %v1319 = vmul.f32 %v1257, %v1293
      %v1320 = vmul.f32 %v1258, %v1300
      %v1321 = vmul.f32 %v1259, %v1307
      %v1322 = vmul.f32 %v1260, %v1314
      %v1324 = vlaneseq
      %v1325 = vshrl.u32 %v1324, 7
      %v1326 = vsub.s32 0, %v1325
      %v1327 = vrot.slane %v1204, %v1326
      %v1329 = vcombine.high %v1327, %v1327
      %v1331 = vmul.f32 %v1319, %v1327
      %v1332 = vmul.f32 %v1320, %v1329
      %v1333 = vmul.f32 %v1321, %v1327
      %v1334 = vmul.f32 %v1322, %v1329
      %v1336 = vlaneseq
      %v1337 = vshrl.u32 %v1336, 7
      %v1338 = vsub.s32 0, %v1337
      %v1339 = vrot.slane %v1205, %v1338
      %v1341 = vcombine.high %v1339, %v1339
      %v1343 = vadd.f32 %v1331, %v1339
      %v1344 = vadd.f32 %v1332, %v1341
      %v1345 = vadd.f32 %v1333, %v1339
      %v1346 = vadd.f32 %v1334, %v1341
      %v1351 = vcombine.low %v1343, %v1344
      %v1352 = vcombine.low %v1345, %v1346
      %v1355 = vpack.c.bf16 %v1352, %v1351
      %v1356 = vld [vmem:[%s5] sm:$0xf]
      %v1357 = vld [vmem:[%s5 + $0x4] sm:$0xf]
      %v1358 = vld [vmem:[%s5 + $0x8] sm:$0xf]
      %v1359 = vld [vmem:[%s5 + $0xc] sm:$0xf]
      %v1360 = vld [vmem:[%s6] sm:$0x1]
      %v1362 = vlaneseq
      %v1363 = vshrl.u32 %v1362, 7
      %v1364 = vsub.s32 0, %v1363
      %v1365 = vrot.slane %v1360, %v1364
      %v1371 = vunpack.c.l.b16 %v1356
      %v1372 = vunpack.c.l.b16 %v1357
      %v1373 = vunpack.c.l.b16 %v1358
      %v1374 = vunpack.c.l.b16 %v1359
      %v1375 = vpack.c.b16 %v1372, %v1371
      %v1376 = vpack.c.b16 %v1374, %v1373
      %v1380 = vsel %vm369, %v1355, 0
      %1382 = vmatprep.subr.bf16.mxu0 0
      %1383 = vmatpush1.bf16.msra.mxu0 %v1375
      %1384 = vmatprep.subr.bf16.mxu0 0
      %1385 = vmatpush1.bf16.msra.mxu0 %v1376
      %1386 = vmatprep.subr.bf16.mxu0 0
      %1387 = vmatpush1.bf16.msra.mxu0 0
      %1388 = vmatprep.subr.bf16.mxu0 0
      %1389 = vmatpush1.bf16.msra.mxu0 0
      %1390 = vmatprep.subr.bf16.mxu0 0
      %1391 = vmatpush1.bf16.msra.mxu0 0
      %1392 = vmatprep.subr.bf16.mxu0 0
      %1393 = vmatpush1.bf16.msra.mxu0 0
      %1394 = vmatprep.subr.bf16.mxu0 0
      %1395 = vmatpush1.bf16.msra.mxu0 0
      %1396 = vmatprep.subr.bf16.mxu0 0
      %1397 = vmatpush1.bf16.msra.mxu0 0
      %1398 = vmatprep.subr.bf16.mxu0 0
      %1399 = vmatpush1.bf16.msra.mxu0 0
      %1400 = vmatprep.subr.bf16.mxu0 0
      %1401 = vmatpush1.bf16.msra.mxu0 0
      %1402 = vmatprep.subr.bf16.mxu0 0
      %1403 = vmatpush1.bf16.msra.mxu0 0
      %1404 = vmatprep.subr.bf16.mxu0 0
      %1405 = vmatpush1.bf16.msra.mxu0 0
      %1406 = vmatprep.subr.bf16.mxu0 0
      %1407 = vmatpush1.bf16.msra.mxu0 0
      %1408 = vmatprep.subr.bf16.mxu0 0
      %1409 = vmatpush1.bf16.msra.mxu0 0
      %1410 = vmatprep.subr.bf16.mxu0 0
      %1411 = vmatpush1.bf16.msra.mxu0 0
      %1412 = vmatprep.subr.bf16.mxu0 0
      %1413 = vmatpush1.bf16.msra.mxu0 0
      %1414 = vmatprep.mubr.bf16.mxu0 0
      %1415 = vmatmul.mubr.bf16.gmra.mrb[0].mxu0 %v1380
      %v1416 = vpop.f32.mrb[0].mxu0
      %v1417 = vadd.f32 %v1365, %v1416
      %v1418 = vpop.f32.mrb[0].mxu0
      %v1419 = vpop.f32.mrb[0].mxu0
      %v1420 = vadd.f32 %v1365, %v1419
      %v1421 = vpop.f32.mrb[0].mxu0
      %1422 = vdwg.mxu0
      %v1423 = vmul.f32 %v1417, %v1417
      %v1424 = vmul.f32 %v1420, %v1420
      %v1425 = vmul.f32 %v1417, %v1423
      %v1426 = vmul.f32 %v1420, %v1424
      %v1427 = vmul.f32 %v1425, 0.044715
      %v1428 = vmul.f32 %v1426, 0.044715
      %v1429 = vadd.f32 %v1417, %v1427
      %v1430 = vadd.f32 %v1420, %v1428
      %v1431 = vmul.f32 %v1429, 0.7978846
      %v1432 = vmul.f32 %v1430, 0.7978846
      %v1433 = vtanh.pop %v1431
      %v1434 = vtanh.pop %v1432
      %v1435 = vadd.f32 %v1433, 1.0
      %v1436 = vadd.f32 %v1434, 1.0
      %v1437 = vmul.f32 %v1435, 0.5
      %v1438 = vmul.f32 %v1436, 0.5
      %v1439 = vmul.f32 %v1417, %v1437
      %v1440 = vmul.f32 %v1420, %v1438
      %v1441 = vpack.c.bf16 %v1440, %v1439
      %v1442 = vld [vmem:[%s7] sm:$0xf]
      %v1443 = vld [vmem:[%s7 + $0x4] sm:$0xf]
      %v1444 = vld [vmem:[%s7 + $0x8] sm:$0xf]
      %v1445 = vld [vmem:[%s7 + $0xc] sm:$0xf]
      %v1446 = vld [vmem:[%s7 + $0x10] sm:$0xf]
      %v1447 = vld [vmem:[%s7 + $0x14] sm:$0xf]
      %v1448 = vld [vmem:[%s7 + $0x18] sm:$0xf]
      %v1449 = vld [vmem:[%s7 + $0x1c] sm:$0xf]
      %v1450 = vld [vmem:[%s7 + $0x20] sm:$0xf]
      %v1451 = vld [vmem:[%s7 + $0x24] sm:$0xf]
      %v1452 = vld [vmem:[%s7 + $0x28] sm:$0xf]
      %v1453 = vld [vmem:[%s7 + $0x2c] sm:$0xf]
      %v1454 = vld [vmem:[%s7 + $0x30] sm:$0xf]
      %v1455 = vld [vmem:[%s7 + $0x34] sm:$0xf]
      %v1456 = vld [vmem:[%s7 + $0x38] sm:$0xf]
      %v1457 = vld [vmem:[%s7 + $0x3c] sm:$0xf]
      %v1458 = vld [vmem:[%s8] sm:$0x1]
      %v1460 = vlaneseq
      %v1461 = vshrl.u32 %v1460, 7
      %v1462 = vsub.s32 0, %v1461
      %v1463 = vrot.slane %v1458, %v1462
      %v1481 = vunpack.c.l.b16 %v1442
      %v1482 = vunpack.c.l.b16 %v1443
      %v1483 = vunpack.c.l.b16 %v1444
      %v1484 = vunpack.c.l.b16 %v1445
      %v1485 = vunpack.c.l.b16 %v1446
      %v1486 = vunpack.c.l.b16 %v1447
      %v1487 = vunpack.c.l.b16 %v1448
      %v1488 = vunpack.c.l.b16 %v1449
      %v1489 = vunpack.c.l.b16 %v1450
      %v1490 = vunpack.c.l.b16 %v1451
      %v1491 = vunpack.c.l.b16 %v1452
      %v1492 = vunpack.c.l.b16 %v1453
      %v1493 = vunpack.c.l.b16 %v1454
      %v1494 = vunpack.c.l.b16 %v1455
      %v1495 = vunpack.c.l.b16 %v1456
      %v1496 = vunpack.c.l.b16 %v1457
      %v1497 = vpack.c.b16 %v1482, %v1481
      %v1498 = vpack.c.b16 %v1484, %v1483
      %v1499 = vpack.c.b16 %v1486, %v1485
      %v1500 = vpack.c.b16 %v1488, %v1487
      %v1501 = vpack.c.b16 %v1490, %v1489
      %v1502 = vpack.c.b16 %v1492, %v1491
      %v1503 = vpack.c.b16 %v1494, %v1493
      %v1504 = vpack.c.b16 %v1496, %v1495
      %1513 = vmatprep.subr.bf16.mxu0 0
      %1514 = vmatpush1.bf16.msra.mxu0 %v1497
      %1515 = vmatprep.subr.bf16.mxu0 0
      %1516 = vmatpush1.bf16.msra.mxu0 %v1498
      %1517 = vmatprep.subr.bf16.mxu0 0
      %1518 = vmatpush1.bf16.msra.mxu0 %v1499
      %1519 = vmatprep.subr.bf16.mxu0 0
      %1520 = vmatpush1.bf16.msra.mxu0 %v1500
      %1521 = vmatprep.subr.bf16.mxu0 0
      %1522 = vmatpush1.bf16.msra.mxu0 %v1501
      %1523 = vmatprep.subr.bf16.mxu0 0
      %1524 = vmatpush1.bf16.msra.mxu0 %v1502
      %1525 = vmatprep.subr.bf16.mxu0 0
      %1526 = vmatpush1.bf16.msra.mxu0 %v1503
      %1527 = vmatprep.subr.bf16.mxu0 0
      %1528 = vmatpush1.bf16.msra.mxu0 %v1504
      %1529 = vmatprep.subr.bf16.mxu0 0
      %1530 = vmatpush1.bf16.msra.mxu0 0
      %1531 = vmatprep.subr.bf16.mxu0 0
      %1532 = vmatpush1.bf16.msra.mxu0 0
      %1533 = vmatprep.subr.bf16.mxu0 0
      %1534 = vmatpush1.bf16.msra.mxu0 0
      %1535 = vmatprep.subr.bf16.mxu0 0
      %1536 = vmatpush1.bf16.msra.mxu0 0
      %1537 = vmatprep.subr.bf16.mxu0 0
      %1538 = vmatpush1.bf16.msra.mxu0 0
      %1539 = vmatprep.subr.bf16.mxu0 0
      %1540 = vmatpush1.bf16.msra.mxu0 0
      %1541 = vmatprep.subr.bf16.mxu0 0
      %1542 = vmatpush1.bf16.msra.mxu0 0
      %1543 = vmatprep.subr.bf16.mxu0 0
      %1544 = vmatpush1.bf16.msra.mxu0 0
      %1545 = vmatprep.mubr.bf16.mxu0 0
      %1546 = vmatmul.mubr.bf16.gmra.mrb[0].mxu0 %v1441
      %v1547 = vpop.f32.mrb[0].mxu0
      %v1548 = vadd.f32 %v1463, %v1547
      %v1549 = vpop.f32.mrb[0].mxu0
      %v1550 = vpop.f32.mrb[0].mxu0
      %v1551 = vadd.f32 %v1463, %v1550
      %v1552 = vpop.f32.mrb[0].mxu0
      %1553 = vdwg.mxu0
      %v1554 = vld [vmem:[%s9] sm:$0x1]
      %v1556 = vlaneseq
      %v1557 = vshrl.u32 %v1556, 7
      %v1558 = vsub.s32 0, %v1557
      %v1559 = vrot.slane %v1554, %v1558
      %v1561 = vmul.f32 %v1559, %v1548
      %v1562 = vmul.f32 %v1559, %v1551
      %v1565 = vcombine.high %v1561, %v1561
      %v1566 = vcombine.high %v1562, %v1562
      %v1569 = vadd.f32 %v365, %v1561
      %v1570 = vadd.f32 %v366, %v1565
      %v1571 = vadd.f32 %v367, %v1562
      %v1572 = vadd.f32 %v368, %v1566
      %v1573 = vpack.c.bf16 %v1569, %v1569
      %v1574 = vpack.c.bf16 %v1570, %v1570
      %v1575 = vpack.c.bf16 %v1571, %v1571
      %v1576 = vpack.c.bf16 %v1572, %v1572
      %1577 = vst.msk [vmem:[%s359] sm:$0x3] %vm371, %v1573
      %1578 = vst.msk [vmem:[%s359 + $0x2] sm:$0x3] %vm371, %v1574
      %1579 = vst.msk [vmem:[%s359 + $0x4] sm:$0x3] %vm371, %v1575
      %1580 = vst.msk [vmem:[%s359 + $0x6] sm:$0x3] %vm371, %v1576
      %p1581 = scmp.lt.s32.totalorder %s21, 1
      %s1582 = scalar_select %p1581, %s21, 1
      %s1583 = smul.addr %s1582, 4
      %s1584 = smul.addr %s1583, 2
      %s1585 = scalar_lea.vmem %s10, %s1584
      // Predicated region
      $region61: #{convnext_forward.11} parent=59 // pred_check
        %p1586 = pneg %p254
      $region62: #{convnext_forward.11} parent=59 // pred_check_branch
        %1588 = sbr.rel (%p1586) target = $region64
      $region63: #{convnext_forward.11} parent=59 // pred_region
        _
      $region64: #{convnext_forward.11} parent=59 // pred_fallthru
        _
    $region60: #{convnext_forward.11} parent=5 // pred_fallthru
      _
    %p1589 = scmp.le.s32.totalorder 2, %s16
    // Predicated region
    $region65: #{convnext_forward.11} parent=5 // pred_check
      %p1590 = pneg %p1589
    $region66: #{convnext_forward.11} parent=5 // pred_check_branch
      %1592 = sbr.rel (%p1590) target = $region68
    $region67: #{convnext_forward.11} parent=5 // pred_region
      %s1593 = ssub.s32 %s16, 2
      // Predicated region
      $region69: #{convnext_forward.11} parent=67 // pred_check
        %p1594 = pneg %p260
      $region70: #{convnext_forward.11} parent=67 // pred_check_branch
        %1596 = sbr.rel (%p1594) target = $region72
      $region71: #{convnext_forward.11} parent=67 // pred_region
        %p1597 = scmp.lt.s32.totalorder %s22, 1
        %s1598 = scalar_select %p1597, %s22, 1
        %s1599 = smul.addr %s1598, 4
        %s1600 = smul.addr %s1599, 2
        %s1601 = scalar_lea.vmem %s10, %s1600
      $region72: #{convnext_forward.11} parent=67 // pred_fallthru
        _
    $region68: #{convnext_forward.11} parent=5 // pred_fallthru
      _
  $region6: #{convnext_forward.11} parent=0 // loop_footer
    %s20 = sadd.s32 1, %s16
  $region7: #{convnext_forward.11} parent=0 // loop_footer_branch
    %15 = sbr.rel target = $region3
  $region8: #{convnext_forward.11} parent=0 // loop_exit
    _

// kernel: convnext_forward.8
$region0: #{convnext_forward.8}
  #allocation0 [shape = 'u32[]', space=smem, size = 0x4, offset = 0x4, fixed_abs, tag = 'smem constant byte address 0x4 - core index']
  #allocation1 [shape = 'u32[144,128]{1,0:T(1,128)}', space=vmem, size = 0x12000, scoped, tag = 'internal scratch']
  #allocation2 [shape = 'f32[14,14,16]{2,1,0:T(8,128)}', space=vmem, size = 0x1c000, scoped, tag = 'scratch operand']
  %s0 = inlined_call_operand.vmem [shape: bf16[2,8,8,16], index: 0, kind: input, shape index: {}, may-alias: {0,10}]
  %s1 = inlined_call_operand.vmem [shape: f32[7,7,16], index: 1, kind: input, shape index: {}]
  %s2 = inlined_call_operand.vmem [shape: f32[1,16], index: 2, kind: input, shape index: {}]
  %s3 = inlined_call_operand.vmem [shape: f32[1,16], index: 3, kind: input, shape index: {}]
  %s4 = inlined_call_operand.vmem [shape: f32[1,16], index: 4, kind: input, shape index: {}]
  %s5 = inlined_call_operand.vmem [shape: bf16[16,64], index: 5, kind: input, shape index: {}]
  %s6 = inlined_call_operand.vmem [shape: f32[1,64], index: 6, kind: input, shape index: {}]
  %s7 = inlined_call_operand.vmem [shape: bf16[64,16], index: 7, kind: input, shape index: {}]
  %s8 = inlined_call_operand.vmem [shape: f32[1,16], index: 8, kind: input, shape index: {}]
  %s9 = inlined_call_operand.vmem [shape: f32[1,16], index: 9, kind: input, shape index: {}]
  %s10 = inlined_call_operand.vmem [shape: bf16[2,8,8,16], index: 10, kind: output, shape index: {}, may-alias: {0,10}]
  %s11 = sld [smem:[#allocation0]]
  $region73: #{convnext_forward.8} parent=0
    _
  %s13 = ssub.s32 1, %s11
  %s14 = scalar_select 0, %s13, %s11
  loop: start=0, step=1, limit=4
  $region2: #{convnext_forward.8} parent=0 // loop_pre_header
    _
  $region3: #{convnext_forward.8} parent=0 // loop_header
    %s16 = sphi 0, %s20
    %p17 = scmp.ge.s32.totalorder %s16, 4
    %s26 = sphi 0, %s28
    %s29 = sphi 0, %s26
    %s30 = sphi 0, %s29
    %s46 = sphi 0, %s30
    %s50 = sphi 0, %s50
    %s52 = sphi 0, %s50
    %s53 = sphi 0, %s52
    %s67 = sphi 0, %s53
    %s71 = sphi 0, %s71
    %s73 = sphi 0, %s71
    %s74 = sphi 0, %s73
    %s88 = sphi 0, %s74
    %s92 = sphi 0, %s92
    %s94 = sphi 0, %s92
    %s95 = sphi 0, %s94
    %s109 = sphi 0, %s95
    %s113 = sphi 0, %s113
    %s115 = sphi 0, %s113
    %s116 = sphi 0, %s115
    %s130 = sphi 0, %s116
    %s134 = sphi 0, %s134
    %s136 = sphi 0, %s134
    %s137 = sphi 0, %s136
    %s151 = sphi 0, %s137
    %s155 = sphi 0, %s155
    %s157 = sphi 0, %s155
    %s158 = sphi 0, %s157
    %s172 = sphi 0, %s158
    %s176 = sphi 0, %s176
    %s178 = sphi 0, %s176
    %s179 = sphi 0, %s178
    %s193 = sphi 0, %s179
    %s197 = sphi 0, %s197
    %s199 = sphi 0, %s197
    %s200 = sphi 0, %s199
    %s214 = sphi 0, %s200
    %s218 = sphi 0, %s218
    %s220 = sphi 0, %s218
    %s221 = sphi 0, %s220
    %s235 = sphi 0, %s221
    %s241 = sphi 0, %s243
    %s244 = sphi 0, %s241
    %s245 = sphi 0, %s244
    %s261 = sphi 0, %s245
  $region4: #{convnext_forward.8} parent=0 // loop_header_branch
    %19 = sbr.rel (%p17) target = $region8
  $region5: #{convnext_forward.8} parent=0 // loop_body
    %s21 = ssub.s32 %s16, 1
    %s22 = ssub.s32 %s16, 2
    %s23 = sadd.s32 %s16, 1
    %s24 = ssub.s32 %s16, %s23
    %p25 = scmp.eq.s32.totalorder %s24, 0
    %s27 = sadd.s32 %s26, 1
    %s28 = scalar_select %p25, %s26, %s27
    %p31 = pneg %p25
    %p32 = scmp.eq.s32.totalorder %s16, 1
    %p33 = por %p31, %p32
    %p34 = scmp.ne.s32.totalorder %s26, %s29
    %p35 = scmp.eq.s32.totalorder %s16, 0
    %p36 = por %p34, %p35
    %p37 = scmp.ne.s32.totalorder %s26, %s29
    %p38 = scmp.eq.s32.totalorder %s21, 1
    %p39 = por %p37, %p38
    %p40 = scmp.ne.s32.totalorder %s29, %s30
    %p41 = scmp.eq.s32.totalorder %s21, 0
    %p42 = por %p40, %p41
    %p43 = scmp.ne.s32.totalorder %s29, %s30
    %p44 = scmp.eq.s32.totalorder %s22, 1
    %p45 = por %p43, %p44
    %p47 = scmp.ne.s32.totalorder %s30, %s46
    %p48 = scmp.eq.s32.totalorder %s22, 0
    %p49 = por %p47, %p48
    %s51 = sadd.s32 %s50, 1
    %p54 = scmp.eq.s32.totalorder %s16, 1
    %p55 = scmp.ne.s32.totalorder %s50, %s52
    %p56 = scmp.eq.s32.totalorder %s16, 0
    %p57 = por %p55, %p56
    %p58 = scmp.ne.s32.totalorder %s50, %s52
    %p59 = scmp.eq.s32.totalorder %s21, 1
    %p60 = por %p58, %p59
    %p61 = scmp.ne.s32.totalorder %s52, %s53
    %p62 = scmp.eq.s32.totalorder %s21, 0
    %p63 = por %p61, %p62
    %p64 = scmp.ne.s32.totalorder %s52, %s53
    %p65 = scmp.eq.s32.totalorder %s22, 1
    %p66 = por %p64, %p65
    %p68 = scmp.ne.s32.totalorder %s53, %s67
    %p69 = scmp.eq.s32.totalorder %s22, 0
    %p70 = por %p68, %p69
    %s72 = sadd.s32 %s71, 1
    %p75 = scmp.eq.s32.totalorder %s16, 1
    %p76 = scmp.ne.s32.totalorder %s71, %s73
    %p77 = scmp.eq.s32.totalorder %s16, 0
    %p78 = por %p76, %p77
    %p79 = scmp.ne.s32.totalorder %s71, %s73
    %p80 = scmp.eq.s32.totalorder %s21, 1
    %p81 = por %p79, %p80
    %p82 = scmp.ne.s32.totalorder %s73, %s74
    %p83 = scmp.eq.s32.totalorder %s21, 0
    %p84 = por %p82, %p83
    %p85 = scmp.ne.s32.totalorder %s73, %s74
    %p86 = scmp.eq.s32.totalorder %s22, 1
    %p87 = por %p85, %p86
    %p89 = scmp.ne.s32.totalorder %s74, %s88
    %p90 = scmp.eq.s32.totalorder %s22, 0
    %p91 = por %p89, %p90
    %s93 = sadd.s32 %s92, 1
    %p96 = scmp.eq.s32.totalorder %s16, 1
    %p97 = scmp.ne.s32.totalorder %s92, %s94
    %p98 = scmp.eq.s32.totalorder %s16, 0
    %p99 = por %p97, %p98
    %p100 = scmp.ne.s32.totalorder %s92, %s94
    %p101 = scmp.eq.s32.totalorder %s21, 1
    %p102 = por %p100, %p101
    %p103 = scmp.ne.s32.totalorder %s94, %s95
    %p104 = scmp.eq.s32.totalorder %s21, 0
    %p105 = por %p103, %p104
    %p106 = scmp.ne.s32.totalorder %s94, %s95
    %p107 = scmp.eq.s32.totalorder %s22, 1
    %p108 = por %p106, %p107
    %p110 = scmp.ne.s32.totalorder %s95, %s109
    %p111 = scmp.eq.s32.totalorder %s22, 0
    %p112 = por %p110, %p111
    %s114 = sadd.s32 %s113, 1
    %p117 = scmp.eq.s32.totalorder %s16, 1
    %p118 = scmp.ne.s32.totalorder %s113, %s115
    %p119 = scmp.eq.s32.totalorder %s16, 0
    %p120 = por %p118, %p119
    %p121 = scmp.ne.s32.totalorder %s113, %s115
    %p122 = scmp.eq.s32.totalorder %s21, 1
    %p123 = por %p121, %p122
    %p124 = scmp.ne.s32.totalorder %s115, %s116
    %p125 = scmp.eq.s32.totalorder %s21, 0
    %p126 = por %p124, %p125
    %p127 = scmp.ne.s32.totalorder %s115, %s116
    %p128 = scmp.eq.s32.totalorder %s22, 1
    %p129 = por %p127, %p128
    %p131 = scmp.ne.s32.totalorder %s116, %s130
    %p132 = scmp.eq.s32.totalorder %s22, 0
    %p133 = por %p131, %p132
    %s135 = sadd.s32 %s134, 1
    %p138 = scmp.eq.s32.totalorder %s16, 1
    %p139 = scmp.ne.s32.totalorder %s134, %s136
    %p140 = scmp.eq.s32.totalorder %s16, 0
    %p141 = por %p139, %p140
    %p142 = scmp.ne.s32.totalorder %s134, %s136
    %p143 = scmp.eq.s32.totalorder %s21, 1
    %p144 = por %p142, %p143
    %p145 = scmp.ne.s32.totalorder %s136, %s137
    %p146 = scmp.eq.s32.totalorder %s21, 0
    %p147 = por %p145, %p146
    %p148 = scmp.ne.s32.totalorder %s136, %s137
    %p149 = scmp.eq.s32.totalorder %s22, 1
    %p150 = por %p148, %p149
    %p152 = scmp.ne.s32.totalorder %s137, %s151
    %p153 = scmp.eq.s32.totalorder %s22, 0
    %p154 = por %p152, %p153
    %s156 = sadd.s32 %s155, 1
    %p159 = scmp.eq.s32.totalorder %s16, 1
    %p160 = scmp.ne.s32.totalorder %s155, %s157
    %p161 = scmp.eq.s32.totalorder %s16, 0
    %p162 = por %p160, %p161
    %p163 = scmp.ne.s32.totalorder %s155, %s157
    %p164 = scmp.eq.s32.totalorder %s21, 1
    %p165 = por %p163, %p164
    %p166 = scmp.ne.s32.totalorder %s157, %s158
    %p167 = scmp.eq.s32.totalorder %s21, 0
    %p168 = por %p166, %p167
    %p169 = scmp.ne.s32.totalorder %s157, %s158
    %p170 = scmp.eq.s32.totalorder %s22, 1
    %p171 = por %p169, %p170
    %p173 = scmp.ne.s32.totalorder %s158, %s172
    %p174 = scmp.eq.s32.totalorder %s22, 0
    %p175 = por %p173, %p174
    %s177 = sadd.s32 %s176, 1
    %p180 = scmp.eq.s32.totalorder %s16, 1
    %p181 = scmp.ne.s32.totalorder %s176, %s178
    %p182 = scmp.eq.s32.totalorder %s16, 0
    %p183 = por %p181, %p182
    %p184 = scmp.ne.s32.totalorder %s176, %s178
    %p185 = scmp.eq.s32.totalorder %s21, 1
    %p186 = por %p184, %p185
    %p187 = scmp.ne.s32.totalorder %s178, %s179
    %p188 = scmp.eq.s32.totalorder %s21, 0
    %p189 = por %p187, %p188
    %p190 = scmp.ne.s32.totalorder %s178, %s179
    %p191 = scmp.eq.s32.totalorder %s22, 1
    %p192 = por %p190, %p191
    %p194 = scmp.ne.s32.totalorder %s179, %s193
    %p195 = scmp.eq.s32.totalorder %s22, 0
    %p196 = por %p194, %p195
    %s198 = sadd.s32 %s197, 1
    %p201 = scmp.eq.s32.totalorder %s16, 1
    %p202 = scmp.ne.s32.totalorder %s197, %s199
    %p203 = scmp.eq.s32.totalorder %s16, 0
    %p204 = por %p202, %p203
    %p205 = scmp.ne.s32.totalorder %s197, %s199
    %p206 = scmp.eq.s32.totalorder %s21, 1
    %p207 = por %p205, %p206
    %p208 = scmp.ne.s32.totalorder %s199, %s200
    %p209 = scmp.eq.s32.totalorder %s21, 0
    %p210 = por %p208, %p209
    %p211 = scmp.ne.s32.totalorder %s199, %s200
    %p212 = scmp.eq.s32.totalorder %s22, 1
    %p213 = por %p211, %p212
    %p215 = scmp.ne.s32.totalorder %s200, %s214
    %p216 = scmp.eq.s32.totalorder %s22, 0
    %p217 = por %p215, %p216
    %s219 = sadd.s32 %s218, 1
    %p222 = scmp.eq.s32.totalorder %s16, 1
    %p223 = scmp.ne.s32.totalorder %s218, %s220
    %p224 = scmp.eq.s32.totalorder %s16, 0
    %p225 = por %p223, %p224
    %p226 = scmp.ne.s32.totalorder %s218, %s220
    %p227 = scmp.eq.s32.totalorder %s21, 1
    %p228 = por %p226, %p227
    %p229 = scmp.ne.s32.totalorder %s220, %s221
    %p230 = scmp.eq.s32.totalorder %s21, 0
    %p231 = por %p229, %p230
    %p232 = scmp.ne.s32.totalorder %s220, %s221
    %p233 = scmp.eq.s32.totalorder %s22, 1
    %p234 = por %p232, %p233
    %p236 = scmp.ne.s32.totalorder %s221, %s235
    %p237 = scmp.eq.s32.totalorder %s22, 0
    %p238 = por %p236, %p237
    %s239 = ssub.s32 %s16, %s23
    %p240 = scmp.eq.s32.totalorder %s239, 0
    %s242 = sadd.s32 %s241, 1
    %s243 = scalar_select %p240, %s241, %s242
    %p246 = pneg %p240
    %p247 = scmp.eq.s32.totalorder %s16, 1
    %p248 = por %p246, %p247
    %p249 = scmp.ne.s32.totalorder %s241, %s244
    %p250 = scmp.eq.s32.totalorder %s16, 0
    %p251 = por %p249, %p250
    %p252 = scmp.ne.s32.totalorder %s241, %s244
    %p253 = scmp.eq.s32.totalorder %s21, 1
    %p254 = por %p252, %p253
    %p255 = scmp.ne.s32.totalorder %s244, %s245
    %p256 = scmp.eq.s32.totalorder %s21, 0
    %p257 = por %p255, %p256
    %p258 = scmp.ne.s32.totalorder %s244, %s245
    %p259 = scmp.eq.s32.totalorder %s22, 1
    %p260 = por %p258, %p259
    %p262 = scmp.ne.s32.totalorder %s245, %s261
    %p263 = scmp.eq.s32.totalorder %s22, 0
    %p264 = por %p262, %p263
    %p265 = scmp.le.s32.totalorder 1, %s16
    %p266 = scmp.lt.s32.totalorder %s16, 3
    %p267 = pnand %p265, %p266
    %p268 = pneg %p267
    // Predicated region
    $region9: #{convnext_forward.8} parent=5 // pred_check
      _
    $region10: #{convnext_forward.8} parent=5 // pred_check_branch
      %270 = sbr.rel (%p267) target = $region12
    $region11: #{convnext_forward.8} parent=5 // pred_region
      %s271 = ssub.s32 %s16, 1
      // Predicated region
      $region13: #{convnext_forward.8} parent=11 // pred_check
        %p272 = pneg %p63
      $region14: #{convnext_forward.8} parent=11 // pred_check_branch
        %274 = sbr.rel (%p272) target = $region16
      $region15: #{convnext_forward.8} parent=11 // pred_region
        _
      $region16: #{convnext_forward.8} parent=11 // pred_fallthru
        _
      // Predicated region
      $region17: #{convnext_forward.8} parent=11 // pred_check
        %p275 = pneg %p84
      $region18: #{convnext_forward.8} parent=11 // pred_check_branch
        %277 = sbr.rel (%p275) target = $region20
      $region19: #{convnext_forward.8} parent=11 // pred_region
        _
      $region20: #{convnext_forward.8} parent=11 // pred_fallthru
        _
      // Predicated region
      $region21: #{convnext_forward.8} parent=11 // pred_check
        %p278 = pneg %p105
      $region22: #{convnext_forward.8} parent=11 // pred_check_branch
        %280 = sbr.rel (%p278) target = $region24
      $region23: #{convnext_forward.8} parent=11 // pred_region
        _
      $region24: #{convnext_forward.8} parent=11 // pred_fallthru
        _
      // Predicated region
      $region25: #{convnext_forward.8} parent=11 // pred_check
        %p281 = pneg %p126
      $region26: #{convnext_forward.8} parent=11 // pred_check_branch
        %283 = sbr.rel (%p281) target = $region28
      $region27: #{convnext_forward.8} parent=11 // pred_region
        _
      $region28: #{convnext_forward.8} parent=11 // pred_fallthru
        _
      // Predicated region
      $region29: #{convnext_forward.8} parent=11 // pred_check
        %p284 = pneg %p147
      $region30: #{convnext_forward.8} parent=11 // pred_check_branch
        %286 = sbr.rel (%p284) target = $region32
      $region31: #{convnext_forward.8} parent=11 // pred_region
        _
      $region32: #{convnext_forward.8} parent=11 // pred_fallthru
        _
      // Predicated region
      $region33: #{convnext_forward.8} parent=11 // pred_check
        %p287 = pneg %p168
      $region34: #{convnext_forward.8} parent=11 // pred_check_branch
        %289 = sbr.rel (%p287) target = $region36
      $region35: #{convnext_forward.8} parent=11 // pred_region
        _
      $region36: #{convnext_forward.8} parent=11 // pred_fallthru
        _
      // Predicated region
      $region37: #{convnext_forward.8} parent=11 // pred_check
        %p290 = pneg %p189
      $region38: #{convnext_forward.8} parent=11 // pred_check_branch
        %292 = sbr.rel (%p290) target = $region40
      $region39: #{convnext_forward.8} parent=11 // pred_region
        _
      $region40: #{convnext_forward.8} parent=11 // pred_fallthru
        _
      // Predicated region
      $region41: #{convnext_forward.8} parent=11 // pred_check
        %p293 = pneg %p210
      $region42: #{convnext_forward.8} parent=11 // pred_check_branch
        %295 = sbr.rel (%p293) target = $region44
      $region43: #{convnext_forward.8} parent=11 // pred_region
        _
      $region44: #{convnext_forward.8} parent=11 // pred_fallthru
        _
      // Predicated region
      $region45: #{convnext_forward.8} parent=11 // pred_check
        %p296 = pneg %p231
      $region46: #{convnext_forward.8} parent=11 // pred_check_branch
        %298 = sbr.rel (%p296) target = $region48
      $region47: #{convnext_forward.8} parent=11 // pred_region
        _
      $region48: #{convnext_forward.8} parent=11 // pred_fallthru
        _
    $region12: #{convnext_forward.8} parent=5 // pred_fallthru
      _
    %p299 = scmp.lt.s32.totalorder %s16, 2
    // Predicated region
    $region49: #{convnext_forward.8} parent=5 // pred_check
      %p300 = pneg %p299
    $region50: #{convnext_forward.8} parent=5 // pred_check_branch
      %302 = sbr.rel (%p300) target = $region52
    $region51: #{convnext_forward.8} parent=5 // pred_region
      // Predicated region
      $region53: #{convnext_forward.8} parent=51 // pred_check
        %p303 = pneg %p36
      $region54: #{convnext_forward.8} parent=51 // pred_check_branch
        %305 = sbr.rel (%p303) target = $region56
      $region55: #{convnext_forward.8} parent=51 // pred_region
        %p306 = scmp.lt.s32.totalorder %s16, 1
        %s307 = scalar_select %p306, %s16, 1
        %s308 = smul.addr %s307, 8
        %s309 = smul.addr %s308, 4
        %s310 = scalar_lea.vmem %s0, %s309
      $region56: #{convnext_forward.8} parent=51 // pred_fallthru
        _
    $region52: #{convnext_forward.8} parent=5 // pred_fallthru
      _
    %p311 = scmp.le.s32.totalorder 1, %s16
    %p312 = scmp.lt.s32.totalorder %s16, 3
    %p313 = pnand %p311, %p312
    %p314 = pneg %p313
    // Predicated region
    $region57: #{convnext_forward.8} parent=5 // pred_check
      _
    $region58: #{convnext_forward.8} parent=5 // pred_check_branch
      %316 = sbr.rel (%p313) target = $region60
    $region59: #{convnext_forward.8} parent=5 // pred_region
      %s317 = ssub.s32 %s16, 1
      %p318 = scmp.lt.s32.totalorder %s21, 1
      %s319 = scalar_select %p318, %s21, 1
      %s320 = smul.addr %s319, 8
      %s321 = smul.addr %s320, 4
      %s322 = scalar_lea.vmem %s0, %s321
      %p323 = pneg %p42
      %p324 = pneg %p39
      %p325 = pneg %p63
      %p326 = pneg %p60
      %p327 = pneg %p84
      %p328 = pneg %p81
      %p329 = pneg %p105
      %p330 = pneg %p102
      %p331 = pneg %p126
      %p332 = pneg %p123
      %p333 = pneg %p147
      %p334 = pneg %p144
      %p335 = pneg %p168
      %p336 = pneg %p165
      %p337 = pneg %p189
      %p338 = pneg %p186
      %p339 = pneg %p210
      %p340 = pneg %p207
      %p341 = pneg %p231
      %p342 = pneg %p228
      %p343 = pneg %p257
      %p344 = pneg %p254
      %p345 = scmp.lt.s32.totalorder %s21, 1
      %s346 = scalar_select %p345, %s21, 1
      %s347 = smul.addr %s346, 8
      %s348 = smul.addr %s347, 4
      %s349 = scalar_lea.vmem %s10, %s348
      %p350 = scmp.lt.s32.totalorder %s21, 1
      %s351 = scalar_select %p350, %s21, 1
      %s352 = smul.addr %s351, 8
      %s353 = smul.addr %s352, 4
      %s354 = scalar_lea.vmem %s0, %s353
      %p355 = scmp.lt.s32.totalorder %s21, 1
      %s356 = scalar_select %p355, %s21, 1
      %s357 = smul.addr %s356, 8
      %s358 = smul.addr %s357, 4
      %s359 = scalar_lea.vmem %s10, %s358
      %v361 = vld [vmem:[%s354] sm:$0xf]
      %v362 = vld [vmem:[%s354 + $0x4] sm:$0xf]
      %v363 = vld [vmem:[%s354 + $0x8] sm:$0xf]
      %v364 = vld [vmem:[%s354 + $0xc] sm:$0xf]
      %v365 = vld [vmem:[%s354 + $0x10] sm:$0xf]
      %v366 = vld [vmem:[%s354 + $0x14] sm:$0xf]
      %v367 = vld [vmem:[%s354 + $0x18] sm:$0xf]
      %v368 = vld [vmem:[%s354 + $0x1c] sm:$0xf]
      %v369 = vunpack.c.l.bf16 %v361
      %v370 = vunpack.c.l.bf16 %v362
      %v371 = vunpack.c.l.bf16 %v363
      %v372 = vunpack.c.l.bf16 %v364
      %v373 = vunpack.c.l.bf16 %v365
      %v374 = vunpack.c.l.bf16 %v366
      %v375 = vunpack.c.l.bf16 %v367
      %v376 = vunpack.c.l.bf16 %v368
      %vm377 = vcmask 130048
      %378 = vst.msk [vmem:[#allocation2] sm:$0xff] %vm377, 0.0
      %vm379 = vcmask 128000
      %380 = vst.msk [vmem:[#allocation2 + $0x8] sm:$0x3f] %vm379, 0.0
      %381 = vst.msk [vmem:[#allocation2 + $0x10] sm:$0xff] %vm377, 0.0
      %382 = vst.msk [vmem:[#allocation2 + $0x18] sm:$0x3f] %vm379, 0.0
      %383 = vst.msk [vmem:[#allocation2 + $0x20] sm:$0xff] %vm377, 0.0
      %384 = vst.msk [vmem:[#allocation2 + $0x28] sm:$0x3f] %vm379, 0.0
      %s385 = scalar_lea.vmem [#allocation2], 176
      %386 = vst.msk [vmem:[%s385] sm:$0xff] %vm377, 0.0
      %387 = vst.msk [vmem:[%s385 + $0x8] sm:$0x3f] %vm379, 0.0
      %388 = vst.msk [vmem:[%s385 + $0x10] sm:$0xff] %vm377, 0.0
      %389 = vst.msk [vmem:[%s385 + $0x18] sm:$0x3f] %vm379, 0.0
      %390 = vst.msk [vmem:[%s385 + $0x20] sm:$0xff] %vm377, 0.0
      %391 = vst.msk [vmem:[%s385 + $0x28] sm:$0x3f] %vm379, 0.0
      %s392 = scalar_lea.vmem [#allocation2], 48
      %vm393 = vcmask 124928
      %394 = vst.msk [vmem:[%s392] sm:$0x7] %vm393, 0.0
      %395 = vst.msk [vmem:[%s392 + $0x10] sm:$0x7] %vm393, 0.0
      %396 = vst.msk [vmem:[%s392 + $0x20] sm:$0x7] %vm393, 0.0
      %397 = vst.msk [vmem:[%s392 + $0x30] sm:$0x7] %vm393, 0.0
      %398 = vst.msk [vmem:[%s392 + $0x40] sm:$0x7] %vm393, 0.0
      %399 = vst.msk [vmem:[%s392 + $0x50] sm:$0x7] %vm393, 0.0
      %400 = vst.msk [vmem:[%s392 + $0x60] sm:$0x7] %vm393, 0.0
      %401 = vst.msk [vmem:[%s392 + $0x70] sm:$0x7] %vm393, 0.0
      %402 = vst.msk [vmem:[%s392 + $0xb] sm:$0x7] %vm393, 0.0
      %403 = vst.msk [vmem:[%s392 + $0x1b] sm:$0x7] %vm393, 0.0
      %404 = vst.msk [vmem:[%s392 + $0x2b] sm:$0x7] %vm393, 0.0
      %405 = vst.msk [vmem:[%s392 + $0x3b] sm:$0x7] %vm393, 0.0
      %406 = vst.msk [vmem:[%s392 + $0x4b] sm:$0x7] %vm393, 0.0
      %407 = vst.msk [vmem:[%s392 + $0x5b] sm:$0x7] %vm393, 0.0
      %408 = vst.msk [vmem:[%s392 + $0x6b] sm:$0x7] %vm393, 0.0
      %409 = vst.msk [vmem:[%s392 + $0x7b] sm:$0x7] %vm393, 0.0
      %410 = vst.msk [vmem:[%s392 + $0x3] sm:$0xff] %vm377, %v369
      %411 = vst.msk [vmem:[%s392 + $0x13] sm:$0xff] %vm377, %v370
      %412 = vst.msk [vmem:[%s392 + $0x23] sm:$0xff] %vm377, %v371
      %413 = vst.msk [vmem:[%s392 + $0x33] sm:$0xff] %vm377, %v372
      %414 = vst.msk [vmem:[%s392 + $0x43] sm:$0xff] %vm377, %v373
      %415 = vst.msk [vmem:[%s392 + $0x53] sm:$0xff] %vm377, %v374
      %416 = vst.msk [vmem:[%s392 + $0x63] sm:$0xff] %vm377, %v375
      %417 = vst.msk [vmem:[%s392 + $0x73] sm:$0xff] %vm377, %v376
      %v418 = vld [vmem:[%s1] sm:$0x7f]
      %v419 = vld [vmem:[%s1 + $0x8] sm:$0x7f]
      %v420 = vld [vmem:[%s1 + $0x10] sm:$0x7f]
      %v421 = vld [vmem:[%s1 + $0x18] sm:$0x7f]
      %v422 = vld [vmem:[%s1 + $0x20] sm:$0x7f]
      %v423 = vld [vmem:[%s1 + $0x28] sm:$0x7f]
      %v424 = vld [vmem:[%s1 + $0x30] sm:$0x7f]
      %v425 = vld [vmem:[#allocation2] sm:$0xff]
      %v426 = vld [vmem:[#allocation2 + $0x10] sm:$0xff]
      %v427 = vld [vmem:[#allocation2 + $0x20] sm:$0xff]
      %v428 = vld [vmem:[#allocation2 + $0x30] sm:$0xff]
      %v429 = vld [vmem:[#allocation2 + $0x40] sm:$0xff]
      %v430 = vld [vmem:[#allocation2 + $0x50] sm:$0xff]
      %v431 = vld [vmem:[#allocation2 + $0x60] sm:$0xff]
      %v432 = vld [vmem:[#allocation2 + $0x70] sm:$0xff]
      %v433 = vlaneseq
      %v434 = vshrl.u32 %v433, 7
      %v435 = vsub.s32 0, %v434
      %v436 = vrot.slane %v418, %v435
      %v437 = vmul.f32 %v425, %v436
      %v438 = vmul.f32 %v426, %v436
      %v439 = vmul.f32 %v427, %v436
      %v440 = vmul.f32 %v428, %v436
      %v441 = vmul.f32 %v429, %v436
      %v442 = vmul.f32 %v430, %v436
      %v443 = vmul.f32 %v431, %v436
      %v444 = vmul.f32 %v432, %v436
      %v445 = vld [vmem:[#allocation2 + $0x1] sm:$0xff]
      %v446 = vld [vmem:[#allocation2 + $0x11] sm:$0xff]
      %v447 = vld [vmem:[#allocation2 + $0x21] sm:$0xff]
      %v448 = vld [vmem:[#allocation2 + $0x31] sm:$0xff]
      %v449 = vld [vmem:[#allocation2 + $0x41] sm:$0xff]
      %v450 = vld [vmem:[#allocation2 + $0x51] sm:$0xff]
      %v451 = vld [vmem:[#allocation2 + $0x61] sm:$0xff]
      %v452 = vld [vmem:[#allocation2 + $0x71] sm:$0xff]
      %v453 = vlaneseq
      %v454 = vshrl.u32 %v453, 7
      %v455 = vsub.s32 1, %v454
      %v456 = vrot.slane %v418, %v455
      %v457 = vmul.f32 %v445, %v456
      %v458 = vmul.f32 %v446, %v456
      %v459 = vmul.f32 %v447, %v456
      %v460 = vmul.f32 %v448, %v456
      %v461 = vmul.f32 %v449, %v456
      %v462 = vmul.f32 %v450, %v456
      %v463 = vmul.f32 %v451, %v456
      %v464 = vmul.f32 %v452, %v456
      %v465 = vadd.f32 %v437, %v457
      %v466 = vadd.f32 %v438, %v458
      %v467 = vadd.f32 %v439, %v459
      %v468 = vadd.f32 %v440, %v460
      %v469 = vadd.f32 %v441, %v461
      %v470 = vadd.f32 %v442, %v462
      %v471 = vadd.f32 %v443, %v463
      %v472 = vadd.f32 %v444, %v464
      %v473 = vld [vmem:[#allocation2 + $0x2] sm:$0xff]
      %v474 = vld [vmem:[#allocation2 + $0x12] sm:$0xff]
      %v475 = vld [vmem:[#allocation2 + $0x22] sm:$0xff]
      %v476 = vld [vmem:[#allocation2 + $0x32] sm:$0xff]
      %v477 = vld [vmem:[#allocation2 + $0x42] sm:$0xff]
      %v478 = vld [vmem:[#allocation2 + $0x52] sm:$0xff]
      %v479 = vld [vmem:[#allocation2 + $0x62] sm:$0xff]
      %v480 = vld [vmem:[#allocation2 + $0x72] sm:$0xff]
      %v481 = vlaneseq
      %v482 = vshrl.u32 %v481, 7
      %v483 = vsub.s32 2, %v482
      %v484 = vrot.slane %v418, %v483
      %v485 = vmul.f32 %v473, %v484
      %v486 = vmul.f32 %v474, %v484
      %v487 = vmul.f32 %v475, %v484
      %v488 = vmul.f32 %v476, %v484
      %v489 = vmul.f32 %v477, %v484
      %v490 = vmul.f32 %v478, %v484
      %v491 = vmul.f32 %v479, %v484
      %v492 = vmul.f32 %v480, %v484
      %v493 = vadd.f32 %v465, %v485
      %v494 = vadd.f32 %v466, %v486
      %v495 = vadd.f32 %v467, %v487
      %v496 = vadd.f32 %v468, %v488
      %v497 = vadd.f32 %v469, %v489
      %v498 = vadd.f32 %v470, %v490
      %v499 = vadd.f32 %v471, %v491
      %v500 = vadd.f32 %v472, %v492
      %v501 = vld [vmem:[#allocation2 + $0x3] sm:$0xff]
      %v502 = vld [vmem:[#allocation2 + $0x13] sm:$0xff]
      %v503 = vld [vmem:[#allocation2 + $0x23] sm:$0xff]
      %v504 = vld [vmem:[#allocation2 + $0x33] sm:$0xff]
      %v505 = vld [vmem:[#allocation2 + $0x43] sm:$0xff]
      %v506 = vld [vmem:[#allocation2 + $0x53] sm:$0xff]
      %v507 = vld [vmem:[#allocation2 + $0x63] sm:$0xff]
      %v508 = vld [vmem:[#allocation2 + $0x73] sm:$0xff]
      %v509 = vlaneseq
      %v510 = vshrl.u32 %v509, 7
      %v511 = vsub.s32 3, %v510
      %v512 = vrot.slane %v418, %v511
      %v513 = vmul.f32 %v501, %v512
      %v514 = vmul.f32 %v502, %v512
      %v515 = vmul.f32 %v503, %v512
      %v516 = vmul.f32 %v504, %v512
      %v517 = vmul.f32 %v505, %v512
      %v518 = vmul.f32 %v506, %v512
      %v519 = vmul.f32 %v507, %v512
      %v520 = vmul.f32 %v508, %v512
      %v521 = vadd.f32 %v493, %v513
      %v522 = vadd.f32 %v494, %v514
      %v523 = vadd.f32 %v495, %v515
      %v524 = vadd.f32 %v496, %v516
      %v525 = vadd.f32 %v497, %v517
      %v526 = vadd.f32 %v498, %v518
      %v527 = vadd.f32 %v499, %v519
      %v528 = vadd.f32 %v500, %v520
      %v529 = vld [vmem:[#allocation2 + $0x4] sm:$0xff]
      %v530 = vld [vmem:[#allocation2 + $0x14] sm:$0xff]
      %v531 = vld [vmem:[#allocation2 + $0x24] sm:$0xff]
      %v532 = vld [vmem:[#allocation2 + $0x34] sm:$0xff]
      %v533 = vld [vmem:[#allocation2 + $0x44] sm:$0xff]
      %v534 = vld [vmem:[#allocation2 + $0x54] sm:$0xff]
      %v535 = vld [vmem:[#allocation2 + $0x64] sm:$0xff]
      %v536 = vld [vmem:[#allocation2 + $0x74] sm:$0xff]
      %v537 = vlaneseq
      %v538 = vshrl.u32 %v537, 7
      %v539 = vsub.s32 4, %v538
      %v540 = vrot.slane %v418, %v539
      %v541 = vmul.f32 %v529, %v540
      %v542 = vmul.f32 %v530, %v540
      %v543 = vmul.f32 %v531, %v540
      %v544 = vmul.f32 %v532, %v540
      %v545 = vmul.f32 %v533, %v540
      %v546 = vmul.f32 %v534, %v540
      %v547 = vmul.f32 %v535, %v540
      %v548 = vmul.f32 %v536, %v540
      %v549 = vadd.f32 %v521, %v541
      %v550 = vadd.f32 %v522, %v542
      %v551 = vadd.f32 %v523, %v543
      %v552 = vadd.f32 %v524, %v544
      %v553 = vadd.f32 %v525, %v545
      %v554 = vadd.f32 %v526, %v546
      %v555 = vadd.f32 %v527, %v547
      %v556 = vadd.f32 %v528, %v548
      %v557 = vld [vmem:[#allocation2 + $0x5] sm:$0xff]
      %v558 = vld [vmem:[#allocation2 + $0x15] sm:$0xff]
      %v559 = vld [vmem:[#allocation2 + $0x25] sm:$0xff]
      %v560 = vld [vmem:[#allocation2 + $0x35] sm:$0xff]
      %v561 = vld [vmem:[#allocation2 + $0x45] sm:$0xff]
      %v562 = vld [vmem:[#allocation2 + $0x55] sm:$0xff]
      %v563 = vld [vmem:[#allocation2 + $0x65] sm:$0xff]
      %v564 = vld [vmem:[#allocation2 + $0x75] sm:$0xff]
      %v565 = vlaneseq
      %v566 = vshrl.u32 %v565, 7
      %v567 = vsub.s32 5, %v566
      %v568 = vrot.slane %v418, %v567
      %v569 = vmul.f32 %v557, %v568
      %v570 = vmul.f32 %v558, %v568
      %v571 = vmul.f32 %v559, %v568
      %v572 = vmul.f32 %v560, %v568
      %v573 = vmul.f32 %v561, %v568
      %v574 = vmul.f32 %v562, %v568
      %v575 = vmul.f32 %v563, %v568
      %v576 = vmul.f32 %v564, %v568
      %v577 = vadd.f32 %v549, %v569
      %v578 = vadd.f32 %v550, %v570
      %v579 = vadd.f32 %v551, %v571
      %v580 = vadd.f32 %v552, %v572
      %v581 = vadd.f32 %v553, %v573
      %v582 = vadd.f32 %v554, %v574
      %v583 = vadd.f32 %v555, %v575
      %v584 = vadd.f32 %v556, %v576
      %v585 = vld [vmem:[#allocation2 + $0x6] sm:$0xff]
      %v586 = vld [vmem:[#allocation2 + $0x16] sm:$0xff]
      %v587 = vld [vmem:[#allocation2 + $0x26] sm:$0xff]
      %v588 = vld [vmem:[#allocation2 + $0x36] sm:$0xff]
      %v589 = vld [vmem:[#allocation2 + $0x46] sm:$0xff]
      %v590 = vld [vmem:[#allocation2 + $0x56] sm:$0xff]
      %v591 = vld [vmem:[#allocation2 + $0x66] sm:$0xff]
      %v592 = vld [vmem:[#allocation2 + $0x76] sm:$0xff]
      %v593 = vlaneseq
      %v594 = vshrl.u32 %v593, 7
      %v595 = vsub.s32 6, %v594
      %v596 = vrot.slane %v418, %v595
      %v597 = vmul.f32 %v585, %v596
      %v598 = vmul.f32 %v586, %v596
      %v599 = vmul.f32 %v587, %v596
      %v600 = vmul.f32 %v588, %v596
      %v601 = vmul.f32 %v589, %v596
      %v602 = vmul.f32 %v590, %v596
      %v603 = vmul.f32 %v591, %v596
      %v604 = vmul.f32 %v592, %v596
      %v605 = vadd.f32 %v577, %v597
      %v606 = vadd.f32 %v578, %v598
      %v607 = vadd.f32 %v579, %v599
      %v608 = vadd.f32 %v580, %v600
      %v609 = vadd.f32 %v581, %v601
      %v610 = vadd.f32 %v582, %v602
      %v611 = vadd.f32 %v583, %v603
      %v612 = vadd.f32 %v584, %v604
      %s613 = scalar_lea.vmem [#allocation2], 16
      %v614 = vld [vmem:[%s613] sm:$0xff]
      %v615 = vld [vmem:[%s613 + $0x10] sm:$0xff]
      %v616 = vld [vmem:[%s613 + $0x20] sm:$0xff]
      %v617 = vld [vmem:[%s613 + $0x30] sm:$0xff]
      %v618 = vld [vmem:[%s613 + $0x40] sm:$0xff]
      %v619 = vld [vmem:[%s613 + $0x50] sm:$0xff]
      %v620 = vld [vmem:[%s613 + $0x60] sm:$0xff]
      %v621 = vld [vmem:[%s613 + $0x70] sm:$0xff]
      %v622 = vlaneseq
      %v623 = vshrl.u32 %v622, 7
      %v624 = vsub.s32 0, %v623
      %v625 = vrot.slane %v419, %v624
      %v626 = vmul.f32 %v614, %v625
      %v627 = vmul.f32 %v615, %v625
      %v628 = vmul.f32 %v616, %v625
      %v629 = vmul.f32 %v617, %v625
      %v630 = vmul.f32 %v618, %v625
      %v631 = vmul.f32 %v619, %v625
      %v632 = vmul.f32 %v620, %v625
      %v633 = vmul.f32 %v621, %v625
      %v634 = vld [vmem:[%s613 + $0x1] sm:$0xff]
      %v635 = vld [vmem:[%s613 + $0x11] sm:$0xff]
      %v636 = vld [vmem:[%s613 + $0x21] sm:$0xff]
      %v637 = vld [vmem:[%s613 + $0x31] sm:$0xff]
      %v638 = vld [vmem:[%s613 + $0x41] sm:$0xff]
      %v639 = vld [vmem:[%s613 + $0x51] sm:$0xff]
      %v640 = vld [vmem:[%s613 + $0x61] sm:$0xff]
      %v641 = vld [vmem:[%s613 + $0x71] sm:$0xff]
      %v642 = vlaneseq
      %v643 = vshrl.u32 %v642, 7
      %v644 = vsub.s32 1, %v643
      %v645 = vrot.slane %v419, %v644
      %v646 = vmul.f32 %v634, %v645
      %v647 = vmul.f32 %v635, %v645
      %v648 = vmul.f32 %v636, %v645
      %v649 = vmul.f32 %v637, %v645
      %v650 = vmul.f32 %v638, %v645
      %v651 = vmul.f32 %v639, %v645
      %v652 = vmul.f32 %v640, %v645
      %v653 = vmul.f32 %v641, %v645
      %v654 = vadd.f32 %v626, %v646
      %v655 = vadd.f32 %v627, %v647
      %v656 = vadd.f32 %v628, %v648
      %v657 = vadd.f32 %v629, %v649
      %v658 = vadd.f32 %v630, %v650
      %v659 = vadd.f32 %v631, %v651
      %v660 = vadd.f32 %v632, %v652
      %v661 = vadd.f32 %v633, %v653
      %v662 = vld [vmem:[%s613 + $0x2] sm:$0xff]
      %v663 = vld [vmem:[%s613 + $0x12] sm:$0xff]
      %v664 = vld [vmem:[%s613 + $0x22] sm:$0xff]
      %v665 = vld [vmem:[%s613 + $0x32] sm:$0xff]
      %v666 = vld [vmem:[%s613 + $0x42] sm:$0xff]
      %v667 = vld [vmem:[%s613 + $0x52] sm:$0xff]
      %v668 = vld [vmem:[%s613 + $0x62] sm:$0xff]
      %v669 = vld [vmem:[%s613 + $0x72] sm:$0xff]
      %v670 = vlaneseq
      %v671 = vshrl.u32 %v670, 7
      %v672 = vsub.s32 2, %v671
      %v673 = vrot.slane %v419, %v672
      %v674 = vmul.f32 %v662, %v673
      %v675 = vmul.f32 %v663, %v673
      %v676 = vmul.f32 %v664, %v673
      %v677 = vmul.f32 %v665, %v673
      %v678 = vmul.f32 %v666, %v673
      %v679 = vmul.f32 %v667, %v673
      %v680 = vmul.f32 %v668, %v673
      %v681 = vmul.f32 %v669, %v673
      %v682 = vadd.f32 %v654, %v674
      %v683 = vadd.f32 %v655, %v675
      %v684 = vadd.f32 %v656, %v676
      %v685 = vadd.f32 %v657, %v677
      %v686 = vadd.f32 %v658, %v678
      %v687 = vadd.f32 %v659, %v679
      %v688 = vadd.f32 %v660, %v680
      %v689 = vadd.f32 %v661, %v681
      %v690 = vld [vmem:[%s613 + $0x3] sm:$0xff]
      %v691 = vld [vmem:[%s613 + $0x13] sm:$0xff]
      %v692 = vld [vmem:[%s613 + $0x23] sm:$0xff]
      %v693 = vld [vmem:[%s613 + $0x33] sm:$0xff]
      %v694 = vld [vmem:[%s613 + $0x43] sm:$0xff]
      %v695 = vld [vmem:[%s613 + $0x53] sm:$0xff]
      %v696 = vld [vmem:[%s613 + $0x63] sm:$0xff]
      %v697 = vld [vmem:[%s613 + $0x73] sm:$0xff]
      %v698 = vlaneseq
      %v699 = vshrl.u32 %v698, 7
      %v700 = vsub.s32 3, %v699
      %v701 = vrot.slane %v419, %v700
      %v702 = vmul.f32 %v690, %v701
      %v703 = vmul.f32 %v691, %v701
      %v704 = vmul.f32 %v692, %v701
      %v705 = vmul.f32 %v693, %v701
      %v706 = vmul.f32 %v694, %v701
      %v707 = vmul.f32 %v695, %v701
      %v708 = vmul.f32 %v696, %v701
      %v709 = vmul.f32 %v697, %v701
      %v710 = vadd.f32 %v682, %v702
      %v711 = vadd.f32 %v683, %v703
      %v712 = vadd.f32 %v684, %v704
      %v713 = vadd.f32 %v685, %v705
      %v714 = vadd.f32 %v686, %v706
      %v715 = vadd.f32 %v687, %v707
      %v716 = vadd.f32 %v688, %v708
      %v717 = vadd.f32 %v689, %v709
      %v718 = vld [vmem:[%s613 + $0x4] sm:$0xff]
      %v719 = vld [vmem:[%s613 + $0x14] sm:$0xff]
      %v720 = vld [vmem:[%s613 + $0x24] sm:$0xff]
      %v721 = vld [vmem:[%s613 + $0x34] sm:$0xff]
      %v722 = vld [vmem:[%s613 + $0x44] sm:$0xff]
      %v723 = vld [vmem:[%s613 + $0x54] sm:$0xff]
      %v724 = vld [vmem:[%s613 + $0x64] sm:$0xff]
      %v725 = vld [vmem:[%s613 + $0x74] sm:$0xff]
      %v726 = vlaneseq
      %v727 = vshrl.u32 %v726, 7
      %v728 = vsub.s32 4, %v727
      %v729 = vrot.slane %v419, %v728
      %v730 = vmul.f32 %v718, %v729
      %v731 = vmul.f32 %v719, %v729
      %v732 = vmul.f32 %v720, %v729
      %v733 = vmul.f32 %v721, %v729
      %v734 = vmul.f32 %v722, %v729
      %v735 = vmul.f32 %v723, %v729
      %v736 = vmul.f32 %v724, %v729
      %v737 = vmul.f32 %v725, %v729
      %v738 = vadd.f32 %v710, %v730
      %v739 = vadd.f32 %v711, %v731
      %v740 = vadd.f32 %v712, %v732
      %v741 = vadd.f32 %v713, %v733
      %v742 = vadd.f32 %v714, %v734
      %v743 = vadd.f32 %v715, %v735
      %v744 = vadd.f32 %v716, %v736
      %v745 = vadd.f32 %v717, %v737
      %v746 = vld [vmem:[%s613 + $0x5] sm:$0xff]
      %v747 = vld [vmem:[%s613 + $0x15] sm:$0xff]
      %v748 = vld [vmem:[%s613 + $0x25] sm:$0xff]
      %v749 = vld [vmem:[%s613 + $0x35] sm:$0xff]
      %v750 = vld [vmem:[%s613 + $0x45] sm:$0xff]
      %v751 = vld [vmem:[%s613 + $0x55] sm:$0xff]
      %v752 = vld [vmem:[%s613 + $0x65] sm:$0xff]
      %v753 = vld [vmem:[%s613 + $0x75] sm:$0xff]
      %v754 = vlaneseq
      %v755 = vshrl.u32 %v754, 7
      %v756 = vsub.s32 5, %v755
      %v757 = vrot.slane %v419, %v756
      %v758 = vmul.f32 %v746, %v757
      %v759 = vmul.f32 %v747, %v757
      %v760 = vmul.f32 %v748, %v757
      %v761 = vmul.f32 %v749, %v757
      %v762 = vmul.f32 %v750, %v757
      %v763 = vmul.f32 %v751, %v757
      %v764 = vmul.f32 %v752, %v757
      %v765 = vmul.f32 %v753, %v757
      %v766 = vadd.f32 %v738, %v758
      %v767 = vadd.f32 %v739, %v759
      %v768 = vadd.f32 %v740, %v760
      %v769 = vadd.f32 %v741, %v761
      %v770 = vadd.f32 %v742, %v762
      %v771 = vadd.f32 %v743, %v763
      %v772 = vadd.f32 %v744, %v764
      %v773 = vadd.f32 %v745, %v765
      %v774 = vld [vmem:[%s613 + $0x6] sm:$0xff]
      %v775 = vld [vmem:[%s613 + $0x16] sm:$0xff]
      %v776 = vld [vmem:[%s613 + $0x26] sm:$0xff]
      %v777 = vld [vmem:[%s613 + $0x36] sm:$0xff]
      %v778 = vld [vmem:[%s613 + $0x46] sm:$0xff]
      %v779 = vld [vmem:[%s613 + $0x56] sm:$0xff]
      %v780 = vld [vmem:[%s613 + $0x66] sm:$0xff]
      %v781 = vld [vmem:[%s613 + $0x76] sm:$0xff]
      %v782 = vlaneseq
      %v783 = vshrl.u32 %v782, 7
      %v784 = vsub.s32 6, %v783
      %v785 = vrot.slane %v419, %v784
      %v786 = vmul.f32 %v774, %v785
      %v787 = vmul.f32 %v775, %v785
      %v788 = vmul.f32 %v776, %v785
      %v789 = vmul.f32 %v777, %v785
      %v790 = vmul.f32 %v778, %v785
      %v791 = vmul.f32 %v779, %v785
      %v792 = vmul.f32 %v780, %v785
      %v793 = vmul.f32 %v781, %v785
      %v794 = vadd.f32 %v766, %v786
      %v795 = vadd.f32 %v767, %v787
      %v796 = vadd.f32 %v768, %v788
      %v797 = vadd.f32 %v769, %v789
      %v798 = vadd.f32 %v770, %v790
      %v799 = vadd.f32 %v771, %v791
      %v800 = vadd.f32 %v772, %v792
      %v801 = vadd.f32 %v773, %v793
      %s802 = scalar_lea.vmem [#allocation2], 32
      %v803 = vld [vmem:[%s802] sm:$0xff]
      %v804 = vld [vmem:[%s802 + $0x10] sm:$0xff]
      %v805 = vld [vmem:[%s802 + $0x20] sm:$0xff]
      %v806 = vld [vmem:[%s802 + $0x30] sm:$0xff]
      %v807 = vld [vmem:[%s802 + $0x40] sm:$0xff]
      %v808 = vld [vmem:[%s802 + $0x50] sm:$0xff]
      %v809 = vld [vmem:[%s802 + $0x60] sm:$0xff]
      %v810 = vld [vmem:[%s802 + $0x70] sm:$0xff]
      %v811 = vlaneseq
      %v812 = vshrl.u32 %v811, 7
      %v813 = vsub.s32 0, %v812
      %v814 = vrot.slane %v420, %v813
      %v815 = vmul.f32 %v803, %v814
      %v816 = vmul.f32 %v804, %v814
      %v817 = vmul.f32 %v805, %v814
      %v818 = vmul.f32 %v806, %v814
      %v819 = vmul.f32 %v807, %v814
      %v820 = vmul.f32 %v808, %v814
      %v821 = vmul.f32 %v809, %v814
      %v822 = vmul.f32 %v810, %v814
      %v823 = vld [vmem:[%s802 + $0x1] sm:$0xff]
      %v824 = vld [vmem:[%s802 + $0x11] sm:$0xff]
      %v825 = vld [vmem:[%s802 + $0x21] sm:$0xff]
      %v826 = vld [vmem:[%s802 + $0x31] sm:$0xff]
      %v827 = vld [vmem:[%s802 + $0x41] sm:$0xff]
      %v828 = vld [vmem:[%s802 + $0x51] sm:$0xff]
      %v829 = vld [vmem:[%s802 + $0x61] sm:$0xff]
      %v830 = vld [vmem:[%s802 + $0x71] sm:$0xff]
      %v831 = vlaneseq
      %v832 = vshrl.u32 %v831, 7
      %v833 = vsub.s32 1, %v832
      %v834 = vrot.slane %v420, %v833
      %v835 = vmul.f32 %v823, %v834
      %v836 = vmul.f32 %v824, %v834
      %v837 = vmul.f32 %v825, %v834
      %v838 = vmul.f32 %v826, %v834
      %v839 = vmul.f32 %v827, %v834
      %v840 = vmul.f32 %v828, %v834
      %v841 = vmul.f32 %v829, %v834
      %v842 = vmul.f32 %v830, %v834
      %v843 = vadd.f32 %v815, %v835
      %v844 = vadd.f32 %v816, %v836
      %v845 = vadd.f32 %v817, %v837
      %v846 = vadd.f32 %v818, %v838
      %v847 = vadd.f32 %v819, %v839
      %v848 = vadd.f32 %v820, %v840
      %v849 = vadd.f32 %v821, %v841
      %v850 = vadd.f32 %v822, %v842
      %v851 = vld [vmem:[%s802 + $0x2] sm:$0xff]
      %v852 = vld [vmem:[%s802 + $0x12] sm:$0xff]
      %v853 = vld [vmem:[%s802 + $0x22] sm:$0xff]
      %v854 = vld [vmem:[%s802 + $0x32] sm:$0xff]
      %v855 = vld [vmem:[%s802 + $0x42] sm:$0xff]
      %v856 = vld [vmem:[%s802 + $0x52] sm:$0xff]
      %v857 = vld [vmem:[%s802 + $0x62] sm:$0xff]
      %v858 = vld [vmem:[%s802 + $0x72] sm:$0xff]
      %v859 = vlaneseq
      %v860 = vshrl.u32 %v859, 7
      %v861 = vsub.s32 2, %v860
      %v862 = vrot.slane %v420, %v861
      %v863 = vmul.f32 %v851, %v862
      %v864 = vmul.f32 %v852, %v862
      %v865 = vmul.f32 %v853, %v862
      %v866 = vmul.f32 %v854, %v862
      %v867 = vmul.f32 %v855, %v862
      %v868 = vmul.f32 %v856, %v862
      %v869 = vmul.f32 %v857, %v862
      %v870 = vmul.f32 %v858, %v862
      %v871 = vadd.f32 %v843, %v863
      %v872 = vadd.f32 %v844, %v864
      %v873 = vadd.f32 %v845, %v865
      %v874 = vadd.f32 %v846, %v866
      %v875 = vadd.f32 %v847, %v867
      %v876 = vadd.f32 %v848, %v868
      %v877 = vadd.f32 %v849, %v869
      %v878 = vadd.f32 %v850, %v870
      %v879 = vld [vmem:[%s802 + $0x3] sm:$0xff]
      %v880 = vld [vmem:[%s802 + $0x13] sm:$0xff]
      %v881 = vld [vmem:[%s802 + $0x23] sm:$0xff]
      %v882 = vld [vmem:[%s802 + $0x33] sm:$0xff]
      %v883 = vld [vmem:[%s802 + $0x43] sm:$0xff]
      %v884 = vld [vmem:[%s802 + $0x53] sm:$0xff]
      %v885 = vld [vmem:[%s802 + $0x63] sm:$0xff]
      %v886 = vld [vmem:[%s802 + $0x73] sm:$0xff]
      %v887 = vlaneseq
      %v888 = vshrl.u32 %v887, 7
      %v889 = vsub.s32 3, %v888
      %v890 = vrot.slane %v420, %v889
      %v891 = vmul.f32 %v879, %v890
      %v892 = vmul.f32 %v880, %v890
      %v893 = vmul.f32 %v881, %v890
      %v894 = vmul.f32 %v882, %v890
      %v895 = vmul.f32 %v883, %v890
      %v896 = vmul.f32 %v884, %v890
      %v897 = vmul.f32 %v885, %v890
      %v898 = vmul.f32 %v886, %v890
      %v899 = vadd.f32 %v871, %v891
      %v900 = vadd.f32 %v872, %v892
      %v901 = vadd.f32 %v873, %v893
      %v902 = vadd.f32 %v874, %v894
      %v903 = vadd.f32 %v875, %v895
      %v904 = vadd.f32 %v876, %v896
      %v905 = vadd.f32 %v877, %v897
      %v906 = vadd.f32 %v878, %v898
      %v907 = vld [vmem:[%s802 + $0x4] sm:$0xff]
      %v908 = vld [vmem:[%s802 + $0x14] sm:$0xff]
      %v909 = vld [vmem:[%s802 + $0x24] sm:$0xff]
      %v910 = vld [vmem:[%s802 + $0x34] sm:$0xff]
      %v911 = vld [vmem:[%s802 + $0x44] sm:$0xff]
      %v912 = vld [vmem:[%s802 + $0x54] sm:$0xff]
      %v913 = vld [vmem:[%s802 + $0x64] sm:$0xff]
      %v914 = vld [vmem:[%s802 + $0x74] sm:$0xff]
      %v915 = vlaneseq
      %v916 = vshrl.u32 %v915, 7
      %v917 = vsub.s32 4, %v916
      %v918 = vrot.slane %v420, %v917
      %v919 = vmul.f32 %v907, %v918
      %v920 = vmul.f32 %v908, %v918
      %v921 = vmul.f32 %v909, %v918
      %v922 = vmul.f32 %v910, %v918
      %v923 = vmul.f32 %v911, %v918
      %v924 = vmul.f32 %v912, %v918
      %v925 = vmul.f32 %v913, %v918
      %v926 = vmul.f32 %v914, %v918
      %v927 = vadd.f32 %v899, %v919
      %v928 = vadd.f32 %v900, %v920
      %v929 = vadd.f32 %v901, %v921
      %v930 = vadd.f32 %v902, %v922
      %v931 = vadd.f32 %v903, %v923
      %v932 = vadd.f32 %v904, %v924
      %v933 = vadd.f32 %v905, %v925
      %v934 = vadd.f32 %v906, %v926
      %v935 = vld [vmem:[%s802 + $0x5] sm:$0xff]
      %v936 = vld [vmem:[%s802 + $0x15] sm:$0xff]
      %v937 = vld [vmem:[%s802 + $0x25] sm:$0xff]
      %v938 = vld [vmem:[%s802 + $0x35] sm:$0xff]
      %v939 = vld [vmem:[%s802 + $0x45] sm:$0xff]
      %v940 = vld [vmem:[%s802 + $0x55] sm:$0xff]
      %v941 = vld [vmem:[%s802 + $0x65] sm:$0xff]
      %v942 = vld [vmem:[%s802 + $0x75] sm:$0xff]
      %v943 = vlaneseq
      %v944 = vshrl.u32 %v943, 7
      %v945 = vsub.s32 5, %v944
      %v946 = vrot.slane %v420, %v945
      %v947 = vmul.f32 %v935, %v946
      %v948 = vmul.f32 %v936, %v946
      %v949 = vmul.f32 %v937, %v946
      %v950 = vmul.f32 %v938, %v946
      %v951 = vmul.f32 %v939, %v946
      %v952 = vmul.f32 %v940, %v946
      %v953 = vmul.f32 %v941, %v946
      %v954 = vmul.f32 %v942, %v946
      %v955 = vadd.f32 %v927, %v947
      %v956 = vadd.f32 %v928, %v948
      %v957 = vadd.f32 %v929, %v949
      %v958 = vadd.f32 %v930, %v950
      %v959 = vadd.f32 %v931, %v951
      %v960 = vadd.f32 %v932, %v952
      %v961 = vadd.f32 %v933, %v953
      %v962 = vadd.f32 %v934, %v954
      %v963 = vld [vmem:[%s802 + $0x6] sm:$0xff]
      %v964 = vld [vmem:[%s802 + $0x16] sm:$0xff]
      %v965 = vld [vmem:[%s802 + $0x26] sm:$0xff]
      %v966 = vld [vmem:[%s802 + $0x36] sm:$0xff]
      %v967 = vld [vmem:[%s802 + $0x46] sm:$0xff]
      %v968 = vld [vmem:[%s802 + $0x56] sm:$0xff]
      %v969 = vld [vmem:[%s802 + $0x66] sm:$0xff]
      %v970 = vld [vmem:[%s802 + $0x76] sm:$0xff]
      %v971 = vlaneseq
      %v972 = vshrl.u32 %v971, 7
      %v973 = vsub.s32 6, %v972
      %v974 = vrot.slane %v420, %v973
      %v975 = vmul.f32 %v963, %v974
      %v976 = vmul.f32 %v964, %v974
      %v977 = vmul.f32 %v965, %v974
      %v978 = vmul.f32 %v966, %v974
      %v979 = vmul.f32 %v967, %v974
      %v980 = vmul.f32 %v968, %v974
      %v981 = vmul.f32 %v969, %v974
      %v982 = vmul.f32 %v970, %v974
      %v983 = vadd.f32 %v955, %v975
      %v984 = vadd.f32 %v956, %v976
      %v985 = vadd.f32 %v957, %v977
      %v986 = vadd.f32 %v958, %v978
      %v987 = vadd.f32 %v959, %v979
      %v988 = vadd.f32 %v960, %v980
      %v989 = vadd.f32 %v961, %v981
      %v990 = vadd.f32 %v962, %v982
      %v991 = vld [vmem:[%s392] sm:$0xff]
      %v992 = vld [vmem:[%s392 + $0x10] sm:$0xff]
      %v993 = vld [vmem:[%s392 + $0x20] sm:$0xff]
      %v994 = vld [vmem:[%s392 + $0x30] sm:$0xff]
      %v995 = vld [vmem:[%s392 + $0x40] sm:$0xff]
      %v996 = vld [vmem:[%s392 + $0x50] sm:$0xff]
      %v997 = vld [vmem:[%s392 + $0x60] sm:$0xff]
      %v998 = vld [vmem:[%s392 + $0x70] sm:$0xff]
      %v999 = vlaneseq
      %v1000 = vshrl.u32 %v999, 7
      %v1001 = vsub.s32 0, %v1000
      %v1002 = vrot.slane %v421, %v1001
      %v1003 = vmul.f32 %v991, %v1002
      %v1004 = vmul.f32 %v992, %v1002
      %v1005 = vmul.f32 %v993, %v1002
      %v1006 = vmul.f32 %v994, %v1002
      %v1007 = vmul.f32 %v995, %v1002
      %v1008 = vmul.f32 %v996, %v1002
      %v1009 = vmul.f32 %v997, %v1002
      %v1010 = vmul.f32 %v998, %v1002
      %v1011 = vld [vmem:[%s392 + $0x1] sm:$0xff]
      %v1012 = vld [vmem:[%s392 + $0x11] sm:$0xff]
      %v1013 = vld [vmem:[%s392 + $0x21] sm:$0xff]
      %v1014 = vld [vmem:[%s392 + $0x31] sm:$0xff]
      %v1015 = vld [vmem:[%s392 + $0x41] sm:$0xff]
      %v1016 = vld [vmem:[%s392 + $0x51] sm:$0xff]
      %v1017 = vld [vmem:[%s392 + $0x61] sm:$0xff]
      %v1018 = vld [vmem:[%s392 + $0x71] sm:$0xff]
      %v1019 = vlaneseq
      %v1020 = vshrl.u32 %v1019, 7
      %v1021 = vsub.s32 1, %v1020
      %v1022 = vrot.slane %v421, %v1021
      %v1023 = vmul.f32 %v1011, %v1022
      %v1024 = vmul.f32 %v1012, %v1022
      %v1025 = vmul.f32 %v1013, %v1022
      %v1026 = vmul.f32 %v1014, %v1022
      %v1027 = vmul.f32 %v1015, %v1022
      %v1028 = vmul.f32 %v1016, %v1022
      %v1029 = vmul.f32 %v1017, %v1022
      %v1030 = vmul.f32 %v1018, %v1022
      %v1031 = vadd.f32 %v1003, %v1023
      %v1032 = vadd.f32 %v1004, %v1024
      %v1033 = vadd.f32 %v1005, %v1025
      %v1034 = vadd.f32 %v1006, %v1026
      %v1035 = vadd.f32 %v1007, %v1027
      %v1036 = vadd.f32 %v1008, %v1028
      %v1037 = vadd.f32 %v1009, %v1029
      %v1038 = vadd.f32 %v1010, %v1030
      %v1039 = vld [vmem:[%s392 + $0x2] sm:$0xff]
      %v1040 = vld [vmem:[%s392 + $0x12] sm:$0xff]
      %v1041 = vld [vmem:[%s392 + $0x22] sm:$0xff]
      %v1042 = vld [vmem:[%s392 + $0x32] sm:$0xff]
      %v1043 = vld [vmem:[%s392 + $0x42] sm:$0xff]
      %v1044 = vld [vmem:[%s392 + $0x52] sm:$0xff]
      %v1045 = vld [vmem:[%s392 + $0x62] sm:$0xff]
      %v1046 = vld [vmem:[%s392 + $0x72] sm:$0xff]
      %v1047 = vlaneseq
      %v1048 = vshrl.u32 %v1047, 7
      %v1049 = vsub.s32 2, %v1048
      %v1050 = vrot.slane %v421, %v1049
      %v1051 = vmul.f32 %v1039, %v1050
      %v1052 = vmul.f32 %v1040, %v1050
      %v1053 = vmul.f32 %v1041, %v1050
      %v1054 = vmul.f32 %v1042, %v1050
      %v1055 = vmul.f32 %v1043, %v1050
      %v1056 = vmul.f32 %v1044, %v1050
      %v1057 = vmul.f32 %v1045, %v1050
      %v1058 = vmul.f32 %v1046, %v1050
      %v1059 = vadd.f32 %v1031, %v1051
      %v1060 = vadd.f32 %v1032, %v1052
      %v1061 = vadd.f32 %v1033, %v1053
      %v1062 = vadd.f32 %v1034, %v1054
      %v1063 = vadd.f32 %v1035, %v1055
      %v1064 = vadd.f32 %v1036, %v1056
      %v1065 = vadd.f32 %v1037, %v1057
      %v1066 = vadd.f32 %v1038, %v1058
      %v1067 = vld [vmem:[%s392 + $0x3] sm:$0xff]
      %v1068 = vld [vmem:[%s392 + $0x13] sm:$0xff]
      %v1069 = vld [vmem:[%s392 + $0x23] sm:$0xff]
      %v1070 = vld [vmem:[%s392 + $0x33] sm:$0xff]
      %v1071 = vld [vmem:[%s392 + $0x43] sm:$0xff]
      %v1072 = vld [vmem:[%s392 + $0x53] sm:$0xff]
      %v1073 = vld [vmem:[%s392 + $0x63] sm:$0xff]
      %v1074 = vld [vmem:[%s392 + $0x73] sm:$0xff]
      %v1075 = vlaneseq
      %v1076 = vshrl.u32 %v1075, 7
      %v1077 = vsub.s32 3, %v1076
      %v1078 = vrot.slane %v421, %v1077
      %v1079 = vmul.f32 %v1067, %v1078
      %v1080 = vmul.f32 %v1068, %v1078
      %v1081 = vmul.f32 %v1069, %v1078
      %v1082 = vmul.f32 %v1070, %v1078
      %v1083 = vmul.f32 %v1071, %v1078
      %v1084 = vmul.f32 %v1072, %v1078
      %v1085 = vmul.f32 %v1073, %v1078
      %v1086 = vmul.f32 %v1074, %v1078
      %v1087 = vadd.f32 %v1059, %v1079
      %v1088 = vadd.f32 %v1060, %v1080
      %v1089 = vadd.f32 %v1061, %v1081
      %v1090 = vadd.f32 %v1062, %v1082
      %v1091 = vadd.f32 %v1063, %v1083
      %v1092 = vadd.f32 %v1064, %v1084
      %v1093 = vadd.f32 %v1065, %v1085
      %v1094 = vadd.f32 %v1066, %v1086
      %v1095 = vld [vmem:[%s392 + $0x4] sm:$0xff]
      %v1096 = vld [vmem:[%s392 + $0x14] sm:$0xff]
      %v1097 = vld [vmem:[%s392 + $0x24] sm:$0xff]
      %v1098 = vld [vmem:[%s392 + $0x34] sm:$0xff]
      %v1099 = vld [vmem:[%s392 + $0x44] sm:$0xff]
      %v1100 = vld [vmem:[%s392 + $0x54] sm:$0xff]
      %v1101 = vld [vmem:[%s392 + $0x64] sm:$0xff]
      %v1102 = vld [vmem:[%s392 + $0x74] sm:$0xff]
      %v1103 = vlaneseq
      %v1104 = vshrl.u32 %v1103, 7
      %v1105 = vsub.s32 4, %v1104
      %v1106 = vrot.slane %v421, %v1105
      %v1107 = vmul.f32 %v1095, %v1106
      %v1108 = vmul.f32 %v1096, %v1106
      %v1109 = vmul.f32 %v1097, %v1106
      %v1110 = vmul.f32 %v1098, %v1106
      %v1111 = vmul.f32 %v1099, %v1106
      %v1112 = vmul.f32 %v1100, %v1106
      %v1113 = vmul.f32 %v1101, %v1106
      %v1114 = vmul.f32 %v1102, %v1106
      %v1115 = vadd.f32 %v1087, %v1107
      %v1116 = vadd.f32 %v1088, %v1108
      %v1117 = vadd.f32 %v1089, %v1109
      %v1118 = vadd.f32 %v1090, %v1110
      %v1119 = vadd.f32 %v1091, %v1111
      %v1120 = vadd.f32 %v1092, %v1112
      %v1121 = vadd.f32 %v1093, %v1113
      %v1122 = vadd.f32 %v1094, %v1114
      %v1123 = vld [vmem:[%s392 + $0x5] sm:$0xff]
      %v1124 = vld [vmem:[%s392 + $0x15] sm:$0xff]
      %v1125 = vld [vmem:[%s392 + $0x25] sm:$0xff]
      %v1126 = vld [vmem:[%s392 + $0x35] sm:$0xff]
      %v1127 = vld [vmem:[%s392 + $0x45] sm:$0xff]
      %v1128 = vld [vmem:[%s392 + $0x55] sm:$0xff]
      %v1129 = vld [vmem:[%s392 + $0x65] sm:$0xff]
      %v1130 = vld [vmem:[%s392 + $0x75] sm:$0xff]
      %v1131 = vlaneseq
      %v1132 = vshrl.u32 %v1131, 7
      %v1133 = vsub.s32 5, %v1132
      %v1134 = vrot.slane %v421, %v1133
      %v1135 = vmul.f32 %v1123, %v1134
      %v1136 = vmul.f32 %v1124, %v1134
      %v1137 = vmul.f32 %v1125, %v1134
      %v1138 = vmul.f32 %v1126, %v1134
      %v1139 = vmul.f32 %v1127, %v1134
      %v1140 = vmul.f32 %v1128, %v1134
      %v1141 = vmul.f32 %v1129, %v1134
      %v1142 = vmul.f32 %v1130, %v1134
      %v1143 = vadd.f32 %v1115, %v1135
      %v1144 = vadd.f32 %v1116, %v1136
      %v1145 = vadd.f32 %v1117, %v1137
      %v1146 = vadd.f32 %v1118, %v1138
      %v1147 = vadd.f32 %v1119, %v1139
      %v1148 = vadd.f32 %v1120, %v1140
      %v1149 = vadd.f32 %v1121, %v1141
      %v1150 = vadd.f32 %v1122, %v1142
      %v1151 = vld [vmem:[%s392 + $0x6] sm:$0xff]
      %v1152 = vld [vmem:[%s392 + $0x16] sm:$0xff]
      %v1153 = vld [vmem:[%s392 + $0x26] sm:$0xff]
      %v1154 = vld [vmem:[%s392 + $0x36] sm:$0xff]
      %v1155 = vld [vmem:[%s392 + $0x46] sm:$0xff]
      %v1156 = vld [vmem:[%s392 + $0x56] sm:$0xff]
      %v1157 = vld [vmem:[%s392 + $0x66] sm:$0xff]
      %v1158 = vld [vmem:[%s392 + $0x76] sm:$0xff]
      %v1159 = vlaneseq
      %v1160 = vshrl.u32 %v1159, 7
      %v1161 = vsub.s32 6, %v1160
      %v1162 = vrot.slane %v421, %v1161
      %v1163 = vmul.f32 %v1151, %v1162
      %v1164 = vmul.f32 %v1152, %v1162
      %v1165 = vmul.f32 %v1153, %v1162
      %v1166 = vmul.f32 %v1154, %v1162
      %v1167 = vmul.f32 %v1155, %v1162
      %v1168 = vmul.f32 %v1156, %v1162
      %v1169 = vmul.f32 %v1157, %v1162
      %v1170 = vmul.f32 %v1158, %v1162
      %v1171 = vadd.f32 %v1143, %v1163
      %v1172 = vadd.f32 %v1144, %v1164
      %v1173 = vadd.f32 %v1145, %v1165
      %v1174 = vadd.f32 %v1146, %v1166
      %v1175 = vadd.f32 %v1147, %v1167
      %v1176 = vadd.f32 %v1148, %v1168
      %v1177 = vadd.f32 %v1149, %v1169
      %v1178 = vadd.f32 %v1150, %v1170
      %s1179 = scalar_lea.vmem [#allocation2], 64
      %v1180 = vld [vmem:[%s1179] sm:$0xff]
      %v1181 = vld [vmem:[%s1179 + $0x10] sm:$0xff]
      %v1182 = vld [vmem:[%s1179 + $0x20] sm:$0xff]
      %v1183 = vld [vmem:[%s1179 + $0x30] sm:$0xff]
      %v1184 = vld [vmem:[%s1179 + $0x40] sm:$0xff]
      %v1185 = vld [vmem:[%s1179 + $0x50] sm:$0xff]
      %v1186 = vld [vmem:[%s1179 + $0x60] sm:$0xff]
      %v1187 = vld [vmem:[%s1179 + $0x70] sm:$0xff]
      %v1188 = vlaneseq
      %v1189 = vshrl.u32 %v1188, 7
      %v1190 = vsub.s32 0, %v1189
      %v1191 = vrot.slane %v422, %v1190
      %v1192 = vmul.f32 %v1180, %v1191
      %v1193 = vmul.f32 %v1181, %v1191
      %v1194 = vmul.f32 %v1182, %v1191
      %v1195 = vmul.f32 %v1183, %v1191
      %v1196 = vmul.f32 %v1184, %v1191
      %v1197 = vmul.f32 %v1185, %v1191
      %v1198 = vmul.f32 %v1186, %v1191
      %v1199 = vmul.f32 %v1187, %v1191
      %v1200 = vld [vmem:[%s1179 + $0x1] sm:$0xff]
      %v1201 = vld [vmem:[%s1179 + $0x11] sm:$0xff]
      %v1202 = vld [vmem:[%s1179 + $0x21] sm:$0xff]
      %v1203 = vld [vmem:[%s1179 + $0x31] sm:$0xff]
      %v1204 = vld [vmem:[%s1179 + $0x41] sm:$0xff]
      %v1205 = vld [vmem:[%s1179 + $0x51] sm:$0xff]
      %v1206 = vld [vmem:[%s1179 + $0x61] sm:$0xff]
      %v1207 = vld [vmem:[%s1179 + $0x71] sm:$0xff]
      %v1208 = vlaneseq
      %v1209 = vshrl.u32 %v1208, 7
      %v1210 = vsub.s32 1, %v1209
      %v1211 = vrot.slane %v422, %v1210
      %v1212 = vmul.f32 %v1200, %v1211
      %v1213 = vmul.f32 %v1201, %v1211
      %v1214 = vmul.f32 %v1202, %v1211
      %v1215 = vmul.f32 %v1203, %v1211
      %v1216 = vmul.f32 %v1204, %v1211
      %v1217 = vmul.f32 %v1205, %v1211
      %v1218 = vmul.f32 %v1206, %v1211
      %v1219 = vmul.f32 %v1207, %v1211
      %v1220 = vadd.f32 %v1192, %v1212
      %v1221 = vadd.f32 %v1193, %v1213
      %v1222 = vadd.f32 %v1194, %v1214
      %v1223 = vadd.f32 %v1195, %v1215
      %v1224 = vadd.f32 %v1196, %v1216
      %v1225 = vadd.f32 %v1197, %v1217
      %v1226 = vadd.f32 %v1198, %v1218
      %v1227 = vadd.f32 %v1199, %v1219
      %v1228 = vld [vmem:[%s1179 + $0x2] sm:$0xff]
      %v1229 = vld [vmem:[%s1179 + $0x12] sm:$0xff]
      %v1230 = vld [vmem:[%s1179 + $0x22] sm:$0xff]
      %v1231 = vld [vmem:[%s1179 + $0x32] sm:$0xff]
      %v1232 = vld [vmem:[%s1179 + $0x42] sm:$0xff]
      %v1233 = vld [vmem:[%s1179 + $0x52] sm:$0xff]
      %v1234 = vld [vmem:[%s1179 + $0x62] sm:$0xff]
      %v1235 = vld [vmem:[%s1179 + $0x72] sm:$0xff]
      %v1236 = vlaneseq
      %v1237 = vshrl.u32 %v1236, 7
      %v1238 = vsub.s32 2, %v1237
      %v1239 = vrot.slane %v422, %v1238
      %v1240 = vmul.f32 %v1228, %v1239
      %v1241 = vmul.f32 %v1229, %v1239
      %v1242 = vmul.f32 %v1230, %v1239
      %v1243 = vmul.f32 %v1231, %v1239
      %v1244 = vmul.f32 %v1232, %v1239
      %v1245 = vmul.f32 %v1233, %v1239
      %v1246 = vmul.f32 %v1234, %v1239
      %v1247 = vmul.f32 %v1235, %v1239
      %v1248 = vadd.f32 %v1220, %v1240
      %v1249 = vadd.f32 %v1221, %v1241
      %v1250 = vadd.f32 %v1222, %v1242
      %v1251 = vadd.f32 %v1223, %v1243
      %v1252 = vadd.f32 %v1224, %v1244
      %v1253 = vadd.f32 %v1225, %v1245
      %v1254 = vadd.f32 %v1226, %v1246
      %v1255 = vadd.f32 %v1227, %v1247
      %v1256 = vld [vmem:[%s1179 + $0x3] sm:$0xff]
      %v1257 = vld [vmem:[%s1179 + $0x13] sm:$0xff]
      %v1258 = vld [vmem:[%s1179 + $0x23] sm:$0xff]
      %v1259 = vld [vmem:[%s1179 + $0x33] sm:$0xff]
      %v1260 = vld [vmem:[%s1179 + $0x43] sm:$0xff]
      %v1261 = vld [vmem:[%s1179 + $0x53] sm:$0xff]
      %v1262 = vld [vmem:[%s1179 + $0x63] sm:$0xff]
      %v1263 = vld [vmem:[%s1179 + $0x73] sm:$0xff]
      %v1264 = vlaneseq
      %v1265 = vshrl.u32 %v1264, 7
      %v1266 = vsub.s32 3, %v1265
      %v1267 = vrot.slane %v422, %v1266
      %v1268 = vmul.f32 %v1256, %v1267
      %v1269 = vmul.f32 %v1257, %v1267
      %v1270 = vmul.f32 %v1258, %v1267
      %v1271 = vmul.f32 %v1259, %v1267
      %v1272 = vmul.f32 %v1260, %v1267
      %v1273 = vmul.f32 %v1261, %v1267
      %v1274 = vmul.f32 %v1262, %v1267
      %v1275 = vmul.f32 %v1263, %v1267
      %v1276 = vadd.f32 %v1248, %v1268
      %v1277 = vadd.f32 %v1249, %v1269
      %v1278 = vadd.f32 %v1250, %v1270
      %v1279 = vadd.f32 %v1251, %v1271
      %v1280 = vadd.f32 %v1252, %v1272
      %v1281 = vadd.f32 %v1253, %v1273
      %v1282 = vadd.f32 %v1254, %v1274
      %v1283 = vadd.f32 %v1255, %v1275
      %v1284 = vld [vmem:[%s1179 + $0x4] sm:$0xff]
      %v1285 = vld [vmem:[%s1179 + $0x14] sm:$0xff]
      %v1286 = vld [vmem:[%s1179 + $0x24] sm:$0xff]
      %v1287 = vld [vmem:[%s1179 + $0x34] sm:$0xff]
      %v1288 = vld [vmem:[%s1179 + $0x44] sm:$0xff]
      %v1289 = vld [vmem:[%s1179 + $0x54] sm:$0xff]
      %v1290 = vld [vmem:[%s1179 + $0x64] sm:$0xff]
      %v1291 = vld [vmem:[%s1179 + $0x74] sm:$0xff]
      %v1292 = vlaneseq
      %v1293 = vshrl.u32 %v1292, 7
      %v1294 = vsub.s32 4, %v1293
      %v1295 = vrot.slane %v422, %v1294
      %v1296 = vmul.f32 %v1284, %v1295
      %v1297 = vmul.f32 %v1285, %v1295
      %v1298 = vmul.f32 %v1286, %v1295
      %v1299 = vmul.f32 %v1287, %v1295
      %v1300 = vmul.f32 %v1288, %v1295
      %v1301 = vmul.f32 %v1289, %v1295
      %v1302 = vmul.f32 %v1290, %v1295
      %v1303 = vmul.f32 %v1291, %v1295
      %v1304 = vadd.f32 %v1276, %v1296
      %v1305 = vadd.f32 %v1277, %v1297
      %v1306 = vadd.f32 %v1278, %v1298
      %v1307 = vadd.f32 %v1279, %v1299
      %v1308 = vadd.f32 %v1280, %v1300
      %v1309 = vadd.f32 %v1281, %v1301
      %v1310 = vadd.f32 %v1282, %v1302
      %v1311 = vadd.f32 %v1283, %v1303
      %v1312 = vld [vmem:[%s1179 + $0x5] sm:$0xff]
      %v1313 = vld [vmem:[%s1179 + $0x15] sm:$0xff]
      %v1314 = vld [vmem:[%s1179 + $0x25] sm:$0xff]
      %v1315 = vld [vmem:[%s1179 + $0x35] sm:$0xff]
      %v1316 = vld [vmem:[%s1179 + $0x45] sm:$0xff]
      %v1317 = vld [vmem:[%s1179 + $0x55] sm:$0xff]
      %v1318 = vld [vmem:[%s1179 + $0x65] sm:$0xff]
      %v1319 = vld [vmem:[%s1179 + $0x75] sm:$0xff]
      %v1320 = vlaneseq
      %v1321 = vshrl.u32 %v1320, 7
      %v1322 = vsub.s32 5, %v1321
      %v1323 = vrot.slane %v422, %v1322
      %v1324 = vmul.f32 %v1312, %v1323
      %v1325 = vmul.f32 %v1313, %v1323
      %v1326 = vmul.f32 %v1314, %v1323
      %v1327 = vmul.f32 %v1315, %v1323
      %v1328 = vmul.f32 %v1316, %v1323
      %v1329 = vmul.f32 %v1317, %v1323
      %v1330 = vmul.f32 %v1318, %v1323
      %v1331 = vmul.f32 %v1319, %v1323
      %v1332 = vadd.f32 %v1304, %v1324
      %v1333 = vadd.f32 %v1305, %v1325
      %v1334 = vadd.f32 %v1306, %v1326
      %v1335 = vadd.f32 %v1307, %v1327
      %v1336 = vadd.f32 %v1308, %v1328
      %v1337 = vadd.f32 %v1309, %v1329
      %v1338 = vadd.f32 %v1310, %v1330
      %v1339 = vadd.f32 %v1311, %v1331
      %v1340 = vld [vmem:[%s1179 + $0x6] sm:$0xff]
      %v1341 = vld [vmem:[%s1179 + $0x16] sm:$0xff]
      %v1342 = vld [vmem:[%s1179 + $0x26] sm:$0xff]
      %v1343 = vld [vmem:[%s1179 + $0x36] sm:$0xff]
      %v1344 = vld [vmem:[%s1179 + $0x46] sm:$0xff]
      %v1345 = vld [vmem:[%s1179 + $0x56] sm:$0xff]
      %v1346 = vld [vmem:[%s1179 + $0x66] sm:$0xff]
      %v1347 = vld [vmem:[%s1179 + $0x76] sm:$0xff]
      %v1348 = vlaneseq
      %v1349 = vshrl.u32 %v1348, 7
      %v1350 = vsub.s32 6, %v1349
      %v1351 = vrot.slane %v422, %v1350
      %v1352 = vmul.f32 %v1340, %v1351
      %v1353 = vmul.f32 %v1341, %v1351
      %v1354 = vmul.f32 %v1342, %v1351
      %v1355 = vmul.f32 %v1343, %v1351
      %v1356 = vmul.f32 %v1344, %v1351
      %v1357 = vmul.f32 %v1345, %v1351
      %v1358 = vmul.f32 %v1346, %v1351
      %v1359 = vmul.f32 %v1347, %v1351
      %v1360 = vadd.f32 %v1332, %v1352
      %v1361 = vadd.f32 %v1333, %v1353
      %v1362 = vadd.f32 %v1334, %v1354
      %v1363 = vadd.f32 %v1335, %v1355
      %v1364 = vadd.f32 %v1336, %v1356
      %v1365 = vadd.f32 %v1337, %v1357
      %v1366 = vadd.f32 %v1338, %v1358
      %v1367 = vadd.f32 %v1339, %v1359
      %s1368 = scalar_lea.vmem [#allocation2], 80
      %v1369 = vld [vmem:[%s1368] sm:$0xff]
      %v1370 = vld [vmem:[%s1368 + $0x10] sm:$0xff]
      %v1371 = vld [vmem:[%s1368 + $0x20] sm:$0xff]
      %v1372 = vld [vmem:[%s1368 + $0x30] sm:$0xff]
      %v1373 = vld [vmem:[%s1368 + $0x40] sm:$0xff]
      %v1374 = vld [vmem:[%s1368 + $0x50] sm:$0xff]
      %v1375 = vld [vmem:[%s1368 + $0x60] sm:$0xff]
      %v1376 = vld [vmem:[%s1368 + $0x70] sm:$0xff]
      %v1377 = vlaneseq
      %v1378 = vshrl.u32 %v1377, 7
      %v1379 = vsub.s32 0, %v1378
      %v1380 = vrot.slane %v423, %v1379
      %v1381 = vmul.f32 %v1369, %v1380
      %v1382 = vmul.f32 %v1370, %v1380
      %v1383 = vmul.f32 %v1371, %v1380
      %v1384 = vmul.f32 %v1372, %v1380
      %v1385 = vmul.f32 %v1373, %v1380
      %v1386 = vmul.f32 %v1374, %v1380
      %v1387 = vmul.f32 %v1375, %v1380
      %v1388 = vmul.f32 %v1376, %v1380
      %v1389 = vld [vmem:[%s1368 + $0x1] sm:$0xff]
      %v1390 = vld [vmem:[%s1368 + $0x11] sm:$0xff]
      %v1391 = vld [vmem:[%s1368 + $0x21] sm:$0xff]
      %v1392 = vld [vmem:[%s1368 + $0x31] sm:$0xff]
      %v1393 = vld [vmem:[%s1368 + $0x41] sm:$0xff]
      %v1394 = vld [vmem:[%s1368 + $0x51] sm:$0xff]
      %v1395 = vld [vmem:[%s1368 + $0x61] sm:$0xff]
      %v1396 = vld [vmem:[%s1368 + $0x71] sm:$0xff]
      %v1397 = vlaneseq
      %v1398 = vshrl.u32 %v1397, 7
      %v1399 = vsub.s32 1, %v1398
      %v1400 = vrot.slane %v423, %v1399
      %v1401 = vmul.f32 %v1389, %v1400
      %v1402 = vmul.f32 %v1390, %v1400
      %v1403 = vmul.f32 %v1391, %v1400
      %v1404 = vmul.f32 %v1392, %v1400
      %v1405 = vmul.f32 %v1393, %v1400
      %v1406 = vmul.f32 %v1394, %v1400
      %v1407 = vmul.f32 %v1395, %v1400
      %v1408 = vmul.f32 %v1396, %v1400
      %v1409 = vadd.f32 %v1381, %v1401
      %v1410 = vadd.f32 %v1382, %v1402
      %v1411 = vadd.f32 %v1383, %v1403
      %v1412 = vadd.f32 %v1384, %v1404
      %v1413 = vadd.f32 %v1385, %v1405
      %v1414 = vadd.f32 %v1386, %v1406
      %v1415 = vadd.f32 %v1387, %v1407
      %v1416 = vadd.f32 %v1388, %v1408
      %v1417 = vld [vmem:[%s1368 + $0x2] sm:$0xff]
      %v1418 = vld [vmem:[%s1368 + $0x12] sm:$0xff]
      %v1419 = vld [vmem:[%s1368 + $0x22] sm:$0xff]
      %v1420 = vld [vmem:[%s1368 + $0x32] sm:$0xff]
      %v1421 = vld [vmem:[%s1368 + $0x42] sm:$0xff]
      %v1422 = vld [vmem:[%s1368 + $0x52] sm:$0xff]
      %v1423 = vld [vmem:[%s1368 + $0x62] sm:$0xff]
      %v1424 = vld [vmem:[%s1368 + $0x72] sm:$0xff]
      %v1425 = vlaneseq
      %v1426 = vshrl.u32 %v1425, 7
      %v1427 = vsub.s32 2, %v1426
      %v1428 = vrot.slane %v423, %v1427
      %v1429 = vmul.f32 %v1417, %v1428
      %v1430 = vmul.f32 %v1418, %v1428
      %v1431 = vmul.f32 %v1419, %v1428
      %v1432 = vmul.f32 %v1420, %v1428
      %v1433 = vmul.f32 %v1421, %v1428
      %v1434 = vmul.f32 %v1422, %v1428
      %v1435 = vmul.f32 %v1423, %v1428
      %v1436 = vmul.f32 %v1424, %v1428
      %v1437 = vadd.f32 %v1409, %v1429
      %v1438 = vadd.f32 %v1410, %v1430
      %v1439 = vadd.f32 %v1411, %v1431
      %v1440 = vadd.f32 %v1412, %v1432
      %v1441 = vadd.f32 %v1413, %v1433
      %v1442 = vadd.f32 %v1414, %v1434
      %v1443 = vadd.f32 %v1415, %v1435
      %v1444 = vadd.f32 %v1416, %v1436
      %v1445 = vld [vmem:[%s1368 + $0x3] sm:$0xff]
      %v1446 = vld [vmem:[%s1368 + $0x13] sm:$0xff]
      %v1447 = vld [vmem:[%s1368 + $0x23] sm:$0xff]
      %v1448 = vld [vmem:[%s1368 + $0x33] sm:$0xff]
      %v1449 = vld [vmem:[%s1368 + $0x43] sm:$0xff]
      %v1450 = vld [vmem:[%s1368 + $0x53] sm:$0xff]
      %v1451 = vld [vmem:[%s1368 + $0x63] sm:$0xff]
      %v1452 = vld [vmem:[%s1368 + $0x73] sm:$0xff]
      %v1453 = vlaneseq
      %v1454 = vshrl.u32 %v1453, 7
      %v1455 = vsub.s32 3, %v1454
      %v1456 = vrot.slane %v423, %v1455
      %v1457 = vmul.f32 %v1445, %v1456
      %v1458 = vmul.f32 %v1446, %v1456
      %v1459 = vmul.f32 %v1447, %v1456
      %v1460 = vmul.f32 %v1448, %v1456
      %v1461 = vmul.f32 %v1449, %v1456
      %v1462 = vmul.f32 %v1450, %v1456
      %v1463 = vmul.f32 %v1451, %v1456
      %v1464 = vmul.f32 %v1452, %v1456
      %v1465 = vadd.f32 %v1437, %v1457
      %v1466 = vadd.f32 %v1438, %v1458
      %v1467 = vadd.f32 %v1439, %v1459
      %v1468 = vadd.f32 %v1440, %v1460
      %v1469 = vadd.f32 %v1441, %v1461
      %v1470 = vadd.f32 %v1442, %v1462
      %v1471 = vadd.f32 %v1443, %v1463
      %v1472 = vadd.f32 %v1444, %v1464
      %v1473 = vld [vmem:[%s1368 + $0x4] sm:$0xff]
      %v1474 = vld [vmem:[%s1368 + $0x14] sm:$0xff]
      %v1475 = vld [vmem:[%s1368 + $0x24] sm:$0xff]
      %v1476 = vld [vmem:[%s1368 + $0x34] sm:$0xff]
      %v1477 = vld [vmem:[%s1368 + $0x44] sm:$0xff]
      %v1478 = vld [vmem:[%s1368 + $0x54] sm:$0xff]
      %v1479 = vld [vmem:[%s1368 + $0x64] sm:$0xff]
      %v1480 = vld [vmem:[%s1368 + $0x74] sm:$0xff]
      %v1481 = vlaneseq
      %v1482 = vshrl.u32 %v1481, 7
      %v1483 = vsub.s32 4, %v1482
      %v1484 = vrot.slane %v423, %v1483
      %v1485 = vmul.f32 %v1473, %v1484
      %v1486 = vmul.f32 %v1474, %v1484
      %v1487 = vmul.f32 %v1475, %v1484
      %v1488 = vmul.f32 %v1476, %v1484
      %v1489 = vmul.f32 %v1477, %v1484
      %v1490 = vmul.f32 %v1478, %v1484
      %v1491 = vmul.f32 %v1479, %v1484
      %v1492 = vmul.f32 %v1480, %v1484
      %v1493 = vadd.f32 %v1465, %v1485
      %v1494 = vadd.f32 %v1466, %v1486
      %v1495 = vadd.f32 %v1467, %v1487
      %v1496 = vadd.f32 %v1468, %v1488
      %v1497 = vadd.f32 %v1469, %v1489
      %v1498 = vadd.f32 %v1470, %v1490
      %v1499 = vadd.f32 %v1471, %v1491
      %v1500 = vadd.f32 %v1472, %v1492
      %v1501 = vld [vmem:[%s1368 + $0x5] sm:$0xff]
      %v1502 = vld [vmem:[%s1368 + $0x15] sm:$0xff]
      %v1503 = vld [vmem:[%s1368 + $0x25] sm:$0xff]
      %v1504 = vld [vmem:[%s1368 + $0x35] sm:$0xff]
      %v1505 = vld [vmem:[%s1368 + $0x45] sm:$0xff]
      %v1506 = vld [vmem:[%s1368 + $0x55] sm:$0xff]
      %v1507 = vld [vmem:[%s1368 + $0x65] sm:$0xff]
      %v1508 = vld [vmem:[%s1368 + $0x75] sm:$0xff]
      %v1509 = vlaneseq
      %v1510 = vshrl.u32 %v1509, 7
      %v1511 = vsub.s32 5, %v1510
      %v1512 = vrot.slane %v423, %v1511
      %v1513 = vmul.f32 %v1501, %v1512
      %v1514 = vmul.f32 %v1502, %v1512
      %v1515 = vmul.f32 %v1503, %v1512
      %v1516 = vmul.f32 %v1504, %v1512
      %v1517 = vmul.f32 %v1505, %v1512
      %v1518 = vmul.f32 %v1506, %v1512
      %v1519 = vmul.f32 %v1507, %v1512
      %v1520 = vmul.f32 %v1508, %v1512
      %v1521 = vadd.f32 %v1493, %v1513
      %v1522 = vadd.f32 %v1494, %v1514
      %v1523 = vadd.f32 %v1495, %v1515
      %v1524 = vadd.f32 %v1496, %v1516
      %v1525 = vadd.f32 %v1497, %v1517
      %v1526 = vadd.f32 %v1498, %v1518
      %v1527 = vadd.f32 %v1499, %v1519
      %v1528 = vadd.f32 %v1500, %v1520
      %v1529 = vld [vmem:[%s1368 + $0x6] sm:$0xff]
      %v1530 = vld [vmem:[%s1368 + $0x16] sm:$0xff]
      %v1531 = vld [vmem:[%s1368 + $0x26] sm:$0xff]
      %v1532 = vld [vmem:[%s1368 + $0x36] sm:$0xff]
      %v1533 = vld [vmem:[%s1368 + $0x46] sm:$0xff]
      %v1534 = vld [vmem:[%s1368 + $0x56] sm:$0xff]
      %v1535 = vld [vmem:[%s1368 + $0x66] sm:$0xff]
      %v1536 = vld [vmem:[%s1368 + $0x76] sm:$0xff]
      %v1537 = vlaneseq
      %v1538 = vshrl.u32 %v1537, 7
      %v1539 = vsub.s32 6, %v1538
      %v1540 = vrot.slane %v423, %v1539
      %v1541 = vmul.f32 %v1529, %v1540
      %v1542 = vmul.f32 %v1530, %v1540
      %v1543 = vmul.f32 %v1531, %v1540
      %v1544 = vmul.f32 %v1532, %v1540
      %v1545 = vmul.f32 %v1533, %v1540
      %v1546 = vmul.f32 %v1534, %v1540
      %v1547 = vmul.f32 %v1535, %v1540
      %v1548 = vmul.f32 %v1536, %v1540
      %v1549 = vadd.f32 %v1521, %v1541
      %v1550 = vadd.f32 %v1522, %v1542
      %v1551 = vadd.f32 %v1523, %v1543
      %v1552 = vadd.f32 %v1524, %v1544
      %v1553 = vadd.f32 %v1525, %v1545
      %v1554 = vadd.f32 %v1526, %v1546
      %v1555 = vadd.f32 %v1527, %v1547
      %v1556 = vadd.f32 %v1528, %v1548
      %s1557 = scalar_lea.vmem [#allocation2], 96
      %v1558 = vld [vmem:[%s1557] sm:$0xff]
      %v1559 = vld [vmem:[%s1557 + $0x10] sm:$0xff]
      %v1560 = vld [vmem:[%s1557 + $0x20] sm:$0xff]
      %v1561 = vld [vmem:[%s1557 + $0x30] sm:$0xff]
      %v1562 = vld [vmem:[%s1557 + $0x40] sm:$0xff]
      %v1563 = vld [vmem:[%s1557 + $0x50] sm:$0xff]
      %v1564 = vld [vmem:[%s1557 + $0x60] sm:$0xff]
      %v1565 = vld [vmem:[%s1557 + $0x70] sm:$0xff]
      %v1566 = vlaneseq
      %v1567 = vshrl.u32 %v1566, 7
      %v1568 = vsub.s32 0, %v1567
      %v1569 = vrot.slane %v424, %v1568
      %v1570 = vmul.f32 %v1558, %v1569
      %v1571 = vmul.f32 %v1559, %v1569
      %v1572 = vmul.f32 %v1560, %v1569
      %v1573 = vmul.f32 %v1561, %v1569
      %v1574 = vmul.f32 %v1562, %v1569
      %v1575 = vmul.f32 %v1563, %v1569
      %v1576 = vmul.f32 %v1564, %v1569
      %v1577 = vmul.f32 %v1565, %v1569
      %v1578 = vld [vmem:[%s1557 + $0x1] sm:$0xff]
      %v1579 = vld [vmem:[%s1557 + $0x11] sm:$0xff]
      %v1580 = vld [vmem:[%s1557 + $0x21] sm:$0xff]
      %v1581 = vld [vmem:[%s1557 + $0x31] sm:$0xff]
      %v1582 = vld [vmem:[%s1557 + $0x41] sm:$0xff]
      %v1583 = vld [vmem:[%s1557 + $0x51] sm:$0xff]
      %v1584 = vld [vmem:[%s1557 + $0x61] sm:$0xff]
      %v1585 = vld [vmem:[%s1557 + $0x71] sm:$0xff]
      %v1586 = vlaneseq
      %v1587 = vshrl.u32 %v1586, 7
      %v1588 = vsub.s32 1, %v1587
      %v1589 = vrot.slane %v424, %v1588
      %v1590 = vmul.f32 %v1578, %v1589
      %v1591 = vmul.f32 %v1579, %v1589
      %v1592 = vmul.f32 %v1580, %v1589
      %v1593 = vmul.f32 %v1581, %v1589
      %v1594 = vmul.f32 %v1582, %v1589
      %v1595 = vmul.f32 %v1583, %v1589
      %v1596 = vmul.f32 %v1584, %v1589
      %v1597 = vmul.f32 %v1585, %v1589
      %v1598 = vadd.f32 %v1570, %v1590
      %v1599 = vadd.f32 %v1571, %v1591
      %v1600 = vadd.f32 %v1572, %v1592
      %v1601 = vadd.f32 %v1573, %v1593
      %v1602 = vadd.f32 %v1574, %v1594
      %v1603 = vadd.f32 %v1575, %v1595
      %v1604 = vadd.f32 %v1576, %v1596
      %v1605 = vadd.f32 %v1577, %v1597
      %v1606 = vld [vmem:[%s1557 + $0x2] sm:$0xff]
      %v1607 = vld [vmem:[%s1557 + $0x12] sm:$0xff]
      %v1608 = vld [vmem:[%s1557 + $0x22] sm:$0xff]
      %v1609 = vld [vmem:[%s1557 + $0x32] sm:$0xff]
      %v1610 = vld [vmem:[%s1557 + $0x42] sm:$0xff]
      %v1611 = vld [vmem:[%s1557 + $0x52] sm:$0xff]
      %v1612 = vld [vmem:[%s1557 + $0x62] sm:$0xff]
      %v1613 = vld [vmem:[%s1557 + $0x72] sm:$0xff]
      %v1614 = vlaneseq
      %v1615 = vshrl.u32 %v1614, 7
      %v1616 = vsub.s32 2, %v1615
      %v1617 = vrot.slane %v424, %v1616
      %v1618 = vmul.f32 %v1606, %v1617
      %v1619 = vmul.f32 %v1607, %v1617
      %v1620 = vmul.f32 %v1608, %v1617
      %v1621 = vmul.f32 %v1609, %v1617
      %v1622 = vmul.f32 %v1610, %v1617
      %v1623 = vmul.f32 %v1611, %v1617
      %v1624 = vmul.f32 %v1612, %v1617
      %v1625 = vmul.f32 %v1613, %v1617
      %v1626 = vadd.f32 %v1598, %v1618
      %v1627 = vadd.f32 %v1599, %v1619
      %v1628 = vadd.f32 %v1600, %v1620
      %v1629 = vadd.f32 %v1601, %v1621
      %v1630 = vadd.f32 %v1602, %v1622
      %v1631 = vadd.f32 %v1603, %v1623
      %v1632 = vadd.f32 %v1604, %v1624
      %v1633 = vadd.f32 %v1605, %v1625
      %v1634 = vld [vmem:[%s1557 + $0x3] sm:$0xff]
      %v1635 = vld [vmem:[%s1557 + $0x13] sm:$0xff]
      %v1636 = vld [vmem:[%s1557 + $0x23] sm:$0xff]
      %v1637 = vld [vmem:[%s1557 + $0x33] sm:$0xff]
      %v1638 = vld [vmem:[%s1557 + $0x43] sm:$0xff]
      %v1639 = vld [vmem:[%s1557 + $0x53] sm:$0xff]
      %v1640 = vld [vmem:[%s1557 + $0x63] sm:$0xff]
      %v1641 = vld [vmem:[%s1557 + $0x73] sm:$0xff]
      %v1642 = vlaneseq
      %v1643 = vshrl.u32 %v1642, 7
      %v1644 = vsub.s32 3, %v1643
      %v1645 = vrot.slane %v424, %v1644
      %v1646 = vmul.f32 %v1634, %v1645
      %v1647 = vmul.f32 %v1635, %v1645
      %v1648 = vmul.f32 %v1636, %v1645
      %v1649 = vmul.f32 %v1637, %v1645
      %v1650 = vmul.f32 %v1638, %v1645
      %v1651 = vmul.f32 %v1639, %v1645
      %v1652 = vmul.f32 %v1640, %v1645
      %v1653 = vmul.f32 %v1641, %v1645
      %v1654 = vadd.f32 %v1626, %v1646
      %v1655 = vadd.f32 %v1627, %v1647
      %v1656 = vadd.f32 %v1628, %v1648
      %v1657 = vadd.f32 %v1629, %v1649
      %v1658 = vadd.f32 %v1630, %v1650
      %v1659 = vadd.f32 %v1631, %v1651
      %v1660 = vadd.f32 %v1632, %v1652
      %v1661 = vadd.f32 %v1633, %v1653
      %v1662 = vld [vmem:[%s1557 + $0x4] sm:$0xff]
      %v1663 = vld [vmem:[%s1557 + $0x14] sm:$0xff]
      %v1664 = vld [vmem:[%s1557 + $0x24] sm:$0xff]
      %v1665 = vld [vmem:[%s1557 + $0x34] sm:$0xff]
      %v1666 = vld [vmem:[%s1557 + $0x44] sm:$0xff]
      %v1667 = vld [vmem:[%s1557 + $0x54] sm:$0xff]
      %v1668 = vld [vmem:[%s1557 + $0x64] sm:$0xff]
      %v1669 = vld [vmem:[%s1557 + $0x74] sm:$0xff]
      %v1670 = vlaneseq
      %v1671 = vshrl.u32 %v1670, 7
      %v1672 = vsub.s32 4, %v1671
      %v1673 = vrot.slane %v424, %v1672
      %v1674 = vmul.f32 %v1662, %v1673
      %v1675 = vmul.f32 %v1663, %v1673
      %v1676 = vmul.f32 %v1664, %v1673
      %v1677 = vmul.f32 %v1665, %v1673
      %v1678 = vmul.f32 %v1666, %v1673
      %v1679 = vmul.f32 %v1667, %v1673
      %v1680 = vmul.f32 %v1668, %v1673
      %v1681 = vmul.f32 %v1669, %v1673
      %v1682 = vadd.f32 %v1654, %v1674
      %v1683 = vadd.f32 %v1655, %v1675
      %v1684 = vadd.f32 %v1656, %v1676
      %v1685 = vadd.f32 %v1657, %v1677
      %v1686 = vadd.f32 %v1658, %v1678
      %v1687 = vadd.f32 %v1659, %v1679
      %v1688 = vadd.f32 %v1660, %v1680
      %v1689 = vadd.f32 %v1661, %v1681
      %v1690 = vld [vmem:[%s1557 + $0x5] sm:$0xff]
      %v1691 = vld [vmem:[%s1557 + $0x15] sm:$0xff]
      %v1692 = vld [vmem:[%s1557 + $0x25] sm:$0xff]
      %v1693 = vld [vmem:[%s1557 + $0x35] sm:$0xff]
      %v1694 = vld [vmem:[%s1557 + $0x45] sm:$0xff]
      %v1695 = vld [vmem:[%s1557 + $0x55] sm:$0xff]
      %v1696 = vld [vmem:[%s1557 + $0x65] sm:$0xff]
      %v1697 = vld [vmem:[%s1557 + $0x75] sm:$0xff]
      %v1698 = vlaneseq
      %v1699 = vshrl.u32 %v1698, 7
      %v1700 = vsub.s32 5, %v1699
      %v1701 = vrot.slane %v424, %v1700
      %v1702 = vmul.f32 %v1690, %v1701
      %v1703 = vmul.f32 %v1691, %v1701
      %v1704 = vmul.f32 %v1692, %v1701
      %v1705 = vmul.f32 %v1693, %v1701
      %v1706 = vmul.f32 %v1694, %v1701
      %v1707 = vmul.f32 %v1695, %v1701
      %v1708 = vmul.f32 %v1696, %v1701
      %v1709 = vmul.f32 %v1697, %v1701
      %v1710 = vadd.f32 %v1682, %v1702
      %v1711 = vadd.f32 %v1683, %v1703
      %v1712 = vadd.f32 %v1684, %v1704
      %v1713 = vadd.f32 %v1685, %v1705
      %v1714 = vadd.f32 %v1686, %v1706
      %v1715 = vadd.f32 %v1687, %v1707
      %v1716 = vadd.f32 %v1688, %v1708
      %v1717 = vadd.f32 %v1689, %v1709
      %v1718 = vld [vmem:[%s1557 + $0x6] sm:$0xff]
      %v1719 = vld [vmem:[%s1557 + $0x16] sm:$0xff]
      %v1720 = vld [vmem:[%s1557 + $0x26] sm:$0xff]
      %v1721 = vld [vmem:[%s1557 + $0x36] sm:$0xff]
      %v1722 = vld [vmem:[%s1557 + $0x46] sm:$0xff]
      %v1723 = vld [vmem:[%s1557 + $0x56] sm:$0xff]
      %v1724 = vld [vmem:[%s1557 + $0x66] sm:$0xff]
      %v1725 = vld [vmem:[%s1557 + $0x76] sm:$0xff]
      %v1726 = vlaneseq
      %v1727 = vshrl.u32 %v1726, 7
      %v1728 = vsub.s32 6, %v1727
      %v1729 = vrot.slane %v424, %v1728
      %v1730 = vmul.f32 %v1718, %v1729
      %v1731 = vmul.f32 %v1719, %v1729
      %v1732 = vmul.f32 %v1720, %v1729
      %v1733 = vmul.f32 %v1721, %v1729
      %v1734 = vmul.f32 %v1722, %v1729
      %v1735 = vmul.f32 %v1723, %v1729
      %v1736 = vmul.f32 %v1724, %v1729
      %v1737 = vmul.f32 %v1725, %v1729
      %v1738 = vadd.f32 %v1710, %v1730
      %v1739 = vadd.f32 %v1711, %v1731
      %v1740 = vadd.f32 %v1712, %v1732
      %v1741 = vadd.f32 %v1713, %v1733
      %v1742 = vadd.f32 %v1714, %v1734
      %v1743 = vadd.f32 %v1715, %v1735
      %v1744 = vadd.f32 %v1716, %v1736
      %v1745 = vadd.f32 %v1717, %v1737
      %v1746 = vadd.f32 %v605, %v794
      %v1747 = vadd.f32 %v606, %v795
      %v1748 = vadd.f32 %v607, %v796
      %v1749 = vadd.f32 %v608, %v797
      %v1750 = vadd.f32 %v609, %v798
      %v1751 = vadd.f32 %v610, %v799
      %v1752 = vadd.f32 %v611, %v800
      %v1753 = vadd.f32 %v612, %v801
      %v1754 = vadd.f32 %v983, %v1171
      %v1755 = vadd.f32 %v984, %v1172
      %v1756 = vadd.f32 %v985, %v1173
      %v1757 = vadd.f32 %v986, %v1174
      %v1758 = vadd.f32 %v987, %v1175
      %v1759 = vadd.f32 %v988, %v1176
      %v1760 = vadd.f32 %v989, %v1177
      %v1761 = vadd.f32 %v990, %v1178
      %v1762 = vadd.f32 %v1746, %v1754
      %v1763 = vadd.f32 %v1747, %v1755
      %v1764 = vadd.f32 %v1748, %v1756
      %v1765 = vadd.f32 %v1749, %v1757
      %v1766 = vadd.f32 %v1750, %v1758
      %v1767 = vadd.f32 %v1751, %v1759
      %v1768 = vadd.f32 %v1752, %v1760
      %v1769 = vadd.f32 %v1753, %v1761
      %v1770 = vadd.f32 %v1360, %v1549
      %v1771 = vadd.f32 %v1361, %v1550
      %v1772 = vadd.f32 %v1362, %v1551
      %v1773 = vadd.f32 %v1363, %v1552
      %v1774 = vadd.f32 %v1364, %v1553
      %v1775 = vadd.f32 %v1365, %v1554
      %v1776 = vadd.f32 %v1366, %v1555
      %v1777 = vadd.f32 %v1367, %v1556
      %v1778 = vadd.f32 %v1770, %v1738
      %v1779 = vadd.f32 %v1771, %v1739
      %v1780 = vadd.f32 %v1772, %v1740
      %v1781 = vadd.f32 %v1773, %v1741
      %v1782 = vadd.f32 %v1774, %v1742
      %v1783 = vadd.f32 %v1775, %v1743
      %v1784 = vadd.f32 %v1776, %v1744
      %v1785 = vadd.f32 %v1777, %v1745
      %v1786 = vadd.f32 %v1762, %v1778
      %v1787 = vadd.f32 %v1763, %v1779
      %v1788 = vadd.f32 %v1764, %v1780
      %v1789 = vadd.f32 %v1765, %v1781
      %v1790 = vadd.f32 %v1766, %v1782
      %v1791 = vadd.f32 %v1767, %v1783
      %v1792 = vadd.f32 %v1768, %v1784
      %v1793 = vadd.f32 %v1769, %v1785
      %v1794 = vld [vmem:[%s2] sm:$0x1]
      %v1796 = vlaneseq
      %v1797 = vshrl.u32 %v1796, 7
      %v1798 = vsub.s32 0, %v1797
      %v1799 = vrot.slane %v1794, %v1798
      %v1801 = vadd.f32 %v1786, %v1799
      %v1802 = vadd.f32 %v1787, %v1799
      %v1803 = vadd.f32 %v1788, %v1799
      %v1804 = vadd.f32 %v1789, %v1799
      %v1805 = vadd.f32 %v1790, %v1799
      %v1806 = vadd.f32 %v1791, %v1799
      %v1807 = vadd.f32 %v1792, %v1799
      %v1808 = vadd.f32 %v1793, %v1799
      %v1809 = vld [vmem:[%s3] sm:$0x1]
      %v1810 = vld [vmem:[%s4] sm:$0x1]
      %v1811 = vsel %vm377, %v1801, 0.0
      %1812 = vadd.xlane.f32.xlu0 %v1811
      %v1813 = vpop.xlane.xlu0 %1812
      %v1814 = vsel %vm377, %v1802, 0.0
      %1815 = vadd.xlane.f32.xlu0 %v1814
      %v1816 = vpop.xlane.xlu0 %1815
      %v1817 = vsel %vm377, %v1803, 0.0
      %1818 = vadd.xlane.f32.xlu0 %v1817
      %v1819 = vpop.xlane.xlu0 %1818
      %v1820 = vsel %vm377, %v1804, 0.0
      %1821 = vadd.xlane.f32.xlu0 %v1820
      %v1822 = vpop.xlane.xlu0 %1821
      %v1823 = vsel %vm377, %v1805, 0.0
      %1824 = vadd.xlane.f32.xlu0 %v1823
      %v1825 = vpop.xlane.xlu0 %1824
      %v1826 = vsel %vm377, %v1806, 0.0
      %1827 = vadd.xlane.f32.xlu0 %v1826
      %v1828 = vpop.xlane.xlu0 %1827
      %v1829 = vsel %vm377, %v1807, 0.0
      %1830 = vadd.xlane.f32.xlu0 %v1829
      %v1831 = vpop.xlane.xlu0 %1830
      %v1832 = vsel %vm377, %v1808, 0.0
      %1833 = vadd.xlane.f32.xlu0 %v1832
      %v1834 = vpop.xlane.xlu0 %1833
      %v1835 = vrcp.pop 16.0
      %v1836 = vmul.f32 %v1813, %v1835
      %v1837 = vmul.f32 %v1816, %v1835
      %v1838 = vmul.f32 %v1819, %v1835
      %v1839 = vmul.f32 %v1822, %v1835
      %v1840 = vmul.f32 %v1825, %v1835
      %v1841 = vmul.f32 %v1828, %v1835
      %v1842 = vmul.f32 %v1831, %v1835
      %v1843 = vmul.f32 %v1834, %v1835
      %v1844 = vsub.f32 %v1801, %v1836
      %v1845 = vsub.f32 %v1802, %v1837
      %v1846 = vsub.f32 %v1803, %v1838
      %v1847 = vsub.f32 %v1804, %v1839
      %v1848 = vsub.f32 %v1805, %v1840
      %v1849 = vsub.f32 %v1806, %v1841
      %v1850 = vsub.f32 %v1807, %v1842
      %v1851 = vsub.f32 %v1808, %v1843
      %v1852 = vmul.f32 %v1844, %v1844
      %v1853 = vmul.f32 %v1845, %v1845
      %v1854 = vmul.f32 %v1846, %v1846
      %v1855 = vmul.f32 %v1847, %v1847
      %v1856 = vmul.f32 %v1848, %v1848
      %v1857 = vmul.f32 %v1849, %v1849
      %v1858 = vmul.f32 %v1850, %v1850
      %v1859 = vmul.f32 %v1851, %v1851
      %v1860 = vsel %vm377, %v1852, 0.0
      %1861 = vadd.xlane.f32.xlu0 %v1860
      %v1862 = vpop.xlane.xlu0 %1861
      %v1863 = vsel %vm377, %v1853, 0.0
      %1864 = vadd.xlane.f32.xlu0 %v1863
      %v1865 = vpop.xlane.xlu0 %1864
      %v1866 = vsel %vm377, %v1854, 0.0
      %1867 = vadd.xlane.f32.xlu0 %v1866
      %v1868 = vpop.xlane.xlu0 %1867
      %v1869 = vsel %vm377, %v1855, 0.0
      %1870 = vadd.xlane.f32.xlu0 %v1869
      %v1871 = vpop.xlane.xlu0 %1870
      %v1872 = vsel %vm377, %v1856, 0.0
      %1873 = vadd.xlane.f32.xlu0 %v1872
      %v1874 = vpop.xlane.xlu0 %1873
      %v1875 = vsel %vm377, %v1857, 0.0
      %1876 = vadd.xlane.f32.xlu0 %v1875
      %v1877 = vpop.xlane.xlu0 %1876
      %v1878 = vsel %vm377, %v1858, 0.0
      %1879 = vadd.xlane.f32.xlu0 %v1878
      %v1880 = vpop.xlane.xlu0 %1879
      %v1881 = vsel %vm377, %v1859, 0.0
      %1882 = vadd.xlane.f32.xlu0 %v1881
      %v1883 = vpop.xlane.xlu0 %1882
      %v1884 = vmul.f32 %v1862, %v1835
      %v1885 = vmul.f32 %v1865, %v1835
      %v1886 = vmul.f32 %v1868, %v1835
      %v1887 = vmul.f32 %v1871, %v1835
      %v1888 = vmul.f32 %v1874, %v1835
      %v1889 = vmul.f32 %v1877, %v1835
      %v1890 = vmul.f32 %v1880, %v1835
      %v1891 = vmul.f32 %v1883, %v1835
      %v1892 = vadd.f32 %v1884, 1e-06
      %v1893 = vadd.f32 %v1885, 1e-06
      %v1894 = vadd.f32 %v1886, 1e-06
      %v1895 = vadd.f32 %v1887, 1e-06
      %v1896 = vadd.f32 %v1888, 1e-06
      %v1897 = vadd.f32 %v1889, 1e-06
      %v1898 = vadd.f32 %v1890, 1e-06
      %v1899 = vadd.f32 %v1891, 1e-06
      %v1900 = vrsqrt.pop %v1892
      %v1901 = vrsqrt.pop %v1893
      %v1902 = vrsqrt.pop %v1894
      %v1903 = vrsqrt.pop %v1895
      %v1904 = vrsqrt.pop %v1896
      %v1905 = vrsqrt.pop %v1897
      %v1906 = vrsqrt.pop %v1898
      %v1907 = vrsqrt.pop %v1899
      %v1908 = vmul.f32 %v1844, %v1900
      %v1909 = vmul.f32 %v1845, %v1901
      %v1910 = vmul.f32 %v1846, %v1902
      %v1911 = vmul.f32 %v1847, %v1903
      %v1912 = vmul.f32 %v1848, %v1904
      %v1913 = vmul.f32 %v1849, %v1905
      %v1914 = vmul.f32 %v1850, %v1906
      %v1915 = vmul.f32 %v1851, %v1907
      %v1917 = vlaneseq
      %v1918 = vshrl.u32 %v1917, 7
      %v1919 = vsub.s32 0, %v1918
      %v1920 = vrot.slane %v1809, %v1919
      %v1922 = vmul.f32 %v1908, %v1920
      %v1923 = vmul.f32 %v1909, %v1920
      %v1924 = vmul.f32 %v1910, %v1920
      %v1925 = vmul.f32 %v1911, %v1920
      %v1926 = vmul.f32 %v1912, %v1920
      %v1927 = vmul.f32 %v1913, %v1920
      %v1928 = vmul.f32 %v1914, %v1920
      %v1929 = vmul.f32 %v1915, %v1920
      %v1931 = vlaneseq
      %v1932 = vshrl.u32 %v1931, 7
      %v1933 = vsub.s32 0, %v1932
      %v1934 = vrot.slane %v1810, %v1933
      %v1936 = vadd.f32 %v1922, %v1934
      %v1937 = vadd.f32 %v1923, %v1934
      %v1938 = vadd.f32 %v1924, %v1934
      %v1939 = vadd.f32 %v1925, %v1934
      %v1940 = vadd.f32 %v1926, %v1934
      %v1941 = vadd.f32 %v1927, %v1934
      %v1942 = vadd.f32 %v1928, %v1934
      %v1943 = vadd.f32 %v1929, %v1934
      %v1944 = vpack.c.bf16 %v1937, %v1936
      %v1945 = vpack.c.bf16 %v1939, %v1938
      %v1946 = vpack.c.bf16 %v1941, %v1940
      %v1947 = vpack.c.bf16 %v1943, %v1942
      %v1948 = vld [vmem:[%s5] sm:$0xf]
      %v1949 = vld [vmem:[%s5 + $0x4] sm:$0xf]
      %v1950 = vld [vmem:[%s6] sm:$0x1]
      %v1952 = vlaneseq
      %v1953 = vshrl.u32 %v1952, 7
      %v1954 = vsub.s32 0, %v1953
      %v1955 = vrot.slane %v1950, %v1954
      %v1959 = vunpack.c.l.b16 %v1948
      %v1960 = vunpack.c.l.b16 %v1949
      %v1961 = vpack.c.b16 %v1960, %v1959
      %v1964 = vsel %vm377, %v1944, 0
      %v1967 = vsel %vm377, %v1945, 0
      %v1970 = vsel %vm377, %v1946, 0
      %v1973 = vsel %vm377, %v1947, 0
      %1975 = vmatprep.subr.bf16.mxu0 0
      %1976 = vmatpush1.bf16.msra.mxu0 %v1961
      %1977 = vmatprep.subr.bf16.mxu0 0
      %1978 = vmatpush1.bf16.msra.mxu0 0
      %1979 = vmatprep.subr.bf16.mxu0 0
      %1980 = vmatpush1.bf16.msra.mxu0 0
      %1981 = vmatprep.subr.bf16.mxu0 0
      %1982 = vmatpush1.bf16.msra.mxu0 0
      %1983 = vmatprep.subr.bf16.mxu0 0
      %1984 = vmatpush1.bf16.msra.mxu0 0
      %1985 = vmatprep.subr.bf16.mxu0 0
      %1986 = vmatpush1.bf16.msra.mxu0 0
      %1987 = vmatprep.subr.bf16.mxu0 0
      %1988 = vmatpush1.bf16.msra.mxu0 0
      %1989 = vmatprep.subr.bf16.mxu0 0
      %1990 = vmatpush1.bf16.msra.mxu0 0
      %1991 = vmatprep.subr.bf16.mxu0 0
      %1992 = vmatpush1.bf16.msra.mxu0 0
      %1993 = vmatprep.subr.bf16.mxu0 0
      %1994 = vmatpush1.bf16.msra.mxu0 0
      %1995 = vmatprep.subr.bf16.mxu0 0
      %1996 = vmatpush1.bf16.msra.mxu0 0
      %1997 = vmatprep.subr.bf16.mxu0 0
      %1998 = vmatpush1.bf16.msra.mxu0 0
      %1999 = vmatprep.subr.bf16.mxu0 0
      %2000 = vmatpush1.bf16.msra.mxu0 0
      %2001 = vmatprep.subr.bf16.mxu0 0
      %2002 = vmatpush1.bf16.msra.mxu0 0
      %2003 = vmatprep.subr.bf16.mxu0 0
      %2004 = vmatpush1.bf16.msra.mxu0 0
      %2005 = vmatprep.subr.bf16.mxu0 0
      %2006 = vmatpush1.bf16.msra.mxu0 0
      %2007 = vmatprep.mubr.bf16.mxu0 0
      %2008 = vmatmul.mubr.bf16.gmra.mrb[0].mxu0 %v1964
      %v2009 = vpop.f32.mrb[0].mxu0
      %v2010 = vadd.f32 %v1955, %v2009
      %v2011 = vpop.f32.mrb[0].mxu0
      %v2012 = vpop.f32.mrb[0].mxu0
      %v2013 = vadd.f32 %v1955, %v2012
      %v2014 = vpop.f32.mrb[0].mxu0
      %2015 = vmatprep.mubr.bf16.mxu0 0
      %2016 = vmatmul.mubr.bf16.gmra.mrb[0].mxu0 %v1967
      %v2017 = vpop.f32.mrb[0].mxu0
      %v2018 = vadd.f32 %v1955, %v2017
      %v2019 = vpop.f32.mrb[0].mxu0
      %v2020 = vpop.f32.mrb[0].mxu0
      %v2021 = vadd.f32 %v1955, %v2020
      %v2022 = vpop.f32.mrb[0].mxu0
      %2023 = vmatprep.mubr.bf16.mxu0 0
      %2024 = vmatmul.mubr.bf16.gmra.mrb[0].mxu0 %v1970
      %v2025 = vpop.f32.mrb[0].mxu0
      %v2026 = vadd.f32 %v1955, %v2025
      %v2027 = vpop.f32.mrb[0].mxu0
      %v2028 = vpop.f32.mrb[0].mxu0
      %v2029 = vadd.f32 %v1955, %v2028
      %v2030 = vpop.f32.mrb[0].mxu0
      %2031 = vmatprep.mubr.bf16.mxu0 0
      %2032 = vmatmul.mubr.bf16.gmra.mrb[0].mxu0 %v1973
      %v2033 = vpop.f32.mrb[0].mxu0
      %v2034 = vadd.f32 %v1955, %v2033
      %v2035 = vpop.f32.mrb[0].mxu0
      %v2036 = vpop.f32.mrb[0].mxu0
      %v2037 = vadd.f32 %v1955, %v2036
      %v2038 = vpop.f32.mrb[0].mxu0
      %2039 = vdwg.mxu0
      %v2040 = vmul.f32 %v2010, %v2010
      %v2041 = vmul.f32 %v2013, %v2013
      %v2042 = vmul.f32 %v2018, %v2018
      %v2043 = vmul.f32 %v2021, %v2021
      %v2044 = vmul.f32 %v2026, %v2026
      %v2045 = vmul.f32 %v2029, %v2029
      %v2046 = vmul.f32 %v2034, %v2034
      %v2047 = vmul.f32 %v2037, %v2037
      %v2048 = vmul.f32 %v2010, %v2040
      %v2049 = vmul.f32 %v2013, %v2041
      %v2050 = vmul.f32 %v2018, %v2042
      %v2051 = vmul.f32 %v2021, %v2043
      %v2052 = vmul.f32 %v2026, %v2044
      %v2053 = vmul.f32 %v2029, %v2045
      %v2054 = vmul.f32 %v2034, %v2046
      %v2055 = vmul.f32 %v2037, %v2047
      %v2056 = vmul.f32 %v2048, 0.044715
      %v2057 = vmul.f32 %v2049, 0.044715
      %v2058 = vmul.f32 %v2050, 0.044715
      %v2059 = vmul.f32 %v2051, 0.044715
      %v2060 = vmul.f32 %v2052, 0.044715
      %v2061 = vmul.f32 %v2053, 0.044715
      %v2062 = vmul.f32 %v2054, 0.044715
      %v2063 = vmul.f32 %v2055, 0.044715
      %v2064 = vadd.f32 %v2010, %v2056
      %v2065 = vadd.f32 %v2013, %v2057
      %v2066 = vadd.f32 %v2018, %v2058
      %v2067 = vadd.f32 %v2021, %v2059
      %v2068 = vadd.f32 %v2026, %v2060
      %v2069 = vadd.f32 %v2029, %v2061
      %v2070 = vadd.f32 %v2034, %v2062
      %v2071 = vadd.f32 %v2037, %v2063
      %v2072 = vmul.f32 %v2064, 0.7978846
      %v2073 = vmul.f32 %v2065, 0.7978846
      %v2074 = vmul.f32 %v2066, 0.7978846
      %v2075 = vmul.f32 %v2067, 0.7978846
      %v2076 = vmul.f32 %v2068, 0.7978846
      %v2077 = vmul.f32 %v2069, 0.7978846
      %v2078 = vmul.f32 %v2070, 0.7978846
      %v2079 = vmul.f32 %v2071, 0.7978846
      %v2080 = vtanh.pop %v2072
      %v2081 = vtanh.pop %v2073
      %v2082 = vtanh.pop %v2074
      %v2083 = vtanh.pop %v2075
      %v2084 = vtanh.pop %v2076
      %v2085 = vtanh.pop %v2077
      %v2086 = vtanh.pop %v2078
      %v2087 = vtanh.pop %v2079
      %v2088 = vadd.f32 %v2080, 1.0
      %v2089 = vadd.f32 %v2081, 1.0
      %v2090 = vadd.f32 %v2082, 1.0
      %v2091 = vadd.f32 %v2083, 1.0
      %v2092 = vadd.f32 %v2084, 1.0
      %v2093 = vadd.f32 %v2085, 1.0
      %v2094 = vadd.f32 %v2086, 1.0
      %v2095 = vadd.f32 %v2087, 1.0
      %v2096 = vmul.f32 %v2088, 0.5
      %v2097 = vmul.f32 %v2089, 0.5
      %v2098 = vmul.f32 %v2090, 0.5
      %v2099 = vmul.f32 %v2091, 0.5
      %v2100 = vmul.f32 %v2092, 0.5
      %v2101 = vmul.f32 %v2093, 0.5
      %v2102 = vmul.f32 %v2094, 0.5
      %v2103 = vmul.f32 %v2095, 0.5
      %v2104 = vmul.f32 %v2010, %v2096
      %v2105 = vmul.f32 %v2013, %v2097
      %v2106 = vmul.f32 %v2018, %v2098
      %v2107 = vmul.f32 %v2021, %v2099
      %v2108 = vmul.f32 %v2026, %v2100
      %v2109 = vmul.f32 %v2029, %v2101
      %v2110 = vmul.f32 %v2034, %v2102
      %v2111 = vmul.f32 %v2037, %v2103
      %v2112 = vpack.c.bf16 %v2105, %v2104
      %v2113 = vpack.c.bf16 %v2107, %v2106
      %v2114 = vpack.c.bf16 %v2109, %v2108
      %v2115 = vpack.c.bf16 %v2111, %v2110
      %v2116 = vld [vmem:[%s7] sm:$0xf]
      %v2117 = vld [vmem:[%s7 + $0x4] sm:$0xf]
      %v2118 = vld [vmem:[%s7 + $0x8] sm:$0xf]
      %v2119 = vld [vmem:[%s7 + $0xc] sm:$0xf]
      %v2120 = vld [vmem:[%s7 + $0x10] sm:$0xf]
      %v2121 = vld [vmem:[%s7 + $0x14] sm:$0xf]
      %v2122 = vld [vmem:[%s7 + $0x18] sm:$0xf]
      %v2123 = vld [vmem:[%s7 + $0x1c] sm:$0xf]
      %v2124 = vld [vmem:[%s8] sm:$0x1]
      %v2126 = vlaneseq
      %v2127 = vshrl.u32 %v2126, 7
      %v2128 = vsub.s32 0, %v2127
      %v2129 = vrot.slane %v2124, %v2128
      %v2139 = vunpack.c.l.b16 %v2116
      %v2140 = vunpack.c.l.b16 %v2117
      %v2141 = vunpack.c.l.b16 %v2118
      %v2142 = vunpack.c.l.b16 %v2119
      %v2143 = vunpack.c.l.b16 %v2120
      %v2144 = vunpack.c.l.b16 %v2121
      %v2145 = vunpack.c.l.b16 %v2122
      %v2146 = vunpack.c.l.b16 %v2123
      %v2147 = vpack.c.b16 %v2140, %v2139
      %v2148 = vpack.c.b16 %v2142, %v2141
      %v2149 = vpack.c.b16 %v2144, %v2143
      %v2150 = vpack.c.b16 %v2146, %v2145
      %vm2155 = vcmask 523264
      %v2157 = vsel %vm2155, %v2112, 0
      %v2160 = vsel %vm2155, %v2113, 0
      %v2163 = vsel %vm2155, %v2114, 0
      %v2166 = vsel %vm2155, %v2115, 0
      %2168 = vmatprep.subr.bf16.mxu0 0
      %2169 = vmatpush1.bf16.msra.mxu0 %v2147
      %2170 = vmatprep.subr.bf16.mxu0 0
      %2171 = vmatpush1.bf16.msra.mxu0 %v2148
      %2172 = vmatprep.subr.bf16.mxu0 0
      %2173 = vmatpush1.bf16.msra.mxu0 %v2149
      %2174 = vmatprep.subr.bf16.mxu0 0
      %2175 = vmatpush1.bf16.msra.mxu0 %v2150
      %2176 = vmatprep.subr.bf16.mxu0 0
      %2177 = vmatpush1.bf16.msra.mxu0 0
      %2178 = vmatprep.subr.bf16.mxu0 0
      %2179 = vmatpush1.bf16.msra.mxu0 0
      %2180 = vmatprep.subr.bf16.mxu0 0
      %2181 = vmatpush1.bf16.msra.mxu0 0
      %2182 = vmatprep.subr.bf16.mxu0 0
      %2183 = vmatpush1.bf16.msra.mxu0 0
      %2184 = vmatprep.subr.bf16.mxu0 0
      %2185 = vmatpush1.bf16.msra.mxu0 0
      %2186 = vmatprep.subr.bf16.mxu0 0
      %2187 = vmatpush1.bf16.msra.mxu0 0
      %2188 = vmatprep.subr.bf16.mxu0 0
      %2189 = vmatpush1.bf16.msra.mxu0 0
      %2190 = vmatprep.subr.bf16.mxu0 0
      %2191 = vmatpush1.bf16.msra.mxu0 0
      %2192 = vmatprep.subr.bf16.mxu0 0
      %2193 = vmatpush1.bf16.msra.mxu0 0
      %2194 = vmatprep.subr.bf16.mxu0 0
      %2195 = vmatpush1.bf16.msra.mxu0 0
      %2196 = vmatprep.subr.bf16.mxu0 0
      %2197 = vmatpush1.bf16.msra.mxu0 0
      %2198 = vmatprep.subr.bf16.mxu0 0
      %2199 = vmatpush1.bf16.msra.mxu0 0
      %2200 = vmatprep.mubr.bf16.mxu0 0
      %2201 = vmatmul.mubr.bf16.gmra.mrb[0].mxu0 %v2157
      %v2202 = vpop.f32.mrb[0].mxu0
      %v2203 = vadd.f32 %v2129, %v2202
      %v2204 = vpop.f32.mrb[0].mxu0
      %v2205 = vpop.f32.mrb[0].mxu0
      %v2206 = vadd.f32 %v2129, %v2205
      %v2207 = vpop.f32.mrb[0].mxu0
      %2208 = vmatprep.mubr.bf16.mxu0 0
      %2209 = vmatmul.mubr.bf16.gmra.mrb[0].mxu0 %v2160
      %v2210 = vpop.f32.mrb[0].mxu0
      %v2211 = vadd.f32 %v2129, %v2210
      %v2212 = vpop.f32.mrb[0].mxu0
      %v2213 = vpop.f32.mrb[0].mxu0
      %v2214 = vadd.f32 %v2129, %v2213
      %v2215 = vpop.f32.mrb[0].mxu0
      %2216 = vmatprep.mubr.bf16.mxu0 0
      %2217 = vmatmul.mubr.bf16.gmra.mrb[0].mxu0 %v2163
      %v2218 = vpop.f32.mrb[0].mxu0
      %v2219 = vadd.f32 %v2129, %v2218
      %v2220 = vpop.f32.mrb[0].mxu0
      %v2221 = vpop.f32.mrb[0].mxu0
      %v2222 = vadd.f32 %v2129, %v2221
      %v2223 = vpop.f32.mrb[0].mxu0
      %2224 = vmatprep.mubr.bf16.mxu0 0
      %2225 = vmatmul.mubr.bf16.gmra.mrb[0].mxu0 %v2166
      %v2226 = vpop.f32.mrb[0].mxu0
      %v2227 = vadd.f32 %v2129, %v2226
      %v2228 = vpop.f32.mrb[0].mxu0
      %v2229 = vpop.f32.mrb[0].mxu0
      %v2230 = vadd.f32 %v2129, %v2229
      %v2231 = vpop.f32.mrb[0].mxu0
      %2232 = vdwg.mxu0
      %v2233 = vld [vmem:[%s9] sm:$0x1]
      %v2235 = vlaneseq
      %v2236 = vshrl.u32 %v2235, 7
      %v2237 = vsub.s32 0, %v2236
      %v2238 = vrot.slane %v2233, %v2237
      %v2240 = vmul.f32 %v2238, %v2203
      %v2241 = vmul.f32 %v2238, %v2206
      %v2242 = vmul.f32 %v2238, %v2211
      %v2243 = vmul.f32 %v2238, %v2214
      %v2244 = vmul.f32 %v2238, %v2219
      %v2245 = vmul.f32 %v2238, %v2222
      %v2246 = vmul.f32 %v2238, %v2227
      %v2247 = vmul.f32 %v2238, %v2230
      %v2248 = vadd.f32 %v369, %v2240
      %v2249 = vadd.f32 %v370, %v2241
      %v2250 = vadd.f32 %v371, %v2242
      %v2251 = vadd.f32 %v372, %v2243
      %v2252 = vadd.f32 %v373, %v2244
      %v2253 = vadd.f32 %v374, %v2245
      %v2254 = vadd.f32 %v375, %v2246
      %v2255 = vadd.f32 %v376, %v2247
      %v2256 = vpack.c.bf16 %v2248, %v2248
      %v2257 = vpack.c.bf16 %v2249, %v2249
      %v2258 = vpack.c.bf16 %v2250, %v2250
      %v2259 = vpack.c.bf16 %v2251, %v2251
      %v2260 = vpack.c.bf16 %v2252, %v2252
      %v2261 = vpack.c.bf16 %v2253, %v2253
      %v2262 = vpack.c.bf16 %v2254, %v2254
      %v2263 = vpack.c.bf16 %v2255, %v2255
      %vm2264 = vcmask 125952
      %2265 = vst.msk [vmem:[%s359] sm:$0xf] %vm2264, %v2256
      %2266 = vst.msk [vmem:[%s359 + $0x4] sm:$0xf] %vm2264, %v2257
      %2267 = vst.msk [vmem:[%s359 + $0x8] sm:$0xf] %vm2264, %v2258
      %2268 = vst.msk [vmem:[%s359 + $0xc] sm:$0xf] %vm2264, %v2259
      %2269 = vst.msk [vmem:[%s359 + $0x10] sm:$0xf] %vm2264, %v2260
      %2270 = vst.msk [vmem:[%s359 + $0x14] sm:$0xf] %vm2264, %v2261
      %2271 = vst.msk [vmem:[%s359 + $0x18] sm:$0xf] %vm2264, %v2262
      %2272 = vst.msk [vmem:[%s359 + $0x1c] sm:$0xf] %vm2264, %v2263
      %p2273 = scmp.lt.s32.totalorder %s21, 1
      %s2274 = scalar_select %p2273, %s21, 1
      %s2275 = smul.addr %s2274, 8
      %s2276 = smul.addr %s2275, 4
      %s2277 = scalar_lea.vmem %s10, %s2276
      // Predicated region
      $region61: #{convnext_forward.8} parent=59 // pred_check
        %p2278 = pneg %p254
      $region62: #{convnext_forward.8} parent=59 // pred_check_branch
        %2280 = sbr.rel (%p2278) target = $region64
      $region63: #{convnext_forward.8} parent=59 // pred_region
        _
      $region64: #{convnext_forward.8} parent=59 // pred_fallthru
        _
    $region60: #{convnext_forward.8} parent=5 // pred_fallthru
      _
    %p2281 = scmp.le.s32.totalorder 2, %s16
    // Predicated region
    $region65: #{convnext_forward.8} parent=5 // pred_check
      %p2282 = pneg %p2281
    $region66: #{convnext_forward.8} parent=5 // pred_check_branch
      %2284 = sbr.rel (%p2282) target = $region68
    $region67: #{convnext_forward.8} parent=5 // pred_region
      %s2285 = ssub.s32 %s16, 2
      // Predicated region
      $region69: #{convnext_forward.8} parent=67 // pred_check
        %p2286 = pneg %p260
      $region70: #{convnext_forward.8} parent=67 // pred_check_branch
        %2288 = sbr.rel (%p2286) target = $region72
      $region71: #{convnext_forward.8} parent=67 // pred_region
        %p2289 = scmp.lt.s32.totalorder %s22, 1
        %s2290 = scalar_select %p2289, %s22, 1
        %s2291 = smul.addr %s2290, 8
        %s2292 = smul.addr %s2291, 4
        %s2293 = scalar_lea.vmem %s10, %s2292
      $region72: #{convnext_forward.8} parent=67 // pred_fallthru
        _
    $region68: #{convnext_forward.8} parent=5 // pred_fallthru
      _
  $region6: #{convnext_forward.8} parent=0 // loop_footer
    %s20 = sadd.s32 1, %s16
  $region7: #{convnext_forward.8} parent=0 // loop_footer_branch
    %15 = sbr.rel target = $region3
  $region8: #{convnext_forward.8} parent=0 // loop_exit
    _

</llo_original>
